<compile_context>
chip_gen: v7x
topology: tpu7x:2x2x1
jax: 0.10.0
libtpu: 0.0.40
codegen_flags: <defaults>
</compile_context>

<pallas_src>
import numpy as np
import jax
import jax.numpy as jnp
from jax.experimental import pallas as pl
from jax.experimental.pallas import tpu as pltpu

W = 125            # spatial width after restructure
C = 13             # number of channels after restructure
K = W * C          # 1625: interleaved input width
LANE = 128         # TPU lane width; each channel gets its own 128-lane slot
N_OUT = C * LANE   # 1664: lane-padded, channel-major gather width


def _build_selector():
    # P[k, c*LANE + w] = 1  iff  k == w*C + c   (w < W); columns w in [125,128) stay 0.
    k = np.arange(K)
    w, c = k // C, k % C
    p = np.zeros((K, N_OUT), dtype=np.float32)
    p[k, c * LANE + w] = 1.0
    return jnp.asarray(p)


_SELECTOR = _build_selector()   # hoisted: built once, reused for every call


def _restruct_kernel(x_ref, p_ref, o_ref):
    # x_ref: (TILE_H, K)       rows of the interleaved image (current H tile)
    # p_ref: (K, N_OUT)        one-hot de-interleave matrix (VMEM-resident)
    # o_ref: (C, TILE_H, W)    output tile
    x = x_ref[...]
    for c0 in range(0, C, 2):                    # two channels per dot -> 256-wide MXU
        nc = min(2, C - c0)
        n0 = c0 * LANE
        r = jnp.dot(x, p_ref[:, n0:n0 + nc * LANE],
                    preferred_element_type=jnp.float32)      # (TILE_H, nc*128)
        for j in range(nc):
            o_ref[c0 + j, :, :] = r[:, j * LANE:j * LANE + W].astype(o_ref.dtype)


def _round_up(n, m):
    return ((n + m - 1) // m) * m


def restruct(img):
    """JAX/Pallas equivalent of the PyTorch `restruct` module (floating dtypes)."""
    x = jnp.asarray(img)
    if x.shape[-1] != K:
        raise ValueError(f"expected last dim {K}, got {x.shape}")
    # torch.squeeze + 'h (w c)' view, robust to H == 1 / extra leading unit dims.
    x = x.reshape(-1, K)
    H = x.shape[0]

    sel = _SELECTOR if x.dtype == jnp.float32 else _SELECTOR.astype(x.dtype)

    tile_h = min(256, _round_up(H, 8))
    grid = (pl.cdiv(H, tile_h),)

    out = pl.pallas_call(
        _restruct_kernel,
        out_shape=jax.ShapeDtypeStruct((C, H, W), x.dtype),
        grid_spec=pltpu.PrefetchScalarGridSpec(
            num_scalar_prefetch=0,
            grid=grid,
            in_specs=[
                pl.BlockSpec((tile_h, K), lambda i: (i, 0)),   # H tile of input rows
                pl.BlockSpec((K, N_OUT), lambda i: (0, 0)),    # selector: loaded once, resident
            ],
            out_specs=pl.BlockSpec((C, tile_h, W), lambda i: (0, i, 0)),
        ),
        compiler_params=pltpu.CompilerParams(
            dimension_semantics=("parallel",),
            vmem_limit_bytes=48 * 1024 * 1024,
        ),
    )(x, sel)
    return out


if __name__ == "__main__":
    H = 8  # small example height; the module works for any H
    key = jax.random.PRNGKey(0)
    img = jax.random.normal(key, (1, H, K), dtype=jnp.float32)

    out = jax.block_until_ready(restruct(img))

    # Pure-JAX reference of the einops rearrange for verification.
    ref = jnp.transpose(jnp.reshape(img.reshape(H, K), (H, W, C)), (2, 0, 1))
    assert out.shape == (C, H, W), out.shape
    assert jnp.allclose(out, ref), "Pallas restruct mismatch vs reference"

    print("KERNEL_OK")
</pallas_src>

<mosaic_0001>
module attributes {stable_mosaic.version = 11 : i64} {
  func.func @_restruct_kernel(%arg0: i32, %arg1: memref<8x1625xf32, #tpu.memory_space<vmem>>, %arg2: memref<1625x1664xf32, #tpu.memory_space<vmem>>, %arg3: memref<13x8x125xf32, #tpu.memory_space<vmem>>) attributes {dimension_semantics = [#tpu.dimension_semantics<parallel>], iteration_bounds = array<i64: 1>, scalar_prefetch = 0 : i64, scratch_operands = 0 : i64, tpu.core_type = #tpu.core_type<tc>, window_params = [{transform_indices = @transform_0, window_bounds = array<i64: 8, 1625>}, {pipeline_mode = #tpu.pipeline_mode<synchronous>, transform_indices = @transform_1, window_bounds = array<i64: 1625, 1664>}, {transform_indices = @transform_2, window_bounds = array<i64: 13, 8, 125>}]} {
    %c0 = arith.constant 0 : index
    %c0_0 = arith.constant 0 : index
    %0 = vector.load %arg1[%c0, %c0_0] : memref<8x1625xf32, #tpu.memory_space<vmem>>, vector<8x1625xf32>
    %c0_1 = arith.constant 0 : index
    %c0_2 = arith.constant 0 : index
    %1 = vector.load %arg2[%c0_1, %c0_2] : memref<1625x1664xf32, #tpu.memory_space<vmem>>, vector<1625x256xf32>
    %cst = arith.constant dense<0.000000e+00> : vector<8x256xf32>
    %2 = tpu.matmul %0, %1, %cst {dimension_numbers = #tpu.dot_dimension_numbers<[1], [0], [0], [1], [0, 0, 1, 1], [], []>} : vector<8x1625xf32>, vector<1625x256xf32>, vector<8x256xf32> -> vector<8x256xf32>
    %3 = vector.extract_strided_slice %2 {offsets = [0, 0], sizes = [8, 125], strides = [1, 1]} : vector<8x256xf32> to vector<8x125xf32>
    %c0_3 = arith.constant 0 : index
    %c0_4 = arith.constant 0 : index
    %c0_5 = arith.constant 0 : index
    %4 = vector.load %arg3[%c0_3, %c0_4, %c0_5] : memref<13x8x125xf32, #tpu.memory_space<vmem>>, vector<1x8x125xf32>
    %5 = vector.shape_cast %4 : vector<1x8x125xf32> to vector<8x125xf32>
    %6 = vector.shape_cast %3 : vector<8x125xf32> to vector<1x8x125xf32>
    tpu.vector_store %arg3[%c0_3, %c0_4, %c0_5], %6 {strides = array<i32>} : memref<13x8x125xf32, #tpu.memory_space<vmem>>, vector<1x8x125xf32>,
    %7 = vector.extract_strided_slice %2 {offsets = [0, 128], sizes = [8, 125], strides = [1, 1]} : vector<8x256xf32> to vector<8x125xf32>
    %c1 = arith.constant 1 : index
    %c0_6 = arith.constant 0 : index
    %c0_7 = arith.constant 0 : index
    %8 = vector.load %arg3[%c1, %c0_6, %c0_7] : memref<13x8x125xf32, #tpu.memory_space<vmem>>, vector<1x8x125xf32>
    %9 = vector.shape_cast %8 : vector<1x8x125xf32> to vector<8x125xf32>
    %10 = vector.shape_cast %7 : vector<8x125xf32> to vector<1x8x125xf32>
    tpu.vector_store %arg3[%c1, %c0_6, %c0_7], %10 {strides = array<i32>} : memref<13x8x125xf32, #tpu.memory_space<vmem>>, vector<1x8x125xf32>,
    %c0_8 = arith.constant 0 : index
    %c256 = arith.constant 256 : index
    %11 = vector.load %arg2[%c0_8, %c256] : memref<1625x1664xf32, #tpu.memory_space<vmem>>, vector<1625x256xf32>
    %cst_9 = arith.constant dense<0.000000e+00> : vector<8x256xf32>
    %12 = tpu.matmul %0, %11, %cst_9 {dimension_numbers = #tpu.dot_dimension_numbers<[1], [0], [0], [1], [0, 0, 1, 1], [], []>} : vector<8x1625xf32>, vector<1625x256xf32>, vector<8x256xf32> -> vector<8x256xf32>
    %13 = vector.extract_strided_slice %12 {offsets = [0, 0], sizes = [8, 125], strides = [1, 1]} : vector<8x256xf32> to vector<8x125xf32>
    %c2 = arith.constant 2 : index
    %c0_10 = arith.constant 0 : index
    %c0_11 = arith.constant 0 : index
    %14 = vector.load %arg3[%c2, %c0_10, %c0_11] : memref<13x8x125xf32, #tpu.memory_space<vmem>>, vector<1x8x125xf32>
    %15 = vector.shape_cast %14 : vector<1x8x125xf32> to vector<8x125xf32>
    %16 = vector.shape_cast %13 : vector<8x125xf32> to vector<1x8x125xf32>
    tpu.vector_store %arg3[%c2, %c0_10, %c0_11], %16 {strides = array<i32>} : memref<13x8x125xf32, #tpu.memory_space<vmem>>, vector<1x8x125xf32>,
    %17 = vector.extract_strided_slice %12 {offsets = [0, 128], sizes = [8, 125], strides = [1, 1]} : vector<8x256xf32> to vector<8x125xf32>
    %c3 = arith.constant 3 : index
    %c0_12 = arith.constant 0 : index
    %c0_13 = arith.constant 0 : index
    %18 = vector.load %arg3[%c3, %c0_12, %c0_13] : memref<13x8x125xf32, #tpu.memory_space<vmem>>, vector<1x8x125xf32>
    %19 = vector.shape_cast %18 : vector<1x8x125xf32> to vector<8x125xf32>
    %20 = vector.shape_cast %17 : vector<8x125xf32> to vector<1x8x125xf32>
    tpu.vector_store %arg3[%c3, %c0_12, %c0_13], %20 {strides = array<i32>} : memref<13x8x125xf32, #tpu.memory_space<vmem>>, vector<1x8x125xf32>,
    %c0_14 = arith.constant 0 : index
    %c512 = arith.constant 512 : index
    %21 = vector.load %arg2[%c0_14, %c512] : memref<1625x1664xf32, #tpu.memory_space<vmem>>, vector<1625x256xf32>
    %cst_15 = arith.constant dense<0.000000e+00> : vector<8x256xf32>
    %22 = tpu.matmul %0, %21, %cst_15 {dimension_numbers = #tpu.dot_dimension_numbers<[1], [0], [0], [1], [0, 0, 1, 1], [], []>} : vector<8x1625xf32>, vector<1625x256xf32>, vector<8x256xf32> -> vector<8x256xf32>
    %23 = vector.extract_strided_slice %22 {offsets = [0, 0], sizes = [8, 125], strides = [1, 1]} : vector<8x256xf32> to vector<8x125xf32>
    %c4 = arith.constant 4 : index
    %c0_16 = arith.constant 0 : index
    %c0_17 = arith.constant 0 : index
    %24 = vector.load %arg3[%c4, %c0_16, %c0_17] : memref<13x8x125xf32, #tpu.memory_space<vmem>>, vector<1x8x125xf32>
    %25 = vector.shape_cast %24 : vector<1x8x125xf32> to vector<8x125xf32>
    %26 = vector.shape_cast %23 : vector<8x125xf32> to vector<1x8x125xf32>
    tpu.vector_store %arg3[%c4, %c0_16, %c0_17], %26 {strides = array<i32>} : memref<13x8x125xf32, #tpu.memory_space<vmem>>, vector<1x8x125xf32>,
    %27 = vector.extract_strided_slice %22 {offsets = [0, 128], sizes = [8, 125], strides = [1, 1]} : vector<8x256xf32> to vector<8x125xf32>
    %c5 = arith.constant 5 : index
    %c0_18 = arith.constant 0 : index
    %c0_19 = arith.constant 0 : index
    %28 = vector.load %arg3[%c5, %c0_18, %c0_19] : memref<13x8x125xf32, #tpu.memory_space<vmem>>, vector<1x8x125xf32>
    %29 = vector.shape_cast %28 : vector<1x8x125xf32> to vector<8x125xf32>
    %30 = vector.shape_cast %27 : vector<8x125xf32> to vector<1x8x125xf32>
    tpu.vector_store %arg3[%c5, %c0_18, %c0_19], %30 {strides = array<i32>} : memref<13x8x125xf32, #tpu.memory_space<vmem>>, vector<1x8x125xf32>,
    %c0_20 = arith.constant 0 : index
    %c768 = arith.constant 768 : index
    %31 = vector.load %arg2[%c0_20, %c768] : memref<1625x1664xf32, #tpu.memory_space<vmem>>, vector<1625x256xf32>
    %cst_21 = arith.constant dense<0.000000e+00> : vector<8x256xf32>
    %32 = tpu.matmul %0, %31, %cst_21 {dimension_numbers = #tpu.dot_dimension_numbers<[1], [0], [0], [1], [0, 0, 1, 1], [], []>} : vector<8x1625xf32>, vector<1625x256xf32>, vector<8x256xf32> -> vector<8x256xf32>
    %33 = vector.extract_strided_slice %32 {offsets = [0, 0], sizes = [8, 125], strides = [1, 1]} : vector<8x256xf32> to vector<8x125xf32>
    %c6 = arith.constant 6 : index
    %c0_22 = arith.constant 0 : index
    %c0_23 = arith.constant 0 : index
    %34 = vector.load %arg3[%c6, %c0_22, %c0_23] : memref<13x8x125xf32, #tpu.memory_space<vmem>>, vector<1x8x125xf32>
    %35 = vector.shape_cast %34 : vector<1x8x125xf32> to vector<8x125xf32>
    %36 = vector.shape_cast %33 : vector<8x125xf32> to vector<1x8x125xf32>
    tpu.vector_store %arg3[%c6, %c0_22, %c0_23], %36 {strides = array<i32>} : memref<13x8x125xf32, #tpu.memory_space<vmem>>, vector<1x8x125xf32>,
    %37 = vector.extract_strided_slice %32 {offsets = [0, 128], sizes = [8, 125], strides = [1, 1]} : vector<8x256xf32> to vector<8x125xf32>
    %c7 = arith.constant 7 : index
    %c0_24 = arith.constant 0 : index
    %c0_25 = arith.constant 0 : index
    %38 = vector.load %arg3[%c7, %c0_24, %c0_25] : memref<13x8x125xf32, #tpu.memory_space<vmem>>, vector<1x8x125xf32>
    %39 = vector.shape_cast %38 : vector<1x8x125xf32> to vector<8x125xf32>
    %40 = vector.shape_cast %37 : vector<8x125xf32> to vector<1x8x125xf32>
    tpu.vector_store %arg3[%c7, %c0_24, %c0_25], %40 {strides = array<i32>} : memref<13x8x125xf32, #tpu.memory_space<vmem>>, vector<1x8x125xf32>,
    %c0_26 = arith.constant 0 : index
    %c1024 = arith.constant 1024 : index
    %41 = vector.load %arg2[%c0_26, %c1024] : memref<1625x1664xf32, #tpu.memory_space<vmem>>, vector<1625x256xf32>
    %cst_27 = arith.constant dense<0.000000e+00> : vector<8x256xf32>
    %42 = tpu.matmul %0, %41, %cst_27 {dimension_numbers = #tpu.dot_dimension_numbers<[1], [0], [0], [1], [0, 0, 1, 1], [], []>} : vector<8x1625xf32>, vector<1625x256xf32>, vector<8x256xf32> -> vector<8x256xf32>
    %43 = vector.extract_strided_slice %42 {offsets = [0, 0], sizes = [8, 125], strides = [1, 1]} : vector<8x256xf32> to vector<8x125xf32>
    %c8 = arith.constant 8 : index
    %c0_28 = arith.constant 0 : index
    %c0_29 = arith.constant 0 : index
    %44 = vector.load %arg3[%c8, %c0_28, %c0_29] : memref<13x8x125xf32, #tpu.memory_space<vmem>>, vector<1x8x125xf32>
    %45 = vector.shape_cast %44 : vector<1x8x125xf32> to vector<8x125xf32>
    %46 = vector.shape_cast %43 : vector<8x125xf32> to vector<1x8x125xf32>
    tpu.vector_store %arg3[%c8, %c0_28, %c0_29], %46 {strides = array<i32>} : memref<13x8x125xf32, #tpu.memory_space<vmem>>, vector<1x8x125xf32>,
    %47 = vector.extract_strided_slice %42 {offsets = [0, 128], sizes = [8, 125], strides = [1, 1]} : vector<8x256xf32> to vector<8x125xf32>
    %c9 = arith.constant 9 : index
    %c0_30 = arith.constant 0 : index
    %c0_31 = arith.constant 0 : index
    %48 = vector.load %arg3[%c9, %c0_30, %c0_31] : memref<13x8x125xf32, #tpu.memory_space<vmem>>, vector<1x8x125xf32>
    %49 = vector.shape_cast %48 : vector<1x8x125xf32> to vector<8x125xf32>
    %50 = vector.shape_cast %47 : vector<8x125xf32> to vector<1x8x125xf32>
    tpu.vector_store %arg3[%c9, %c0_30, %c0_31], %50 {strides = array<i32>} : memref<13x8x125xf32, #tpu.memory_space<vmem>>, vector<1x8x125xf32>,
    %c0_32 = arith.constant 0 : index
    %c1280 = arith.constant 1280 : index
    %51 = vector.load %arg2[%c0_32, %c1280] : memref<1625x1664xf32, #tpu.memory_space<vmem>>, vector<1625x256xf32>
    %cst_33 = arith.constant dense<0.000000e+00> : vector<8x256xf32>
    %52 = tpu.matmul %0, %51, %cst_33 {dimension_numbers = #tpu.dot_dimension_numbers<[1], [0], [0], [1], [0, 0, 1, 1], [], []>} : vector<8x1625xf32>, vector<1625x256xf32>, vector<8x256xf32> -> vector<8x256xf32>
    %53 = vector.extract_strided_slice %52 {offsets = [0, 0], sizes = [8, 125], strides = [1, 1]} : vector<8x256xf32> to vector<8x125xf32>
    %c10 = arith.constant 10 : index
    %c0_34 = arith.constant 0 : index
    %c0_35 = arith.constant 0 : index
    %54 = vector.load %arg3[%c10, %c0_34, %c0_35] : memref<13x8x125xf32, #tpu.memory_space<vmem>>, vector<1x8x125xf32>
    %55 = vector.shape_cast %54 : vector<1x8x125xf32> to vector<8x125xf32>
    %56 = vector.shape_cast %53 : vector<8x125xf32> to vector<1x8x125xf32>
    tpu.vector_store %arg3[%c10, %c0_34, %c0_35], %56 {strides = array<i32>} : memref<13x8x125xf32, #tpu.memory_space<vmem>>, vector<1x8x125xf32>,
    %57 = vector.extract_strided_slice %52 {offsets = [0, 128], sizes = [8, 125], strides = [1, 1]} : vector<8x256xf32> to vector<8x125xf32>
    %c11 = arith.constant 11 : index
    %c0_36 = arith.constant 0 : index
    %c0_37 = arith.constant 0 : index
    %58 = vector.load %arg3[%c11, %c0_36, %c0_37] : memref<13x8x125xf32, #tpu.memory_space<vmem>>, vector<1x8x125xf32>
    %59 = vector.shape_cast %58 : vector<1x8x125xf32> to vector<8x125xf32>
    %60 = vector.shape_cast %57 : vector<8x125xf32> to vector<1x8x125xf32>
    tpu.vector_store %arg3[%c11, %c0_36, %c0_37], %60 {strides = array<i32>} : memref<13x8x125xf32, #tpu.memory_space<vmem>>, vector<1x8x125xf32>,
    %c0_38 = arith.constant 0 : index
    %c1536 = arith.constant 1536 : index
    %61 = vector.load %arg2[%c0_38, %c1536] : memref<1625x1664xf32, #tpu.memory_space<vmem>>, vector<1625x128xf32>
    %cst_39 = arith.constant dense<0.000000e+00> : vector<8x128xf32>
    %62 = tpu.matmul %0, %61, %cst_39 {dimension_numbers = #tpu.dot_dimension_numbers<[1], [0], [0], [1], [0, 0, 1, 1], [], []>} : vector<8x1625xf32>, vector<1625x128xf32>, vector<8x128xf32> -> vector<8x128xf32>
    %63 = vector.extract_strided_slice %62 {offsets = [0, 0], sizes = [8, 125], strides = [1, 1]} : vector<8x128xf32> to vector<8x125xf32>
    %c12 = arith.constant 12 : index
    %c0_40 = arith.constant 0 : index
    %c0_41 = arith.constant 0 : index
    %64 = vector.load %arg3[%c12, %c0_40, %c0_41] : memref<13x8x125xf32, #tpu.memory_space<vmem>>, vector<1x8x125xf32>
    %65 = vector.shape_cast %64 : vector<1x8x125xf32> to vector<8x125xf32>
    %66 = vector.shape_cast %63 : vector<8x125xf32> to vector<1x8x125xf32>
    tpu.vector_store %arg3[%c12, %c0_40, %c0_41], %66 {strides = array<i32>} : memref<13x8x125xf32, #tpu.memory_space<vmem>>, vector<1x8x125xf32>,
    return
  }
  func.func @transform_0(%arg0: i32) -> (i32, i32) {
    %c0_i32 = arith.constant 0 : i32
    %c0_i32_0 = arith.constant 0 : i32
    return %arg0, %c0_i32 : i32, i32
  }
  func.func @transform_1(%arg0: i32) -> (i32, i32) {
    %c0_i32 = arith.constant 0 : i32
    %c0_i32_0 = arith.constant 0 : i32
    %c0_i32_1 = arith.constant 0 : i32
    return %c0_i32, %c0_i32_0 : i32, i32
  }
  func.func @transform_2(%arg0: i32) -> (i32, i32, i32) {
    %c0_i32 = arith.constant 0 : i32
    %c0_i32_0 = arith.constant 0 : i32
    %c0_i32_1 = arith.constant 0 : i32
    return %c0_i32, %arg0, %c0_i32_0 : i32, i32, i32
  }
}

</mosaic_0001>

<llo_original>
// kernel: tpu_custom_call.1
$region0: #{tpu_custom_call.1}
  #allocation0 [shape = 'u32[]', space=smem, size = 0x4, offset = 0x4, fixed_abs, tag = 'smem constant byte address 0x4 - core index']
  #allocation1 [shape = 'u32[144,128]{1,0:T(1,128)}', space=vmem, size = 0x12000, scoped, tag = 'internal scratch']
  %s0 = inlined_call_operand.hbm [shape: f32[8,1625], index: 0, kind: input, shape index: {}]
  %s1 = inlined_call_operand.hbm [shape: f32[1625,1664], index: 1, kind: input, shape index: {}]
  %s2 = inlined_call_operand.hbm [shape: f32[13,8,125], index: 2, kind: output, shape index: {}]
  %s3 = sld [smem:[#allocation0]]
  $region26: #{tpu_custom_call.1} parent=0
    _
  %s5 = ssub.s32 1, %s3
  %s6 = scalar_select 0, %s5, %s3
  $region1: #{tpu_custom_call.1} parent=0
    #allocation2 [shape = 'u8[53248]{0}', space=vmem, size = 0xd000, scoped, tag = 'input window, operand 0, single buffered']
    #allocation3 [shape = 's32[1]{0}', space=sflag, size = 0x4, scoped, tag = 'scoped memory for tpu_custom_call.1']
    #allocation4 [shape = 's32[1]{0}', space=sflag, size = 0x4, scoped, tag = 'scoped memory for tpu_custom_call.1']
    #allocation5 [shape = 'u8[10862592]{0}', space=vmem, size = 0xa5c000, scoped, tag = 'input window, operand 1, single buffered']
    #allocation6 [shape = 's32[1]{0}', space=sflag, size = 0x4, scoped, tag = 'scoped memory for tpu_custom_call.1']
    #allocation7 [shape = 'u8[53248]{0}', space=vmem, size = 0xd000, scoped, tag = 'output window, operand 0, single buffered']
    %7 = vsyncpa [#allocation3], 0
    %8 = vsyncpa [#allocation6], 0
    %9 = vsyncpa [#allocation4], 0
    // Predicated region
    $region2: #{tpu_custom_call.1} parent=1 // pred_check
      _
    $region3: #{tpu_custom_call.1} parent=1 // pred_check_branch
      %11 = sbr.rel (0) target = $region5
    $region4: #{tpu_custom_call.1} parent=1 // pred_region
      %s13 = ssub.s32 1664, 1664
      %14 = vsyncadd [#allocation3], %s13
      %s16 = sshll.u32 [#allocation2], 4
      %s17 = int_to_ptr.vmem [resolvable:$true] %s16
      %19 = dma.hbm_to_vmem [thread:$0]  %s0, 1664, %s17, [#allocation3]
    $region5: #{tpu_custom_call.1} parent=1 // pred_fallthru
      _
    // Predicated region
    $region6: #{tpu_custom_call.1} parent=1 // pred_check
      _
    $region7: #{tpu_custom_call.1} parent=1 // pred_check_branch
      %21 = sbr.rel (0) target = $region9
    $region8: #{tpu_custom_call.1} parent=1 // pred_region
      %s23 = ssub.s32 339456, 339456
      %24 = vsyncadd [#allocation6], %s23
      %s25 = sshll.u32 [#allocation5], 4
      %s26 = int_to_ptr.vmem [resolvable:$true] %s25
      %31 = dma.hbm_to_vmem [thread:$0]  %s1, 339456, %s26, [#allocation6], 1664, 1664, 104
    $region9: #{tpu_custom_call.1} parent=1 // pred_fallthru
      _
    // Predicated region
    $region10: #{tpu_custom_call.1} parent=1 // pred_check
      _
    $region11: #{tpu_custom_call.1} parent=1 // pred_check_branch
      %33 = sbr.rel (0) target = $region13
    $region12: #{tpu_custom_call.1} parent=1 // pred_region
      %34 = dma.done [#allocation3], 1664
    $region13: #{tpu_custom_call.1} parent=1 // pred_fallthru
      _
    // Predicated region
    $region14: #{tpu_custom_call.1} parent=1 // pred_check
      _
    $region15: #{tpu_custom_call.1} parent=1 // pred_check_branch
      %36 = sbr.rel (0) target = $region17
    $region16: #{tpu_custom_call.1} parent=1 // pred_region
      %37 = dma.done [#allocation6], 339456
    $region17: #{tpu_custom_call.1} parent=1 // pred_fallthru
      _
    %v38 = vld [vmem:[#allocation2] sm:$0xff]
    %v39 = vld [vmem:[#allocation2 + $0x8] sm:$0xff]
    %v40 = vld [vmem:[#allocation2 + $0x10] sm:$0xff]
    %v41 = vld [vmem:[#allocation2 + $0x18] sm:$0xff]
    %v42 = vld [vmem:[#allocation2 + $0x20] sm:$0xff]
    %v43 = vld [vmem:[#allocation2 + $0x28] sm:$0xff]
    %v44 = vld [vmem:[#allocation2 + $0x30] sm:$0xff]
    %v45 = vld [vmem:[#allocation2 + $0x38] sm:$0xff]
    %v46 = vld [vmem:[#allocation2 + $0x40] sm:$0xff]
    %v47 = vld [vmem:[#allocation2 + $0x48] sm:$0xff]
    %v48 = vld [vmem:[#allocation2 + $0x50] sm:$0xff]
    %v49 = vld [vmem:[#allocation2 + $0x58] sm:$0xff]
    %v50 = vld [vmem:[#allocation2 + $0x60] sm:$0xff]
    %v51 = vld [vmem:[#allocation5] sm:$0xff]
    %v52 = vld [vmem:[#allocation5 + $0x8] sm:$0xff]
    %v53 = vld [vmem:[#allocation5 + $0x68] sm:$0xff]
    %v54 = vld [vmem:[#allocation5 + $0x70] sm:$0xff]
    %v55 = vld [vmem:[#allocation5 + $0xd0] sm:$0xff]
    %v56 = vld [vmem:[#allocation5 + $0xd8] sm:$0xff]
    %v57 = vld [vmem:[#allocation5 + $0x138] sm:$0xff]
    %v58 = vld [vmem:[#allocation5 + $0x140] sm:$0xff]
    %v59 = vld [vmem:[#allocation5 + $0x1a0] sm:$0xff]
    %v60 = vld [vmem:[#allocation5 + $0x1a8] sm:$0xff]
    %v61 = vld [vmem:[#allocation5 + $0x208] sm:$0xff]
    %v62 = vld [vmem:[#allocation5 + $0x210] sm:$0xff]
    %v63 = vld [vmem:[#allocation5 + $0x270] sm:$0xff]
    %v64 = vld [vmem:[#allocation5 + $0x278] sm:$0xff]
    %v65 = vld [vmem:[#allocation5 + $0x2d8] sm:$0xff]
    %v66 = vld [vmem:[#allocation5 + $0x2e0] sm:$0xff]
    %v67 = vld [vmem:[#allocation5 + $0x340] sm:$0xff]
    %v68 = vld [vmem:[#allocation5 + $0x348] sm:$0xff]
    %v69 = vld [vmem:[#allocation5 + $0x3a8] sm:$0xff]
    %v70 = vld [vmem:[#allocation5 + $0x3b0] sm:$0xff]
    %v71 = vld [vmem:[#allocation5 + $0x410] sm:$0xff]
    %v72 = vld [vmem:[#allocation5 + $0x418] sm:$0xff]
    %v73 = vld [vmem:[#allocation5 + $0x478] sm:$0xff]
    %v74 = vld [vmem:[#allocation5 + $0x480] sm:$0xff]
    %v75 = vld [vmem:[#allocation5 + $0x4e0] sm:$0xff]
    %v76 = vld [vmem:[#allocation5 + $0x4e8] sm:$0xff]
    %v77 = vld [vmem:[#allocation5 + $0x548] sm:$0xff]
    %v78 = vld [vmem:[#allocation5 + $0x550] sm:$0xff]
    %v79 = vld [vmem:[#allocation5 + $0x5b0] sm:$0xff]
    %v80 = vld [vmem:[#allocation5 + $0x5b8] sm:$0xff]
    %v81 = vld [vmem:[#allocation5 + $0x618] sm:$0xff]
    %v82 = vld [vmem:[#allocation5 + $0x620] sm:$0xff]
    %v83 = vld [vmem:[#allocation5 + $0x680] sm:$0xff]
    %v84 = vld [vmem:[#allocation5 + $0x688] sm:$0xff]
    %v85 = vld [vmem:[#allocation5 + $0x6e8] sm:$0xff]
    %v86 = vld [vmem:[#allocation5 + $0x6f0] sm:$0xff]
    %v87 = vld [vmem:[#allocation5 + $0x750] sm:$0xff]
    %v88 = vld [vmem:[#allocation5 + $0x758] sm:$0xff]
    %v89 = vld [vmem:[#allocation5 + $0x7b8] sm:$0xff]
    %v90 = vld [vmem:[#allocation5 + $0x7c0] sm:$0xff]
    %v91 = vld [vmem:[#allocation5 + $0x820] sm:$0xff]
    %v92 = vld [vmem:[#allocation5 + $0x828] sm:$0xff]
    %v93 = vld [vmem:[#allocation5 + $0x888] sm:$0xff]
    %v94 = vld [vmem:[#allocation5 + $0x890] sm:$0xff]
    %v95 = vld [vmem:[#allocation5 + $0x8f0] sm:$0xff]
    %v96 = vld [vmem:[#allocation5 + $0x8f8] sm:$0xff]
    %v97 = vld [vmem:[#allocation5 + $0x958] sm:$0xff]
    %v98 = vld [vmem:[#allocation5 + $0x960] sm:$0xff]
    %v99 = vld [vmem:[#allocation5 + $0x9c0] sm:$0xff]
    %v100 = vld [vmem:[#allocation5 + $0x9c8] sm:$0xff]
    %v101 = vld [vmem:[#allocation5 + $0xa28] sm:$0xff]
    %v102 = vld [vmem:[#allocation5 + $0xa30] sm:$0xff]
    %v103 = vld [vmem:[#allocation5 + $0xa90] sm:$0xff]
    %v104 = vld [vmem:[#allocation5 + $0xa98] sm:$0xff]
    %v105 = vld [vmem:[#allocation5 + $0xaf8] sm:$0xff]
    %v106 = vld [vmem:[#allocation5 + $0xb00] sm:$0xff]
    %v107 = vld [vmem:[#allocation5 + $0xb60] sm:$0xff]
    %v108 = vld [vmem:[#allocation5 + $0xb68] sm:$0xff]
    %v109 = vld [vmem:[#allocation5 + $0xbc8] sm:$0xff]
    %v110 = vld [vmem:[#allocation5 + $0xbd0] sm:$0xff]
    %v111 = vld [vmem:[#allocation5 + $0xc30] sm:$0xff]
    %v112 = vld [vmem:[#allocation5 + $0xc38] sm:$0xff]
    %v113 = vld [vmem:[#allocation5 + $0xc98] sm:$0xff]
    %v114 = vld [vmem:[#allocation5 + $0xca0] sm:$0xff]
    %v115 = vld [vmem:[#allocation5 + $0xd00] sm:$0xff]
    %v116 = vld [vmem:[#allocation5 + $0xd08] sm:$0xff]
    %v117 = vld [vmem:[#allocation5 + $0xd68] sm:$0xff]
    %v118 = vld [vmem:[#allocation5 + $0xd70] sm:$0xff]
    %v119 = vld [vmem:[#allocation5 + $0xdd0] sm:$0xff]
    %v120 = vld [vmem:[#allocation5 + $0xdd8] sm:$0xff]
    %v121 = vld [vmem:[#allocation5 + $0xe38] sm:$0xff]
    %v122 = vld [vmem:[#allocation5 + $0xe40] sm:$0xff]
    %v123 = vld [vmem:[#allocation5 + $0xea0] sm:$0xff]
    %v124 = vld [vmem:[#allocation5 + $0xea8] sm:$0xff]
    %v125 = vld [vmem:[#allocation5 + $0xf08] sm:$0xff]
    %v126 = vld [vmem:[#allocation5 + $0xf10] sm:$0xff]
    %v127 = vld [vmem:[#allocation5 + $0xf70] sm:$0xff]
    %v128 = vld [vmem:[#allocation5 + $0xf78] sm:$0xff]
    %v129 = vld [vmem:[#allocation5 + $0xfd8] sm:$0xff]
    %v130 = vld [vmem:[#allocation5 + $0xfe0] sm:$0xff]
    %v131 = vld [vmem:[#allocation5 + $0x1040] sm:$0xff]
    %v132 = vld [vmem:[#allocation5 + $0x1048] sm:$0xff]
    %v133 = vld [vmem:[#allocation5 + $0x10a8] sm:$0xff]
    %v134 = vld [vmem:[#allocation5 + $0x10b0] sm:$0xff]
    %v135 = vld [vmem:[#allocation5 + $0x1110] sm:$0xff]
    %v136 = vld [vmem:[#allocation5 + $0x1118] sm:$0xff]
    %v137 = vld [vmem:[#allocation5 + $0x1178] sm:$0xff]
    %v138 = vld [vmem:[#allocation5 + $0x1180] sm:$0xff]
    %v139 = vld [vmem:[#allocation5 + $0x11e0] sm:$0xff]
    %v140 = vld [vmem:[#allocation5 + $0x11e8] sm:$0xff]
    %v141 = vld [vmem:[#allocation5 + $0x1248] sm:$0xff]
    %v142 = vld [vmem:[#allocation5 + $0x1250] sm:$0xff]
    %v143 = vld [vmem:[#allocation5 + $0x12b0] sm:$0xff]
    %v144 = vld [vmem:[#allocation5 + $0x12b8] sm:$0xff]
    %v145 = vld [vmem:[#allocation5 + $0x1318] sm:$0xff]
    %v146 = vld [vmem:[#allocation5 + $0x1320] sm:$0xff]
    %v147 = vld [vmem:[#allocation5 + $0x1380] sm:$0xff]
    %v148 = vld [vmem:[#allocation5 + $0x1388] sm:$0xff]
    %v149 = vld [vmem:[#allocation5 + $0x13e8] sm:$0xff]
    %v150 = vld [vmem:[#allocation5 + $0x13f0] sm:$0xff]
    %v151 = vld [vmem:[#allocation5 + $0x1450] sm:$0xff]
    %v152 = vld [vmem:[#allocation5 + $0x1458] sm:$0xff]
    %v153 = vld [vmem:[#allocation5 + $0x14b8] sm:$0xff]
    %v154 = vld [vmem:[#allocation5 + $0x14c0] sm:$0xff]
    %v155 = vld [vmem:[#allocation5 + $0x1520] sm:$0xff]
    %v156 = vld [vmem:[#allocation5 + $0x1528] sm:$0xff]
    %v157 = vld [vmem:[#allocation5 + $0x1588] sm:$0xff]
    %v158 = vld [vmem:[#allocation5 + $0x1590] sm:$0xff]
    %v159 = vld [vmem:[#allocation5 + $0x15f0] sm:$0xff]
    %v160 = vld [vmem:[#allocation5 + $0x15f8] sm:$0xff]
    %v161 = vld [vmem:[#allocation5 + $0x1658] sm:$0xff]
    %v162 = vld [vmem:[#allocation5 + $0x1660] sm:$0xff]
    %v163 = vld [vmem:[#allocation5 + $0x16c0] sm:$0xff]
    %v164 = vld [vmem:[#allocation5 + $0x16c8] sm:$0xff]
    %v165 = vld [vmem:[#allocation5 + $0x1728] sm:$0xff]
    %v166 = vld [vmem:[#allocation5 + $0x1730] sm:$0xff]
    %v167 = vld [vmem:[#allocation5 + $0x1790] sm:$0xff]
    %v168 = vld [vmem:[#allocation5 + $0x1798] sm:$0xff]
    %v169 = vld [vmem:[#allocation5 + $0x17f8] sm:$0xff]
    %v170 = vld [vmem:[#allocation5 + $0x1800] sm:$0xff]
    %v171 = vld [vmem:[#allocation5 + $0x1860] sm:$0xff]
    %v172 = vld [vmem:[#allocation5 + $0x1868] sm:$0xff]
    %v173 = vld [vmem:[#allocation5 + $0x18c8] sm:$0xff]
    %v174 = vld [vmem:[#allocation5 + $0x18d0] sm:$0xff]
    %v175 = vld [vmem:[#allocation5 + $0x1930] sm:$0xff]
    %v176 = vld [vmem:[#allocation5 + $0x1938] sm:$0xff]
    %v177 = vld [vmem:[#allocation5 + $0x1998] sm:$0xff]
    %v178 = vld [vmem:[#allocation5 + $0x19a0] sm:$0xff]
    %v179 = vld [vmem:[#allocation5 + $0x1a00] sm:$0xff]
    %v180 = vld [vmem:[#allocation5 + $0x1a08] sm:$0xff]
    %v181 = vld [vmem:[#allocation5 + $0x1a68] sm:$0xff]
    %v182 = vld [vmem:[#allocation5 + $0x1a70] sm:$0xff]
    %v183 = vld [vmem:[#allocation5 + $0x1ad0] sm:$0xff]
    %v184 = vld [vmem:[#allocation5 + $0x1ad8] sm:$0xff]
    %v185 = vld [vmem:[#allocation5 + $0x1b38] sm:$0xff]
    %v186 = vld [vmem:[#allocation5 + $0x1b40] sm:$0xff]
    %v187 = vld [vmem:[#allocation5 + $0x1ba0] sm:$0xff]
    %v188 = vld [vmem:[#allocation5 + $0x1ba8] sm:$0xff]
    %v189 = vld [vmem:[#allocation5 + $0x1c08] sm:$0xff]
    %v190 = vld [vmem:[#allocation5 + $0x1c10] sm:$0xff]
    %v191 = vld [vmem:[#allocation5 + $0x1c70] sm:$0xff]
    %v192 = vld [vmem:[#allocation5 + $0x1c78] sm:$0xff]
    %v193 = vld [vmem:[#allocation5 + $0x1cd8] sm:$0xff]
    %v194 = vld [vmem:[#allocation5 + $0x1ce0] sm:$0xff]
    %v195 = vld [vmem:[#allocation5 + $0x1d40] sm:$0xff]
    %v196 = vld [vmem:[#allocation5 + $0x1d48] sm:$0xff]
    %v197 = vld [vmem:[#allocation5 + $0x1da8] sm:$0xff]
    %v198 = vld [vmem:[#allocation5 + $0x1db0] sm:$0xff]
    %v199 = vld [vmem:[#allocation5 + $0x1e10] sm:$0xff]
    %v200 = vld [vmem:[#allocation5 + $0x1e18] sm:$0xff]
    %v201 = vld [vmem:[#allocation5 + $0x1e78] sm:$0xff]
    %v202 = vld [vmem:[#allocation5 + $0x1e80] sm:$0xff]
    %v203 = vld [vmem:[#allocation5 + $0x1ee0] sm:$0xff]
    %v204 = vld [vmem:[#allocation5 + $0x1ee8] sm:$0xff]
    %v205 = vld [vmem:[#allocation5 + $0x1f48] sm:$0xff]
    %v206 = vld [vmem:[#allocation5 + $0x1f50] sm:$0xff]
    %v207 = vld [vmem:[#allocation5 + $0x1fb0] sm:$0xff]
    %v208 = vld [vmem:[#allocation5 + $0x1fb8] sm:$0xff]
    %v209 = vld [vmem:[#allocation5 + $0x2018] sm:$0xff]
    %v210 = vld [vmem:[#allocation5 + $0x2020] sm:$0xff]
    %v211 = vld [vmem:[#allocation5 + $0x2080] sm:$0xff]
    %v212 = vld [vmem:[#allocation5 + $0x2088] sm:$0xff]
    %v213 = vld [vmem:[#allocation5 + $0x20e8] sm:$0xff]
    %v214 = vld [vmem:[#allocation5 + $0x20f0] sm:$0xff]
    %v215 = vld [vmem:[#allocation5 + $0x2150] sm:$0xff]
    %v216 = vld [vmem:[#allocation5 + $0x2158] sm:$0xff]
    %v217 = vld [vmem:[#allocation5 + $0x21b8] sm:$0xff]
    %v218 = vld [vmem:[#allocation5 + $0x21c0] sm:$0xff]
    %v219 = vld [vmem:[#allocation5 + $0x2220] sm:$0xff]
    %v220 = vld [vmem:[#allocation5 + $0x2228] sm:$0xff]
    %v221 = vld [vmem:[#allocation5 + $0x2288] sm:$0xff]
    %v222 = vld [vmem:[#allocation5 + $0x2290] sm:$0xff]
    %v223 = vld [vmem:[#allocation5 + $0x22f0] sm:$0xff]
    %v224 = vld [vmem:[#allocation5 + $0x22f8] sm:$0xff]
    %v225 = vld [vmem:[#allocation5 + $0x2358] sm:$0xff]
    %v226 = vld [vmem:[#allocation5 + $0x2360] sm:$0xff]
    %v227 = vld [vmem:[#allocation5 + $0x23c0] sm:$0xff]
    %v228 = vld [vmem:[#allocation5 + $0x23c8] sm:$0xff]
    %v229 = vld [vmem:[#allocation5 + $0x2428] sm:$0xff]
    %v230 = vld [vmem:[#allocation5 + $0x2430] sm:$0xff]
    %v231 = vld [vmem:[#allocation5 + $0x2490] sm:$0xff]
    %v232 = vld [vmem:[#allocation5 + $0x2498] sm:$0xff]
    %v233 = vld [vmem:[#allocation5 + $0x24f8] sm:$0xff]
    %v234 = vld [vmem:[#allocation5 + $0x2500] sm:$0xff]
    %v235 = vld [vmem:[#allocation5 + $0x2560] sm:$0xff]
    %v236 = vld [vmem:[#allocation5 + $0x2568] sm:$0xff]
    %v237 = vld [vmem:[#allocation5 + $0x25c8] sm:$0xff]
    %v238 = vld [vmem:[#allocation5 + $0x25d0] sm:$0xff]
    %v239 = vld [vmem:[#allocation5 + $0x2630] sm:$0xff]
    %v240 = vld [vmem:[#allocation5 + $0x2638] sm:$0xff]
    %v241 = vld [vmem:[#allocation5 + $0x2698] sm:$0xff]
    %v242 = vld [vmem:[#allocation5 + $0x26a0] sm:$0xff]
    %v243 = vld [vmem:[#allocation5 + $0x2700] sm:$0xff]
    %v244 = vld [vmem:[#allocation5 + $0x2708] sm:$0xff]
    %v245 = vld [vmem:[#allocation5 + $0x2768] sm:$0xff]
    %v246 = vld [vmem:[#allocation5 + $0x2770] sm:$0xff]
    %v247 = vld [vmem:[#allocation5 + $0x27d0] sm:$0xff]
    %v248 = vld [vmem:[#allocation5 + $0x27d8] sm:$0xff]
    %v249 = vld [vmem:[#allocation5 + $0x2838] sm:$0xff]
    %v250 = vld [vmem:[#allocation5 + $0x2840] sm:$0xff]
    %v251 = vld [vmem:[#allocation5 + $0x28a0] sm:$0xff]
    %v252 = vld [vmem:[#allocation5 + $0x28a8] sm:$0xff]
    %v253 = vld [vmem:[#allocation5 + $0x2908] sm:$0xff]
    %v254 = vld [vmem:[#allocation5 + $0x2910] sm:$0xff]
    %v255 = vld [vmem:[#allocation5 + $0x2970] sm:$0xff]
    %v256 = vld [vmem:[#allocation5 + $0x2978] sm:$0xff]
    %v257 = vld [vmem:[#allocation5 + $0x29d8] sm:$0xff]
    %v258 = vld [vmem:[#allocation5 + $0x29e0] sm:$0xff]
    %v259 = vld [vmem:[#allocation5 + $0x2a40] sm:$0xff]
    %v260 = vld [vmem:[#allocation5 + $0x2a48] sm:$0xff]
    %v261 = vld [vmem:[#allocation5 + $0x2aa8] sm:$0xff]
    %v262 = vld [vmem:[#allocation5 + $0x2ab0] sm:$0xff]
    %v263 = vld [vmem:[#allocation5 + $0x2b10] sm:$0xff]
    %v264 = vld [vmem:[#allocation5 + $0x2b18] sm:$0xff]
    %v265 = vld [vmem:[#allocation5 + $0x2b78] sm:$0xff]
    %v266 = vld [vmem:[#allocation5 + $0x2b80] sm:$0xff]
    %v267 = vld [vmem:[#allocation5 + $0x2be0] sm:$0xff]
    %v268 = vld [vmem:[#allocation5 + $0x2be8] sm:$0xff]
    %v269 = vld [vmem:[#allocation5 + $0x2c48] sm:$0xff]
    %v270 = vld [vmem:[#allocation5 + $0x2c50] sm:$0xff]
    %v271 = vld [vmem:[#allocation5 + $0x2cb0] sm:$0xff]
    %v272 = vld [vmem:[#allocation5 + $0x2cb8] sm:$0xff]
    %v273 = vld [vmem:[#allocation5 + $0x2d18] sm:$0xff]
    %v274 = vld [vmem:[#allocation5 + $0x2d20] sm:$0xff]
    %v275 = vld [vmem:[#allocation5 + $0x2d80] sm:$0xff]
    %v276 = vld [vmem:[#allocation5 + $0x2d88] sm:$0xff]
    %v277 = vld [vmem:[#allocation5 + $0x2de8] sm:$0xff]
    %v278 = vld [vmem:[#allocation5 + $0x2df0] sm:$0xff]
    %v279 = vld [vmem:[#allocation5 + $0x2e50] sm:$0xff]
    %v280 = vld [vmem:[#allocation5 + $0x2e58] sm:$0xff]
    %v281 = vld [vmem:[#allocation5 + $0x2eb8] sm:$0xff]
    %v282 = vld [vmem:[#allocation5 + $0x2ec0] sm:$0xff]
    %v283 = vld [vmem:[#allocation5 + $0x2f20] sm:$0xff]
    %v284 = vld [vmem:[#allocation5 + $0x2f28] sm:$0xff]
    %v285 = vld [vmem:[#allocation5 + $0x2f88] sm:$0xff]
    %v286 = vld [vmem:[#allocation5 + $0x2f90] sm:$0xff]
    %v287 = vld [vmem:[#allocation5 + $0x2ff0] sm:$0xff]
    %v288 = vld [vmem:[#allocation5 + $0x2ff8] sm:$0xff]
    %v289 = vld [vmem:[#allocation5 + $0x3058] sm:$0xff]
    %v290 = vld [vmem:[#allocation5 + $0x3060] sm:$0xff]
    %v291 = vld [vmem:[#allocation5 + $0x30c0] sm:$0xff]
    %v292 = vld [vmem:[#allocation5 + $0x30c8] sm:$0xff]
    %v293 = vld [vmem:[#allocation5 + $0x3128] sm:$0xff]
    %v294 = vld [vmem:[#allocation5 + $0x3130] sm:$0xff]
    %v295 = vld [vmem:[#allocation5 + $0x3190] sm:$0xff]
    %v296 = vld [vmem:[#allocation5 + $0x3198] sm:$0xff]
    %v297 = vld [vmem:[#allocation5 + $0x31f8] sm:$0xff]
    %v298 = vld [vmem:[#allocation5 + $0x3200] sm:$0xff]
    %v299 = vld [vmem:[#allocation5 + $0x3260] sm:$0xff]
    %v300 = vld [vmem:[#allocation5 + $0x3268] sm:$0xff]
    %v301 = vld [vmem:[#allocation5 + $0x32c8] sm:$0xff]
    %v302 = vld [vmem:[#allocation5 + $0x32d0] sm:$0xff]
    %v303 = vld [vmem:[#allocation5 + $0x3330] sm:$0xff]
    %v304 = vld [vmem:[#allocation5 + $0x3338] sm:$0xff]
    %v305 = vld [vmem:[#allocation5 + $0x3398] sm:$0xff]
    %v306 = vld [vmem:[#allocation5 + $0x33a0] sm:$0xff]
    %v307 = vld [vmem:[#allocation5 + $0x3400] sm:$0xff]
    %v308 = vld [vmem:[#allocation5 + $0x3408] sm:$0xff]
    %v309 = vld [vmem:[#allocation5 + $0x3468] sm:$0xff]
    %v310 = vld [vmem:[#allocation5 + $0x3470] sm:$0xff]
    %v311 = vld [vmem:[#allocation5 + $0x34d0] sm:$0xff]
    %v312 = vld [vmem:[#allocation5 + $0x34d8] sm:$0xff]
    %v313 = vld [vmem:[#allocation5 + $0x3538] sm:$0xff]
    %v314 = vld [vmem:[#allocation5 + $0x3540] sm:$0xff]
    %v315 = vld [vmem:[#allocation5 + $0x35a0] sm:$0xff]
    %v316 = vld [vmem:[#allocation5 + $0x35a8] sm:$0xff]
    %v317 = vld [vmem:[#allocation5 + $0x3608] sm:$0xff]
    %v318 = vld [vmem:[#allocation5 + $0x3610] sm:$0xff]
    %v319 = vld [vmem:[#allocation5 + $0x3670] sm:$0xff]
    %v320 = vld [vmem:[#allocation5 + $0x3678] sm:$0xff]
    %v321 = vld [vmem:[#allocation5 + $0x36d8] sm:$0xff]
    %v322 = vld [vmem:[#allocation5 + $0x36e0] sm:$0xff]
    %v323 = vld [vmem:[#allocation5 + $0x3740] sm:$0xff]
    %v324 = vld [vmem:[#allocation5 + $0x3748] sm:$0xff]
    %v325 = vld [vmem:[#allocation5 + $0x37a8] sm:$0xff]
    %v326 = vld [vmem:[#allocation5 + $0x37b0] sm:$0xff]
    %v327 = vld [vmem:[#allocation5 + $0x3810] sm:$0xff]
    %v328 = vld [vmem:[#allocation5 + $0x3818] sm:$0xff]
    %v329 = vld [vmem:[#allocation5 + $0x3878] sm:$0xff]
    %v330 = vld [vmem:[#allocation5 + $0x3880] sm:$0xff]
    %v331 = vld [vmem:[#allocation5 + $0x38e0] sm:$0xff]
    %v332 = vld [vmem:[#allocation5 + $0x38e8] sm:$0xff]
    %v333 = vld [vmem:[#allocation5 + $0x3948] sm:$0xff]
    %v334 = vld [vmem:[#allocation5 + $0x3950] sm:$0xff]
    %v335 = vld [vmem:[#allocation5 + $0x39b0] sm:$0xff]
    %v336 = vld [vmem:[#allocation5 + $0x39b8] sm:$0xff]
    %v337 = vld [vmem:[#allocation5 + $0x3a18] sm:$0xff]
    %v338 = vld [vmem:[#allocation5 + $0x3a20] sm:$0xff]
    %v339 = vld [vmem:[#allocation5 + $0x3a80] sm:$0xff]
    %v340 = vld [vmem:[#allocation5 + $0x3a88] sm:$0xff]
    %v341 = vld [vmem:[#allocation5 + $0x3ae8] sm:$0xff]
    %v342 = vld [vmem:[#allocation5 + $0x3af0] sm:$0xff]
    %v343 = vld [vmem:[#allocation5 + $0x3b50] sm:$0xff]
    %v344 = vld [vmem:[#allocation5 + $0x3b58] sm:$0xff]
    %v345 = vld [vmem:[#allocation5 + $0x3bb8] sm:$0xff]
    %v346 = vld [vmem:[#allocation5 + $0x3bc0] sm:$0xff]
    %v347 = vld [vmem:[#allocation5 + $0x3c20] sm:$0xff]
    %v348 = vld [vmem:[#allocation5 + $0x3c28] sm:$0xff]
    %v349 = vld [vmem:[#allocation5 + $0x3c88] sm:$0xff]
    %v350 = vld [vmem:[#allocation5 + $0x3c90] sm:$0xff]
    %v351 = vld [vmem:[#allocation5 + $0x3cf0] sm:$0xff]
    %v352 = vld [vmem:[#allocation5 + $0x3cf8] sm:$0xff]
    %v353 = vld [vmem:[#allocation5 + $0x3d58] sm:$0xff]
    %v354 = vld [vmem:[#allocation5 + $0x3d60] sm:$0xff]
    %v355 = vld [vmem:[#allocation5 + $0x3dc0] sm:$0xff]
    %v356 = vld [vmem:[#allocation5 + $0x3dc8] sm:$0xff]
    %v357 = vld [vmem:[#allocation5 + $0x3e28] sm:$0xff]
    %v358 = vld [vmem:[#allocation5 + $0x3e30] sm:$0xff]
    %v359 = vld [vmem:[#allocation5 + $0x3e90] sm:$0xff]
    %v360 = vld [vmem:[#allocation5 + $0x3e98] sm:$0xff]
    %v361 = vld [vmem:[#allocation5 + $0x3ef8] sm:$0xff]
    %v362 = vld [vmem:[#allocation5 + $0x3f00] sm:$0xff]
    %v363 = vld [vmem:[#allocation5 + $0x3f60] sm:$0xff]
    %v364 = vld [vmem:[#allocation5 + $0x3f68] sm:$0xff]
    %v365 = vld [vmem:[#allocation5 + $0x3fc8] sm:$0xff]
    %v366 = vld [vmem:[#allocation5 + $0x3fd0] sm:$0xff]
    %v367 = vld [vmem:[#allocation5 + $0x4030] sm:$0xff]
    %v368 = vld [vmem:[#allocation5 + $0x4038] sm:$0xff]
    %v369 = vld [vmem:[#allocation5 + $0x4098] sm:$0xff]
    %v370 = vld [vmem:[#allocation5 + $0x40a0] sm:$0xff]
    %v371 = vld [vmem:[#allocation5 + $0x4100] sm:$0xff]
    %v372 = vld [vmem:[#allocation5 + $0x4108] sm:$0xff]
    %v373 = vld [vmem:[#allocation5 + $0x4168] sm:$0xff]
    %v374 = vld [vmem:[#allocation5 + $0x4170] sm:$0xff]
    %v375 = vld [vmem:[#allocation5 + $0x41d0] sm:$0xff]
    %v376 = vld [vmem:[#allocation5 + $0x41d8] sm:$0xff]
    %v377 = vld [vmem:[#allocation5 + $0x4238] sm:$0xff]
    %v378 = vld [vmem:[#allocation5 + $0x4240] sm:$0xff]
    %v379 = vld [vmem:[#allocation5 + $0x42a0] sm:$0xff]
    %v380 = vld [vmem:[#allocation5 + $0x42a8] sm:$0xff]
    %v381 = vld [vmem:[#allocation5 + $0x4308] sm:$0xff]
    %v382 = vld [vmem:[#allocation5 + $0x4310] sm:$0xff]
    %v383 = vld [vmem:[#allocation5 + $0x4370] sm:$0xff]
    %v384 = vld [vmem:[#allocation5 + $0x4378] sm:$0xff]
    %v385 = vld [vmem:[#allocation5 + $0x43d8] sm:$0xff]
    %v386 = vld [vmem:[#allocation5 + $0x43e0] sm:$0xff]
    %v387 = vld [vmem:[#allocation5 + $0x4440] sm:$0xff]
    %v388 = vld [vmem:[#allocation5 + $0x4448] sm:$0xff]
    %v389 = vld [vmem:[#allocation5 + $0x44a8] sm:$0xff]
    %v390 = vld [vmem:[#allocation5 + $0x44b0] sm:$0xff]
    %v391 = vld [vmem:[#allocation5 + $0x4510] sm:$0xff]
    %v392 = vld [vmem:[#allocation5 + $0x4518] sm:$0xff]
    %v393 = vld [vmem:[#allocation5 + $0x4578] sm:$0xff]
    %v394 = vld [vmem:[#allocation5 + $0x4580] sm:$0xff]
    %v395 = vld [vmem:[#allocation5 + $0x45e0] sm:$0xff]
    %v396 = vld [vmem:[#allocation5 + $0x45e8] sm:$0xff]
    %v397 = vld [vmem:[#allocation5 + $0x4648] sm:$0xff]
    %v398 = vld [vmem:[#allocation5 + $0x4650] sm:$0xff]
    %v399 = vld [vmem:[#allocation5 + $0x46b0] sm:$0xff]
    %v400 = vld [vmem:[#allocation5 + $0x46b8] sm:$0xff]
    %v401 = vld [vmem:[#allocation5 + $0x4718] sm:$0xff]
    %v402 = vld [vmem:[#allocation5 + $0x4720] sm:$0xff]
    %v403 = vld [vmem:[#allocation5 + $0x4780] sm:$0xff]
    %v404 = vld [vmem:[#allocation5 + $0x4788] sm:$0xff]
    %v405 = vld [vmem:[#allocation5 + $0x47e8] sm:$0xff]
    %v406 = vld [vmem:[#allocation5 + $0x47f0] sm:$0xff]
    %v407 = vld [vmem:[#allocation5 + $0x4850] sm:$0xff]
    %v408 = vld [vmem:[#allocation5 + $0x4858] sm:$0xff]
    %v409 = vld [vmem:[#allocation5 + $0x48b8] sm:$0xff]
    %v410 = vld [vmem:[#allocation5 + $0x48c0] sm:$0xff]
    %v411 = vld [vmem:[#allocation5 + $0x4920] sm:$0xff]
    %v412 = vld [vmem:[#allocation5 + $0x4928] sm:$0xff]
    %v413 = vld [vmem:[#allocation5 + $0x4988] sm:$0xff]
    %v414 = vld [vmem:[#allocation5 + $0x4990] sm:$0xff]
    %v415 = vld [vmem:[#allocation5 + $0x49f0] sm:$0xff]
    %v416 = vld [vmem:[#allocation5 + $0x49f8] sm:$0xff]
    %v417 = vld [vmem:[#allocation5 + $0x4a58] sm:$0xff]
    %v418 = vld [vmem:[#allocation5 + $0x4a60] sm:$0xff]
    %v419 = vld [vmem:[#allocation5 + $0x4ac0] sm:$0xff]
    %v420 = vld [vmem:[#allocation5 + $0x4ac8] sm:$0xff]
    %v421 = vld [vmem:[#allocation5 + $0x4b28] sm:$0xff]
    %v422 = vld [vmem:[#allocation5 + $0x4b30] sm:$0xff]
    %v423 = vld [vmem:[#allocation5 + $0x4b90] sm:$0xff]
    %v424 = vld [vmem:[#allocation5 + $0x4b98] sm:$0xff]
    %v425 = vld [vmem:[#allocation5 + $0x4bf8] sm:$0xff]
    %v426 = vld [vmem:[#allocation5 + $0x4c00] sm:$0xff]
    %v427 = vld [vmem:[#allocation5 + $0x4c60] sm:$0xff]
    %v428 = vld [vmem:[#allocation5 + $0x4c68] sm:$0xff]
    %v429 = vld [vmem:[#allocation5 + $0x4cc8] sm:$0xff]
    %v430 = vld [vmem:[#allocation5 + $0x4cd0] sm:$0xff]
    %v431 = vld [vmem:[#allocation5 + $0x4d30] sm:$0xff]
    %v432 = vld [vmem:[#allocation5 + $0x4d38] sm:$0xff]
    %v433 = vld [vmem:[#allocation5 + $0x4d98] sm:$0xff]
    %v434 = vld [vmem:[#allocation5 + $0x4da0] sm:$0xff]
    %v435 = vld [vmem:[#allocation5 + $0x4e00] sm:$0xff]
    %v436 = vld [vmem:[#allocation5 + $0x4e08] sm:$0xff]
    %v437 = vld [vmem:[#allocation5 + $0x4e68] sm:$0xff]
    %v438 = vld [vmem:[#allocation5 + $0x4e70] sm:$0xff]
    %v439 = vld [vmem:[#allocation5 + $0x4ed0] sm:$0xff]
    %v440 = vld [vmem:[#allocation5 + $0x4ed8] sm:$0xff]
    %v441 = vld [vmem:[#allocation5 + $0x4f38] sm:$0xff]
    %v442 = vld [vmem:[#allocation5 + $0x4f40] sm:$0xff]
    %v443 = vld [vmem:[#allocation5 + $0x4fa0] sm:$0xff]
    %v444 = vld [vmem:[#allocation5 + $0x4fa8] sm:$0xff]
    %v445 = vld [vmem:[#allocation5 + $0x5008] sm:$0xff]
    %v446 = vld [vmem:[#allocation5 + $0x5010] sm:$0xff]
    %v447 = vld [vmem:[#allocation5 + $0x5070] sm:$0xff]
    %v448 = vld [vmem:[#allocation5 + $0x5078] sm:$0xff]
    %v449 = vld [vmem:[#allocation5 + $0x50d8] sm:$0xff]
    %v450 = vld [vmem:[#allocation5 + $0x50e0] sm:$0xff]
    %v451 = vld [vmem:[#allocation5 + $0x5140] sm:$0xff]
    %v452 = vld [vmem:[#allocation5 + $0x5148] sm:$0xff]
    %v453 = vld [vmem:[#allocation5 + $0x51a8] sm:$0xff]
    %v454 = vld [vmem:[#allocation5 + $0x51b0] sm:$0xff]
    %v455 = vld [vmem:[#allocation5 + $0x5210] sm:$0xff]
    %v456 = vld [vmem:[#allocation5 + $0x5218] sm:$0xff]
    %v457 = vld [vmem:[#allocation5 + $0x5278] sm:$0x1]
    %v458 = vld [vmem:[#allocation5 + $0x5280] sm:$0x1]
    %vm459 = vcmask 728064
    %v461 = vsel %vm459, %v50, 0
    %vm463 = vcmask 1040384
    %v465 = vsel %vm463, %v457, 0
    %v468 = vsel %vm463, %v458, 0
    %470 = vmatprep.subr.mxu0 %v52
    %471 = vmatpush1.msra.mxu0 %v51
    %472 = vmatprep.subr.mxu0 %v54
    %473 = vmatpush1.msra.mxu0 %v53
    %474 = vmatprep.subr.mxu0 %v56
    %475 = vmatpush1.msra.mxu0 %v55
    %476 = vmatprep.subr.mxu0 %v58
    %477 = vmatpush1.msra.mxu0 %v57
    %478 = vmatprep.subr.mxu0 %v60
    %479 = vmatpush1.msra.mxu0 %v59
    %480 = vmatprep.subr.mxu0 %v62
    %481 = vmatpush1.msra.mxu0 %v61
    %482 = vmatprep.subr.mxu0 %v64
    %483 = vmatpush1.msra.mxu0 %v63
    %484 = vmatprep.subr.mxu0 %v66
    %485 = vmatpush1.msra.mxu0 %v65
    %486 = vmatprep.subr.mxu0 %v68
    %487 = vmatpush1.msra.mxu0 %v67
    %488 = vmatprep.subr.mxu0 %v70
    %489 = vmatpush1.msra.mxu0 %v69
    %490 = vmatprep.subr.mxu0 %v72
    %491 = vmatpush1.msra.mxu0 %v71
    %492 = vmatprep.subr.mxu0 %v74
    %493 = vmatpush1.msra.mxu0 %v73
    %494 = vmatprep.subr.mxu0 %v76
    %495 = vmatpush1.msra.mxu0 %v75
    %496 = vmatprep.subr.mxu0 %v78
    %497 = vmatpush1.msra.mxu0 %v77
    %498 = vmatprep.subr.mxu0 %v80
    %499 = vmatpush1.msra.mxu0 %v79
    %500 = vmatprep.subr.mxu0 %v82
    %501 = vmatpush1.msra.mxu0 %v81
    %502 = vmatprep.subr.mxu0 %v84
    %503 = vmatpush1.msra.mxu0 %v83
    %504 = vmatprep.subr.mxu0 %v86
    %505 = vmatpush1.msra.mxu0 %v85
    %506 = vmatprep.subr.mxu0 %v88
    %507 = vmatpush1.msra.mxu0 %v87
    %508 = vmatprep.subr.mxu0 %v90
    %509 = vmatpush1.msra.mxu0 %v89
    %510 = vmatprep.subr.mxu0 %v92
    %511 = vmatpush1.msra.mxu0 %v91
    %512 = vmatprep.subr.mxu0 %v94
    %513 = vmatpush1.msra.mxu0 %v93
    %514 = vmatprep.subr.mxu0 %v96
    %515 = vmatpush1.msra.mxu0 %v95
    %516 = vmatprep.subr.mxu0 %v98
    %517 = vmatpush1.msra.mxu0 %v97
    %518 = vmatprep.subr.mxu0 %v100
    %519 = vmatpush1.msra.mxu0 %v99
    %520 = vmatprep.subr.mxu0 %v102
    %521 = vmatpush1.msra.mxu0 %v101
    %522 = vmatprep.subr.mxu0 %v104
    %523 = vmatpush1.msra.mxu0 %v103
    %524 = vmatprep.subr.mxu0 %v106
    %525 = vmatpush1.msra.mxu0 %v105
    %526 = vmatprep.subr.mxu0 %v108
    %527 = vmatpush1.msra.mxu0 %v107
    %528 = vmatprep.subr.mxu0 %v110
    %529 = vmatpush1.msra.mxu0 %v109
    %530 = vmatprep.subr.mxu0 %v112
    %531 = vmatpush1.msra.mxu0 %v111
    %532 = vmatprep.subr.mxu0 %v114
    %533 = vmatpush1.msra.mxu0 %v113
    %534 = vmatprep.mubr.f32.mxu0 %v39
    %535 = vmatmul.mubr.f32.gmra.mrb[0].mxu0 %v38
    %v536 = vpop.f32.mrb[0].mxu0
    %v537 = vadd.f32 0.0, %v536
    %v538 = vpop.f32.mrb[0].mxu0
    %v539 = vadd.f32 0.0, %v538
    %540 = vdwg.mxu0
    %541 = vmatprep.subr.mxu0 %v116
    %542 = vmatpush1.msra.mxu0 %v115
    %543 = vmatprep.subr.mxu0 %v118
    %544 = vmatpush1.msra.mxu0 %v117
    %545 = vmatprep.subr.mxu0 %v120
    %546 = vmatpush1.msra.mxu0 %v119
    %547 = vmatprep.subr.mxu0 %v122
    %548 = vmatpush1.msra.mxu0 %v121
    %549 = vmatprep.subr.mxu0 %v124
    %550 = vmatpush1.msra.mxu0 %v123
    %551 = vmatprep.subr.mxu0 %v126
    %552 = vmatpush1.msra.mxu0 %v125
    %553 = vmatprep.subr.mxu0 %v128
    %554 = vmatpush1.msra.mxu0 %v127
    %555 = vmatprep.subr.mxu0 %v130
    %556 = vmatpush1.msra.mxu0 %v129
    %557 = vmatprep.subr.mxu0 %v132
    %558 = vmatpush1.msra.mxu0 %v131
    %559 = vmatprep.subr.mxu0 %v134
    %560 = vmatpush1.msra.mxu0 %v133
    %561 = vmatprep.subr.mxu0 %v136
    %562 = vmatpush1.msra.mxu0 %v135
    %563 = vmatprep.subr.mxu0 %v138
    %564 = vmatpush1.msra.mxu0 %v137
    %565 = vmatprep.subr.mxu0 %v140
    %566 = vmatpush1.msra.mxu0 %v139
    %567 = vmatprep.subr.mxu0 %v142
    %568 = vmatpush1.msra.mxu0 %v141
    %569 = vmatprep.subr.mxu0 %v144
    %570 = vmatpush1.msra.mxu0 %v143
    %571 = vmatprep.subr.mxu0 %v146
    %572 = vmatpush1.msra.mxu0 %v145
    %573 = vmatprep.subr.mxu0 %v148
    %574 = vmatpush1.msra.mxu0 %v147
    %575 = vmatprep.subr.mxu0 %v150
    %576 = vmatpush1.msra.mxu0 %v149
    %577 = vmatprep.subr.mxu0 %v152
    %578 = vmatpush1.msra.mxu0 %v151
    %579 = vmatprep.subr.mxu0 %v154
    %580 = vmatpush1.msra.mxu0 %v153
    %581 = vmatprep.subr.mxu0 %v156
    %582 = vmatpush1.msra.mxu0 %v155
    %583 = vmatprep.subr.mxu0 %v158
    %584 = vmatpush1.msra.mxu0 %v157
    %585 = vmatprep.subr.mxu0 %v160
    %586 = vmatpush1.msra.mxu0 %v159
    %587 = vmatprep.subr.mxu0 %v162
    %588 = vmatpush1.msra.mxu0 %v161
    %589 = vmatprep.subr.mxu0 %v164
    %590 = vmatpush1.msra.mxu0 %v163
    %591 = vmatprep.subr.mxu0 %v166
    %592 = vmatpush1.msra.mxu0 %v165
    %593 = vmatprep.subr.mxu0 %v168
    %594 = vmatpush1.msra.mxu0 %v167
    %595 = vmatprep.subr.mxu0 %v170
    %596 = vmatpush1.msra.mxu0 %v169
    %597 = vmatprep.subr.mxu0 %v172
    %598 = vmatpush1.msra.mxu0 %v171
    %599 = vmatprep.subr.mxu0 %v174
    %600 = vmatpush1.msra.mxu0 %v173
    %601 = vmatprep.subr.mxu0 %v176
    %602 = vmatpush1.msra.mxu0 %v175
    %603 = vmatprep.subr.mxu0 %v178
    %604 = vmatpush1.msra.mxu0 %v177
    %605 = vmatprep.mubr.f32.mxu0 %v41
    %606 = vmatmul.mubr.f32.gmra.mrb[0].mxu0 %v40
    %v607 = vpop.f32.mrb[0].mxu0
    %v608 = vadd.f32 %v537, %v607
    %v609 = vpop.f32.mrb[0].mxu0
    %v610 = vadd.f32 %v539, %v609
    %611 = vdwg.mxu0
    %612 = vmatprep.subr.mxu0 %v180
    %613 = vmatpush1.msra.mxu0 %v179
    %614 = vmatprep.subr.mxu0 %v182
    %615 = vmatpush1.msra.mxu0 %v181
    %616 = vmatprep.subr.mxu0 %v184
    %617 = vmatpush1.msra.mxu0 %v183
    %618 = vmatprep.subr.mxu0 %v186
    %619 = vmatpush1.msra.mxu0 %v185
    %620 = vmatprep.subr.mxu0 %v188
    %621 = vmatpush1.msra.mxu0 %v187
    %622 = vmatprep.subr.mxu0 %v190
    %623 = vmatpush1.msra.mxu0 %v189
    %624 = vmatprep.subr.mxu0 %v192
    %625 = vmatpush1.msra.mxu0 %v191
    %626 = vmatprep.subr.mxu0 %v194
    %627 = vmatpush1.msra.mxu0 %v193
    %628 = vmatprep.subr.mxu0 %v196
    %629 = vmatpush1.msra.mxu0 %v195
    %630 = vmatprep.subr.mxu0 %v198
    %631 = vmatpush1.msra.mxu0 %v197
    %632 = vmatprep.subr.mxu0 %v200
    %633 = vmatpush1.msra.mxu0 %v199
    %634 = vmatprep.subr.mxu0 %v202
    %635 = vmatpush1.msra.mxu0 %v201
    %636 = vmatprep.subr.mxu0 %v204
    %637 = vmatpush1.msra.mxu0 %v203
    %638 = vmatprep.subr.mxu0 %v206
    %639 = vmatpush1.msra.mxu0 %v205
    %640 = vmatprep.subr.mxu0 %v208
    %641 = vmatpush1.msra.mxu0 %v207
    %642 = vmatprep.subr.mxu0 %v210
    %643 = vmatpush1.msra.mxu0 %v209
    %644 = vmatprep.subr.mxu0 %v212
    %645 = vmatpush1.msra.mxu0 %v211
    %646 = vmatprep.subr.mxu0 %v214
    %647 = vmatpush1.msra.mxu0 %v213
    %648 = vmatprep.subr.mxu0 %v216
    %649 = vmatpush1.msra.mxu0 %v215
    %650 = vmatprep.subr.mxu0 %v218
    %651 = vmatpush1.msra.mxu0 %v217
    %652 = vmatprep.subr.mxu0 %v220
    %653 = vmatpush1.msra.mxu0 %v219
    %654 = vmatprep.subr.mxu0 %v222
    %655 = vmatpush1.msra.mxu0 %v221
    %656 = vmatprep.subr.mxu0 %v224
    %657 = vmatpush1.msra.mxu0 %v223
    %658 = vmatprep.subr.mxu0 %v226
    %659 = vmatpush1.msra.mxu0 %v225
    %660 = vmatprep.subr.mxu0 %v228
    %661 = vmatpush1.msra.mxu0 %v227
    %662 = vmatprep.subr.mxu0 %v230
    %663 = vmatpush1.msra.mxu0 %v229
    %664 = vmatprep.subr.mxu0 %v232
    %665 = vmatpush1.msra.mxu0 %v231
    %666 = vmatprep.subr.mxu0 %v234
    %667 = vmatpush1.msra.mxu0 %v233
    %668 = vmatprep.subr.mxu0 %v236
    %669 = vmatpush1.msra.mxu0 %v235
    %670 = vmatprep.subr.mxu0 %v238
    %671 = vmatpush1.msra.mxu0 %v237
    %672 = vmatprep.subr.mxu0 %v240
    %673 = vmatpush1.msra.mxu0 %v239
    %674 = vmatprep.subr.mxu0 %v242
    %675 = vmatpush1.msra.mxu0 %v241
    %676 = vmatprep.mubr.f32.mxu0 %v43
    %677 = vmatmul.mubr.f32.gmra.mrb[0].mxu0 %v42
    %v678 = vpop.f32.mrb[0].mxu0
    %v679 = vadd.f32 %v608, %v678
    %v680 = vpop.f32.mrb[0].mxu0
    %v681 = vadd.f32 %v610, %v680
    %682 = vdwg.mxu0
    %683 = vmatprep.subr.mxu0 %v244
    %684 = vmatpush1.msra.mxu0 %v243
    %685 = vmatprep.subr.mxu0 %v246
    %686 = vmatpush1.msra.mxu0 %v245
    %687 = vmatprep.subr.mxu0 %v248
    %688 = vmatpush1.msra.mxu0 %v247
    %689 = vmatprep.subr.mxu0 %v250
    %690 = vmatpush1.msra.mxu0 %v249
    %691 = vmatprep.subr.mxu0 %v252
    %692 = vmatpush1.msra.mxu0 %v251
    %693 = vmatprep.subr.mxu0 %v254
    %694 = vmatpush1.msra.mxu0 %v253
    %695 = vmatprep.subr.mxu0 %v256
    %696 = vmatpush1.msra.mxu0 %v255
    %697 = vmatprep.subr.mxu0 %v258
    %698 = vmatpush1.msra.mxu0 %v257
    %699 = vmatprep.subr.mxu0 %v260
    %700 = vmatpush1.msra.mxu0 %v259
    %701 = vmatprep.subr.mxu0 %v262
    %702 = vmatpush1.msra.mxu0 %v261
    %703 = vmatprep.subr.mxu0 %v264
    %704 = vmatpush1.msra.mxu0 %v263
    %705 = vmatprep.subr.mxu0 %v266
    %706 = vmatpush1.msra.mxu0 %v265
    %707 = vmatprep.subr.mxu0 %v268
    %708 = vmatpush1.msra.mxu0 %v267
    %709 = vmatprep.subr.mxu0 %v270
    %710 = vmatpush1.msra.mxu0 %v269
    %711 = vmatprep.subr.mxu0 %v272
    %712 = vmatpush1.msra.mxu0 %v271
    %713 = vmatprep.subr.mxu0 %v274
    %714 = vmatpush1.msra.mxu0 %v273
    %715 = vmatprep.subr.mxu0 %v276
    %716 = vmatpush1.msra.mxu0 %v275
    %717 = vmatprep.subr.mxu0 %v278
    %718 = vmatpush1.msra.mxu0 %v277
    %719 = vmatprep.subr.mxu0 %v280
    %720 = vmatpush1.msra.mxu0 %v279
    %721 = vmatprep.subr.mxu0 %v282
    %722 = vmatpush1.msra.mxu0 %v281
    %723 = vmatprep.subr.mxu0 %v284
    %724 = vmatpush1.msra.mxu0 %v283
    %725 = vmatprep.subr.mxu0 %v286
    %726 = vmatpush1.msra.mxu0 %v285
    %727 = vmatprep.subr.mxu0 %v288
    %728 = vmatpush1.msra.mxu0 %v287
    %729 = vmatprep.subr.mxu0 %v290
    %730 = vmatpush1.msra.mxu0 %v289
    %731 = vmatprep.subr.mxu0 %v292
    %732 = vmatpush1.msra.mxu0 %v291
    %733 = vmatprep.subr.mxu0 %v294
    %734 = vmatpush1.msra.mxu0 %v293
    %735 = vmatprep.subr.mxu0 %v296
    %736 = vmatpush1.msra.mxu0 %v295
    %737 = vmatprep.subr.mxu0 %v298
    %738 = vmatpush1.msra.mxu0 %v297
    %739 = vmatprep.subr.mxu0 %v300
    %740 = vmatpush1.msra.mxu0 %v299
    %741 = vmatprep.subr.mxu0 %v302
    %742 = vmatpush1.msra.mxu0 %v301
    %743 = vmatprep.subr.mxu0 %v304
    %744 = vmatpush1.msra.mxu0 %v303
    %745 = vmatprep.subr.mxu0 %v306
    %746 = vmatpush1.msra.mxu0 %v305
    %747 = vmatprep.mubr.f32.mxu0 %v45
    %748 = vmatmul.mubr.f32.gmra.mrb[0].mxu0 %v44
    %v749 = vpop.f32.mrb[0].mxu0
    %v750 = vadd.f32 %v679, %v749
    %v751 = vpop.f32.mrb[0].mxu0
    %v752 = vadd.f32 %v681, %v751
    %753 = vdwg.mxu0
    %754 = vmatprep.subr.mxu0 %v308
    %755 = vmatpush1.msra.mxu0 %v307
    %756 = vmatprep.subr.mxu0 %v310
    %757 = vmatpush1.msra.mxu0 %v309
    %758 = vmatprep.subr.mxu0 %v312
    %759 = vmatpush1.msra.mxu0 %v311
    %760 = vmatprep.subr.mxu0 %v314
    %761 = vmatpush1.msra.mxu0 %v313
    %762 = vmatprep.subr.mxu0 %v316
    %763 = vmatpush1.msra.mxu0 %v315
    %764 = vmatprep.subr.mxu0 %v318
    %765 = vmatpush1.msra.mxu0 %v317
    %766 = vmatprep.subr.mxu0 %v320
    %767 = vmatpush1.msra.mxu0 %v319
    %768 = vmatprep.subr.mxu0 %v322
    %769 = vmatpush1.msra.mxu0 %v321
    %770 = vmatprep.subr.mxu0 %v324
    %771 = vmatpush1.msra.mxu0 %v323
    %772 = vmatprep.subr.mxu0 %v326
    %773 = vmatpush1.msra.mxu0 %v325
    %774 = vmatprep.subr.mxu0 %v328
    %775 = vmatpush1.msra.mxu0 %v327
    %776 = vmatprep.subr.mxu0 %v330
    %777 = vmatpush1.msra.mxu0 %v329
    %778 = vmatprep.subr.mxu0 %v332
    %779 = vmatpush1.msra.mxu0 %v331
    %780 = vmatprep.subr.mxu0 %v334
    %781 = vmatpush1.msra.mxu0 %v333
    %782 = vmatprep.subr.mxu0 %v336
    %783 = vmatpush1.msra.mxu0 %v335
    %784 = vmatprep.subr.mxu0 %v338
    %785 = vmatpush1.msra.mxu0 %v337
    %786 = vmatprep.subr.mxu0 %v340
    %787 = vmatpush1.msra.mxu0 %v339
    %788 = vmatprep.subr.mxu0 %v342
    %789 = vmatpush1.msra.mxu0 %v341
    %790 = vmatprep.subr.mxu0 %v344
    %791 = vmatpush1.msra.mxu0 %v343
    %792 = vmatprep.subr.mxu0 %v346
    %793 = vmatpush1.msra.mxu0 %v345
    %794 = vmatprep.subr.mxu0 %v348
    %795 = vmatpush1.msra.mxu0 %v347
    %796 = vmatprep.subr.mxu0 %v350
    %797 = vmatpush1.msra.mxu0 %v349
    %798 = vmatprep.subr.mxu0 %v352
    %799 = vmatpush1.msra.mxu0 %v351
    %800 = vmatprep.subr.mxu0 %v354
    %801 = vmatpush1.msra.mxu0 %v353
    %802 = vmatprep.subr.mxu0 %v356
    %803 = vmatpush1.msra.mxu0 %v355
    %804 = vmatprep.subr.mxu0 %v358
    %805 = vmatpush1.msra.mxu0 %v357
    %806 = vmatprep.subr.mxu0 %v360
    %807 = vmatpush1.msra.mxu0 %v359
    %808 = vmatprep.subr.mxu0 %v362
    %809 = vmatpush1.msra.mxu0 %v361
    %810 = vmatprep.subr.mxu0 %v364
    %811 = vmatpush1.msra.mxu0 %v363
    %812 = vmatprep.subr.mxu0 %v366
    %813 = vmatpush1.msra.mxu0 %v365
    %814 = vmatprep.subr.mxu0 %v368
    %815 = vmatpush1.msra.mxu0 %v367
    %816 = vmatprep.subr.mxu0 %v370
    %817 = vmatpush1.msra.mxu0 %v369
    %818 = vmatprep.mubr.f32.mxu0 %v47
    %819 = vmatmul.mubr.f32.gmra.mrb[0].mxu0 %v46
    %v820 = vpop.f32.mrb[0].mxu0
    %v821 = vadd.f32 %v750, %v820
    %v822 = vpop.f32.mrb[0].mxu0
    %v823 = vadd.f32 %v752, %v822
    %824 = vdwg.mxu0
    %825 = vmatprep.subr.mxu0 %v372
    %826 = vmatpush1.msra.mxu0 %v371
    %827 = vmatprep.subr.mxu0 %v374
    %828 = vmatpush1.msra.mxu0 %v373
    %829 = vmatprep.subr.mxu0 %v376
    %830 = vmatpush1.msra.mxu0 %v375
    %831 = vmatprep.subr.mxu0 %v378
    %832 = vmatpush1.msra.mxu0 %v377
    %833 = vmatprep.subr.mxu0 %v380
    %834 = vmatpush1.msra.mxu0 %v379
    %835 = vmatprep.subr.mxu0 %v382
    %836 = vmatpush1.msra.mxu0 %v381
    %837 = vmatprep.subr.mxu0 %v384
    %838 = vmatpush1.msra.mxu0 %v383
    %839 = vmatprep.subr.mxu0 %v386
    %840 = vmatpush1.msra.mxu0 %v385
    %841 = vmatprep.subr.mxu0 %v388
    %842 = vmatpush1.msra.mxu0 %v387
    %843 = vmatprep.subr.mxu0 %v390
    %844 = vmatpush1.msra.mxu0 %v389
    %845 = vmatprep.subr.mxu0 %v392
    %846 = vmatpush1.msra.mxu0 %v391
    %847 = vmatprep.subr.mxu0 %v394
    %848 = vmatpush1.msra.mxu0 %v393
    %849 = vmatprep.subr.mxu0 %v396
    %850 = vmatpush1.msra.mxu0 %v395
    %851 = vmatprep.subr.mxu0 %v398
    %852 = vmatpush1.msra.mxu0 %v397
    %853 = vmatprep.subr.mxu0 %v400
    %854 = vmatpush1.msra.mxu0 %v399
    %855 = vmatprep.subr.mxu0 %v402
    %856 = vmatpush1.msra.mxu0 %v401
    %857 = vmatprep.subr.mxu0 %v404
    %858 = vmatpush1.msra.mxu0 %v403
    %859 = vmatprep.subr.mxu0 %v406
    %860 = vmatpush1.msra.mxu0 %v405
    %861 = vmatprep.subr.mxu0 %v408
    %862 = vmatpush1.msra.mxu0 %v407
    %863 = vmatprep.subr.mxu0 %v410
    %864 = vmatpush1.msra.mxu0 %v409
    %865 = vmatprep.subr.mxu0 %v412
    %866 = vmatpush1.msra.mxu0 %v411
    %867 = vmatprep.subr.mxu0 %v414
    %868 = vmatpush1.msra.mxu0 %v413
    %869 = vmatprep.subr.mxu0 %v416
    %870 = vmatpush1.msra.mxu0 %v415
    %871 = vmatprep.subr.mxu0 %v418
    %872 = vmatpush1.msra.mxu0 %v417
    %873 = vmatprep.subr.mxu0 %v420
    %874 = vmatpush1.msra.mxu0 %v419
    %875 = vmatprep.subr.mxu0 %v422
    %876 = vmatpush1.msra.mxu0 %v421
    %877 = vmatprep.subr.mxu0 %v424
    %878 = vmatpush1.msra.mxu0 %v423
    %879 = vmatprep.subr.mxu0 %v426
    %880 = vmatpush1.msra.mxu0 %v425
    %881 = vmatprep.subr.mxu0 %v428
    %882 = vmatpush1.msra.mxu0 %v427
    %883 = vmatprep.subr.mxu0 %v430
    %884 = vmatpush1.msra.mxu0 %v429
    %885 = vmatprep.subr.mxu0 %v432
    %886 = vmatpush1.msra.mxu0 %v431
    %887 = vmatprep.subr.mxu0 %v434
    %888 = vmatpush1.msra.mxu0 %v433
    %889 = vmatprep.mubr.f32.mxu0 %v49
    %890 = vmatmul.mubr.f32.gmra.mrb[0].mxu0 %v48
    %v891 = vpop.f32.mrb[0].mxu0
    %v892 = vadd.f32 %v821, %v891
    %v893 = vpop.f32.mrb[0].mxu0
    %v894 = vadd.f32 %v823, %v893
    %895 = vdwg.mxu0
    %896 = vmatprep.subr.mxu0 %v436
    %897 = vmatpush1.msra.mxu0 %v435
    %898 = vmatprep.subr.mxu0 %v438
    %899 = vmatpush1.msra.mxu0 %v437
    %900 = vmatprep.subr.mxu0 %v440
    %901 = vmatpush1.msra.mxu0 %v439
    %902 = vmatprep.subr.mxu0 %v442
    %903 = vmatpush1.msra.mxu0 %v441
    %904 = vmatprep.subr.mxu0 %v444
    %905 = vmatpush1.msra.mxu0 %v443
    %906 = vmatprep.subr.mxu0 %v446
    %907 = vmatpush1.msra.mxu0 %v445
    %908 = vmatprep.subr.mxu0 %v448
    %909 = vmatpush1.msra.mxu0 %v447
    %910 = vmatprep.subr.mxu0 %v450
    %911 = vmatpush1.msra.mxu0 %v449
    %912 = vmatprep.subr.mxu0 %v452
    %913 = vmatpush1.msra.mxu0 %v451
    %914 = vmatprep.subr.mxu0 %v454
    %915 = vmatpush1.msra.mxu0 %v453
    %916 = vmatprep.subr.mxu0 %v456
    %917 = vmatpush1.msra.mxu0 %v455
    %918 = vmatprep.subr.mxu0 %v468
    %919 = vmatpush1.msra.mxu0 %v465
    %920 = vmatprep.subr.mxu0 0.0
    %921 = vmatpush1.msra.mxu0 0.0
    %922 = vmatprep.subr.mxu0 0.0
    %923 = vmatpush1.msra.mxu0 0.0
    %924 = vmatprep.subr.mxu0 0.0
    %925 = vmatpush1.msra.mxu0 0.0
    %926 = vmatprep.subr.mxu0 0.0
    %927 = vmatpush1.msra.mxu0 0.0
    %928 = vmatprep.subr.mxu0 0.0
    %929 = vmatpush1.msra.mxu0 0.0
    %930 = vmatprep.subr.mxu0 0.0
    %931 = vmatpush1.msra.mxu0 0.0
    %932 = vmatprep.subr.mxu0 0.0
    %933 = vmatpush1.msra.mxu0 0.0
    %934 = vmatprep.subr.mxu0 0.0
    %935 = vmatpush1.msra.mxu0 0.0
    %936 = vmatprep.subr.mxu0 0.0
    %937 = vmatpush1.msra.mxu0 0.0
    %938 = vmatprep.subr.mxu0 0.0
    %939 = vmatpush1.msra.mxu0 0.0
    %940 = vmatprep.subr.mxu0 0.0
    %941 = vmatpush1.msra.mxu0 0.0
    %942 = vmatprep.subr.mxu0 0.0
    %943 = vmatpush1.msra.mxu0 0.0
    %944 = vmatprep.subr.mxu0 0.0
    %945 = vmatpush1.msra.mxu0 0.0
    %946 = vmatprep.subr.mxu0 0.0
    %947 = vmatpush1.msra.mxu0 0.0
    %948 = vmatprep.subr.mxu0 0.0
    %949 = vmatpush1.msra.mxu0 0.0
    %950 = vmatprep.subr.mxu0 0.0
    %951 = vmatpush1.msra.mxu0 0.0
    %952 = vmatprep.subr.mxu0 0.0
    %953 = vmatpush1.msra.mxu0 0.0
    %954 = vmatprep.subr.mxu0 0.0
    %955 = vmatpush1.msra.mxu0 0.0
    %956 = vmatprep.subr.mxu0 0.0
    %957 = vmatpush1.msra.mxu0 0.0
    %958 = vmatprep.subr.mxu0 0.0
    %959 = vmatpush1.msra.mxu0 0.0
    %960 = vmatprep.mubr.f32.mxu0 0.0
    %961 = vmatmul.mubr.f32.gmra.mrb[0].mxu0 %v461
    %v962 = vpop.f32.mrb[0].mxu0
    %v963 = vadd.f32 %v892, %v962
    %v964 = vpop.f32.mrb[0].mxu0
    %v965 = vadd.f32 %v894, %v964
    %966 = vdwg.mxu0
    %vm967 = vcmask 1022976
    %968 = vst.msk [vmem:[#allocation7] sm:$0xff] %vm967, %v963
    %s969 = scalar_lea.vmem [#allocation7], 8
    %970 = vst.msk [vmem:[%s969] sm:$0xff] %vm967, %v965
    %v971 = vld [vmem:[#allocation5 + $0x10] sm:$0xff]
    %v972 = vld [vmem:[#allocation5 + $0x18] sm:$0xff]
    %v973 = vld [vmem:[#allocation5 + $0x78] sm:$0xff]
    %v974 = vld [vmem:[#allocation5 + $0x80] sm:$0xff]
    %v975 = vld [vmem:[#allocation5 + $0xe0] sm:$0xff]
    %v976 = vld [vmem:[#allocation5 + $0xe8] sm:$0xff]
    %v977 = vld [vmem:[#allocation5 + $0x148] sm:$0xff]
    %v978 = vld [vmem:[#allocation5 + $0x150] sm:$0xff]
    %v979 = vld [vmem:[#allocation5 + $0x1b0] sm:$0xff]
    %v980 = vld [vmem:[#allocation5 + $0x1b8] sm:$0xff]
    %v981 = vld [vmem:[#allocation5 + $0x218] sm:$0xff]
    %v982 = vld [vmem:[#allocation5 + $0x220] sm:$0xff]
    %v983 = vld [vmem:[#allocation5 + $0x280] sm:$0xff]
    %v984 = vld [vmem:[#allocation5 + $0x288] sm:$0xff]
    %v985 = vld [vmem:[#allocation5 + $0x2e8] sm:$0xff]
    %v986 = vld [vmem:[#allocation5 + $0x2f0] sm:$0xff]
    %v987 = vld [vmem:[#allocation5 + $0x350] sm:$0xff]
    %v988 = vld [vmem:[#allocation5 + $0x358] sm:$0xff]
    %v989 = vld [vmem:[#allocation5 + $0x3b8] sm:$0xff]
    %v990 = vld [vmem:[#allocation5 + $0x3c0] sm:$0xff]
    %v991 = vld [vmem:[#allocation5 + $0x420] sm:$0xff]
    %v992 = vld [vmem:[#allocation5 + $0x428] sm:$0xff]
    %v993 = vld [vmem:[#allocation5 + $0x488] sm:$0xff]
    %v994 = vld [vmem:[#allocation5 + $0x490] sm:$0xff]
    %v995 = vld [vmem:[#allocation5 + $0x4f0] sm:$0xff]
    %v996 = vld [vmem:[#allocation5 + $0x4f8] sm:$0xff]
    %v997 = vld [vmem:[#allocation5 + $0x558] sm:$0xff]
    %v998 = vld [vmem:[#allocation5 + $0x560] sm:$0xff]
    %v999 = vld [vmem:[#allocation5 + $0x5c0] sm:$0xff]
    %v1000 = vld [vmem:[#allocation5 + $0x5c8] sm:$0xff]
    %v1001 = vld [vmem:[#allocation5 + $0x628] sm:$0xff]
    %v1002 = vld [vmem:[#allocation5 + $0x630] sm:$0xff]
    %v1003 = vld [vmem:[#allocation5 + $0x690] sm:$0xff]
    %v1004 = vld [vmem:[#allocation5 + $0x698] sm:$0xff]
    %v1005 = vld [vmem:[#allocation5 + $0x6f8] sm:$0xff]
    %v1006 = vld [vmem:[#allocation5 + $0x700] sm:$0xff]
    %v1007 = vld [vmem:[#allocation5 + $0x760] sm:$0xff]
    %v1008 = vld [vmem:[#allocation5 + $0x768] sm:$0xff]
    %v1009 = vld [vmem:[#allocation5 + $0x7c8] sm:$0xff]
    %v1010 = vld [vmem:[#allocation5 + $0x7d0] sm:$0xff]
    %v1011 = vld [vmem:[#allocation5 + $0x830] sm:$0xff]
    %v1012 = vld [vmem:[#allocation5 + $0x838] sm:$0xff]
    %v1013 = vld [vmem:[#allocation5 + $0x898] sm:$0xff]
    %v1014 = vld [vmem:[#allocation5 + $0x8a0] sm:$0xff]
    %v1015 = vld [vmem:[#allocation5 + $0x900] sm:$0xff]
    %v1016 = vld [vmem:[#allocation5 + $0x908] sm:$0xff]
    %v1017 = vld [vmem:[#allocation5 + $0x968] sm:$0xff]
    %v1018 = vld [vmem:[#allocation5 + $0x970] sm:$0xff]
    %v1019 = vld [vmem:[#allocation5 + $0x9d0] sm:$0xff]
    %v1020 = vld [vmem:[#allocation5 + $0x9d8] sm:$0xff]
    %v1021 = vld [vmem:[#allocation5 + $0xa38] sm:$0xff]
    %v1022 = vld [vmem:[#allocation5 + $0xa40] sm:$0xff]
    %v1023 = vld [vmem:[#allocation5 + $0xaa0] sm:$0xff]
    %v1024 = vld [vmem:[#allocation5 + $0xaa8] sm:$0xff]
    %v1025 = vld [vmem:[#allocation5 + $0xb08] sm:$0xff]
    %v1026 = vld [vmem:[#allocation5 + $0xb10] sm:$0xff]
    %v1027 = vld [vmem:[#allocation5 + $0xb70] sm:$0xff]
    %v1028 = vld [vmem:[#allocation5 + $0xb78] sm:$0xff]
    %v1029 = vld [vmem:[#allocation5 + $0xbd8] sm:$0xff]
    %v1030 = vld [vmem:[#allocation5 + $0xbe0] sm:$0xff]
    %v1031 = vld [vmem:[#allocation5 + $0xc40] sm:$0xff]
    %v1032 = vld [vmem:[#allocation5 + $0xc48] sm:$0xff]
    %v1033 = vld [vmem:[#allocation5 + $0xca8] sm:$0xff]
    %v1034 = vld [vmem:[#allocation5 + $0xcb0] sm:$0xff]
    %v1035 = vld [vmem:[#allocation5 + $0xd10] sm:$0xff]
    %v1036 = vld [vmem:[#allocation5 + $0xd18] sm:$0xff]
    %v1037 = vld [vmem:[#allocation5 + $0xd78] sm:$0xff]
    %v1038 = vld [vmem:[#allocation5 + $0xd80] sm:$0xff]
    %v1039 = vld [vmem:[#allocation5 + $0xde0] sm:$0xff]
    %v1040 = vld [vmem:[#allocation5 + $0xde8] sm:$0xff]
    %v1041 = vld [vmem:[#allocation5 + $0xe48] sm:$0xff]
    %v1042 = vld [vmem:[#allocation5 + $0xe50] sm:$0xff]
    %v1043 = vld [vmem:[#allocation5 + $0xeb0] sm:$0xff]
    %v1044 = vld [vmem:[#allocation5 + $0xeb8] sm:$0xff]
    %v1045 = vld [vmem:[#allocation5 + $0xf18] sm:$0xff]
    %v1046 = vld [vmem:[#allocation5 + $0xf20] sm:$0xff]
    %v1047 = vld [vmem:[#allocation5 + $0xf80] sm:$0xff]
    %v1048 = vld [vmem:[#allocation5 + $0xf88] sm:$0xff]
    %v1049 = vld [vmem:[#allocation5 + $0xfe8] sm:$0xff]
    %v1050 = vld [vmem:[#allocation5 + $0xff0] sm:$0xff]
    %v1051 = vld [vmem:[#allocation5 + $0x1050] sm:$0xff]
    %v1052 = vld [vmem:[#allocation5 + $0x1058] sm:$0xff]
    %v1053 = vld [vmem:[#allocation5 + $0x10b8] sm:$0xff]
    %v1054 = vld [vmem:[#allocation5 + $0x10c0] sm:$0xff]
    %v1055 = vld [vmem:[#allocation5 + $0x1120] sm:$0xff]
    %v1056 = vld [vmem:[#allocation5 + $0x1128] sm:$0xff]
    %v1057 = vld [vmem:[#allocation5 + $0x1188] sm:$0xff]
    %v1058 = vld [vmem:[#allocation5 + $0x1190] sm:$0xff]
    %v1059 = vld [vmem:[#allocation5 + $0x11f0] sm:$0xff]
    %v1060 = vld [vmem:[#allocation5 + $0x11f8] sm:$0xff]
    %v1061 = vld [vmem:[#allocation5 + $0x1258] sm:$0xff]
    %v1062 = vld [vmem:[#allocation5 + $0x1260] sm:$0xff]
    %v1063 = vld [vmem:[#allocation5 + $0x12c0] sm:$0xff]
    %v1064 = vld [vmem:[#allocation5 + $0x12c8] sm:$0xff]
    %v1065 = vld [vmem:[#allocation5 + $0x1328] sm:$0xff]
    %v1066 = vld [vmem:[#allocation5 + $0x1330] sm:$0xff]
    %v1067 = vld [vmem:[#allocation5 + $0x1390] sm:$0xff]
    %v1068 = vld [vmem:[#allocation5 + $0x1398] sm:$0xff]
    %v1069 = vld [vmem:[#allocation5 + $0x13f8] sm:$0xff]
    %v1070 = vld [vmem:[#allocation5 + $0x1400] sm:$0xff]
    %v1071 = vld [vmem:[#allocation5 + $0x1460] sm:$0xff]
    %v1072 = vld [vmem:[#allocation5 + $0x1468] sm:$0xff]
    %v1073 = vld [vmem:[#allocation5 + $0x14c8] sm:$0xff]
    %v1074 = vld [vmem:[#allocation5 + $0x14d0] sm:$0xff]
    %v1075 = vld [vmem:[#allocation5 + $0x1530] sm:$0xff]
    %v1076 = vld [vmem:[#allocation5 + $0x1538] sm:$0xff]
    %v1077 = vld [vmem:[#allocation5 + $0x1598] sm:$0xff]
    %v1078 = vld [vmem:[#allocation5 + $0x15a0] sm:$0xff]
    %v1079 = vld [vmem:[#allocation5 + $0x1600] sm:$0xff]
    %v1080 = vld [vmem:[#allocation5 + $0x1608] sm:$0xff]
    %v1081 = vld [vmem:[#allocation5 + $0x1668] sm:$0xff]
    %v1082 = vld [vmem:[#allocation5 + $0x1670] sm:$0xff]
    %v1083 = vld [vmem:[#allocation5 + $0x16d0] sm:$0xff]
    %v1084 = vld [vmem:[#allocation5 + $0x16d8] sm:$0xff]
    %v1085 = vld [vmem:[#allocation5 + $0x1738] sm:$0xff]
    %v1086 = vld [vmem:[#allocation5 + $0x1740] sm:$0xff]
    %v1087 = vld [vmem:[#allocation5 + $0x17a0] sm:$0xff]
    %v1088 = vld [vmem:[#allocation5 + $0x17a8] sm:$0xff]
    %v1089 = vld [vmem:[#allocation5 + $0x1808] sm:$0xff]
    %v1090 = vld [vmem:[#allocation5 + $0x1810] sm:$0xff]
    %v1091 = vld [vmem:[#allocation5 + $0x1870] sm:$0xff]
    %v1092 = vld [vmem:[#allocation5 + $0x1878] sm:$0xff]
    %v1093 = vld [vmem:[#allocation5 + $0x18d8] sm:$0xff]
    %v1094 = vld [vmem:[#allocation5 + $0x18e0] sm:$0xff]
    %v1095 = vld [vmem:[#allocation5 + $0x1940] sm:$0xff]
    %v1096 = vld [vmem:[#allocation5 + $0x1948] sm:$0xff]
    %v1097 = vld [vmem:[#allocation5 + $0x19a8] sm:$0xff]
    %v1098 = vld [vmem:[#allocation5 + $0x19b0] sm:$0xff]
    %v1099 = vld [vmem:[#allocation5 + $0x1a10] sm:$0xff]
    %v1100 = vld [vmem:[#allocation5 + $0x1a18] sm:$0xff]
    %v1101 = vld [vmem:[#allocation5 + $0x1a78] sm:$0xff]
    %v1102 = vld [vmem:[#allocation5 + $0x1a80] sm:$0xff]
    %v1103 = vld [vmem:[#allocation5 + $0x1ae0] sm:$0xff]
    %v1104 = vld [vmem:[#allocation5 + $0x1ae8] sm:$0xff]
    %v1105 = vld [vmem:[#allocation5 + $0x1b48] sm:$0xff]
    %v1106 = vld [vmem:[#allocation5 + $0x1b50] sm:$0xff]
    %v1107 = vld [vmem:[#allocation5 + $0x1bb0] sm:$0xff]
    %v1108 = vld [vmem:[#allocation5 + $0x1bb8] sm:$0xff]
    %v1109 = vld [vmem:[#allocation5 + $0x1c18] sm:$0xff]
    %v1110 = vld [vmem:[#allocation5 + $0x1c20] sm:$0xff]
    %v1111 = vld [vmem:[#allocation5 + $0x1c80] sm:$0xff]
    %v1112 = vld [vmem:[#allocation5 + $0x1c88] sm:$0xff]
    %v1113 = vld [vmem:[#allocation5 + $0x1ce8] sm:$0xff]
    %v1114 = vld [vmem:[#allocation5 + $0x1cf0] sm:$0xff]
    %v1115 = vld [vmem:[#allocation5 + $0x1d50] sm:$0xff]
    %v1116 = vld [vmem:[#allocation5 + $0x1d58] sm:$0xff]
    %v1117 = vld [vmem:[#allocation5 + $0x1db8] sm:$0xff]
    %v1118 = vld [vmem:[#allocation5 + $0x1dc0] sm:$0xff]
    %v1119 = vld [vmem:[#allocation5 + $0x1e20] sm:$0xff]
    %v1120 = vld [vmem:[#allocation5 + $0x1e28] sm:$0xff]
    %v1121 = vld [vmem:[#allocation5 + $0x1e88] sm:$0xff]
    %v1122 = vld [vmem:[#allocation5 + $0x1e90] sm:$0xff]
    %v1123 = vld [vmem:[#allocation5 + $0x1ef0] sm:$0xff]
    %v1124 = vld [vmem:[#allocation5 + $0x1ef8] sm:$0xff]
    %v1125 = vld [vmem:[#allocation5 + $0x1f58] sm:$0xff]
    %v1126 = vld [vmem:[#allocation5 + $0x1f60] sm:$0xff]
    %v1127 = vld [vmem:[#allocation5 + $0x1fc0] sm:$0xff]
    %v1128 = vld [vmem:[#allocation5 + $0x1fc8] sm:$0xff]
    %v1129 = vld [vmem:[#allocation5 + $0x2028] sm:$0xff]
    %v1130 = vld [vmem:[#allocation5 + $0x2030] sm:$0xff]
    %v1131 = vld [vmem:[#allocation5 + $0x2090] sm:$0xff]
    %v1132 = vld [vmem:[#allocation5 + $0x2098] sm:$0xff]
    %v1133 = vld [vmem:[#allocation5 + $0x20f8] sm:$0xff]
    %v1134 = vld [vmem:[#allocation5 + $0x2100] sm:$0xff]
    %v1135 = vld [vmem:[#allocation5 + $0x2160] sm:$0xff]
    %v1136 = vld [vmem:[#allocation5 + $0x2168] sm:$0xff]
    %v1137 = vld [vmem:[#allocation5 + $0x21c8] sm:$0xff]
    %v1138 = vld [vmem:[#allocation5 + $0x21d0] sm:$0xff]
    %v1139 = vld [vmem:[#allocation5 + $0x2230] sm:$0xff]
    %v1140 = vld [vmem:[#allocation5 + $0x2238] sm:$0xff]
    %v1141 = vld [vmem:[#allocation5 + $0x2298] sm:$0xff]
    %v1142 = vld [vmem:[#allocation5 + $0x22a0] sm:$0xff]
    %v1143 = vld [vmem:[#allocation5 + $0x2300] sm:$0xff]
    %v1144 = vld [vmem:[#allocation5 + $0x2308] sm:$0xff]
    %v1145 = vld [vmem:[#allocation5 + $0x2368] sm:$0xff]
    %v1146 = vld [vmem:[#allocation5 + $0x2370] sm:$0xff]
    %v1147 = vld [vmem:[#allocation5 + $0x23d0] sm:$0xff]
    %v1148 = vld [vmem:[#allocation5 + $0x23d8] sm:$0xff]
    %v1149 = vld [vmem:[#allocation5 + $0x2438] sm:$0xff]
    %v1150 = vld [vmem:[#allocation5 + $0x2440] sm:$0xff]
    %v1151 = vld [vmem:[#allocation5 + $0x24a0] sm:$0xff]
    %v1152 = vld [vmem:[#allocation5 + $0x24a8] sm:$0xff]
    %v1153 = vld [vmem:[#allocation5 + $0x2508] sm:$0xff]
    %v1154 = vld [vmem:[#allocation5 + $0x2510] sm:$0xff]
    %v1155 = vld [vmem:[#allocation5 + $0x2570] sm:$0xff]
    %v1156 = vld [vmem:[#allocation5 + $0x2578] sm:$0xff]
    %v1157 = vld [vmem:[#allocation5 + $0x25d8] sm:$0xff]
    %v1158 = vld [vmem:[#allocation5 + $0x25e0] sm:$0xff]
    %v1159 = vld [vmem:[#allocation5 + $0x2640] sm:$0xff]
    %v1160 = vld [vmem:[#allocation5 + $0x2648] sm:$0xff]
    %v1161 = vld [vmem:[#allocation5 + $0x26a8] sm:$0xff]
    %v1162 = vld [vmem:[#allocation5 + $0x26b0] sm:$0xff]
    %v1163 = vld [vmem:[#allocation5 + $0x2710] sm:$0xff]
    %v1164 = vld [vmem:[#allocation5 + $0x2718] sm:$0xff]
    %v1165 = vld [vmem:[#allocation5 + $0x2778] sm:$0xff]
    %v1166 = vld [vmem:[#allocation5 + $0x2780] sm:$0xff]
    %v1167 = vld [vmem:[#allocation5 + $0x27e0] sm:$0xff]
    %v1168 = vld [vmem:[#allocation5 + $0x27e8] sm:$0xff]
    %v1169 = vld [vmem:[#allocation5 + $0x2848] sm:$0xff]
    %v1170 = vld [vmem:[#allocation5 + $0x2850] sm:$0xff]
    %v1171 = vld [vmem:[#allocation5 + $0x28b0] sm:$0xff]
    %v1172 = vld [vmem:[#allocation5 + $0x28b8] sm:$0xff]
    %v1173 = vld [vmem:[#allocation5 + $0x2918] sm:$0xff]
    %v1174 = vld [vmem:[#allocation5 + $0x2920] sm:$0xff]
    %v1175 = vld [vmem:[#allocation5 + $0x2980] sm:$0xff]
    %v1176 = vld [vmem:[#allocation5 + $0x2988] sm:$0xff]
    %v1177 = vld [vmem:[#allocation5 + $0x29e8] sm:$0xff]
    %v1178 = vld [vmem:[#allocation5 + $0x29f0] sm:$0xff]
    %v1179 = vld [vmem:[#allocation5 + $0x2a50] sm:$0xff]
    %v1180 = vld [vmem:[#allocation5 + $0x2a58] sm:$0xff]
    %v1181 = vld [vmem:[#allocation5 + $0x2ab8] sm:$0xff]
    %v1182 = vld [vmem:[#allocation5 + $0x2ac0] sm:$0xff]
    %v1183 = vld [vmem:[#allocation5 + $0x2b20] sm:$0xff]
    %v1184 = vld [vmem:[#allocation5 + $0x2b28] sm:$0xff]
    %v1185 = vld [vmem:[#allocation5 + $0x2b88] sm:$0xff]
    %v1186 = vld [vmem:[#allocation5 + $0x2b90] sm:$0xff]
    %v1187 = vld [vmem:[#allocation5 + $0x2bf0] sm:$0xff]
    %v1188 = vld [vmem:[#allocation5 + $0x2bf8] sm:$0xff]
    %v1189 = vld [vmem:[#allocation5 + $0x2c58] sm:$0xff]
    %v1190 = vld [vmem:[#allocation5 + $0x2c60] sm:$0xff]
    %v1191 = vld [vmem:[#allocation5 + $0x2cc0] sm:$0xff]
    %v1192 = vld [vmem:[#allocation5 + $0x2cc8] sm:$0xff]
    %v1193 = vld [vmem:[#allocation5 + $0x2d28] sm:$0xff]
    %v1194 = vld [vmem:[#allocation5 + $0x2d30] sm:$0xff]
    %v1195 = vld [vmem:[#allocation5 + $0x2d90] sm:$0xff]
    %v1196 = vld [vmem:[#allocation5 + $0x2d98] sm:$0xff]
    %v1197 = vld [vmem:[#allocation5 + $0x2df8] sm:$0xff]
    %v1198 = vld [vmem:[#allocation5 + $0x2e00] sm:$0xff]
    %v1199 = vld [vmem:[#allocation5 + $0x2e60] sm:$0xff]
    %v1200 = vld [vmem:[#allocation5 + $0x2e68] sm:$0xff]
    %v1201 = vld [vmem:[#allocation5 + $0x2ec8] sm:$0xff]
    %v1202 = vld [vmem:[#allocation5 + $0x2ed0] sm:$0xff]
    %v1203 = vld [vmem:[#allocation5 + $0x2f30] sm:$0xff]
    %v1204 = vld [vmem:[#allocation5 + $0x2f38] sm:$0xff]
    %v1205 = vld [vmem:[#allocation5 + $0x2f98] sm:$0xff]
    %v1206 = vld [vmem:[#allocation5 + $0x2fa0] sm:$0xff]
    %v1207 = vld [vmem:[#allocation5 + $0x3000] sm:$0xff]
    %v1208 = vld [vmem:[#allocation5 + $0x3008] sm:$0xff]
    %v1209 = vld [vmem:[#allocation5 + $0x3068] sm:$0xff]
    %v1210 = vld [vmem:[#allocation5 + $0x3070] sm:$0xff]
    %v1211 = vld [vmem:[#allocation5 + $0x30d0] sm:$0xff]
    %v1212 = vld [vmem:[#allocation5 + $0x30d8] sm:$0xff]
    %v1213 = vld [vmem:[#allocation5 + $0x3138] sm:$0xff]
    %v1214 = vld [vmem:[#allocation5 + $0x3140] sm:$0xff]
    %v1215 = vld [vmem:[#allocation5 + $0x31a0] sm:$0xff]
    %v1216 = vld [vmem:[#allocation5 + $0x31a8] sm:$0xff]
    %v1217 = vld [vmem:[#allocation5 + $0x3208] sm:$0xff]
    %v1218 = vld [vmem:[#allocation5 + $0x3210] sm:$0xff]
    %v1219 = vld [vmem:[#allocation5 + $0x3270] sm:$0xff]
    %v1220 = vld [vmem:[#allocation5 + $0x3278] sm:$0xff]
    %v1221 = vld [vmem:[#allocation5 + $0x32d8] sm:$0xff]
    %v1222 = vld [vmem:[#allocation5 + $0x32e0] sm:$0xff]
    %v1223 = vld [vmem:[#allocation5 + $0x3340] sm:$0xff]
    %v1224 = vld [vmem:[#allocation5 + $0x3348] sm:$0xff]
    %v1225 = vld [vmem:[#allocation5 + $0x33a8] sm:$0xff]
    %v1226 = vld [vmem:[#allocation5 + $0x33b0] sm:$0xff]
    %v1227 = vld [vmem:[#allocation5 + $0x3410] sm:$0xff]
    %v1228 = vld [vmem:[#allocation5 + $0x3418] sm:$0xff]
    %v1229 = vld [vmem:[#allocation5 + $0x3478] sm:$0xff]
    %v1230 = vld [vmem:[#allocation5 + $0x3480] sm:$0xff]
    %v1231 = vld [vmem:[#allocation5 + $0x34e0] sm:$0xff]
    %v1232 = vld [vmem:[#allocation5 + $0x34e8] sm:$0xff]
    %v1233 = vld [vmem:[#allocation5 + $0x3548] sm:$0xff]
    %v1234 = vld [vmem:[#allocation5 + $0x3550] sm:$0xff]
    %v1235 = vld [vmem:[#allocation5 + $0x35b0] sm:$0xff]
    %v1236 = vld [vmem:[#allocation5 + $0x35b8] sm:$0xff]
    %v1237 = vld [vmem:[#allocation5 + $0x3618] sm:$0xff]
    %v1238 = vld [vmem:[#allocation5 + $0x3620] sm:$0xff]
    %v1239 = vld [vmem:[#allocation5 + $0x3680] sm:$0xff]
    %v1240 = vld [vmem:[#allocation5 + $0x3688] sm:$0xff]
    %v1241 = vld [vmem:[#allocation5 + $0x36e8] sm:$0xff]
    %v1242 = vld [vmem:[#allocation5 + $0x36f0] sm:$0xff]
    %v1243 = vld [vmem:[#allocation5 + $0x3750] sm:$0xff]
    %v1244 = vld [vmem:[#allocation5 + $0x3758] sm:$0xff]
    %v1245 = vld [vmem:[#allocation5 + $0x37b8] sm:$0xff]
    %v1246 = vld [vmem:[#allocation5 + $0x37c0] sm:$0xff]
    %v1247 = vld [vmem:[#allocation5 + $0x3820] sm:$0xff]
    %v1248 = vld [vmem:[#allocation5 + $0x3828] sm:$0xff]
    %v1249 = vld [vmem:[#allocation5 + $0x3888] sm:$0xff]
    %v1250 = vld [vmem:[#allocation5 + $0x3890] sm:$0xff]
    %v1251 = vld [vmem:[#allocation5 + $0x38f0] sm:$0xff]
    %v1252 = vld [vmem:[#allocation5 + $0x38f8] sm:$0xff]
    %v1253 = vld [vmem:[#allocation5 + $0x3958] sm:$0xff]
    %v1254 = vld [vmem:[#allocation5 + $0x3960] sm:$0xff]
    %v1255 = vld [vmem:[#allocation5 + $0x39c0] sm:$0xff]
    %v1256 = vld [vmem:[#allocation5 + $0x39c8] sm:$0xff]
    %v1257 = vld [vmem:[#allocation5 + $0x3a28] sm:$0xff]
    %v1258 = vld [vmem:[#allocation5 + $0x3a30] sm:$0xff]
    %v1259 = vld [vmem:[#allocation5 + $0x3a90] sm:$0xff]
    %v1260 = vld [vmem:[#allocation5 + $0x3a98] sm:$0xff]
    %v1261 = vld [vmem:[#allocation5 + $0x3af8] sm:$0xff]
    %v1262 = vld [vmem:[#allocation5 + $0x3b00] sm:$0xff]
    %v1263 = vld [vmem:[#allocation5 + $0x3b60] sm:$0xff]
    %v1264 = vld [vmem:[#allocation5 + $0x3b68] sm:$0xff]
    %v1265 = vld [vmem:[#allocation5 + $0x3bc8] sm:$0xff]
    %v1266 = vld [vmem:[#allocation5 + $0x3bd0] sm:$0xff]
    %v1267 = vld [vmem:[#allocation5 + $0x3c30] sm:$0xff]
    %v1268 = vld [vmem:[#allocation5 + $0x3c38] sm:$0xff]
    %v1269 = vld [vmem:[#allocation5 + $0x3c98] sm:$0xff]
    %v1270 = vld [vmem:[#allocation5 + $0x3ca0] sm:$0xff]
    %v1271 = vld [vmem:[#allocation5 + $0x3d00] sm:$0xff]
    %v1272 = vld [vmem:[#allocation5 + $0x3d08] sm:$0xff]
    %v1273 = vld [vmem:[#allocation5 + $0x3d68] sm:$0xff]
    %v1274 = vld [vmem:[#allocation5 + $0x3d70] sm:$0xff]
    %v1275 = vld [vmem:[#allocation5 + $0x3dd0] sm:$0xff]
    %v1276 = vld [vmem:[#allocation5 + $0x3dd8] sm:$0xff]
    %v1277 = vld [vmem:[#allocation5 + $0x3e38] sm:$0xff]
    %v1278 = vld [vmem:[#allocation5 + $0x3e40] sm:$0xff]
    %v1279 = vld [vmem:[#allocation5 + $0x3ea0] sm:$0xff]
    %v1280 = vld [vmem:[#allocation5 + $0x3ea8] sm:$0xff]
    %v1281 = vld [vmem:[#allocation5 + $0x3f08] sm:$0xff]
    %v1282 = vld [vmem:[#allocation5 + $0x3f10] sm:$0xff]
    %v1283 = vld [vmem:[#allocation5 + $0x3f70] sm:$0xff]
    %v1284 = vld [vmem:[#allocation5 + $0x3f78] sm:$0xff]
    %v1285 = vld [vmem:[#allocation5 + $0x3fd8] sm:$0xff]
    %v1286 = vld [vmem:[#allocation5 + $0x3fe0] sm:$0xff]
    %v1287 = vld [vmem:[#allocation5 + $0x4040] sm:$0xff]
    %v1288 = vld [vmem:[#allocation5 + $0x4048] sm:$0xff]
    %v1289 = vld [vmem:[#allocation5 + $0x40a8] sm:$0xff]
    %v1290 = vld [vmem:[#allocation5 + $0x40b0] sm:$0xff]
    %v1291 = vld [vmem:[#allocation5 + $0x4110] sm:$0xff]
    %v1292 = vld [vmem:[#allocation5 + $0x4118] sm:$0xff]
    %v1293 = vld [vmem:[#allocation5 + $0x4178] sm:$0xff]
    %v1294 = vld [vmem:[#allocation5 + $0x4180] sm:$0xff]
    %v1295 = vld [vmem:[#allocation5 + $0x41e0] sm:$0xff]
    %v1296 = vld [vmem:[#allocation5 + $0x41e8] sm:$0xff]
    %v1297 = vld [vmem:[#allocation5 + $0x4248] sm:$0xff]
    %v1298 = vld [vmem:[#allocation5 + $0x4250] sm:$0xff]
    %v1299 = vld [vmem:[#allocation5 + $0x42b0] sm:$0xff]
    %v1300 = vld [vmem:[#allocation5 + $0x42b8] sm:$0xff]
    %v1301 = vld [vmem:[#allocation5 + $0x4318] sm:$0xff]
    %v1302 = vld [vmem:[#allocation5 + $0x4320] sm:$0xff]
    %v1303 = vld [vmem:[#allocation5 + $0x4380] sm:$0xff]
    %v1304 = vld [vmem:[#allocation5 + $0x4388] sm:$0xff]
    %v1305 = vld [vmem:[#allocation5 + $0x43e8] sm:$0xff]
    %v1306 = vld [vmem:[#allocation5 + $0x43f0] sm:$0xff]
    %v1307 = vld [vmem:[#allocation5 + $0x4450] sm:$0xff]
    %v1308 = vld [vmem:[#allocation5 + $0x4458] sm:$0xff]
    %v1309 = vld [vmem:[#allocation5 + $0x44b8] sm:$0xff]
    %v1310 = vld [vmem:[#allocation5 + $0x44c0] sm:$0xff]
    %v1311 = vld [vmem:[#allocation5 + $0x4520] sm:$0xff]
    %v1312 = vld [vmem:[#allocation5 + $0x4528] sm:$0xff]
    %v1313 = vld [vmem:[#allocation5 + $0x4588] sm:$0xff]
    %v1314 = vld [vmem:[#allocation5 + $0x4590] sm:$0xff]
    %v1315 = vld [vmem:[#allocation5 + $0x45f0] sm:$0xff]
    %v1316 = vld [vmem:[#allocation5 + $0x45f8] sm:$0xff]
    %v1317 = vld [vmem:[#allocation5 + $0x4658] sm:$0xff]
    %v1318 = vld [vmem:[#allocation5 + $0x4660] sm:$0xff]
    %v1319 = vld [vmem:[#allocation5 + $0x46c0] sm:$0xff]
    %v1320 = vld [vmem:[#allocation5 + $0x46c8] sm:$0xff]
    %v1321 = vld [vmem:[#allocation5 + $0x4728] sm:$0xff]
    %v1322 = vld [vmem:[#allocation5 + $0x4730] sm:$0xff]
    %v1323 = vld [vmem:[#allocation5 + $0x4790] sm:$0xff]
    %v1324 = vld [vmem:[#allocation5 + $0x4798] sm:$0xff]
    %v1325 = vld [vmem:[#allocation5 + $0x47f8] sm:$0xff]
    %v1326 = vld [vmem:[#allocation5 + $0x4800] sm:$0xff]
    %v1327 = vld [vmem:[#allocation5 + $0x4860] sm:$0xff]
    %v1328 = vld [vmem:[#allocation5 + $0x4868] sm:$0xff]
    %v1329 = vld [vmem:[#allocation5 + $0x48c8] sm:$0xff]
    %v1330 = vld [vmem:[#allocation5 + $0x48d0] sm:$0xff]
    %v1331 = vld [vmem:[#allocation5 + $0x4930] sm:$0xff]
    %v1332 = vld [vmem:[#allocation5 + $0x4938] sm:$0xff]
    %v1333 = vld [vmem:[#allocation5 + $0x4998] sm:$0xff]
    %v1334 = vld [vmem:[#allocation5 + $0x49a0] sm:$0xff]
    %v1335 = vld [vmem:[#allocation5 + $0x4a00] sm:$0xff]
    %v1336 = vld [vmem:[#allocation5 + $0x4a08] sm:$0xff]
    %v1337 = vld [vmem:[#allocation5 + $0x4a68] sm:$0xff]
    %v1338 = vld [vmem:[#allocation5 + $0x4a70] sm:$0xff]
    %v1339 = vld [vmem:[#allocation5 + $0x4ad0] sm:$0xff]
    %v1340 = vld [vmem:[#allocation5 + $0x4ad8] sm:$0xff]
    %v1341 = vld [vmem:[#allocation5 + $0x4b38] sm:$0xff]
    %v1342 = vld [vmem:[#allocation5 + $0x4b40] sm:$0xff]
    %v1343 = vld [vmem:[#allocation5 + $0x4ba0] sm:$0xff]
    %v1344 = vld [vmem:[#allocation5 + $0x4ba8] sm:$0xff]
    %v1345 = vld [vmem:[#allocation5 + $0x4c08] sm:$0xff]
    %v1346 = vld [vmem:[#allocation5 + $0x4c10] sm:$0xff]
    %v1347 = vld [vmem:[#allocation5 + $0x4c70] sm:$0xff]
    %v1348 = vld [vmem:[#allocation5 + $0x4c78] sm:$0xff]
    %v1349 = vld [vmem:[#allocation5 + $0x4cd8] sm:$0xff]
    %v1350 = vld [vmem:[#allocation5 + $0x4ce0] sm:$0xff]
    %v1351 = vld [vmem:[#allocation5 + $0x4d40] sm:$0xff]
    %v1352 = vld [vmem:[#allocation5 + $0x4d48] sm:$0xff]
    %v1353 = vld [vmem:[#allocation5 + $0x4da8] sm:$0xff]
    %v1354 = vld [vmem:[#allocation5 + $0x4db0] sm:$0xff]
    %v1355 = vld [vmem:[#allocation5 + $0x4e10] sm:$0xff]
    %v1356 = vld [vmem:[#allocation5 + $0x4e18] sm:$0xff]
    %v1357 = vld [vmem:[#allocation5 + $0x4e78] sm:$0xff]
    %v1358 = vld [vmem:[#allocation5 + $0x4e80] sm:$0xff]
    %v1359 = vld [vmem:[#allocation5 + $0x4ee0] sm:$0xff]
    %v1360 = vld [vmem:[#allocation5 + $0x4ee8] sm:$0xff]
    %v1361 = vld [vmem:[#allocation5 + $0x4f48] sm:$0xff]
    %v1362 = vld [vmem:[#allocation5 + $0x4f50] sm:$0xff]
    %v1363 = vld [vmem:[#allocation5 + $0x4fb0] sm:$0xff]
    %v1364 = vld [vmem:[#allocation5 + $0x4fb8] sm:$0xff]
    %v1365 = vld [vmem:[#allocation5 + $0x5018] sm:$0xff]
    %v1366 = vld [vmem:[#allocation5 + $0x5020] sm:$0xff]
    %v1367 = vld [vmem:[#allocation5 + $0x5080] sm:$0xff]
    %v1368 = vld [vmem:[#allocation5 + $0x5088] sm:$0xff]
    %v1369 = vld [vmem:[#allocation5 + $0x50e8] sm:$0xff]
    %v1370 = vld [vmem:[#allocation5 + $0x50f0] sm:$0xff]
    %v1371 = vld [vmem:[#allocation5 + $0x5150] sm:$0xff]
    %v1372 = vld [vmem:[#allocation5 + $0x5158] sm:$0xff]
    %v1373 = vld [vmem:[#allocation5 + $0x51b8] sm:$0xff]
    %v1374 = vld [vmem:[#allocation5 + $0x51c0] sm:$0xff]
    %v1375 = vld [vmem:[#allocation5 + $0x5220] sm:$0xff]
    %v1376 = vld [vmem:[#allocation5 + $0x5228] sm:$0xff]
    %v1377 = vld [vmem:[#allocation5 + $0x5288] sm:$0x1]
    %v1378 = vld [vmem:[#allocation5 + $0x5290] sm:$0x1]
    %v1380 = vsel %vm463, %v1377, 0
    %v1383 = vsel %vm463, %v1378, 0
    %1385 = vmatprep.subr.mxu0 %v972
    %1386 = vmatpush1.msra.mxu0 %v971
    %1387 = vmatprep.subr.mxu0 %v974
    %1388 = vmatpush1.msra.mxu0 %v973
    %1389 = vmatprep.subr.mxu0 %v976
    %1390 = vmatpush1.msra.mxu0 %v975
    %1391 = vmatprep.subr.mxu0 %v978
    %1392 = vmatpush1.msra.mxu0 %v977
    %1393 = vmatprep.subr.mxu0 %v980
    %1394 = vmatpush1.msra.mxu0 %v979
    %1395 = vmatprep.subr.mxu0 %v982
    %1396 = vmatpush1.msra.mxu0 %v981
    %1397 = vmatprep.subr.mxu0 %v984
    %1398 = vmatpush1.msra.mxu0 %v983
    %1399 = vmatprep.subr.mxu0 %v986
    %1400 = vmatpush1.msra.mxu0 %v985
    %1401 = vmatprep.subr.mxu0 %v988
    %1402 = vmatpush1.msra.mxu0 %v987
    %1403 = vmatprep.subr.mxu0 %v990
    %1404 = vmatpush1.msra.mxu0 %v989
    %1405 = vmatprep.subr.mxu0 %v992
    %1406 = vmatpush1.msra.mxu0 %v991
    %1407 = vmatprep.subr.mxu0 %v994
    %1408 = vmatpush1.msra.mxu0 %v993
    %1409 = vmatprep.subr.mxu0 %v996
    %1410 = vmatpush1.msra.mxu0 %v995
    %1411 = vmatprep.subr.mxu0 %v998
    %1412 = vmatpush1.msra.mxu0 %v997
    %1413 = vmatprep.subr.mxu0 %v1000
    %1414 = vmatpush1.msra.mxu0 %v999
    %1415 = vmatprep.subr.mxu0 %v1002
    %1416 = vmatpush1.msra.mxu0 %v1001
    %1417 = vmatprep.subr.mxu0 %v1004
    %1418 = vmatpush1.msra.mxu0 %v1003
    %1419 = vmatprep.subr.mxu0 %v1006
    %1420 = vmatpush1.msra.mxu0 %v1005
    %1421 = vmatprep.subr.mxu0 %v1008
    %1422 = vmatpush1.msra.mxu0 %v1007
    %1423 = vmatprep.subr.mxu0 %v1010
    %1424 = vmatpush1.msra.mxu0 %v1009
    %1425 = vmatprep.subr.mxu0 %v1012
    %1426 = vmatpush1.msra.mxu0 %v1011
    %1427 = vmatprep.subr.mxu0 %v1014
    %1428 = vmatpush1.msra.mxu0 %v1013
    %1429 = vmatprep.subr.mxu0 %v1016
    %1430 = vmatpush1.msra.mxu0 %v1015
    %1431 = vmatprep.subr.mxu0 %v1018
    %1432 = vmatpush1.msra.mxu0 %v1017
    %1433 = vmatprep.subr.mxu0 %v1020
    %1434 = vmatpush1.msra.mxu0 %v1019
    %1435 = vmatprep.subr.mxu0 %v1022
    %1436 = vmatpush1.msra.mxu0 %v1021
    %1437 = vmatprep.subr.mxu0 %v1024
    %1438 = vmatpush1.msra.mxu0 %v1023
    %1439 = vmatprep.subr.mxu0 %v1026
    %1440 = vmatpush1.msra.mxu0 %v1025
    %1441 = vmatprep.subr.mxu0 %v1028
    %1442 = vmatpush1.msra.mxu0 %v1027
    %1443 = vmatprep.subr.mxu0 %v1030
    %1444 = vmatpush1.msra.mxu0 %v1029
    %1445 = vmatprep.subr.mxu0 %v1032
    %1446 = vmatpush1.msra.mxu0 %v1031
    %1447 = vmatprep.subr.mxu0 %v1034
    %1448 = vmatpush1.msra.mxu0 %v1033
    %1449 = vmatprep.mubr.f32.mxu0 %v39
    %1450 = vmatmul.mubr.f32.gmra.mrb[0].mxu0 %v38
    %v1451 = vpop.f32.mrb[0].mxu0
    %v1452 = vadd.f32 0.0, %v1451
    %v1453 = vpop.f32.mrb[0].mxu0
    %v1454 = vadd.f32 0.0, %v1453
    %1455 = vdwg.mxu0
    %1456 = vmatprep.subr.mxu0 %v1036
    %1457 = vmatpush1.msra.mxu0 %v1035
    %1458 = vmatprep.subr.mxu0 %v1038
    %1459 = vmatpush1.msra.mxu0 %v1037
    %1460 = vmatprep.subr.mxu0 %v1040
    %1461 = vmatpush1.msra.mxu0 %v1039
    %1462 = vmatprep.subr.mxu0 %v1042
    %1463 = vmatpush1.msra.mxu0 %v1041
    %1464 = vmatprep.subr.mxu0 %v1044
    %1465 = vmatpush1.msra.mxu0 %v1043
    %1466 = vmatprep.subr.mxu0 %v1046
    %1467 = vmatpush1.msra.mxu0 %v1045
    %1468 = vmatprep.subr.mxu0 %v1048
    %1469 = vmatpush1.msra.mxu0 %v1047
    %1470 = vmatprep.subr.mxu0 %v1050
    %1471 = vmatpush1.msra.mxu0 %v1049
    %1472 = vmatprep.subr.mxu0 %v1052
    %1473 = vmatpush1.msra.mxu0 %v1051
    %1474 = vmatprep.subr.mxu0 %v1054
    %1475 = vmatpush1.msra.mxu0 %v1053
    %1476 = vmatprep.subr.mxu0 %v1056
    %1477 = vmatpush1.msra.mxu0 %v1055
    %1478 = vmatprep.subr.mxu0 %v1058
    %1479 = vmatpush1.msra.mxu0 %v1057
    %1480 = vmatprep.subr.mxu0 %v1060
    %1481 = vmatpush1.msra.mxu0 %v1059
    %1482 = vmatprep.subr.mxu0 %v1062
    %1483 = vmatpush1.msra.mxu0 %v1061
    %1484 = vmatprep.subr.mxu0 %v1064
    %1485 = vmatpush1.msra.mxu0 %v1063
    %1486 = vmatprep.subr.mxu0 %v1066
    %1487 = vmatpush1.msra.mxu0 %v1065
    %1488 = vmatprep.subr.mxu0 %v1068
    %1489 = vmatpush1.msra.mxu0 %v1067
    %1490 = vmatprep.subr.mxu0 %v1070
    %1491 = vmatpush1.msra.mxu0 %v1069
    %1492 = vmatprep.subr.mxu0 %v1072
    %1493 = vmatpush1.msra.mxu0 %v1071
    %1494 = vmatprep.subr.mxu0 %v1074
    %1495 = vmatpush1.msra.mxu0 %v1073
    %1496 = vmatprep.subr.mxu0 %v1076
    %1497 = vmatpush1.msra.mxu0 %v1075
    %1498 = vmatprep.subr.mxu0 %v1078
    %1499 = vmatpush1.msra.mxu0 %v1077
    %1500 = vmatprep.subr.mxu0 %v1080
    %1501 = vmatpush1.msra.mxu0 %v1079
    %1502 = vmatprep.subr.mxu0 %v1082
    %1503 = vmatpush1.msra.mxu0 %v1081
    %1504 = vmatprep.subr.mxu0 %v1084
    %1505 = vmatpush1.msra.mxu0 %v1083
    %1506 = vmatprep.subr.mxu0 %v1086
    %1507 = vmatpush1.msra.mxu0 %v1085
    %1508 = vmatprep.subr.mxu0 %v1088
    %1509 = vmatpush1.msra.mxu0 %v1087
    %1510 = vmatprep.subr.mxu0 %v1090
    %1511 = vmatpush1.msra.mxu0 %v1089
    %1512 = vmatprep.subr.mxu0 %v1092
    %1513 = vmatpush1.msra.mxu0 %v1091
    %1514 = vmatprep.subr.mxu0 %v1094
    %1515 = vmatpush1.msra.mxu0 %v1093
    %1516 = vmatprep.subr.mxu0 %v1096
    %1517 = vmatpush1.msra.mxu0 %v1095
    %1518 = vmatprep.subr.mxu0 %v1098
    %1519 = vmatpush1.msra.mxu0 %v1097
    %1520 = vmatprep.mubr.f32.mxu0 %v41
    %1521 = vmatmul.mubr.f32.gmra.mrb[0].mxu0 %v40
    %v1522 = vpop.f32.mrb[0].mxu0
    %v1523 = vadd.f32 %v1452, %v1522
    %v1524 = vpop.f32.mrb[0].mxu0
    %v1525 = vadd.f32 %v1454, %v1524
    %1526 = vdwg.mxu0
    %1527 = vmatprep.subr.mxu0 %v1100
    %1528 = vmatpush1.msra.mxu0 %v1099
    %1529 = vmatprep.subr.mxu0 %v1102
    %1530 = vmatpush1.msra.mxu0 %v1101
    %1531 = vmatprep.subr.mxu0 %v1104
    %1532 = vmatpush1.msra.mxu0 %v1103
    %1533 = vmatprep.subr.mxu0 %v1106
    %1534 = vmatpush1.msra.mxu0 %v1105
    %1535 = vmatprep.subr.mxu0 %v1108
    %1536 = vmatpush1.msra.mxu0 %v1107
    %1537 = vmatprep.subr.mxu0 %v1110
    %1538 = vmatpush1.msra.mxu0 %v1109
    %1539 = vmatprep.subr.mxu0 %v1112
    %1540 = vmatpush1.msra.mxu0 %v1111
    %1541 = vmatprep.subr.mxu0 %v1114
    %1542 = vmatpush1.msra.mxu0 %v1113
    %1543 = vmatprep.subr.mxu0 %v1116
    %1544 = vmatpush1.msra.mxu0 %v1115
    %1545 = vmatprep.subr.mxu0 %v1118
    %1546 = vmatpush1.msra.mxu0 %v1117
    %1547 = vmatprep.subr.mxu0 %v1120
    %1548 = vmatpush1.msra.mxu0 %v1119
    %1549 = vmatprep.subr.mxu0 %v1122
    %1550 = vmatpush1.msra.mxu0 %v1121
    %1551 = vmatprep.subr.mxu0 %v1124
    %1552 = vmatpush1.msra.mxu0 %v1123
    %1553 = vmatprep.subr.mxu0 %v1126
    %1554 = vmatpush1.msra.mxu0 %v1125
    %1555 = vmatprep.subr.mxu0 %v1128
    %1556 = vmatpush1.msra.mxu0 %v1127
    %1557 = vmatprep.subr.mxu0 %v1130
    %1558 = vmatpush1.msra.mxu0 %v1129
    %1559 = vmatprep.subr.mxu0 %v1132
    %1560 = vmatpush1.msra.mxu0 %v1131
    %1561 = vmatprep.subr.mxu0 %v1134
    %1562 = vmatpush1.msra.mxu0 %v1133
    %1563 = vmatprep.subr.mxu0 %v1136
    %1564 = vmatpush1.msra.mxu0 %v1135
    %1565 = vmatprep.subr.mxu0 %v1138
    %1566 = vmatpush1.msra.mxu0 %v1137
    %1567 = vmatprep.subr.mxu0 %v1140
    %1568 = vmatpush1.msra.mxu0 %v1139
    %1569 = vmatprep.subr.mxu0 %v1142
    %1570 = vmatpush1.msra.mxu0 %v1141
    %1571 = vmatprep.subr.mxu0 %v1144
    %1572 = vmatpush1.msra.mxu0 %v1143
    %1573 = vmatprep.subr.mxu0 %v1146
    %1574 = vmatpush1.msra.mxu0 %v1145
    %1575 = vmatprep.subr.mxu0 %v1148
    %1576 = vmatpush1.msra.mxu0 %v1147
    %1577 = vmatprep.subr.mxu0 %v1150
    %1578 = vmatpush1.msra.mxu0 %v1149
    %1579 = vmatprep.subr.mxu0 %v1152
    %1580 = vmatpush1.msra.mxu0 %v1151
    %1581 = vmatprep.subr.mxu0 %v1154
    %1582 = vmatpush1.msra.mxu0 %v1153
    %1583 = vmatprep.subr.mxu0 %v1156
    %1584 = vmatpush1.msra.mxu0 %v1155
    %1585 = vmatprep.subr.mxu0 %v1158
    %1586 = vmatpush1.msra.mxu0 %v1157
    %1587 = vmatprep.subr.mxu0 %v1160
    %1588 = vmatpush1.msra.mxu0 %v1159
    %1589 = vmatprep.subr.mxu0 %v1162
    %1590 = vmatpush1.msra.mxu0 %v1161
    %1591 = vmatprep.mubr.f32.mxu0 %v43
    %1592 = vmatmul.mubr.f32.gmra.mrb[0].mxu0 %v42
    %v1593 = vpop.f32.mrb[0].mxu0
    %v1594 = vadd.f32 %v1523, %v1593
    %v1595 = vpop.f32.mrb[0].mxu0
    %v1596 = vadd.f32 %v1525, %v1595
    %1597 = vdwg.mxu0
    %1598 = vmatprep.subr.mxu0 %v1164
    %1599 = vmatpush1.msra.mxu0 %v1163
    %1600 = vmatprep.subr.mxu0 %v1166
    %1601 = vmatpush1.msra.mxu0 %v1165
    %1602 = vmatprep.subr.mxu0 %v1168
    %1603 = vmatpush1.msra.mxu0 %v1167
    %1604 = vmatprep.subr.mxu0 %v1170
    %1605 = vmatpush1.msra.mxu0 %v1169
    %1606 = vmatprep.subr.mxu0 %v1172
    %1607 = vmatpush1.msra.mxu0 %v1171
    %1608 = vmatprep.subr.mxu0 %v1174
    %1609 = vmatpush1.msra.mxu0 %v1173
    %1610 = vmatprep.subr.mxu0 %v1176
    %1611 = vmatpush1.msra.mxu0 %v1175
    %1612 = vmatprep.subr.mxu0 %v1178
    %1613 = vmatpush1.msra.mxu0 %v1177
    %1614 = vmatprep.subr.mxu0 %v1180
    %1615 = vmatpush1.msra.mxu0 %v1179
    %1616 = vmatprep.subr.mxu0 %v1182
    %1617 = vmatpush1.msra.mxu0 %v1181
    %1618 = vmatprep.subr.mxu0 %v1184
    %1619 = vmatpush1.msra.mxu0 %v1183
    %1620 = vmatprep.subr.mxu0 %v1186
    %1621 = vmatpush1.msra.mxu0 %v1185
    %1622 = vmatprep.subr.mxu0 %v1188
    %1623 = vmatpush1.msra.mxu0 %v1187
    %1624 = vmatprep.subr.mxu0 %v1190
    %1625 = vmatpush1.msra.mxu0 %v1189
    %1626 = vmatprep.subr.mxu0 %v1192
    %1627 = vmatpush1.msra.mxu0 %v1191
    %1628 = vmatprep.subr.mxu0 %v1194
    %1629 = vmatpush1.msra.mxu0 %v1193
    %1630 = vmatprep.subr.mxu0 %v1196
    %1631 = vmatpush1.msra.mxu0 %v1195
    %1632 = vmatprep.subr.mxu0 %v1198
    %1633 = vmatpush1.msra.mxu0 %v1197
    %1634 = vmatprep.subr.mxu0 %v1200
    %1635 = vmatpush1.msra.mxu0 %v1199
    %1636 = vmatprep.subr.mxu0 %v1202
    %1637 = vmatpush1.msra.mxu0 %v1201
    %1638 = vmatprep.subr.mxu0 %v1204
    %1639 = vmatpush1.msra.mxu0 %v1203
    %1640 = vmatprep.subr.mxu0 %v1206
    %1641 = vmatpush1.msra.mxu0 %v1205
    %1642 = vmatprep.subr.mxu0 %v1208
    %1643 = vmatpush1.msra.mxu0 %v1207
    %1644 = vmatprep.subr.mxu0 %v1210
    %1645 = vmatpush1.msra.mxu0 %v1209
    %1646 = vmatprep.subr.mxu0 %v1212
    %1647 = vmatpush1.msra.mxu0 %v1211
    %1648 = vmatprep.subr.mxu0 %v1214
    %1649 = vmatpush1.msra.mxu0 %v1213
    %1650 = vmatprep.subr.mxu0 %v1216
    %1651 = vmatpush1.msra.mxu0 %v1215
    %1652 = vmatprep.subr.mxu0 %v1218
    %1653 = vmatpush1.msra.mxu0 %v1217
    %1654 = vmatprep.subr.mxu0 %v1220
    %1655 = vmatpush1.msra.mxu0 %v1219
    %1656 = vmatprep.subr.mxu0 %v1222
    %1657 = vmatpush1.msra.mxu0 %v1221
    %1658 = vmatprep.subr.mxu0 %v1224
    %1659 = vmatpush1.msra.mxu0 %v1223
    %1660 = vmatprep.subr.mxu0 %v1226
    %1661 = vmatpush1.msra.mxu0 %v1225
    %1662 = vmatprep.mubr.f32.mxu0 %v45
    %1663 = vmatmul.mubr.f32.gmra.mrb[0].mxu0 %v44
    %v1664 = vpop.f32.mrb[0].mxu0
    %v1665 = vadd.f32 %v1594, %v1664
    %v1666 = vpop.f32.mrb[0].mxu0
    %v1667 = vadd.f32 %v1596, %v1666
    %1668 = vdwg.mxu0
    %1669 = vmatprep.subr.mxu0 %v1228
    %1670 = vmatpush1.msra.mxu0 %v1227
    %1671 = vmatprep.subr.mxu0 %v1230
    %1672 = vmatpush1.msra.mxu0 %v1229
    %1673 = vmatprep.subr.mxu0 %v1232
    %1674 = vmatpush1.msra.mxu0 %v1231
    %1675 = vmatprep.subr.mxu0 %v1234
    %1676 = vmatpush1.msra.mxu0 %v1233
    %1677 = vmatprep.subr.mxu0 %v1236
    %1678 = vmatpush1.msra.mxu0 %v1235
    %1679 = vmatprep.subr.mxu0 %v1238
    %1680 = vmatpush1.msra.mxu0 %v1237
    %1681 = vmatprep.subr.mxu0 %v1240
    %1682 = vmatpush1.msra.mxu0 %v1239
    %1683 = vmatprep.subr.mxu0 %v1242
    %1684 = vmatpush1.msra.mxu0 %v1241
    %1685 = vmatprep.subr.mxu0 %v1244
    %1686 = vmatpush1.msra.mxu0 %v1243
    %1687 = vmatprep.subr.mxu0 %v1246
    %1688 = vmatpush1.msra.mxu0 %v1245
    %1689 = vmatprep.subr.mxu0 %v1248
    %1690 = vmatpush1.msra.mxu0 %v1247
    %1691 = vmatprep.subr.mxu0 %v1250
    %1692 = vmatpush1.msra.mxu0 %v1249
    %1693 = vmatprep.subr.mxu0 %v1252
    %1694 = vmatpush1.msra.mxu0 %v1251
    %1695 = vmatprep.subr.mxu0 %v1254
    %1696 = vmatpush1.msra.mxu0 %v1253
    %1697 = vmatprep.subr.mxu0 %v1256
    %1698 = vmatpush1.msra.mxu0 %v1255
    %1699 = vmatprep.subr.mxu0 %v1258
    %1700 = vmatpush1.msra.mxu0 %v1257
    %1701 = vmatprep.subr.mxu0 %v1260
    %1702 = vmatpush1.msra.mxu0 %v1259
    %1703 = vmatprep.subr.mxu0 %v1262
    %1704 = vmatpush1.msra.mxu0 %v1261
    %1705 = vmatprep.subr.mxu0 %v1264
    %1706 = vmatpush1.msra.mxu0 %v1263
    %1707 = vmatprep.subr.mxu0 %v1266
    %1708 = vmatpush1.msra.mxu0 %v1265
    %1709 = vmatprep.subr.mxu0 %v1268
    %1710 = vmatpush1.msra.mxu0 %v1267
    %1711 = vmatprep.subr.mxu0 %v1270
    %1712 = vmatpush1.msra.mxu0 %v1269
    %1713 = vmatprep.subr.mxu0 %v1272
    %1714 = vmatpush1.msra.mxu0 %v1271
    %1715 = vmatprep.subr.mxu0 %v1274
    %1716 = vmatpush1.msra.mxu0 %v1273
    %1717 = vmatprep.subr.mxu0 %v1276
    %1718 = vmatpush1.msra.mxu0 %v1275
    %1719 = vmatprep.subr.mxu0 %v1278
    %1720 = vmatpush1.msra.mxu0 %v1277
    %1721 = vmatprep.subr.mxu0 %v1280
    %1722 = vmatpush1.msra.mxu0 %v1279
    %1723 = vmatprep.subr.mxu0 %v1282
    %1724 = vmatpush1.msra.mxu0 %v1281
    %1725 = vmatprep.subr.mxu0 %v1284
    %1726 = vmatpush1.msra.mxu0 %v1283
    %1727 = vmatprep.subr.mxu0 %v1286
    %1728 = vmatpush1.msra.mxu0 %v1285
    %1729 = vmatprep.subr.mxu0 %v1288
    %1730 = vmatpush1.msra.mxu0 %v1287
    %1731 = vmatprep.subr.mxu0 %v1290
    %1732 = vmatpush1.msra.mxu0 %v1289
    %1733 = vmatprep.mubr.f32.mxu0 %v47
    %1734 = vmatmul.mubr.f32.gmra.mrb[0].mxu0 %v46
    %v1735 = vpop.f32.mrb[0].mxu0
    %v1736 = vadd.f32 %v1665, %v1735
    %v1737 = vpop.f32.mrb[0].mxu0
    %v1738 = vadd.f32 %v1667, %v1737
    %1739 = vdwg.mxu0
    %1740 = vmatprep.subr.mxu0 %v1292
    %1741 = vmatpush1.msra.mxu0 %v1291
    %1742 = vmatprep.subr.mxu0 %v1294
    %1743 = vmatpush1.msra.mxu0 %v1293
    %1744 = vmatprep.subr.mxu0 %v1296
    %1745 = vmatpush1.msra.mxu0 %v1295
    %1746 = vmatprep.subr.mxu0 %v1298
    %1747 = vmatpush1.msra.mxu0 %v1297
    %1748 = vmatprep.subr.mxu0 %v1300
    %1749 = vmatpush1.msra.mxu0 %v1299
    %1750 = vmatprep.subr.mxu0 %v1302
    %1751 = vmatpush1.msra.mxu0 %v1301
    %1752 = vmatprep.subr.mxu0 %v1304
    %1753 = vmatpush1.msra.mxu0 %v1303
    %1754 = vmatprep.subr.mxu0 %v1306
    %1755 = vmatpush1.msra.mxu0 %v1305
    %1756 = vmatprep.subr.mxu0 %v1308
    %1757 = vmatpush1.msra.mxu0 %v1307
    %1758 = vmatprep.subr.mxu0 %v1310
    %1759 = vmatpush1.msra.mxu0 %v1309
    %1760 = vmatprep.subr.mxu0 %v1312
    %1761 = vmatpush1.msra.mxu0 %v1311
    %1762 = vmatprep.subr.mxu0 %v1314
    %1763 = vmatpush1.msra.mxu0 %v1313
    %1764 = vmatprep.subr.mxu0 %v1316
    %1765 = vmatpush1.msra.mxu0 %v1315
    %1766 = vmatprep.subr.mxu0 %v1318
    %1767 = vmatpush1.msra.mxu0 %v1317
    %1768 = vmatprep.subr.mxu0 %v1320
    %1769 = vmatpush1.msra.mxu0 %v1319
    %1770 = vmatprep.subr.mxu0 %v1322
    %1771 = vmatpush1.msra.mxu0 %v1321
    %1772 = vmatprep.subr.mxu0 %v1324
    %1773 = vmatpush1.msra.mxu0 %v1323
    %1774 = vmatprep.subr.mxu0 %v1326
    %1775 = vmatpush1.msra.mxu0 %v1325
    %1776 = vmatprep.subr.mxu0 %v1328
    %1777 = vmatpush1.msra.mxu0 %v1327
    %1778 = vmatprep.subr.mxu0 %v1330
    %1779 = vmatpush1.msra.mxu0 %v1329
    %1780 = vmatprep.subr.mxu0 %v1332
    %1781 = vmatpush1.msra.mxu0 %v1331
    %1782 = vmatprep.subr.mxu0 %v1334
    %1783 = vmatpush1.msra.mxu0 %v1333
    %1784 = vmatprep.subr.mxu0 %v1336
    %1785 = vmatpush1.msra.mxu0 %v1335
    %1786 = vmatprep.subr.mxu0 %v1338
    %1787 = vmatpush1.msra.mxu0 %v1337
    %1788 = vmatprep.subr.mxu0 %v1340
    %1789 = vmatpush1.msra.mxu0 %v1339
    %1790 = vmatprep.subr.mxu0 %v1342
    %1791 = vmatpush1.msra.mxu0 %v1341
    %1792 = vmatprep.subr.mxu0 %v1344
    %1793 = vmatpush1.msra.mxu0 %v1343
    %1794 = vmatprep.subr.mxu0 %v1346
    %1795 = vmatpush1.msra.mxu0 %v1345
    %1796 = vmatprep.subr.mxu0 %v1348
    %1797 = vmatpush1.msra.mxu0 %v1347
    %1798 = vmatprep.subr.mxu0 %v1350
    %1799 = vmatpush1.msra.mxu0 %v1349
    %1800 = vmatprep.subr.mxu0 %v1352
    %1801 = vmatpush1.msra.mxu0 %v1351
    %1802 = vmatprep.subr.mxu0 %v1354
    %1803 = vmatpush1.msra.mxu0 %v1353
    %1804 = vmatprep.mubr.f32.mxu0 %v49
    %1805 = vmatmul.mubr.f32.gmra.mrb[0].mxu0 %v48
    %v1806 = vpop.f32.mrb[0].mxu0
    %v1807 = vadd.f32 %v1736, %v1806
    %v1808 = vpop.f32.mrb[0].mxu0
    %v1809 = vadd.f32 %v1738, %v1808
    %1810 = vdwg.mxu0
    %1811 = vmatprep.subr.mxu0 %v1356
    %1812 = vmatpush1.msra.mxu0 %v1355
    %1813 = vmatprep.subr.mxu0 %v1358
    %1814 = vmatpush1.msra.mxu0 %v1357
    %1815 = vmatprep.subr.mxu0 %v1360
    %1816 = vmatpush1.msra.mxu0 %v1359
    %1817 = vmatprep.subr.mxu0 %v1362
    %1818 = vmatpush1.msra.mxu0 %v1361
    %1819 = vmatprep.subr.mxu0 %v1364
    %1820 = vmatpush1.msra.mxu0 %v1363
    %1821 = vmatprep.subr.mxu0 %v1366
    %1822 = vmatpush1.msra.mxu0 %v1365
    %1823 = vmatprep.subr.mxu0 %v1368
    %1824 = vmatpush1.msra.mxu0 %v1367
    %1825 = vmatprep.subr.mxu0 %v1370
    %1826 = vmatpush1.msra.mxu0 %v1369
    %1827 = vmatprep.subr.mxu0 %v1372
    %1828 = vmatpush1.msra.mxu0 %v1371
    %1829 = vmatprep.subr.mxu0 %v1374
    %1830 = vmatpush1.msra.mxu0 %v1373
    %1831 = vmatprep.subr.mxu0 %v1376
    %1832 = vmatpush1.msra.mxu0 %v1375
    %1833 = vmatprep.subr.mxu0 %v1383
    %1834 = vmatpush1.msra.mxu0 %v1380
    %1835 = vmatprep.subr.mxu0 0.0
    %1836 = vmatpush1.msra.mxu0 0.0
    %1837 = vmatprep.subr.mxu0 0.0
    %1838 = vmatpush1.msra.mxu0 0.0
    %1839 = vmatprep.subr.mxu0 0.0
    %1840 = vmatpush1.msra.mxu0 0.0
    %1841 = vmatprep.subr.mxu0 0.0
    %1842 = vmatpush1.msra.mxu0 0.0
    %1843 = vmatprep.subr.mxu0 0.0
    %1844 = vmatpush1.msra.mxu0 0.0
    %1845 = vmatprep.subr.mxu0 0.0
    %1846 = vmatpush1.msra.mxu0 0.0
    %1847 = vmatprep.subr.mxu0 0.0
    %1848 = vmatpush1.msra.mxu0 0.0
    %1849 = vmatprep.subr.mxu0 0.0
    %1850 = vmatpush1.msra.mxu0 0.0
    %1851 = vmatprep.subr.mxu0 0.0
    %1852 = vmatpush1.msra.mxu0 0.0
    %1853 = vmatprep.subr.mxu0 0.0
    %1854 = vmatpush1.msra.mxu0 0.0
    %1855 = vmatprep.subr.mxu0 0.0
    %1856 = vmatpush1.msra.mxu0 0.0
    %1857 = vmatprep.subr.mxu0 0.0
    %1858 = vmatpush1.msra.mxu0 0.0
    %1859 = vmatprep.subr.mxu0 0.0
    %1860 = vmatpush1.msra.mxu0 0.0
    %1861 = vmatprep.subr.mxu0 0.0
    %1862 = vmatpush1.msra.mxu0 0.0
    %1863 = vmatprep.subr.mxu0 0.0
    %1864 = vmatpush1.msra.mxu0 0.0
    %1865 = vmatprep.subr.mxu0 0.0
    %1866 = vmatpush1.msra.mxu0 0.0
    %1867 = vmatprep.subr.mxu0 0.0
    %1868 = vmatpush1.msra.mxu0 0.0
    %1869 = vmatprep.subr.mxu0 0.0
    %1870 = vmatpush1.msra.mxu0 0.0
    %1871 = vmatprep.subr.mxu0 0.0
    %1872 = vmatpush1.msra.mxu0 0.0
    %1873 = vmatprep.subr.mxu0 0.0
    %1874 = vmatpush1.msra.mxu0 0.0
    %1875 = vmatprep.mubr.f32.mxu0 0.0
    %1876 = vmatmul.mubr.f32.gmra.mrb[0].mxu0 %v461
    %v1877 = vpop.f32.mrb[0].mxu0
    %v1878 = vadd.f32 %v1807, %v1877
    %v1879 = vpop.f32.mrb[0].mxu0
    %v1880 = vadd.f32 %v1809, %v1879
    %1881 = vdwg.mxu0
    %s1882 = scalar_lea.vmem [#allocation7], 16
    %1883 = vst.msk [vmem:[%s1882] sm:$0xff] %vm967, %v1878
    %s1884 = scalar_lea.vmem [#allocation7], 24
    %1885 = vst.msk [vmem:[%s1884] sm:$0xff] %vm967, %v1880
    %v1886 = vld [vmem:[#allocation5 + $0x20] sm:$0xff]
    %v1887 = vld [vmem:[#allocation5 + $0x28] sm:$0xff]
    %v1888 = vld [vmem:[#allocation5 + $0x88] sm:$0xff]
    %v1889 = vld [vmem:[#allocation5 + $0x90] sm:$0xff]
    %v1890 = vld [vmem:[#allocation5 + $0xf0] sm:$0xff]
    %v1891 = vld [vmem:[#allocation5 + $0xf8] sm:$0xff]
    %v1892 = vld [vmem:[#allocation5 + $0x158] sm:$0xff]
    %v1893 = vld [vmem:[#allocation5 + $0x160] sm:$0xff]
    %v1894 = vld [vmem:[#allocation5 + $0x1c0] sm:$0xff]
    %v1895 = vld [vmem:[#allocation5 + $0x1c8] sm:$0xff]
    %v1896 = vld [vmem:[#allocation5 + $0x228] sm:$0xff]
    %v1897 = vld [vmem:[#allocation5 + $0x230] sm:$0xff]
    %v1898 = vld [vmem:[#allocation5 + $0x290] sm:$0xff]
    %v1899 = vld [vmem:[#allocation5 + $0x298] sm:$0xff]
    %v1900 = vld [vmem:[#allocation5 + $0x2f8] sm:$0xff]
    %v1901 = vld [vmem:[#allocation5 + $0x300] sm:$0xff]
    %v1902 = vld [vmem:[#allocation5 + $0x360] sm:$0xff]
    %v1903 = vld [vmem:[#allocation5 + $0x368] sm:$0xff]
    %v1904 = vld [vmem:[#allocation5 + $0x3c8] sm:$0xff]
    %v1905 = vld [vmem:[#allocation5 + $0x3d0] sm:$0xff]
    %v1906 = vld [vmem:[#allocation5 + $0x430] sm:$0xff]
    %v1907 = vld [vmem:[#allocation5 + $0x438] sm:$0xff]
    %v1908 = vld [vmem:[#allocation5 + $0x498] sm:$0xff]
    %v1909 = vld [vmem:[#allocation5 + $0x4a0] sm:$0xff]
    %v1910 = vld [vmem:[#allocation5 + $0x500] sm:$0xff]
    %v1911 = vld [vmem:[#allocation5 + $0x508] sm:$0xff]
    %v1912 = vld [vmem:[#allocation5 + $0x568] sm:$0xff]
    %v1913 = vld [vmem:[#allocation5 + $0x570] sm:$0xff]
    %v1914 = vld [vmem:[#allocation5 + $0x5d0] sm:$0xff]
    %v1915 = vld [vmem:[#allocation5 + $0x5d8] sm:$0xff]
    %v1916 = vld [vmem:[#allocation5 + $0x638] sm:$0xff]
    %v1917 = vld [vmem:[#allocation5 + $0x640] sm:$0xff]
    %v1918 = vld [vmem:[#allocation5 + $0x6a0] sm:$0xff]
    %v1919 = vld [vmem:[#allocation5 + $0x6a8] sm:$0xff]
    %v1920 = vld [vmem:[#allocation5 + $0x708] sm:$0xff]
    %v1921 = vld [vmem:[#allocation5 + $0x710] sm:$0xff]
    %v1922 = vld [vmem:[#allocation5 + $0x770] sm:$0xff]
    %v1923 = vld [vmem:[#allocation5 + $0x778] sm:$0xff]
    %v1924 = vld [vmem:[#allocation5 + $0x7d8] sm:$0xff]
    %v1925 = vld [vmem:[#allocation5 + $0x7e0] sm:$0xff]
    %v1926 = vld [vmem:[#allocation5 + $0x840] sm:$0xff]
    %v1927 = vld [vmem:[#allocation5 + $0x848] sm:$0xff]
    %v1928 = vld [vmem:[#allocation5 + $0x8a8] sm:$0xff]
    %v1929 = vld [vmem:[#allocation5 + $0x8b0] sm:$0xff]
    %v1930 = vld [vmem:[#allocation5 + $0x910] sm:$0xff]
    %v1931 = vld [vmem:[#allocation5 + $0x918] sm:$0xff]
    %v1932 = vld [vmem:[#allocation5 + $0x978] sm:$0xff]
    %v1933 = vld [vmem:[#allocation5 + $0x980] sm:$0xff]
    %v1934 = vld [vmem:[#allocation5 + $0x9e0] sm:$0xff]
    %v1935 = vld [vmem:[#allocation5 + $0x9e8] sm:$0xff]
    %v1936 = vld [vmem:[#allocation5 + $0xa48] sm:$0xff]
    %v1937 = vld [vmem:[#allocation5 + $0xa50] sm:$0xff]
    %v1938 = vld [vmem:[#allocation5 + $0xab0] sm:$0xff]
    %v1939 = vld [vmem:[#allocation5 + $0xab8] sm:$0xff]
    %v1940 = vld [vmem:[#allocation5 + $0xb18] sm:$0xff]
    %v1941 = vld [vmem:[#allocation5 + $0xb20] sm:$0xff]
    %v1942 = vld [vmem:[#allocation5 + $0xb80] sm:$0xff]
    %v1943 = vld [vmem:[#allocation5 + $0xb88] sm:$0xff]
    %v1944 = vld [vmem:[#allocation5 + $0xbe8] sm:$0xff]
    %v1945 = vld [vmem:[#allocation5 + $0xbf0] sm:$0xff]
    %v1946 = vld [vmem:[#allocation5 + $0xc50] sm:$0xff]
    %v1947 = vld [vmem:[#allocation5 + $0xc58] sm:$0xff]
    %v1948 = vld [vmem:[#allocation5 + $0xcb8] sm:$0xff]
    %v1949 = vld [vmem:[#allocation5 + $0xcc0] sm:$0xff]
    %v1950 = vld [vmem:[#allocation5 + $0xd20] sm:$0xff]
    %v1951 = vld [vmem:[#allocation5 + $0xd28] sm:$0xff]
    %v1952 = vld [vmem:[#allocation5 + $0xd88] sm:$0xff]
    %v1953 = vld [vmem:[#allocation5 + $0xd90] sm:$0xff]
    %v1954 = vld [vmem:[#allocation5 + $0xdf0] sm:$0xff]
    %v1955 = vld [vmem:[#allocation5 + $0xdf8] sm:$0xff]
    %v1956 = vld [vmem:[#allocation5 + $0xe58] sm:$0xff]
    %v1957 = vld [vmem:[#allocation5 + $0xe60] sm:$0xff]
    %v1958 = vld [vmem:[#allocation5 + $0xec0] sm:$0xff]
    %v1959 = vld [vmem:[#allocation5 + $0xec8] sm:$0xff]
    %v1960 = vld [vmem:[#allocation5 + $0xf28] sm:$0xff]
    %v1961 = vld [vmem:[#allocation5 + $0xf30] sm:$0xff]
    %v1962 = vld [vmem:[#allocation5 + $0xf90] sm:$0xff]
    %v1963 = vld [vmem:[#allocation5 + $0xf98] sm:$0xff]
    %v1964 = vld [vmem:[#allocation5 + $0xff8] sm:$0xff]
    %v1965 = vld [vmem:[#allocation5 + $0x1000] sm:$0xff]
    %v1966 = vld [vmem:[#allocation5 + $0x1060] sm:$0xff]
    %v1967 = vld [vmem:[#allocation5 + $0x1068] sm:$0xff]
    %v1968 = vld [vmem:[#allocation5 + $0x10c8] sm:$0xff]
    %v1969 = vld [vmem:[#allocation5 + $0x10d0] sm:$0xff]
    %v1970 = vld [vmem:[#allocation5 + $0x1130] sm:$0xff]
    %v1971 = vld [vmem:[#allocation5 + $0x1138] sm:$0xff]
    %v1972 = vld [vmem:[#allocation5 + $0x1198] sm:$0xff]
    %v1973 = vld [vmem:[#allocation5 + $0x11a0] sm:$0xff]
    %v1974 = vld [vmem:[#allocation5 + $0x1200] sm:$0xff]
    %v1975 = vld [vmem:[#allocation5 + $0x1208] sm:$0xff]
    %v1976 = vld [vmem:[#allocation5 + $0x1268] sm:$0xff]
    %v1977 = vld [vmem:[#allocation5 + $0x1270] sm:$0xff]
    %v1978 = vld [vmem:[#allocation5 + $0x12d0] sm:$0xff]
    %v1979 = vld [vmem:[#allocation5 + $0x12d8] sm:$0xff]
    %v1980 = vld [vmem:[#allocation5 + $0x1338] sm:$0xff]
    %v1981 = vld [vmem:[#allocation5 + $0x1340] sm:$0xff]
    %v1982 = vld [vmem:[#allocation5 + $0x13a0] sm:$0xff]
    %v1983 = vld [vmem:[#allocation5 + $0x13a8] sm:$0xff]
    %v1984 = vld [vmem:[#allocation5 + $0x1408] sm:$0xff]
    %v1985 = vld [vmem:[#allocation5 + $0x1410] sm:$0xff]
    %v1986 = vld [vmem:[#allocation5 + $0x1470] sm:$0xff]
    %v1987 = vld [vmem:[#allocation5 + $0x1478] sm:$0xff]
    %v1988 = vld [vmem:[#allocation5 + $0x14d8] sm:$0xff]
    %v1989 = vld [vmem:[#allocation5 + $0x14e0] sm:$0xff]
    %v1990 = vld [vmem:[#allocation5 + $0x1540] sm:$0xff]
    %v1991 = vld [vmem:[#allocation5 + $0x1548] sm:$0xff]
    %v1992 = vld [vmem:[#allocation5 + $0x15a8] sm:$0xff]
    %v1993 = vld [vmem:[#allocation5 + $0x15b0] sm:$0xff]
    %v1994 = vld [vmem:[#allocation5 + $0x1610] sm:$0xff]
    %v1995 = vld [vmem:[#allocation5 + $0x1618] sm:$0xff]
    %v1996 = vld [vmem:[#allocation5 + $0x1678] sm:$0xff]
    %v1997 = vld [vmem:[#allocation5 + $0x1680] sm:$0xff]
    %v1998 = vld [vmem:[#allocation5 + $0x16e0] sm:$0xff]
    %v1999 = vld [vmem:[#allocation5 + $0x16e8] sm:$0xff]
    %v2000 = vld [vmem:[#allocation5 + $0x1748] sm:$0xff]
    %v2001 = vld [vmem:[#allocation5 + $0x1750] sm:$0xff]
    %v2002 = vld [vmem:[#allocation5 + $0x17b0] sm:$0xff]
    %v2003 = vld [vmem:[#allocation5 + $0x17b8] sm:$0xff]
    %v2004 = vld [vmem:[#allocation5 + $0x1818] sm:$0xff]
    %v2005 = vld [vmem:[#allocation5 + $0x1820] sm:$0xff]
    %v2006 = vld [vmem:[#allocation5 + $0x1880] sm:$0xff]
    %v2007 = vld [vmem:[#allocation5 + $0x1888] sm:$0xff]
    %v2008 = vld [vmem:[#allocation5 + $0x18e8] sm:$0xff]
    %v2009 = vld [vmem:[#allocation5 + $0x18f0] sm:$0xff]
    %v2010 = vld [vmem:[#allocation5 + $0x1950] sm:$0xff]
    %v2011 = vld [vmem:[#allocation5 + $0x1958] sm:$0xff]
    %v2012 = vld [vmem:[#allocation5 + $0x19b8] sm:$0xff]
    %v2013 = vld [vmem:[#allocation5 + $0x19c0] sm:$0xff]
    %v2014 = vld [vmem:[#allocation5 + $0x1a20] sm:$0xff]
    %v2015 = vld [vmem:[#allocation5 + $0x1a28] sm:$0xff]
    %v2016 = vld [vmem:[#allocation5 + $0x1a88] sm:$0xff]
    %v2017 = vld [vmem:[#allocation5 + $0x1a90] sm:$0xff]
    %v2018 = vld [vmem:[#allocation5 + $0x1af0] sm:$0xff]
    %v2019 = vld [vmem:[#allocation5 + $0x1af8] sm:$0xff]
    %v2020 = vld [vmem:[#allocation5 + $0x1b58] sm:$0xff]
    %v2021 = vld [vmem:[#allocation5 + $0x1b60] sm:$0xff]
    %v2022 = vld [vmem:[#allocation5 + $0x1bc0] sm:$0xff]
    %v2023 = vld [vmem:[#allocation5 + $0x1bc8] sm:$0xff]
    %v2024 = vld [vmem:[#allocation5 + $0x1c28] sm:$0xff]
    %v2025 = vld [vmem:[#allocation5 + $0x1c30] sm:$0xff]
    %v2026 = vld [vmem:[#allocation5 + $0x1c90] sm:$0xff]
    %v2027 = vld [vmem:[#allocation5 + $0x1c98] sm:$0xff]
    %v2028 = vld [vmem:[#allocation5 + $0x1cf8] sm:$0xff]
    %v2029 = vld [vmem:[#allocation5 + $0x1d00] sm:$0xff]
    %v2030 = vld [vmem:[#allocation5 + $0x1d60] sm:$0xff]
    %v2031 = vld [vmem:[#allocation5 + $0x1d68] sm:$0xff]
    %v2032 = vld [vmem:[#allocation5 + $0x1dc8] sm:$0xff]
    %v2033 = vld [vmem:[#allocation5 + $0x1dd0] sm:$0xff]
    %v2034 = vld [vmem:[#allocation5 + $0x1e30] sm:$0xff]
    %v2035 = vld [vmem:[#allocation5 + $0x1e38] sm:$0xff]
    %v2036 = vld [vmem:[#allocation5 + $0x1e98] sm:$0xff]
    %v2037 = vld [vmem:[#allocation5 + $0x1ea0] sm:$0xff]
    %v2038 = vld [vmem:[#allocation5 + $0x1f00] sm:$0xff]
    %v2039 = vld [vmem:[#allocation5 + $0x1f08] sm:$0xff]
    %v2040 = vld [vmem:[#allocation5 + $0x1f68] sm:$0xff]
    %v2041 = vld [vmem:[#allocation5 + $0x1f70] sm:$0xff]
    %v2042 = vld [vmem:[#allocation5 + $0x1fd0] sm:$0xff]
    %v2043 = vld [vmem:[#allocation5 + $0x1fd8] sm:$0xff]
    %v2044 = vld [vmem:[#allocation5 + $0x2038] sm:$0xff]
    %v2045 = vld [vmem:[#allocation5 + $0x2040] sm:$0xff]
    %v2046 = vld [vmem:[#allocation5 + $0x20a0] sm:$0xff]
    %v2047 = vld [vmem:[#allocation5 + $0x20a8] sm:$0xff]
    %v2048 = vld [vmem:[#allocation5 + $0x2108] sm:$0xff]
    %v2049 = vld [vmem:[#allocation5 + $0x2110] sm:$0xff]
    %v2050 = vld [vmem:[#allocation5 + $0x2170] sm:$0xff]
    %v2051 = vld [vmem:[#allocation5 + $0x2178] sm:$0xff]
    %v2052 = vld [vmem:[#allocation5 + $0x21d8] sm:$0xff]
    %v2053 = vld [vmem:[#allocation5 + $0x21e0] sm:$0xff]
    %v2054 = vld [vmem:[#allocation5 + $0x2240] sm:$0xff]
    %v2055 = vld [vmem:[#allocation5 + $0x2248] sm:$0xff]
    %v2056 = vld [vmem:[#allocation5 + $0x22a8] sm:$0xff]
    %v2057 = vld [vmem:[#allocation5 + $0x22b0] sm:$0xff]
    %v2058 = vld [vmem:[#allocation5 + $0x2310] sm:$0xff]
    %v2059 = vld [vmem:[#allocation5 + $0x2318] sm:$0xff]
    %v2060 = vld [vmem:[#allocation5 + $0x2378] sm:$0xff]
    %v2061 = vld [vmem:[#allocation5 + $0x2380] sm:$0xff]
    %v2062 = vld [vmem:[#allocation5 + $0x23e0] sm:$0xff]
    %v2063 = vld [vmem:[#allocation5 + $0x23e8] sm:$0xff]
    %v2064 = vld [vmem:[#allocation5 + $0x2448] sm:$0xff]
    %v2065 = vld [vmem:[#allocation5 + $0x2450] sm:$0xff]
    %v2066 = vld [vmem:[#allocation5 + $0x24b0] sm:$0xff]
    %v2067 = vld [vmem:[#allocation5 + $0x24b8] sm:$0xff]
    %v2068 = vld [vmem:[#allocation5 + $0x2518] sm:$0xff]
    %v2069 = vld [vmem:[#allocation5 + $0x2520] sm:$0xff]
    %v2070 = vld [vmem:[#allocation5 + $0x2580] sm:$0xff]
    %v2071 = vld [vmem:[#allocation5 + $0x2588] sm:$0xff]
    %v2072 = vld [vmem:[#allocation5 + $0x25e8] sm:$0xff]
    %v2073 = vld [vmem:[#allocation5 + $0x25f0] sm:$0xff]
    %v2074 = vld [vmem:[#allocation5 + $0x2650] sm:$0xff]
    %v2075 = vld [vmem:[#allocation5 + $0x2658] sm:$0xff]
    %v2076 = vld [vmem:[#allocation5 + $0x26b8] sm:$0xff]
    %v2077 = vld [vmem:[#allocation5 + $0x26c0] sm:$0xff]
    %v2078 = vld [vmem:[#allocation5 + $0x2720] sm:$0xff]
    %v2079 = vld [vmem:[#allocation5 + $0x2728] sm:$0xff]
    %v2080 = vld [vmem:[#allocation5 + $0x2788] sm:$0xff]
    %v2081 = vld [vmem:[#allocation5 + $0x2790] sm:$0xff]
    %v2082 = vld [vmem:[#allocation5 + $0x27f0] sm:$0xff]
    %v2083 = vld [vmem:[#allocation5 + $0x27f8] sm:$0xff]
    %v2084 = vld [vmem:[#allocation5 + $0x2858] sm:$0xff]
    %v2085 = vld [vmem:[#allocation5 + $0x2860] sm:$0xff]
    %v2086 = vld [vmem:[#allocation5 + $0x28c0] sm:$0xff]
    %v2087 = vld [vmem:[#allocation5 + $0x28c8] sm:$0xff]
    %v2088 = vld [vmem:[#allocation5 + $0x2928] sm:$0xff]
    %v2089 = vld [vmem:[#allocation5 + $0x2930] sm:$0xff]
    %v2090 = vld [vmem:[#allocation5 + $0x2990] sm:$0xff]
    %v2091 = vld [vmem:[#allocation5 + $0x2998] sm:$0xff]
    %v2092 = vld [vmem:[#allocation5 + $0x29f8] sm:$0xff]
    %v2093 = vld [vmem:[#allocation5 + $0x2a00] sm:$0xff]
    %v2094 = vld [vmem:[#allocation5 + $0x2a60] sm:$0xff]
    %v2095 = vld [vmem:[#allocation5 + $0x2a68] sm:$0xff]
    %v2096 = vld [vmem:[#allocation5 + $0x2ac8] sm:$0xff]
    %v2097 = vld [vmem:[#allocation5 + $0x2ad0] sm:$0xff]
    %v2098 = vld [vmem:[#allocation5 + $0x2b30] sm:$0xff]
    %v2099 = vld [vmem:[#allocation5 + $0x2b38] sm:$0xff]
    %v2100 = vld [vmem:[#allocation5 + $0x2b98] sm:$0xff]
    %v2101 = vld [vmem:[#allocation5 + $0x2ba0] sm:$0xff]
    %v2102 = vld [vmem:[#allocation5 + $0x2c00] sm:$0xff]
    %v2103 = vld [vmem:[#allocation5 + $0x2c08] sm:$0xff]
    %v2104 = vld [vmem:[#allocation5 + $0x2c68] sm:$0xff]
    %v2105 = vld [vmem:[#allocation5 + $0x2c70] sm:$0xff]
    %v2106 = vld [vmem:[#allocation5 + $0x2cd0] sm:$0xff]
    %v2107 = vld [vmem:[#allocation5 + $0x2cd8] sm:$0xff]
    %v2108 = vld [vmem:[#allocation5 + $0x2d38] sm:$0xff]
    %v2109 = vld [vmem:[#allocation5 + $0x2d40] sm:$0xff]
    %v2110 = vld [vmem:[#allocation5 + $0x2da0] sm:$0xff]
    %v2111 = vld [vmem:[#allocation5 + $0x2da8] sm:$0xff]
    %v2112 = vld [vmem:[#allocation5 + $0x2e08] sm:$0xff]
    %v2113 = vld [vmem:[#allocation5 + $0x2e10] sm:$0xff]
    %v2114 = vld [vmem:[#allocation5 + $0x2e70] sm:$0xff]
    %v2115 = vld [vmem:[#allocation5 + $0x2e78] sm:$0xff]
    %v2116 = vld [vmem:[#allocation5 + $0x2ed8] sm:$0xff]
    %v2117 = vld [vmem:[#allocation5 + $0x2ee0] sm:$0xff]
    %v2118 = vld [vmem:[#allocation5 + $0x2f40] sm:$0xff]
    %v2119 = vld [vmem:[#allocation5 + $0x2f48] sm:$0xff]
    %v2120 = vld [vmem:[#allocation5 + $0x2fa8] sm:$0xff]
    %v2121 = vld [vmem:[#allocation5 + $0x2fb0] sm:$0xff]
    %v2122 = vld [vmem:[#allocation5 + $0x3010] sm:$0xff]
    %v2123 = vld [vmem:[#allocation5 + $0x3018] sm:$0xff]
    %v2124 = vld [vmem:[#allocation5 + $0x3078] sm:$0xff]
    %v2125 = vld [vmem:[#allocation5 + $0x3080] sm:$0xff]
    %v2126 = vld [vmem:[#allocation5 + $0x30e0] sm:$0xff]
    %v2127 = vld [vmem:[#allocation5 + $0x30e8] sm:$0xff]
    %v2128 = vld [vmem:[#allocation5 + $0x3148] sm:$0xff]
    %v2129 = vld [vmem:[#allocation5 + $0x3150] sm:$0xff]
    %v2130 = vld [vmem:[#allocation5 + $0x31b0] sm:$0xff]
    %v2131 = vld [vmem:[#allocation5 + $0x31b8] sm:$0xff]
    %v2132 = vld [vmem:[#allocation5 + $0x3218] sm:$0xff]
    %v2133 = vld [vmem:[#allocation5 + $0x3220] sm:$0xff]
    %v2134 = vld [vmem:[#allocation5 + $0x3280] sm:$0xff]
    %v2135 = vld [vmem:[#allocation5 + $0x3288] sm:$0xff]
    %v2136 = vld [vmem:[#allocation5 + $0x32e8] sm:$0xff]
    %v2137 = vld [vmem:[#allocation5 + $0x32f0] sm:$0xff]
    %v2138 = vld [vmem:[#allocation5 + $0x3350] sm:$0xff]
    %v2139 = vld [vmem:[#allocation5 + $0x3358] sm:$0xff]
    %v2140 = vld [vmem:[#allocation5 + $0x33b8] sm:$0xff]
    %v2141 = vld [vmem:[#allocation5 + $0x33c0] sm:$0xff]
    %v2142 = vld [vmem:[#allocation5 + $0x3420] sm:$0xff]
    %v2143 = vld [vmem:[#allocation5 + $0x3428] sm:$0xff]
    %v2144 = vld [vmem:[#allocation5 + $0x3488] sm:$0xff]
    %v2145 = vld [vmem:[#allocation5 + $0x3490] sm:$0xff]
    %v2146 = vld [vmem:[#allocation5 + $0x34f0] sm:$0xff]
    %v2147 = vld [vmem:[#allocation5 + $0x34f8] sm:$0xff]
    %v2148 = vld [vmem:[#allocation5 + $0x3558] sm:$0xff]
    %v2149 = vld [vmem:[#allocation5 + $0x3560] sm:$0xff]
    %v2150 = vld [vmem:[#allocation5 + $0x35c0] sm:$0xff]
    %v2151 = vld [vmem:[#allocation5 + $0x35c8] sm:$0xff]
    %v2152 = vld [vmem:[#allocation5 + $0x3628] sm:$0xff]
    %v2153 = vld [vmem:[#allocation5 + $0x3630] sm:$0xff]
    %v2154 = vld [vmem:[#allocation5 + $0x3690] sm:$0xff]
    %v2155 = vld [vmem:[#allocation5 + $0x3698] sm:$0xff]
    %v2156 = vld [vmem:[#allocation5 + $0x36f8] sm:$0xff]
    %v2157 = vld [vmem:[#allocation5 + $0x3700] sm:$0xff]
    %v2158 = vld [vmem:[#allocation5 + $0x3760] sm:$0xff]
    %v2159 = vld [vmem:[#allocation5 + $0x3768] sm:$0xff]
    %v2160 = vld [vmem:[#allocation5 + $0x37c8] sm:$0xff]
    %v2161 = vld [vmem:[#allocation5 + $0x37d0] sm:$0xff]
    %v2162 = vld [vmem:[#allocation5 + $0x3830] sm:$0xff]
    %v2163 = vld [vmem:[#allocation5 + $0x3838] sm:$0xff]
    %v2164 = vld [vmem:[#allocation5 + $0x3898] sm:$0xff]
    %v2165 = vld [vmem:[#allocation5 + $0x38a0] sm:$0xff]
    %v2166 = vld [vmem:[#allocation5 + $0x3900] sm:$0xff]
    %v2167 = vld [vmem:[#allocation5 + $0x3908] sm:$0xff]
    %v2168 = vld [vmem:[#allocation5 + $0x3968] sm:$0xff]
    %v2169 = vld [vmem:[#allocation5 + $0x3970] sm:$0xff]
    %v2170 = vld [vmem:[#allocation5 + $0x39d0] sm:$0xff]
    %v2171 = vld [vmem:[#allocation5 + $0x39d8] sm:$0xff]
    %v2172 = vld [vmem:[#allocation5 + $0x3a38] sm:$0xff]
    %v2173 = vld [vmem:[#allocation5 + $0x3a40] sm:$0xff]
    %v2174 = vld [vmem:[#allocation5 + $0x3aa0] sm:$0xff]
    %v2175 = vld [vmem:[#allocation5 + $0x3aa8] sm:$0xff]
    %v2176 = vld [vmem:[#allocation5 + $0x3b08] sm:$0xff]
    %v2177 = vld [vmem:[#allocation5 + $0x3b10] sm:$0xff]
    %v2178 = vld [vmem:[#allocation5 + $0x3b70] sm:$0xff]
    %v2179 = vld [vmem:[#allocation5 + $0x3b78] sm:$0xff]
    %v2180 = vld [vmem:[#allocation5 + $0x3bd8] sm:$0xff]
    %v2181 = vld [vmem:[#allocation5 + $0x3be0] sm:$0xff]
    %v2182 = vld [vmem:[#allocation5 + $0x3c40] sm:$0xff]
    %v2183 = vld [vmem:[#allocation5 + $0x3c48] sm:$0xff]
    %v2184 = vld [vmem:[#allocation5 + $0x3ca8] sm:$0xff]
    %v2185 = vld [vmem:[#allocation5 + $0x3cb0] sm:$0xff]
    %v2186 = vld [vmem:[#allocation5 + $0x3d10] sm:$0xff]
    %v2187 = vld [vmem:[#allocation5 + $0x3d18] sm:$0xff]
    %v2188 = vld [vmem:[#allocation5 + $0x3d78] sm:$0xff]
    %v2189 = vld [vmem:[#allocation5 + $0x3d80] sm:$0xff]
    %v2190 = vld [vmem:[#allocation5 + $0x3de0] sm:$0xff]
    %v2191 = vld [vmem:[#allocation5 + $0x3de8] sm:$0xff]
    %v2192 = vld [vmem:[#allocation5 + $0x3e48] sm:$0xff]
    %v2193 = vld [vmem:[#allocation5 + $0x3e50] sm:$0xff]
    %v2194 = vld [vmem:[#allocation5 + $0x3eb0] sm:$0xff]
    %v2195 = vld [vmem:[#allocation5 + $0x3eb8] sm:$0xff]
    %v2196 = vld [vmem:[#allocation5 + $0x3f18] sm:$0xff]
    %v2197 = vld [vmem:[#allocation5 + $0x3f20] sm:$0xff]
    %v2198 = vld [vmem:[#allocation5 + $0x3f80] sm:$0xff]
    %v2199 = vld [vmem:[#allocation5 + $0x3f88] sm:$0xff]
    %v2200 = vld [vmem:[#allocation5 + $0x3fe8] sm:$0xff]
    %v2201 = vld [vmem:[#allocation5 + $0x3ff0] sm:$0xff]
    %v2202 = vld [vmem:[#allocation5 + $0x4050] sm:$0xff]
    %v2203 = vld [vmem:[#allocation5 + $0x4058] sm:$0xff]
    %v2204 = vld [vmem:[#allocation5 + $0x40b8] sm:$0xff]
    %v2205 = vld [vmem:[#allocation5 + $0x40c0] sm:$0xff]
    %v2206 = vld [vmem:[#allocation5 + $0x4120] sm:$0xff]
    %v2207 = vld [vmem:[#allocation5 + $0x4128] sm:$0xff]
    %v2208 = vld [vmem:[#allocation5 + $0x4188] sm:$0xff]
    %v2209 = vld [vmem:[#allocation5 + $0x4190] sm:$0xff]
    %v2210 = vld [vmem:[#allocation5 + $0x41f0] sm:$0xff]
    %v2211 = vld [vmem:[#allocation5 + $0x41f8] sm:$0xff]
    %v2212 = vld [vmem:[#allocation5 + $0x4258] sm:$0xff]
    %v2213 = vld [vmem:[#allocation5 + $0x4260] sm:$0xff]
    %v2214 = vld [vmem:[#allocation5 + $0x42c0] sm:$0xff]
    %v2215 = vld [vmem:[#allocation5 + $0x42c8] sm:$0xff]
    %v2216 = vld [vmem:[#allocation5 + $0x4328] sm:$0xff]
    %v2217 = vld [vmem:[#allocation5 + $0x4330] sm:$0xff]
    %v2218 = vld [vmem:[#allocation5 + $0x4390] sm:$0xff]
    %v2219 = vld [vmem:[#allocation5 + $0x4398] sm:$0xff]
    %v2220 = vld [vmem:[#allocation5 + $0x43f8] sm:$0xff]
    %v2221 = vld [vmem:[#allocation5 + $0x4400] sm:$0xff]
    %v2222 = vld [vmem:[#allocation5 + $0x4460] sm:$0xff]
    %v2223 = vld [vmem:[#allocation5 + $0x4468] sm:$0xff]
    %v2224 = vld [vmem:[#allocation5 + $0x44c8] sm:$0xff]
    %v2225 = vld [vmem:[#allocation5 + $0x44d0] sm:$0xff]
    %v2226 = vld [vmem:[#allocation5 + $0x4530] sm:$0xff]
    %v2227 = vld [vmem:[#allocation5 + $0x4538] sm:$0xff]
    %v2228 = vld [vmem:[#allocation5 + $0x4598] sm:$0xff]
    %v2229 = vld [vmem:[#allocation5 + $0x45a0] sm:$0xff]
    %v2230 = vld [vmem:[#allocation5 + $0x4600] sm:$0xff]
    %v2231 = vld [vmem:[#allocation5 + $0x4608] sm:$0xff]
    %v2232 = vld [vmem:[#allocation5 + $0x4668] sm:$0xff]
    %v2233 = vld [vmem:[#allocation5 + $0x4670] sm:$0xff]
    %v2234 = vld [vmem:[#allocation5 + $0x46d0] sm:$0xff]
    %v2235 = vld [vmem:[#allocation5 + $0x46d8] sm:$0xff]
    %v2236 = vld [vmem:[#allocation5 + $0x4738] sm:$0xff]
    %v2237 = vld [vmem:[#allocation5 + $0x4740] sm:$0xff]
    %v2238 = vld [vmem:[#allocation5 + $0x47a0] sm:$0xff]
    %v2239 = vld [vmem:[#allocation5 + $0x47a8] sm:$0xff]
    %v2240 = vld [vmem:[#allocation5 + $0x4808] sm:$0xff]
    %v2241 = vld [vmem:[#allocation5 + $0x4810] sm:$0xff]
    %v2242 = vld [vmem:[#allocation5 + $0x4870] sm:$0xff]
    %v2243 = vld [vmem:[#allocation5 + $0x4878] sm:$0xff]
    %v2244 = vld [vmem:[#allocation5 + $0x48d8] sm:$0xff]
    %v2245 = vld [vmem:[#allocation5 + $0x48e0] sm:$0xff]
    %v2246 = vld [vmem:[#allocation5 + $0x4940] sm:$0xff]
    %v2247 = vld [vmem:[#allocation5 + $0x4948] sm:$0xff]
    %v2248 = vld [vmem:[#allocation5 + $0x49a8] sm:$0xff]
    %v2249 = vld [vmem:[#allocation5 + $0x49b0] sm:$0xff]
    %v2250 = vld [vmem:[#allocation5 + $0x4a10] sm:$0xff]
    %v2251 = vld [vmem:[#allocation5 + $0x4a18] sm:$0xff]
    %v2252 = vld [vmem:[#allocation5 + $0x4a78] sm:$0xff]
    %v2253 = vld [vmem:[#allocation5 + $0x4a80] sm:$0xff]
    %v2254 = vld [vmem:[#allocation5 + $0x4ae0] sm:$0xff]
    %v2255 = vld [vmem:[#allocation5 + $0x4ae8] sm:$0xff]
    %v2256 = vld [vmem:[#allocation5 + $0x4b48] sm:$0xff]
    %v2257 = vld [vmem:[#allocation5 + $0x4b50] sm:$0xff]
    %v2258 = vld [vmem:[#allocation5 + $0x4bb0] sm:$0xff]
    %v2259 = vld [vmem:[#allocation5 + $0x4bb8] sm:$0xff]
    %v2260 = vld [vmem:[#allocation5 + $0x4c18] sm:$0xff]
    %v2261 = vld [vmem:[#allocation5 + $0x4c20] sm:$0xff]
    %v2262 = vld [vmem:[#allocation5 + $0x4c80] sm:$0xff]
    %v2263 = vld [vmem:[#allocation5 + $0x4c88] sm:$0xff]
    %v2264 = vld [vmem:[#allocation5 + $0x4ce8] sm:$0xff]
    %v2265 = vld [vmem:[#allocation5 + $0x4cf0] sm:$0xff]
    %v2266 = vld [vmem:[#allocation5 + $0x4d50] sm:$0xff]
    %v2267 = vld [vmem:[#allocation5 + $0x4d58] sm:$0xff]
    %v2268 = vld [vmem:[#allocation5 + $0x4db8] sm:$0xff]
    %v2269 = vld [vmem:[#allocation5 + $0x4dc0] sm:$0xff]
    %v2270 = vld [vmem:[#allocation5 + $0x4e20] sm:$0xff]
    %v2271 = vld [vmem:[#allocation5 + $0x4e28] sm:$0xff]
    %v2272 = vld [vmem:[#allocation5 + $0x4e88] sm:$0xff]
    %v2273 = vld [vmem:[#allocation5 + $0x4e90] sm:$0xff]
    %v2274 = vld [vmem:[#allocation5 + $0x4ef0] sm:$0xff]
    %v2275 = vld [vmem:[#allocation5 + $0x4ef8] sm:$0xff]
    %v2276 = vld [vmem:[#allocation5 + $0x4f58] sm:$0xff]
    %v2277 = vld [vmem:[#allocation5 + $0x4f60] sm:$0xff]
    %v2278 = vld [vmem:[#allocation5 + $0x4fc0] sm:$0xff]
    %v2279 = vld [vmem:[#allocation5 + $0x4fc8] sm:$0xff]
    %v2280 = vld [vmem:[#allocation5 + $0x5028] sm:$0xff]
    %v2281 = vld [vmem:[#allocation5 + $0x5030] sm:$0xff]
    %v2282 = vld [vmem:[#allocation5 + $0x5090] sm:$0xff]
    %v2283 = vld [vmem:[#allocation5 + $0x5098] sm:$0xff]
    %v2284 = vld [vmem:[#allocation5 + $0x50f8] sm:$0xff]
    %v2285 = vld [vmem:[#allocation5 + $0x5100] sm:$0xff]
    %v2286 = vld [vmem:[#allocation5 + $0x5160] sm:$0xff]
    %v2287 = vld [vmem:[#allocation5 + $0x5168] sm:$0xff]
    %v2288 = vld [vmem:[#allocation5 + $0x51c8] sm:$0xff]
    %v2289 = vld [vmem:[#allocation5 + $0x51d0] sm:$0xff]
    %v2290 = vld [vmem:[#allocation5 + $0x5230] sm:$0xff]
    %v2291 = vld [vmem:[#allocation5 + $0x5238] sm:$0xff]
    %v2292 = vld [vmem:[#allocation5 + $0x5298] sm:$0x1]
    %v2293 = vld [vmem:[#allocation5 + $0x52a0] sm:$0x1]
    %v2295 = vsel %vm463, %v2292, 0
    %v2298 = vsel %vm463, %v2293, 0
    %2300 = vmatprep.subr.mxu0 %v1887
    %2301 = vmatpush1.msra.mxu0 %v1886
    %2302 = vmatprep.subr.mxu0 %v1889
    %2303 = vmatpush1.msra.mxu0 %v1888
    %2304 = vmatprep.subr.mxu0 %v1891
    %2305 = vmatpush1.msra.mxu0 %v1890
    %2306 = vmatprep.subr.mxu0 %v1893
    %2307 = vmatpush1.msra.mxu0 %v1892
    %2308 = vmatprep.subr.mxu0 %v1895
    %2309 = vmatpush1.msra.mxu0 %v1894
    %2310 = vmatprep.subr.mxu0 %v1897
    %2311 = vmatpush1.msra.mxu0 %v1896
    %2312 = vmatprep.subr.mxu0 %v1899
    %2313 = vmatpush1.msra.mxu0 %v1898
    %2314 = vmatprep.subr.mxu0 %v1901
    %2315 = vmatpush1.msra.mxu0 %v1900
    %2316 = vmatprep.subr.mxu0 %v1903
    %2317 = vmatpush1.msra.mxu0 %v1902
    %2318 = vmatprep.subr.mxu0 %v1905
    %2319 = vmatpush1.msra.mxu0 %v1904
    %2320 = vmatprep.subr.mxu0 %v1907
    %2321 = vmatpush1.msra.mxu0 %v1906
    %2322 = vmatprep.subr.mxu0 %v1909
    %2323 = vmatpush1.msra.mxu0 %v1908
    %2324 = vmatprep.subr.mxu0 %v1911
    %2325 = vmatpush1.msra.mxu0 %v1910
    %2326 = vmatprep.subr.mxu0 %v1913
    %2327 = vmatpush1.msra.mxu0 %v1912
    %2328 = vmatprep.subr.mxu0 %v1915
    %2329 = vmatpush1.msra.mxu0 %v1914
    %2330 = vmatprep.subr.mxu0 %v1917
    %2331 = vmatpush1.msra.mxu0 %v1916
    %2332 = vmatprep.subr.mxu0 %v1919
    %2333 = vmatpush1.msra.mxu0 %v1918
    %2334 = vmatprep.subr.mxu0 %v1921
    %2335 = vmatpush1.msra.mxu0 %v1920
    %2336 = vmatprep.subr.mxu0 %v1923
    %2337 = vmatpush1.msra.mxu0 %v1922
    %2338 = vmatprep.subr.mxu0 %v1925
    %2339 = vmatpush1.msra.mxu0 %v1924
    %2340 = vmatprep.subr.mxu0 %v1927
    %2341 = vmatpush1.msra.mxu0 %v1926
    %2342 = vmatprep.subr.mxu0 %v1929
    %2343 = vmatpush1.msra.mxu0 %v1928
    %2344 = vmatprep.subr.mxu0 %v1931
    %2345 = vmatpush1.msra.mxu0 %v1930
    %2346 = vmatprep.subr.mxu0 %v1933
    %2347 = vmatpush1.msra.mxu0 %v1932
    %2348 = vmatprep.subr.mxu0 %v1935
    %2349 = vmatpush1.msra.mxu0 %v1934
    %2350 = vmatprep.subr.mxu0 %v1937
    %2351 = vmatpush1.msra.mxu0 %v1936
    %2352 = vmatprep.subr.mxu0 %v1939
    %2353 = vmatpush1.msra.mxu0 %v1938
    %2354 = vmatprep.subr.mxu0 %v1941
    %2355 = vmatpush1.msra.mxu0 %v1940
    %2356 = vmatprep.subr.mxu0 %v1943
    %2357 = vmatpush1.msra.mxu0 %v1942
    %2358 = vmatprep.subr.mxu0 %v1945
    %2359 = vmatpush1.msra.mxu0 %v1944
    %2360 = vmatprep.subr.mxu0 %v1947
    %2361 = vmatpush1.msra.mxu0 %v1946
    %2362 = vmatprep.subr.mxu0 %v1949
    %2363 = vmatpush1.msra.mxu0 %v1948
    %2364 = vmatprep.mubr.f32.mxu0 %v39
    %2365 = vmatmul.mubr.f32.gmra.mrb[0].mxu0 %v38
    %v2366 = vpop.f32.mrb[0].mxu0
    %v2367 = vadd.f32 0.0, %v2366
    %v2368 = vpop.f32.mrb[0].mxu0
    %v2369 = vadd.f32 0.0, %v2368
    %2370 = vdwg.mxu0
    %2371 = vmatprep.subr.mxu0 %v1951
    %2372 = vmatpush1.msra.mxu0 %v1950
    %2373 = vmatprep.subr.mxu0 %v1953
    %2374 = vmatpush1.msra.mxu0 %v1952
    %2375 = vmatprep.subr.mxu0 %v1955
    %2376 = vmatpush1.msra.mxu0 %v1954
    %2377 = vmatprep.subr.mxu0 %v1957
    %2378 = vmatpush1.msra.mxu0 %v1956
    %2379 = vmatprep.subr.mxu0 %v1959
    %2380 = vmatpush1.msra.mxu0 %v1958
    %2381 = vmatprep.subr.mxu0 %v1961
    %2382 = vmatpush1.msra.mxu0 %v1960
    %2383 = vmatprep.subr.mxu0 %v1963
    %2384 = vmatpush1.msra.mxu0 %v1962
    %2385 = vmatprep.subr.mxu0 %v1965
    %2386 = vmatpush1.msra.mxu0 %v1964
    %2387 = vmatprep.subr.mxu0 %v1967
    %2388 = vmatpush1.msra.mxu0 %v1966
    %2389 = vmatprep.subr.mxu0 %v1969
    %2390 = vmatpush1.msra.mxu0 %v1968
    %2391 = vmatprep.subr.mxu0 %v1971
    %2392 = vmatpush1.msra.mxu0 %v1970
    %2393 = vmatprep.subr.mxu0 %v1973
    %2394 = vmatpush1.msra.mxu0 %v1972
    %2395 = vmatprep.subr.mxu0 %v1975
    %2396 = vmatpush1.msra.mxu0 %v1974
    %2397 = vmatprep.subr.mxu0 %v1977
    %2398 = vmatpush1.msra.mxu0 %v1976
    %2399 = vmatprep.subr.mxu0 %v1979
    %2400 = vmatpush1.msra.mxu0 %v1978
    %2401 = vmatprep.subr.mxu0 %v1981
    %2402 = vmatpush1.msra.mxu0 %v1980
    %2403 = vmatprep.subr.mxu0 %v1983
    %2404 = vmatpush1.msra.mxu0 %v1982
    %2405 = vmatprep.subr.mxu0 %v1985
    %2406 = vmatpush1.msra.mxu0 %v1984
    %2407 = vmatprep.subr.mxu0 %v1987
    %2408 = vmatpush1.msra.mxu0 %v1986
    %2409 = vmatprep.subr.mxu0 %v1989
    %2410 = vmatpush1.msra.mxu0 %v1988
    %2411 = vmatprep.subr.mxu0 %v1991
    %2412 = vmatpush1.msra.mxu0 %v1990
    %2413 = vmatprep.subr.mxu0 %v1993
    %2414 = vmatpush1.msra.mxu0 %v1992
    %2415 = vmatprep.subr.mxu0 %v1995
    %2416 = vmatpush1.msra.mxu0 %v1994
    %2417 = vmatprep.subr.mxu0 %v1997
    %2418 = vmatpush1.msra.mxu0 %v1996
    %2419 = vmatprep.subr.mxu0 %v1999
    %2420 = vmatpush1.msra.mxu0 %v1998
    %2421 = vmatprep.subr.mxu0 %v2001
    %2422 = vmatpush1.msra.mxu0 %v2000
    %2423 = vmatprep.subr.mxu0 %v2003
    %2424 = vmatpush1.msra.mxu0 %v2002
    %2425 = vmatprep.subr.mxu0 %v2005
    %2426 = vmatpush1.msra.mxu0 %v2004
    %2427 = vmatprep.subr.mxu0 %v2007
    %2428 = vmatpush1.msra.mxu0 %v2006
    %2429 = vmatprep.subr.mxu0 %v2009
    %2430 = vmatpush1.msra.mxu0 %v2008
    %2431 = vmatprep.subr.mxu0 %v2011
    %2432 = vmatpush1.msra.mxu0 %v2010
    %2433 = vmatprep.subr.mxu0 %v2013
    %2434 = vmatpush1.msra.mxu0 %v2012
    %2435 = vmatprep.mubr.f32.mxu0 %v41
    %2436 = vmatmul.mubr.f32.gmra.mrb[0].mxu0 %v40
    %v2437 = vpop.f32.mrb[0].mxu0
    %v2438 = vadd.f32 %v2367, %v2437
    %v2439 = vpop.f32.mrb[0].mxu0
    %v2440 = vadd.f32 %v2369, %v2439
    %2441 = vdwg.mxu0
    %2442 = vmatprep.subr.mxu0 %v2015
    %2443 = vmatpush1.msra.mxu0 %v2014
    %2444 = vmatprep.subr.mxu0 %v2017
    %2445 = vmatpush1.msra.mxu0 %v2016
    %2446 = vmatprep.subr.mxu0 %v2019
    %2447 = vmatpush1.msra.mxu0 %v2018
    %2448 = vmatprep.subr.mxu0 %v2021
    %2449 = vmatpush1.msra.mxu0 %v2020
    %2450 = vmatprep.subr.mxu0 %v2023
    %2451 = vmatpush1.msra.mxu0 %v2022
    %2452 = vmatprep.subr.mxu0 %v2025
    %2453 = vmatpush1.msra.mxu0 %v2024
    %2454 = vmatprep.subr.mxu0 %v2027
    %2455 = vmatpush1.msra.mxu0 %v2026
    %2456 = vmatprep.subr.mxu0 %v2029
    %2457 = vmatpush1.msra.mxu0 %v2028
    %2458 = vmatprep.subr.mxu0 %v2031
    %2459 = vmatpush1.msra.mxu0 %v2030
    %2460 = vmatprep.subr.mxu0 %v2033
    %2461 = vmatpush1.msra.mxu0 %v2032
    %2462 = vmatprep.subr.mxu0 %v2035
    %2463 = vmatpush1.msra.mxu0 %v2034
    %2464 = vmatprep.subr.mxu0 %v2037
    %2465 = vmatpush1.msra.mxu0 %v2036
    %2466 = vmatprep.subr.mxu0 %v2039
    %2467 = vmatpush1.msra.mxu0 %v2038
    %2468 = vmatprep.subr.mxu0 %v2041
    %2469 = vmatpush1.msra.mxu0 %v2040
    %2470 = vmatprep.subr.mxu0 %v2043
    %2471 = vmatpush1.msra.mxu0 %v2042
    %2472 = vmatprep.subr.mxu0 %v2045
    %2473 = vmatpush1.msra.mxu0 %v2044
    %2474 = vmatprep.subr.mxu0 %v2047
    %2475 = vmatpush1.msra.mxu0 %v2046
    %2476 = vmatprep.subr.mxu0 %v2049
    %2477 = vmatpush1.msra.mxu0 %v2048
    %2478 = vmatprep.subr.mxu0 %v2051
    %2479 = vmatpush1.msra.mxu0 %v2050
    %2480 = vmatprep.subr.mxu0 %v2053
    %2481 = vmatpush1.msra.mxu0 %v2052
    %2482 = vmatprep.subr.mxu0 %v2055
    %2483 = vmatpush1.msra.mxu0 %v2054
    %2484 = vmatprep.subr.mxu0 %v2057
    %2485 = vmatpush1.msra.mxu0 %v2056
    %2486 = vmatprep.subr.mxu0 %v2059
    %2487 = vmatpush1.msra.mxu0 %v2058
    %2488 = vmatprep.subr.mxu0 %v2061
    %2489 = vmatpush1.msra.mxu0 %v2060
    %2490 = vmatprep.subr.mxu0 %v2063
    %2491 = vmatpush1.msra.mxu0 %v2062
    %2492 = vmatprep.subr.mxu0 %v2065
    %2493 = vmatpush1.msra.mxu0 %v2064
    %2494 = vmatprep.subr.mxu0 %v2067
    %2495 = vmatpush1.msra.mxu0 %v2066
    %2496 = vmatprep.subr.mxu0 %v2069
    %2497 = vmatpush1.msra.mxu0 %v2068
    %2498 = vmatprep.subr.mxu0 %v2071
    %2499 = vmatpush1.msra.mxu0 %v2070
    %2500 = vmatprep.subr.mxu0 %v2073
    %2501 = vmatpush1.msra.mxu0 %v2072
    %2502 = vmatprep.subr.mxu0 %v2075
    %2503 = vmatpush1.msra.mxu0 %v2074
    %2504 = vmatprep.subr.mxu0 %v2077
    %2505 = vmatpush1.msra.mxu0 %v2076
    %2506 = vmatprep.mubr.f32.mxu0 %v43
    %2507 = vmatmul.mubr.f32.gmra.mrb[0].mxu0 %v42
    %v2508 = vpop.f32.mrb[0].mxu0
    %v2509 = vadd.f32 %v2438, %v2508
    %v2510 = vpop.f32.mrb[0].mxu0
    %v2511 = vadd.f32 %v2440, %v2510
    %2512 = vdwg.mxu0
    %2513 = vmatprep.subr.mxu0 %v2079
    %2514 = vmatpush1.msra.mxu0 %v2078
    %2515 = vmatprep.subr.mxu0 %v2081
    %2516 = vmatpush1.msra.mxu0 %v2080
    %2517 = vmatprep.subr.mxu0 %v2083
    %2518 = vmatpush1.msra.mxu0 %v2082
    %2519 = vmatprep.subr.mxu0 %v2085
    %2520 = vmatpush1.msra.mxu0 %v2084
    %2521 = vmatprep.subr.mxu0 %v2087
    %2522 = vmatpush1.msra.mxu0 %v2086
    %2523 = vmatprep.subr.mxu0 %v2089
    %2524 = vmatpush1.msra.mxu0 %v2088
    %2525 = vmatprep.subr.mxu0 %v2091
    %2526 = vmatpush1.msra.mxu0 %v2090
    %2527 = vmatprep.subr.mxu0 %v2093
    %2528 = vmatpush1.msra.mxu0 %v2092
    %2529 = vmatprep.subr.mxu0 %v2095
    %2530 = vmatpush1.msra.mxu0 %v2094
    %2531 = vmatprep.subr.mxu0 %v2097
    %2532 = vmatpush1.msra.mxu0 %v2096
    %2533 = vmatprep.subr.mxu0 %v2099
    %2534 = vmatpush1.msra.mxu0 %v2098
    %2535 = vmatprep.subr.mxu0 %v2101
    %2536 = vmatpush1.msra.mxu0 %v2100
    %2537 = vmatprep.subr.mxu0 %v2103
    %2538 = vmatpush1.msra.mxu0 %v2102
    %2539 = vmatprep.subr.mxu0 %v2105
    %2540 = vmatpush1.msra.mxu0 %v2104
    %2541 = vmatprep.subr.mxu0 %v2107
    %2542 = vmatpush1.msra.mxu0 %v2106
    %2543 = vmatprep.subr.mxu0 %v2109
    %2544 = vmatpush1.msra.mxu0 %v2108
    %2545 = vmatprep.subr.mxu0 %v2111
    %2546 = vmatpush1.msra.mxu0 %v2110
    %2547 = vmatprep.subr.mxu0 %v2113
    %2548 = vmatpush1.msra.mxu0 %v2112
    %2549 = vmatprep.subr.mxu0 %v2115
    %2550 = vmatpush1.msra.mxu0 %v2114
    %2551 = vmatprep.subr.mxu0 %v2117
    %2552 = vmatpush1.msra.mxu0 %v2116
    %2553 = vmatprep.subr.mxu0 %v2119
    %2554 = vmatpush1.msra.mxu0 %v2118
    %2555 = vmatprep.subr.mxu0 %v2121
    %2556 = vmatpush1.msra.mxu0 %v2120
    %2557 = vmatprep.subr.mxu0 %v2123
    %2558 = vmatpush1.msra.mxu0 %v2122
    %2559 = vmatprep.subr.mxu0 %v2125
    %2560 = vmatpush1.msra.mxu0 %v2124
    %2561 = vmatprep.subr.mxu0 %v2127
    %2562 = vmatpush1.msra.mxu0 %v2126
    %2563 = vmatprep.subr.mxu0 %v2129
    %2564 = vmatpush1.msra.mxu0 %v2128
    %2565 = vmatprep.subr.mxu0 %v2131
    %2566 = vmatpush1.msra.mxu0 %v2130
    %2567 = vmatprep.subr.mxu0 %v2133
    %2568 = vmatpush1.msra.mxu0 %v2132
    %2569 = vmatprep.subr.mxu0 %v2135
    %2570 = vmatpush1.msra.mxu0 %v2134
    %2571 = vmatprep.subr.mxu0 %v2137
    %2572 = vmatpush1.msra.mxu0 %v2136
    %2573 = vmatprep.subr.mxu0 %v2139
    %2574 = vmatpush1.msra.mxu0 %v2138
    %2575 = vmatprep.subr.mxu0 %v2141
    %2576 = vmatpush1.msra.mxu0 %v2140
    %2577 = vmatprep.mubr.f32.mxu0 %v45
    %2578 = vmatmul.mubr.f32.gmra.mrb[0].mxu0 %v44
    %v2579 = vpop.f32.mrb[0].mxu0
    %v2580 = vadd.f32 %v2509, %v2579
    %v2581 = vpop.f32.mrb[0].mxu0
    %v2582 = vadd.f32 %v2511, %v2581
    %2583 = vdwg.mxu0
    %2584 = vmatprep.subr.mxu0 %v2143
    %2585 = vmatpush1.msra.mxu0 %v2142
    %2586 = vmatprep.subr.mxu0 %v2145
    %2587 = vmatpush1.msra.mxu0 %v2144
    %2588 = vmatprep.subr.mxu0 %v2147
    %2589 = vmatpush1.msra.mxu0 %v2146
    %2590 = vmatprep.subr.mxu0 %v2149
    %2591 = vmatpush1.msra.mxu0 %v2148
    %2592 = vmatprep.subr.mxu0 %v2151
    %2593 = vmatpush1.msra.mxu0 %v2150
    %2594 = vmatprep.subr.mxu0 %v2153
    %2595 = vmatpush1.msra.mxu0 %v2152
    %2596 = vmatprep.subr.mxu0 %v2155
    %2597 = vmatpush1.msra.mxu0 %v2154
    %2598 = vmatprep.subr.mxu0 %v2157
    %2599 = vmatpush1.msra.mxu0 %v2156
    %2600 = vmatprep.subr.mxu0 %v2159
    %2601 = vmatpush1.msra.mxu0 %v2158
    %2602 = vmatprep.subr.mxu0 %v2161
    %2603 = vmatpush1.msra.mxu0 %v2160
    %2604 = vmatprep.subr.mxu0 %v2163
    %2605 = vmatpush1.msra.mxu0 %v2162
    %2606 = vmatprep.subr.mxu0 %v2165
    %2607 = vmatpush1.msra.mxu0 %v2164
    %2608 = vmatprep.subr.mxu0 %v2167
    %2609 = vmatpush1.msra.mxu0 %v2166
    %2610 = vmatprep.subr.mxu0 %v2169
    %2611 = vmatpush1.msra.mxu0 %v2168
    %2612 = vmatprep.subr.mxu0 %v2171
    %2613 = vmatpush1.msra.mxu0 %v2170
    %2614 = vmatprep.subr.mxu0 %v2173
    %2615 = vmatpush1.msra.mxu0 %v2172
    %2616 = vmatprep.subr.mxu0 %v2175
    %2617 = vmatpush1.msra.mxu0 %v2174
    %2618 = vmatprep.subr.mxu0 %v2177
    %2619 = vmatpush1.msra.mxu0 %v2176
    %2620 = vmatprep.subr.mxu0 %v2179
    %2621 = vmatpush1.msra.mxu0 %v2178
    %2622 = vmatprep.subr.mxu0 %v2181
    %2623 = vmatpush1.msra.mxu0 %v2180
    %2624 = vmatprep.subr.mxu0 %v2183
    %2625 = vmatpush1.msra.mxu0 %v2182
    %2626 = vmatprep.subr.mxu0 %v2185
    %2627 = vmatpush1.msra.mxu0 %v2184
    %2628 = vmatprep.subr.mxu0 %v2187
    %2629 = vmatpush1.msra.mxu0 %v2186
    %2630 = vmatprep.subr.mxu0 %v2189
    %2631 = vmatpush1.msra.mxu0 %v2188
    %2632 = vmatprep.subr.mxu0 %v2191
    %2633 = vmatpush1.msra.mxu0 %v2190
    %2634 = vmatprep.subr.mxu0 %v2193
    %2635 = vmatpush1.msra.mxu0 %v2192
    %2636 = vmatprep.subr.mxu0 %v2195
    %2637 = vmatpush1.msra.mxu0 %v2194
    %2638 = vmatprep.subr.mxu0 %v2197
    %2639 = vmatpush1.msra.mxu0 %v2196
    %2640 = vmatprep.subr.mxu0 %v2199
    %2641 = vmatpush1.msra.mxu0 %v2198
    %2642 = vmatprep.subr.mxu0 %v2201
    %2643 = vmatpush1.msra.mxu0 %v2200
    %2644 = vmatprep.subr.mxu0 %v2203
    %2645 = vmatpush1.msra.mxu0 %v2202
    %2646 = vmatprep.subr.mxu0 %v2205
    %2647 = vmatpush1.msra.mxu0 %v2204
    %2648 = vmatprep.mubr.f32.mxu0 %v47
    %2649 = vmatmul.mubr.f32.gmra.mrb[0].mxu0 %v46
    %v2650 = vpop.f32.mrb[0].mxu0
    %v2651 = vadd.f32 %v2580, %v2650
    %v2652 = vpop.f32.mrb[0].mxu0
    %v2653 = vadd.f32 %v2582, %v2652
    %2654 = vdwg.mxu0
    %2655 = vmatprep.subr.mxu0 %v2207
    %2656 = vmatpush1.msra.mxu0 %v2206
    %2657 = vmatprep.subr.mxu0 %v2209
    %2658 = vmatpush1.msra.mxu0 %v2208
    %2659 = vmatprep.subr.mxu0 %v2211
    %2660 = vmatpush1.msra.mxu0 %v2210
    %2661 = vmatprep.subr.mxu0 %v2213
    %2662 = vmatpush1.msra.mxu0 %v2212
    %2663 = vmatprep.subr.mxu0 %v2215
    %2664 = vmatpush1.msra.mxu0 %v2214
    %2665 = vmatprep.subr.mxu0 %v2217
    %2666 = vmatpush1.msra.mxu0 %v2216
    %2667 = vmatprep.subr.mxu0 %v2219
    %2668 = vmatpush1.msra.mxu0 %v2218
    %2669 = vmatprep.subr.mxu0 %v2221
    %2670 = vmatpush1.msra.mxu0 %v2220
    %2671 = vmatprep.subr.mxu0 %v2223
    %2672 = vmatpush1.msra.mxu0 %v2222
    %2673 = vmatprep.subr.mxu0 %v2225
    %2674 = vmatpush1.msra.mxu0 %v2224
    %2675 = vmatprep.subr.mxu0 %v2227
    %2676 = vmatpush1.msra.mxu0 %v2226
    %2677 = vmatprep.subr.mxu0 %v2229
    %2678 = vmatpush1.msra.mxu0 %v2228
    %2679 = vmatprep.subr.mxu0 %v2231
    %2680 = vmatpush1.msra.mxu0 %v2230
    %2681 = vmatprep.subr.mxu0 %v2233
    %2682 = vmatpush1.msra.mxu0 %v2232
    %2683 = vmatprep.subr.mxu0 %v2235
    %2684 = vmatpush1.msra.mxu0 %v2234
    %2685 = vmatprep.subr.mxu0 %v2237
    %2686 = vmatpush1.msra.mxu0 %v2236
    %2687 = vmatprep.subr.mxu0 %v2239
    %2688 = vmatpush1.msra.mxu0 %v2238
    %2689 = vmatprep.subr.mxu0 %v2241
    %2690 = vmatpush1.msra.mxu0 %v2240
    %2691 = vmatprep.subr.mxu0 %v2243
    %2692 = vmatpush1.msra.mxu0 %v2242
    %2693 = vmatprep.subr.mxu0 %v2245
    %2694 = vmatpush1.msra.mxu0 %v2244
    %2695 = vmatprep.subr.mxu0 %v2247
    %2696 = vmatpush1.msra.mxu0 %v2246
    %2697 = vmatprep.subr.mxu0 %v2249
    %2698 = vmatpush1.msra.mxu0 %v2248
    %2699 = vmatprep.subr.mxu0 %v2251
    %2700 = vmatpush1.msra.mxu0 %v2250
    %2701 = vmatprep.subr.mxu0 %v2253
    %2702 = vmatpush1.msra.mxu0 %v2252
    %2703 = vmatprep.subr.mxu0 %v2255
    %2704 = vmatpush1.msra.mxu0 %v2254
    %2705 = vmatprep.subr.mxu0 %v2257
    %2706 = vmatpush1.msra.mxu0 %v2256
    %2707 = vmatprep.subr.mxu0 %v2259
    %2708 = vmatpush1.msra.mxu0 %v2258
    %2709 = vmatprep.subr.mxu0 %v2261
    %2710 = vmatpush1.msra.mxu0 %v2260
    %2711 = vmatprep.subr.mxu0 %v2263
    %2712 = vmatpush1.msra.mxu0 %v2262
    %2713 = vmatprep.subr.mxu0 %v2265
    %2714 = vmatpush1.msra.mxu0 %v2264
    %2715 = vmatprep.subr.mxu0 %v2267
    %2716 = vmatpush1.msra.mxu0 %v2266
    %2717 = vmatprep.subr.mxu0 %v2269
    %2718 = vmatpush1.msra.mxu0 %v2268
    %2719 = vmatprep.mubr.f32.mxu0 %v49
    %2720 = vmatmul.mubr.f32.gmra.mrb[0].mxu0 %v48
    %v2721 = vpop.f32.mrb[0].mxu0
    %v2722 = vadd.f32 %v2651, %v2721
    %v2723 = vpop.f32.mrb[0].mxu0
    %v2724 = vadd.f32 %v2653, %v2723
    %2725 = vdwg.mxu0
    %2726 = vmatprep.subr.mxu0 %v2271
    %2727 = vmatpush1.msra.mxu0 %v2270
    %2728 = vmatprep.subr.mxu0 %v2273
    %2729 = vmatpush1.msra.mxu0 %v2272
    %2730 = vmatprep.subr.mxu0 %v2275
    %2731 = vmatpush1.msra.mxu0 %v2274
    %2732 = vmatprep.subr.mxu0 %v2277
    %2733 = vmatpush1.msra.mxu0 %v2276
    %2734 = vmatprep.subr.mxu0 %v2279
    %2735 = vmatpush1.msra.mxu0 %v2278
    %2736 = vmatprep.subr.mxu0 %v2281
    %2737 = vmatpush1.msra.mxu0 %v2280
    %2738 = vmatprep.subr.mxu0 %v2283
    %2739 = vmatpush1.msra.mxu0 %v2282
    %2740 = vmatprep.subr.mxu0 %v2285
    %2741 = vmatpush1.msra.mxu0 %v2284
    %2742 = vmatprep.subr.mxu0 %v2287
    %2743 = vmatpush1.msra.mxu0 %v2286
    %2744 = vmatprep.subr.mxu0 %v2289
    %2745 = vmatpush1.msra.mxu0 %v2288
    %2746 = vmatprep.subr.mxu0 %v2291
    %2747 = vmatpush1.msra.mxu0 %v2290
    %2748 = vmatprep.subr.mxu0 %v2298
    %2749 = vmatpush1.msra.mxu0 %v2295
    %2750 = vmatprep.subr.mxu0 0.0
    %2751 = vmatpush1.msra.mxu0 0.0
    %2752 = vmatprep.subr.mxu0 0.0
    %2753 = vmatpush1.msra.mxu0 0.0
    %2754 = vmatprep.subr.mxu0 0.0
    %2755 = vmatpush1.msra.mxu0 0.0
    %2756 = vmatprep.subr.mxu0 0.0
    %2757 = vmatpush1.msra.mxu0 0.0
    %2758 = vmatprep.subr.mxu0 0.0
    %2759 = vmatpush1.msra.mxu0 0.0
    %2760 = vmatprep.subr.mxu0 0.0
    %2761 = vmatpush1.msra.mxu0 0.0
    %2762 = vmatprep.subr.mxu0 0.0
    %2763 = vmatpush1.msra.mxu0 0.0
    %2764 = vmatprep.subr.mxu0 0.0
    %2765 = vmatpush1.msra.mxu0 0.0
    %2766 = vmatprep.subr.mxu0 0.0
    %2767 = vmatpush1.msra.mxu0 0.0
    %2768 = vmatprep.subr.mxu0 0.0
    %2769 = vmatpush1.msra.mxu0 0.0
    %2770 = vmatprep.subr.mxu0 0.0
    %2771 = vmatpush1.msra.mxu0 0.0
    %2772 = vmatprep.subr.mxu0 0.0
    %2773 = vmatpush1.msra.mxu0 0.0
    %2774 = vmatprep.subr.mxu0 0.0
    %2775 = vmatpush1.msra.mxu0 0.0
    %2776 = vmatprep.subr.mxu0 0.0
    %2777 = vmatpush1.msra.mxu0 0.0
    %2778 = vmatprep.subr.mxu0 0.0
    %2779 = vmatpush1.msra.mxu0 0.0
    %2780 = vmatprep.subr.mxu0 0.0
    %2781 = vmatpush1.msra.mxu0 0.0
    %2782 = vmatprep.subr.mxu0 0.0
    %2783 = vmatpush1.msra.mxu0 0.0
    %2784 = vmatprep.subr.mxu0 0.0
    %2785 = vmatpush1.msra.mxu0 0.0
    %2786 = vmatprep.subr.mxu0 0.0
    %2787 = vmatpush1.msra.mxu0 0.0
    %2788 = vmatprep.subr.mxu0 0.0
    %2789 = vmatpush1.msra.mxu0 0.0
    %2790 = vmatprep.mubr.f32.mxu0 0.0
    %2791 = vmatmul.mubr.f32.gmra.mrb[0].mxu0 %v461
    %v2792 = vpop.f32.mrb[0].mxu0
    %v2793 = vadd.f32 %v2722, %v2792
    %v2794 = vpop.f32.mrb[0].mxu0
    %v2795 = vadd.f32 %v2724, %v2794
    %2796 = vdwg.mxu0
    %s2797 = scalar_lea.vmem [#allocation7], 32
    %2798 = vst.msk [vmem:[%s2797] sm:$0xff] %vm967, %v2793
    %s2799 = scalar_lea.vmem [#allocation7], 40
    %2800 = vst.msk [vmem:[%s2799] sm:$0xff] %vm967, %v2795
    %v2801 = vld [vmem:[#allocation5 + $0x30] sm:$0xff]
    %v2802 = vld [vmem:[#allocation5 + $0x38] sm:$0xff]
    %v2803 = vld [vmem:[#allocation5 + $0x98] sm:$0xff]
    %v2804 = vld [vmem:[#allocation5 + $0xa0] sm:$0xff]
    %v2805 = vld [vmem:[#allocation5 + $0x100] sm:$0xff]
    %v2806 = vld [vmem:[#allocation5 + $0x108] sm:$0xff]
    %v2807 = vld [vmem:[#allocation5 + $0x168] sm:$0xff]
    %v2808 = vld [vmem:[#allocation5 + $0x170] sm:$0xff]
    %v2809 = vld [vmem:[#allocation5 + $0x1d0] sm:$0xff]
    %v2810 = vld [vmem:[#allocation5 + $0x1d8] sm:$0xff]
    %v2811 = vld [vmem:[#allocation5 + $0x238] sm:$0xff]
    %v2812 = vld [vmem:[#allocation5 + $0x240] sm:$0xff]
    %v2813 = vld [vmem:[#allocation5 + $0x2a0] sm:$0xff]
    %v2814 = vld [vmem:[#allocation5 + $0x2a8] sm:$0xff]
    %v2815 = vld [vmem:[#allocation5 + $0x308] sm:$0xff]
    %v2816 = vld [vmem:[#allocation5 + $0x310] sm:$0xff]
    %v2817 = vld [vmem:[#allocation5 + $0x370] sm:$0xff]
    %v2818 = vld [vmem:[#allocation5 + $0x378] sm:$0xff]
    %v2819 = vld [vmem:[#allocation5 + $0x3d8] sm:$0xff]
    %v2820 = vld [vmem:[#allocation5 + $0x3e0] sm:$0xff]
    %v2821 = vld [vmem:[#allocation5 + $0x440] sm:$0xff]
    %v2822 = vld [vmem:[#allocation5 + $0x448] sm:$0xff]
    %v2823 = vld [vmem:[#allocation5 + $0x4a8] sm:$0xff]
    %v2824 = vld [vmem:[#allocation5 + $0x4b0] sm:$0xff]
    %v2825 = vld [vmem:[#allocation5 + $0x510] sm:$0xff]
    %v2826 = vld [vmem:[#allocation5 + $0x518] sm:$0xff]
    %v2827 = vld [vmem:[#allocation5 + $0x578] sm:$0xff]
    %v2828 = vld [vmem:[#allocation5 + $0x580] sm:$0xff]
    %v2829 = vld [vmem:[#allocation5 + $0x5e0] sm:$0xff]
    %v2830 = vld [vmem:[#allocation5 + $0x5e8] sm:$0xff]
    %v2831 = vld [vmem:[#allocation5 + $0x648] sm:$0xff]
    %v2832 = vld [vmem:[#allocation5 + $0x650] sm:$0xff]
    %v2833 = vld [vmem:[#allocation5 + $0x6b0] sm:$0xff]
    %v2834 = vld [vmem:[#allocation5 + $0x6b8] sm:$0xff]
    %v2835 = vld [vmem:[#allocation5 + $0x718] sm:$0xff]
    %v2836 = vld [vmem:[#allocation5 + $0x720] sm:$0xff]
    %v2837 = vld [vmem:[#allocation5 + $0x780] sm:$0xff]
    %v2838 = vld [vmem:[#allocation5 + $0x788] sm:$0xff]
    %v2839 = vld [vmem:[#allocation5 + $0x7e8] sm:$0xff]
    %v2840 = vld [vmem:[#allocation5 + $0x7f0] sm:$0xff]
    %v2841 = vld [vmem:[#allocation5 + $0x850] sm:$0xff]
    %v2842 = vld [vmem:[#allocation5 + $0x858] sm:$0xff]
    %v2843 = vld [vmem:[#allocation5 + $0x8b8] sm:$0xff]
    %v2844 = vld [vmem:[#allocation5 + $0x8c0] sm:$0xff]
    %v2845 = vld [vmem:[#allocation5 + $0x920] sm:$0xff]
    %v2846 = vld [vmem:[#allocation5 + $0x928] sm:$0xff]
    %v2847 = vld [vmem:[#allocation5 + $0x988] sm:$0xff]
    %v2848 = vld [vmem:[#allocation5 + $0x990] sm:$0xff]
    %v2849 = vld [vmem:[#allocation5 + $0x9f0] sm:$0xff]
    %v2850 = vld [vmem:[#allocation5 + $0x9f8] sm:$0xff]
    %v2851 = vld [vmem:[#allocation5 + $0xa58] sm:$0xff]
    %v2852 = vld [vmem:[#allocation5 + $0xa60] sm:$0xff]
    %v2853 = vld [vmem:[#allocation5 + $0xac0] sm:$0xff]
    %v2854 = vld [vmem:[#allocation5 + $0xac8] sm:$0xff]
    %v2855 = vld [vmem:[#allocation5 + $0xb28] sm:$0xff]
    %v2856 = vld [vmem:[#allocation5 + $0xb30] sm:$0xff]
    %v2857 = vld [vmem:[#allocation5 + $0xb90] sm:$0xff]
    %v2858 = vld [vmem:[#allocation5 + $0xb98] sm:$0xff]
    %v2859 = vld [vmem:[#allocation5 + $0xbf8] sm:$0xff]
    %v2860 = vld [vmem:[#allocation5 + $0xc00] sm:$0xff]
    %v2861 = vld [vmem:[#allocation5 + $0xc60] sm:$0xff]
    %v2862 = vld [vmem:[#allocation5 + $0xc68] sm:$0xff]
    %v2863 = vld [vmem:[#allocation5 + $0xcc8] sm:$0xff]
    %v2864 = vld [vmem:[#allocation5 + $0xcd0] sm:$0xff]
    %v2865 = vld [vmem:[#allocation5 + $0xd30] sm:$0xff]
    %v2866 = vld [vmem:[#allocation5 + $0xd38] sm:$0xff]
    %v2867 = vld [vmem:[#allocation5 + $0xd98] sm:$0xff]
    %v2868 = vld [vmem:[#allocation5 + $0xda0] sm:$0xff]
    %v2869 = vld [vmem:[#allocation5 + $0xe00] sm:$0xff]
    %v2870 = vld [vmem:[#allocation5 + $0xe08] sm:$0xff]
    %v2871 = vld [vmem:[#allocation5 + $0xe68] sm:$0xff]
    %v2872 = vld [vmem:[#allocation5 + $0xe70] sm:$0xff]
    %v2873 = vld [vmem:[#allocation5 + $0xed0] sm:$0xff]
    %v2874 = vld [vmem:[#allocation5 + $0xed8] sm:$0xff]
    %v2875 = vld [vmem:[#allocation5 + $0xf38] sm:$0xff]
    %v2876 = vld [vmem:[#allocation5 + $0xf40] sm:$0xff]
    %v2877 = vld [vmem:[#allocation5 + $0xfa0] sm:$0xff]
    %v2878 = vld [vmem:[#allocation5 + $0xfa8] sm:$0xff]
    %v2879 = vld [vmem:[#allocation5 + $0x1008] sm:$0xff]
    %v2880 = vld [vmem:[#allocation5 + $0x1010] sm:$0xff]
    %v2881 = vld [vmem:[#allocation5 + $0x1070] sm:$0xff]
    %v2882 = vld [vmem:[#allocation5 + $0x1078] sm:$0xff]
    %v2883 = vld [vmem:[#allocation5 + $0x10d8] sm:$0xff]
    %v2884 = vld [vmem:[#allocation5 + $0x10e0] sm:$0xff]
    %v2885 = vld [vmem:[#allocation5 + $0x1140] sm:$0xff]
    %v2886 = vld [vmem:[#allocation5 + $0x1148] sm:$0xff]
    %v2887 = vld [vmem:[#allocation5 + $0x11a8] sm:$0xff]
    %v2888 = vld [vmem:[#allocation5 + $0x11b0] sm:$0xff]
    %v2889 = vld [vmem:[#allocation5 + $0x1210] sm:$0xff]
    %v2890 = vld [vmem:[#allocation5 + $0x1218] sm:$0xff]
    %v2891 = vld [vmem:[#allocation5 + $0x1278] sm:$0xff]
    %v2892 = vld [vmem:[#allocation5 + $0x1280] sm:$0xff]
    %v2893 = vld [vmem:[#allocation5 + $0x12e0] sm:$0xff]
    %v2894 = vld [vmem:[#allocation5 + $0x12e8] sm:$0xff]
    %v2895 = vld [vmem:[#allocation5 + $0x1348] sm:$0xff]
    %v2896 = vld [vmem:[#allocation5 + $0x1350] sm:$0xff]
    %v2897 = vld [vmem:[#allocation5 + $0x13b0] sm:$0xff]
    %v2898 = vld [vmem:[#allocation5 + $0x13b8] sm:$0xff]
    %v2899 = vld [vmem:[#allocation5 + $0x1418] sm:$0xff]
    %v2900 = vld [vmem:[#allocation5 + $0x1420] sm:$0xff]
    %v2901 = vld [vmem:[#allocation5 + $0x1480] sm:$0xff]
    %v2902 = vld [vmem:[#allocation5 + $0x1488] sm:$0xff]
    %v2903 = vld [vmem:[#allocation5 + $0x14e8] sm:$0xff]
    %v2904 = vld [vmem:[#allocation5 + $0x14f0] sm:$0xff]
    %v2905 = vld [vmem:[#allocation5 + $0x1550] sm:$0xff]
    %v2906 = vld [vmem:[#allocation5 + $0x1558] sm:$0xff]
    %v2907 = vld [vmem:[#allocation5 + $0x15b8] sm:$0xff]
    %v2908 = vld [vmem:[#allocation5 + $0x15c0] sm:$0xff]
    %v2909 = vld [vmem:[#allocation5 + $0x1620] sm:$0xff]
    %v2910 = vld [vmem:[#allocation5 + $0x1628] sm:$0xff]
    %v2911 = vld [vmem:[#allocation5 + $0x1688] sm:$0xff]
    %v2912 = vld [vmem:[#allocation5 + $0x1690] sm:$0xff]
    %v2913 = vld [vmem:[#allocation5 + $0x16f0] sm:$0xff]
    %v2914 = vld [vmem:[#allocation5 + $0x16f8] sm:$0xff]
    %v2915 = vld [vmem:[#allocation5 + $0x1758] sm:$0xff]
    %v2916 = vld [vmem:[#allocation5 + $0x1760] sm:$0xff]
    %v2917 = vld [vmem:[#allocation5 + $0x17c0] sm:$0xff]
    %v2918 = vld [vmem:[#allocation5 + $0x17c8] sm:$0xff]
    %v2919 = vld [vmem:[#allocation5 + $0x1828] sm:$0xff]
    %v2920 = vld [vmem:[#allocation5 + $0x1830] sm:$0xff]
    %v2921 = vld [vmem:[#allocation5 + $0x1890] sm:$0xff]
    %v2922 = vld [vmem:[#allocation5 + $0x1898] sm:$0xff]
    %v2923 = vld [vmem:[#allocation5 + $0x18f8] sm:$0xff]
    %v2924 = vld [vmem:[#allocation5 + $0x1900] sm:$0xff]
    %v2925 = vld [vmem:[#allocation5 + $0x1960] sm:$0xff]
    %v2926 = vld [vmem:[#allocation5 + $0x1968] sm:$0xff]
    %v2927 = vld [vmem:[#allocation5 + $0x19c8] sm:$0xff]
    %v2928 = vld [vmem:[#allocation5 + $0x19d0] sm:$0xff]
    %v2929 = vld [vmem:[#allocation5 + $0x1a30] sm:$0xff]
    %v2930 = vld [vmem:[#allocation5 + $0x1a38] sm:$0xff]
    %v2931 = vld [vmem:[#allocation5 + $0x1a98] sm:$0xff]
    %v2932 = vld [vmem:[#allocation5 + $0x1aa0] sm:$0xff]
    %v2933 = vld [vmem:[#allocation5 + $0x1b00] sm:$0xff]
    %v2934 = vld [vmem:[#allocation5 + $0x1b08] sm:$0xff]
    %v2935 = vld [vmem:[#allocation5 + $0x1b68] sm:$0xff]
    %v2936 = vld [vmem:[#allocation5 + $0x1b70] sm:$0xff]
    %v2937 = vld [vmem:[#allocation5 + $0x1bd0] sm:$0xff]
    %v2938 = vld [vmem:[#allocation5 + $0x1bd8] sm:$0xff]
    %v2939 = vld [vmem:[#allocation5 + $0x1c38] sm:$0xff]
    %v2940 = vld [vmem:[#allocation5 + $0x1c40] sm:$0xff]
    %v2941 = vld [vmem:[#allocation5 + $0x1ca0] sm:$0xff]
    %v2942 = vld [vmem:[#allocation5 + $0x1ca8] sm:$0xff]
    %v2943 = vld [vmem:[#allocation5 + $0x1d08] sm:$0xff]
    %v2944 = vld [vmem:[#allocation5 + $0x1d10] sm:$0xff]
    %v2945 = vld [vmem:[#allocation5 + $0x1d70] sm:$0xff]
    %v2946 = vld [vmem:[#allocation5 + $0x1d78] sm:$0xff]
    %v2947 = vld [vmem:[#allocation5 + $0x1dd8] sm:$0xff]
    %v2948 = vld [vmem:[#allocation5 + $0x1de0] sm:$0xff]
    %v2949 = vld [vmem:[#allocation5 + $0x1e40] sm:$0xff]
    %v2950 = vld [vmem:[#allocation5 + $0x1e48] sm:$0xff]
    %v2951 = vld [vmem:[#allocation5 + $0x1ea8] sm:$0xff]
    %v2952 = vld [vmem:[#allocation5 + $0x1eb0] sm:$0xff]
    %v2953 = vld [vmem:[#allocation5 + $0x1f10] sm:$0xff]
    %v2954 = vld [vmem:[#allocation5 + $0x1f18] sm:$0xff]
    %v2955 = vld [vmem:[#allocation5 + $0x1f78] sm:$0xff]
    %v2956 = vld [vmem:[#allocation5 + $0x1f80] sm:$0xff]
    %v2957 = vld [vmem:[#allocation5 + $0x1fe0] sm:$0xff]
    %v2958 = vld [vmem:[#allocation5 + $0x1fe8] sm:$0xff]
    %v2959 = vld [vmem:[#allocation5 + $0x2048] sm:$0xff]
    %v2960 = vld [vmem:[#allocation5 + $0x2050] sm:$0xff]
    %v2961 = vld [vmem:[#allocation5 + $0x20b0] sm:$0xff]
    %v2962 = vld [vmem:[#allocation5 + $0x20b8] sm:$0xff]
    %v2963 = vld [vmem:[#allocation5 + $0x2118] sm:$0xff]
    %v2964 = vld [vmem:[#allocation5 + $0x2120] sm:$0xff]
    %v2965 = vld [vmem:[#allocation5 + $0x2180] sm:$0xff]
    %v2966 = vld [vmem:[#allocation5 + $0x2188] sm:$0xff]
    %v2967 = vld [vmem:[#allocation5 + $0x21e8] sm:$0xff]
    %v2968 = vld [vmem:[#allocation5 + $0x21f0] sm:$0xff]
    %v2969 = vld [vmem:[#allocation5 + $0x2250] sm:$0xff]
    %v2970 = vld [vmem:[#allocation5 + $0x2258] sm:$0xff]
    %v2971 = vld [vmem:[#allocation5 + $0x22b8] sm:$0xff]
    %v2972 = vld [vmem:[#allocation5 + $0x22c0] sm:$0xff]
    %v2973 = vld [vmem:[#allocation5 + $0x2320] sm:$0xff]
    %v2974 = vld [vmem:[#allocation5 + $0x2328] sm:$0xff]
    %v2975 = vld [vmem:[#allocation5 + $0x2388] sm:$0xff]
    %v2976 = vld [vmem:[#allocation5 + $0x2390] sm:$0xff]
    %v2977 = vld [vmem:[#allocation5 + $0x23f0] sm:$0xff]
    %v2978 = vld [vmem:[#allocation5 + $0x23f8] sm:$0xff]
    %v2979 = vld [vmem:[#allocation5 + $0x2458] sm:$0xff]
    %v2980 = vld [vmem:[#allocation5 + $0x2460] sm:$0xff]
    %v2981 = vld [vmem:[#allocation5 + $0x24c0] sm:$0xff]
    %v2982 = vld [vmem:[#allocation5 + $0x24c8] sm:$0xff]
    %v2983 = vld [vmem:[#allocation5 + $0x2528] sm:$0xff]
    %v2984 = vld [vmem:[#allocation5 + $0x2530] sm:$0xff]
    %v2985 = vld [vmem:[#allocation5 + $0x2590] sm:$0xff]
    %v2986 = vld [vmem:[#allocation5 + $0x2598] sm:$0xff]
    %v2987 = vld [vmem:[#allocation5 + $0x25f8] sm:$0xff]
    %v2988 = vld [vmem:[#allocation5 + $0x2600] sm:$0xff]
    %v2989 = vld [vmem:[#allocation5 + $0x2660] sm:$0xff]
    %v2990 = vld [vmem:[#allocation5 + $0x2668] sm:$0xff]
    %v2991 = vld [vmem:[#allocation5 + $0x26c8] sm:$0xff]
    %v2992 = vld [vmem:[#allocation5 + $0x26d0] sm:$0xff]
    %v2993 = vld [vmem:[#allocation5 + $0x2730] sm:$0xff]
    %v2994 = vld [vmem:[#allocation5 + $0x2738] sm:$0xff]
    %v2995 = vld [vmem:[#allocation5 + $0x2798] sm:$0xff]
    %v2996 = vld [vmem:[#allocation5 + $0x27a0] sm:$0xff]
    %v2997 = vld [vmem:[#allocation5 + $0x2800] sm:$0xff]
    %v2998 = vld [vmem:[#allocation5 + $0x2808] sm:$0xff]
    %v2999 = vld [vmem:[#allocation5 + $0x2868] sm:$0xff]
    %v3000 = vld [vmem:[#allocation5 + $0x2870] sm:$0xff]
    %v3001 = vld [vmem:[#allocation5 + $0x28d0] sm:$0xff]
    %v3002 = vld [vmem:[#allocation5 + $0x28d8] sm:$0xff]
    %v3003 = vld [vmem:[#allocation5 + $0x2938] sm:$0xff]
    %v3004 = vld [vmem:[#allocation5 + $0x2940] sm:$0xff]
    %v3005 = vld [vmem:[#allocation5 + $0x29a0] sm:$0xff]
    %v3006 = vld [vmem:[#allocation5 + $0x29a8] sm:$0xff]
    %v3007 = vld [vmem:[#allocation5 + $0x2a08] sm:$0xff]
    %v3008 = vld [vmem:[#allocation5 + $0x2a10] sm:$0xff]
    %v3009 = vld [vmem:[#allocation5 + $0x2a70] sm:$0xff]
    %v3010 = vld [vmem:[#allocation5 + $0x2a78] sm:$0xff]
    %v3011 = vld [vmem:[#allocation5 + $0x2ad8] sm:$0xff]
    %v3012 = vld [vmem:[#allocation5 + $0x2ae0] sm:$0xff]
    %v3013 = vld [vmem:[#allocation5 + $0x2b40] sm:$0xff]
    %v3014 = vld [vmem:[#allocation5 + $0x2b48] sm:$0xff]
    %v3015 = vld [vmem:[#allocation5 + $0x2ba8] sm:$0xff]
    %v3016 = vld [vmem:[#allocation5 + $0x2bb0] sm:$0xff]
    %v3017 = vld [vmem:[#allocation5 + $0x2c10] sm:$0xff]
    %v3018 = vld [vmem:[#allocation5 + $0x2c18] sm:$0xff]
    %v3019 = vld [vmem:[#allocation5 + $0x2c78] sm:$0xff]
    %v3020 = vld [vmem:[#allocation5 + $0x2c80] sm:$0xff]
    %v3021 = vld [vmem:[#allocation5 + $0x2ce0] sm:$0xff]
    %v3022 = vld [vmem:[#allocation5 + $0x2ce8] sm:$0xff]
    %v3023 = vld [vmem:[#allocation5 + $0x2d48] sm:$0xff]
    %v3024 = vld [vmem:[#allocation5 + $0x2d50] sm:$0xff]
    %v3025 = vld [vmem:[#allocation5 + $0x2db0] sm:$0xff]
    %v3026 = vld [vmem:[#allocation5 + $0x2db8] sm:$0xff]
    %v3027 = vld [vmem:[#allocation5 + $0x2e18] sm:$0xff]
    %v3028 = vld [vmem:[#allocation5 + $0x2e20] sm:$0xff]
    %v3029 = vld [vmem:[#allocation5 + $0x2e80] sm:$0xff]
    %v3030 = vld [vmem:[#allocation5 + $0x2e88] sm:$0xff]
    %v3031 = vld [vmem:[#allocation5 + $0x2ee8] sm:$0xff]
    %v3032 = vld [vmem:[#allocation5 + $0x2ef0] sm:$0xff]
    %v3033 = vld [vmem:[#allocation5 + $0x2f50] sm:$0xff]
    %v3034 = vld [vmem:[#allocation5 + $0x2f58] sm:$0xff]
    %v3035 = vld [vmem:[#allocation5 + $0x2fb8] sm:$0xff]
    %v3036 = vld [vmem:[#allocation5 + $0x2fc0] sm:$0xff]
    %v3037 = vld [vmem:[#allocation5 + $0x3020] sm:$0xff]
    %v3038 = vld [vmem:[#allocation5 + $0x3028] sm:$0xff]
    %v3039 = vld [vmem:[#allocation5 + $0x3088] sm:$0xff]
    %v3040 = vld [vmem:[#allocation5 + $0x3090] sm:$0xff]
    %v3041 = vld [vmem:[#allocation5 + $0x30f0] sm:$0xff]
    %v3042 = vld [vmem:[#allocation5 + $0x30f8] sm:$0xff]
    %v3043 = vld [vmem:[#allocation5 + $0x3158] sm:$0xff]
    %v3044 = vld [vmem:[#allocation5 + $0x3160] sm:$0xff]
    %v3045 = vld [vmem:[#allocation5 + $0x31c0] sm:$0xff]
    %v3046 = vld [vmem:[#allocation5 + $0x31c8] sm:$0xff]
    %v3047 = vld [vmem:[#allocation5 + $0x3228] sm:$0xff]
    %v3048 = vld [vmem:[#allocation5 + $0x3230] sm:$0xff]
    %v3049 = vld [vmem:[#allocation5 + $0x3290] sm:$0xff]
    %v3050 = vld [vmem:[#allocation5 + $0x3298] sm:$0xff]
    %v3051 = vld [vmem:[#allocation5 + $0x32f8] sm:$0xff]
    %v3052 = vld [vmem:[#allocation5 + $0x3300] sm:$0xff]
    %v3053 = vld [vmem:[#allocation5 + $0x3360] sm:$0xff]
    %v3054 = vld [vmem:[#allocation5 + $0x3368] sm:$0xff]
    %v3055 = vld [vmem:[#allocation5 + $0x33c8] sm:$0xff]
    %v3056 = vld [vmem:[#allocation5 + $0x33d0] sm:$0xff]
    %v3057 = vld [vmem:[#allocation5 + $0x3430] sm:$0xff]
    %v3058 = vld [vmem:[#allocation5 + $0x3438] sm:$0xff]
    %v3059 = vld [vmem:[#allocation5 + $0x3498] sm:$0xff]
    %v3060 = vld [vmem:[#allocation5 + $0x34a0] sm:$0xff]
    %v3061 = vld [vmem:[#allocation5 + $0x3500] sm:$0xff]
    %v3062 = vld [vmem:[#allocation5 + $0x3508] sm:$0xff]
    %v3063 = vld [vmem:[#allocation5 + $0x3568] sm:$0xff]
    %v3064 = vld [vmem:[#allocation5 + $0x3570] sm:$0xff]
    %v3065 = vld [vmem:[#allocation5 + $0x35d0] sm:$0xff]
    %v3066 = vld [vmem:[#allocation5 + $0x35d8] sm:$0xff]
    %v3067 = vld [vmem:[#allocation5 + $0x3638] sm:$0xff]
    %v3068 = vld [vmem:[#allocation5 + $0x3640] sm:$0xff]
    %v3069 = vld [vmem:[#allocation5 + $0x36a0] sm:$0xff]
    %v3070 = vld [vmem:[#allocation5 + $0x36a8] sm:$0xff]
    %v3071 = vld [vmem:[#allocation5 + $0x3708] sm:$0xff]
    %v3072 = vld [vmem:[#allocation5 + $0x3710] sm:$0xff]
    %v3073 = vld [vmem:[#allocation5 + $0x3770] sm:$0xff]
    %v3074 = vld [vmem:[#allocation5 + $0x3778] sm:$0xff]
    %v3075 = vld [vmem:[#allocation5 + $0x37d8] sm:$0xff]
    %v3076 = vld [vmem:[#allocation5 + $0x37e0] sm:$0xff]
    %v3077 = vld [vmem:[#allocation5 + $0x3840] sm:$0xff]
    %v3078 = vld [vmem:[#allocation5 + $0x3848] sm:$0xff]
    %v3079 = vld [vmem:[#allocation5 + $0x38a8] sm:$0xff]
    %v3080 = vld [vmem:[#allocation5 + $0x38b0] sm:$0xff]
    %v3081 = vld [vmem:[#allocation5 + $0x3910] sm:$0xff]
    %v3082 = vld [vmem:[#allocation5 + $0x3918] sm:$0xff]
    %v3083 = vld [vmem:[#allocation5 + $0x3978] sm:$0xff]
    %v3084 = vld [vmem:[#allocation5 + $0x3980] sm:$0xff]
    %v3085 = vld [vmem:[#allocation5 + $0x39e0] sm:$0xff]
    %v3086 = vld [vmem:[#allocation5 + $0x39e8] sm:$0xff]
    %v3087 = vld [vmem:[#allocation5 + $0x3a48] sm:$0xff]
    %v3088 = vld [vmem:[#allocation5 + $0x3a50] sm:$0xff]
    %v3089 = vld [vmem:[#allocation5 + $0x3ab0] sm:$0xff]
    %v3090 = vld [vmem:[#allocation5 + $0x3ab8] sm:$0xff]
    %v3091 = vld [vmem:[#allocation5 + $0x3b18] sm:$0xff]
    %v3092 = vld [vmem:[#allocation5 + $0x3b20] sm:$0xff]
    %v3093 = vld [vmem:[#allocation5 + $0x3b80] sm:$0xff]
    %v3094 = vld [vmem:[#allocation5 + $0x3b88] sm:$0xff]
    %v3095 = vld [vmem:[#allocation5 + $0x3be8] sm:$0xff]
    %v3096 = vld [vmem:[#allocation5 + $0x3bf0] sm:$0xff]
    %v3097 = vld [vmem:[#allocation5 + $0x3c50] sm:$0xff]
    %v3098 = vld [vmem:[#allocation5 + $0x3c58] sm:$0xff]
    %v3099 = vld [vmem:[#allocation5 + $0x3cb8] sm:$0xff]
    %v3100 = vld [vmem:[#allocation5 + $0x3cc0] sm:$0xff]
    %v3101 = vld [vmem:[#allocation5 + $0x3d20] sm:$0xff]
    %v3102 = vld [vmem:[#allocation5 + $0x3d28] sm:$0xff]
    %v3103 = vld [vmem:[#allocation5 + $0x3d88] sm:$0xff]
    %v3104 = vld [vmem:[#allocation5 + $0x3d90] sm:$0xff]
    %v3105 = vld [vmem:[#allocation5 + $0x3df0] sm:$0xff]
    %v3106 = vld [vmem:[#allocation5 + $0x3df8] sm:$0xff]
    %v3107 = vld [vmem:[#allocation5 + $0x3e58] sm:$0xff]
    %v3108 = vld [vmem:[#allocation5 + $0x3e60] sm:$0xff]
    %v3109 = vld [vmem:[#allocation5 + $0x3ec0] sm:$0xff]
    %v3110 = vld [vmem:[#allocation5 + $0x3ec8] sm:$0xff]
    %v3111 = vld [vmem:[#allocation5 + $0x3f28] sm:$0xff]
    %v3112 = vld [vmem:[#allocation5 + $0x3f30] sm:$0xff]
    %v3113 = vld [vmem:[#allocation5 + $0x3f90] sm:$0xff]
    %v3114 = vld [vmem:[#allocation5 + $0x3f98] sm:$0xff]
    %v3115 = vld [vmem:[#allocation5 + $0x3ff8] sm:$0xff]
    %v3116 = vld [vmem:[#allocation5 + $0x4000] sm:$0xff]
    %v3117 = vld [vmem:[#allocation5 + $0x4060] sm:$0xff]
    %v3118 = vld [vmem:[#allocation5 + $0x4068] sm:$0xff]
    %v3119 = vld [vmem:[#allocation5 + $0x40c8] sm:$0xff]
    %v3120 = vld [vmem:[#allocation5 + $0x40d0] sm:$0xff]
    %v3121 = vld [vmem:[#allocation5 + $0x4130] sm:$0xff]
    %v3122 = vld [vmem:[#allocation5 + $0x4138] sm:$0xff]
    %v3123 = vld [vmem:[#allocation5 + $0x4198] sm:$0xff]
    %v3124 = vld [vmem:[#allocation5 + $0x41a0] sm:$0xff]
    %v3125 = vld [vmem:[#allocation5 + $0x4200] sm:$0xff]
    %v3126 = vld [vmem:[#allocation5 + $0x4208] sm:$0xff]
    %v3127 = vld [vmem:[#allocation5 + $0x4268] sm:$0xff]
    %v3128 = vld [vmem:[#allocation5 + $0x4270] sm:$0xff]
    %v3129 = vld [vmem:[#allocation5 + $0x42d0] sm:$0xff]
    %v3130 = vld [vmem:[#allocation5 + $0x42d8] sm:$0xff]
    %v3131 = vld [vmem:[#allocation5 + $0x4338] sm:$0xff]
    %v3132 = vld [vmem:[#allocation5 + $0x4340] sm:$0xff]
    %v3133 = vld [vmem:[#allocation5 + $0x43a0] sm:$0xff]
    %v3134 = vld [vmem:[#allocation5 + $0x43a8] sm:$0xff]
    %v3135 = vld [vmem:[#allocation5 + $0x4408] sm:$0xff]
    %v3136 = vld [vmem:[#allocation5 + $0x4410] sm:$0xff]
    %v3137 = vld [vmem:[#allocation5 + $0x4470] sm:$0xff]
    %v3138 = vld [vmem:[#allocation5 + $0x4478] sm:$0xff]
    %v3139 = vld [vmem:[#allocation5 + $0x44d8] sm:$0xff]
    %v3140 = vld [vmem:[#allocation5 + $0x44e0] sm:$0xff]
    %v3141 = vld [vmem:[#allocation5 + $0x4540] sm:$0xff]
    %v3142 = vld [vmem:[#allocation5 + $0x4548] sm:$0xff]
    %v3143 = vld [vmem:[#allocation5 + $0x45a8] sm:$0xff]
    %v3144 = vld [vmem:[#allocation5 + $0x45b0] sm:$0xff]
    %v3145 = vld [vmem:[#allocation5 + $0x4610] sm:$0xff]
    %v3146 = vld [vmem:[#allocation5 + $0x4618] sm:$0xff]
    %v3147 = vld [vmem:[#allocation5 + $0x4678] sm:$0xff]
    %v3148 = vld [vmem:[#allocation5 + $0x4680] sm:$0xff]
    %v3149 = vld [vmem:[#allocation5 + $0x46e0] sm:$0xff]
    %v3150 = vld [vmem:[#allocation5 + $0x46e8] sm:$0xff]
    %v3151 = vld [vmem:[#allocation5 + $0x4748] sm:$0xff]
    %v3152 = vld [vmem:[#allocation5 + $0x4750] sm:$0xff]
    %v3153 = vld [vmem:[#allocation5 + $0x47b0] sm:$0xff]
    %v3154 = vld [vmem:[#allocation5 + $0x47b8] sm:$0xff]
    %v3155 = vld [vmem:[#allocation5 + $0x4818] sm:$0xff]
    %v3156 = vld [vmem:[#allocation5 + $0x4820] sm:$0xff]
    %v3157 = vld [vmem:[#allocation5 + $0x4880] sm:$0xff]
    %v3158 = vld [vmem:[#allocation5 + $0x4888] sm:$0xff]
    %v3159 = vld [vmem:[#allocation5 + $0x48e8] sm:$0xff]
    %v3160 = vld [vmem:[#allocation5 + $0x48f0] sm:$0xff]
    %v3161 = vld [vmem:[#allocation5 + $0x4950] sm:$0xff]
    %v3162 = vld [vmem:[#allocation5 + $0x4958] sm:$0xff]
    %v3163 = vld [vmem:[#allocation5 + $0x49b8] sm:$0xff]
    %v3164 = vld [vmem:[#allocation5 + $0x49c0] sm:$0xff]
    %v3165 = vld [vmem:[#allocation5 + $0x4a20] sm:$0xff]
    %v3166 = vld [vmem:[#allocation5 + $0x4a28] sm:$0xff]
    %v3167 = vld [vmem:[#allocation5 + $0x4a88] sm:$0xff]
    %v3168 = vld [vmem:[#allocation5 + $0x4a90] sm:$0xff]
    %v3169 = vld [vmem:[#allocation5 + $0x4af0] sm:$0xff]
    %v3170 = vld [vmem:[#allocation5 + $0x4af8] sm:$0xff]
    %v3171 = vld [vmem:[#allocation5 + $0x4b58] sm:$0xff]
    %v3172 = vld [vmem:[#allocation5 + $0x4b60] sm:$0xff]
    %v3173 = vld [vmem:[#allocation5 + $0x4bc0] sm:$0xff]
    %v3174 = vld [vmem:[#allocation5 + $0x4bc8] sm:$0xff]
    %v3175 = vld [vmem:[#allocation5 + $0x4c28] sm:$0xff]
    %v3176 = vld [vmem:[#allocation5 + $0x4c30] sm:$0xff]
    %v3177 = vld [vmem:[#allocation5 + $0x4c90] sm:$0xff]
    %v3178 = vld [vmem:[#allocation5 + $0x4c98] sm:$0xff]
    %v3179 = vld [vmem:[#allocation5 + $0x4cf8] sm:$0xff]
    %v3180 = vld [vmem:[#allocation5 + $0x4d00] sm:$0xff]
    %v3181 = vld [vmem:[#allocation5 + $0x4d60] sm:$0xff]
    %v3182 = vld [vmem:[#allocation5 + $0x4d68] sm:$0xff]
    %v3183 = vld [vmem:[#allocation5 + $0x4dc8] sm:$0xff]
    %v3184 = vld [vmem:[#allocation5 + $0x4dd0] sm:$0xff]
    %v3185 = vld [vmem:[#allocation5 + $0x4e30] sm:$0xff]
    %v3186 = vld [vmem:[#allocation5 + $0x4e38] sm:$0xff]
    %v3187 = vld [vmem:[#allocation5 + $0x4e98] sm:$0xff]
    %v3188 = vld [vmem:[#allocation5 + $0x4ea0] sm:$0xff]
    %v3189 = vld [vmem:[#allocation5 + $0x4f00] sm:$0xff]
    %v3190 = vld [vmem:[#allocation5 + $0x4f08] sm:$0xff]
    %v3191 = vld [vmem:[#allocation5 + $0x4f68] sm:$0xff]
    %v3192 = vld [vmem:[#allocation5 + $0x4f70] sm:$0xff]
    %v3193 = vld [vmem:[#allocation5 + $0x4fd0] sm:$0xff]
    %v3194 = vld [vmem:[#allocation5 + $0x4fd8] sm:$0xff]
    %v3195 = vld [vmem:[#allocation5 + $0x5038] sm:$0xff]
    %v3196 = vld [vmem:[#allocation5 + $0x5040] sm:$0xff]
    %v3197 = vld [vmem:[#allocation5 + $0x50a0] sm:$0xff]
    %v3198 = vld [vmem:[#allocation5 + $0x50a8] sm:$0xff]
    %v3199 = vld [vmem:[#allocation5 + $0x5108] sm:$0xff]
    %v3200 = vld [vmem:[#allocation5 + $0x5110] sm:$0xff]
    %v3201 = vld [vmem:[#allocation5 + $0x5170] sm:$0xff]
    %v3202 = vld [vmem:[#allocation5 + $0x5178] sm:$0xff]
    %v3203 = vld [vmem:[#allocation5 + $0x51d8] sm:$0xff]
    %v3204 = vld [vmem:[#allocation5 + $0x51e0] sm:$0xff]
    %v3205 = vld [vmem:[#allocation5 + $0x5240] sm:$0xff]
    %v3206 = vld [vmem:[#allocation5 + $0x5248] sm:$0xff]
    %v3207 = vld [vmem:[#allocation5 + $0x52a8] sm:$0x1]
    %v3208 = vld [vmem:[#allocation5 + $0x52b0] sm:$0x1]
    %v3210 = vsel %vm463, %v3207, 0
    %v3213 = vsel %vm463, %v3208, 0
    %3215 = vmatprep.subr.mxu0 %v2802
    %3216 = vmatpush1.msra.mxu0 %v2801
    %3217 = vmatprep.subr.mxu0 %v2804
    %3218 = vmatpush1.msra.mxu0 %v2803
    %3219 = vmatprep.subr.mxu0 %v2806
    %3220 = vmatpush1.msra.mxu0 %v2805
    %3221 = vmatprep.subr.mxu0 %v2808
    %3222 = vmatpush1.msra.mxu0 %v2807
    %3223 = vmatprep.subr.mxu0 %v2810
    %3224 = vmatpush1.msra.mxu0 %v2809
    %3225 = vmatprep.subr.mxu0 %v2812
    %3226 = vmatpush1.msra.mxu0 %v2811
    %3227 = vmatprep.subr.mxu0 %v2814
    %3228 = vmatpush1.msra.mxu0 %v2813
    %3229 = vmatprep.subr.mxu0 %v2816
    %3230 = vmatpush1.msra.mxu0 %v2815
    %3231 = vmatprep.subr.mxu0 %v2818
    %3232 = vmatpush1.msra.mxu0 %v2817
    %3233 = vmatprep.subr.mxu0 %v2820
    %3234 = vmatpush1.msra.mxu0 %v2819
    %3235 = vmatprep.subr.mxu0 %v2822
    %3236 = vmatpush1.msra.mxu0 %v2821
    %3237 = vmatprep.subr.mxu0 %v2824
    %3238 = vmatpush1.msra.mxu0 %v2823
    %3239 = vmatprep.subr.mxu0 %v2826
    %3240 = vmatpush1.msra.mxu0 %v2825
    %3241 = vmatprep.subr.mxu0 %v2828
    %3242 = vmatpush1.msra.mxu0 %v2827
    %3243 = vmatprep.subr.mxu0 %v2830
    %3244 = vmatpush1.msra.mxu0 %v2829
    %3245 = vmatprep.subr.mxu0 %v2832
    %3246 = vmatpush1.msra.mxu0 %v2831
    %3247 = vmatprep.subr.mxu0 %v2834
    %3248 = vmatpush1.msra.mxu0 %v2833
    %3249 = vmatprep.subr.mxu0 %v2836
    %3250 = vmatpush1.msra.mxu0 %v2835
    %3251 = vmatprep.subr.mxu0 %v2838
    %3252 = vmatpush1.msra.mxu0 %v2837
    %3253 = vmatprep.subr.mxu0 %v2840
    %3254 = vmatpush1.msra.mxu0 %v2839
    %3255 = vmatprep.subr.mxu0 %v2842
    %3256 = vmatpush1.msra.mxu0 %v2841
    %3257 = vmatprep.subr.mxu0 %v2844
    %3258 = vmatpush1.msra.mxu0 %v2843
    %3259 = vmatprep.subr.mxu0 %v2846
    %3260 = vmatpush1.msra.mxu0 %v2845
    %3261 = vmatprep.subr.mxu0 %v2848
    %3262 = vmatpush1.msra.mxu0 %v2847
    %3263 = vmatprep.subr.mxu0 %v2850
    %3264 = vmatpush1.msra.mxu0 %v2849
    %3265 = vmatprep.subr.mxu0 %v2852
    %3266 = vmatpush1.msra.mxu0 %v2851
    %3267 = vmatprep.subr.mxu0 %v2854
    %3268 = vmatpush1.msra.mxu0 %v2853
    %3269 = vmatprep.subr.mxu0 %v2856
    %3270 = vmatpush1.msra.mxu0 %v2855
    %3271 = vmatprep.subr.mxu0 %v2858
    %3272 = vmatpush1.msra.mxu0 %v2857
    %3273 = vmatprep.subr.mxu0 %v2860
    %3274 = vmatpush1.msra.mxu0 %v2859
    %3275 = vmatprep.subr.mxu0 %v2862
    %3276 = vmatpush1.msra.mxu0 %v2861
    %3277 = vmatprep.subr.mxu0 %v2864
    %3278 = vmatpush1.msra.mxu0 %v2863
    %3279 = vmatprep.mubr.f32.mxu0 %v39
    %3280 = vmatmul.mubr.f32.gmra.mrb[0].mxu0 %v38
    %v3281 = vpop.f32.mrb[0].mxu0
    %v3282 = vadd.f32 0.0, %v3281
    %v3283 = vpop.f32.mrb[0].mxu0
    %v3284 = vadd.f32 0.0, %v3283
    %3285 = vdwg.mxu0
    %3286 = vmatprep.subr.mxu0 %v2866
    %3287 = vmatpush1.msra.mxu0 %v2865
    %3288 = vmatprep.subr.mxu0 %v2868
    %3289 = vmatpush1.msra.mxu0 %v2867
    %3290 = vmatprep.subr.mxu0 %v2870
    %3291 = vmatpush1.msra.mxu0 %v2869
    %3292 = vmatprep.subr.mxu0 %v2872
    %3293 = vmatpush1.msra.mxu0 %v2871
    %3294 = vmatprep.subr.mxu0 %v2874
    %3295 = vmatpush1.msra.mxu0 %v2873
    %3296 = vmatprep.subr.mxu0 %v2876
    %3297 = vmatpush1.msra.mxu0 %v2875
    %3298 = vmatprep.subr.mxu0 %v2878
    %3299 = vmatpush1.msra.mxu0 %v2877
    %3300 = vmatprep.subr.mxu0 %v2880
    %3301 = vmatpush1.msra.mxu0 %v2879
    %3302 = vmatprep.subr.mxu0 %v2882
    %3303 = vmatpush1.msra.mxu0 %v2881
    %3304 = vmatprep.subr.mxu0 %v2884
    %3305 = vmatpush1.msra.mxu0 %v2883
    %3306 = vmatprep.subr.mxu0 %v2886
    %3307 = vmatpush1.msra.mxu0 %v2885
    %3308 = vmatprep.subr.mxu0 %v2888
    %3309 = vmatpush1.msra.mxu0 %v2887
    %3310 = vmatprep.subr.mxu0 %v2890
    %3311 = vmatpush1.msra.mxu0 %v2889
    %3312 = vmatprep.subr.mxu0 %v2892
    %3313 = vmatpush1.msra.mxu0 %v2891
    %3314 = vmatprep.subr.mxu0 %v2894
    %3315 = vmatpush1.msra.mxu0 %v2893
    %3316 = vmatprep.subr.mxu0 %v2896
    %3317 = vmatpush1.msra.mxu0 %v2895
    %3318 = vmatprep.subr.mxu0 %v2898
    %3319 = vmatpush1.msra.mxu0 %v2897
    %3320 = vmatprep.subr.mxu0 %v2900
    %3321 = vmatpush1.msra.mxu0 %v2899
    %3322 = vmatprep.subr.mxu0 %v2902
    %3323 = vmatpush1.msra.mxu0 %v2901
    %3324 = vmatprep.subr.mxu0 %v2904
    %3325 = vmatpush1.msra.mxu0 %v2903
    %3326 = vmatprep.subr.mxu0 %v2906
    %3327 = vmatpush1.msra.mxu0 %v2905
    %3328 = vmatprep.subr.mxu0 %v2908
    %3329 = vmatpush1.msra.mxu0 %v2907
    %3330 = vmatprep.subr.mxu0 %v2910
    %3331 = vmatpush1.msra.mxu0 %v2909
    %3332 = vmatprep.subr.mxu0 %v2912
    %3333 = vmatpush1.msra.mxu0 %v2911
    %3334 = vmatprep.subr.mxu0 %v2914
    %3335 = vmatpush1.msra.mxu0 %v2913
    %3336 = vmatprep.subr.mxu0 %v2916
    %3337 = vmatpush1.msra.mxu0 %v2915
    %3338 = vmatprep.subr.mxu0 %v2918
    %3339 = vmatpush1.msra.mxu0 %v2917
    %3340 = vmatprep.subr.mxu0 %v2920
    %3341 = vmatpush1.msra.mxu0 %v2919
    %3342 = vmatprep.subr.mxu0 %v2922
    %3343 = vmatpush1.msra.mxu0 %v2921
    %3344 = vmatprep.subr.mxu0 %v2924
    %3345 = vmatpush1.msra.mxu0 %v2923
    %3346 = vmatprep.subr.mxu0 %v2926
    %3347 = vmatpush1.msra.mxu0 %v2925
    %3348 = vmatprep.subr.mxu0 %v2928
    %3349 = vmatpush1.msra.mxu0 %v2927
    %3350 = vmatprep.mubr.f32.mxu0 %v41
    %3351 = vmatmul.mubr.f32.gmra.mrb[0].mxu0 %v40
    %v3352 = vpop.f32.mrb[0].mxu0
    %v3353 = vadd.f32 %v3282, %v3352
    %v3354 = vpop.f32.mrb[0].mxu0
    %v3355 = vadd.f32 %v3284, %v3354
    %3356 = vdwg.mxu0
    %3357 = vmatprep.subr.mxu0 %v2930
    %3358 = vmatpush1.msra.mxu0 %v2929
    %3359 = vmatprep.subr.mxu0 %v2932
    %3360 = vmatpush1.msra.mxu0 %v2931
    %3361 = vmatprep.subr.mxu0 %v2934
    %3362 = vmatpush1.msra.mxu0 %v2933
    %3363 = vmatprep.subr.mxu0 %v2936
    %3364 = vmatpush1.msra.mxu0 %v2935
    %3365 = vmatprep.subr.mxu0 %v2938
    %3366 = vmatpush1.msra.mxu0 %v2937
    %3367 = vmatprep.subr.mxu0 %v2940
    %3368 = vmatpush1.msra.mxu0 %v2939
    %3369 = vmatprep.subr.mxu0 %v2942
    %3370 = vmatpush1.msra.mxu0 %v2941
    %3371 = vmatprep.subr.mxu0 %v2944
    %3372 = vmatpush1.msra.mxu0 %v2943
    %3373 = vmatprep.subr.mxu0 %v2946
    %3374 = vmatpush1.msra.mxu0 %v2945
    %3375 = vmatprep.subr.mxu0 %v2948
    %3376 = vmatpush1.msra.mxu0 %v2947
    %3377 = vmatprep.subr.mxu0 %v2950
    %3378 = vmatpush1.msra.mxu0 %v2949
    %3379 = vmatprep.subr.mxu0 %v2952
    %3380 = vmatpush1.msra.mxu0 %v2951
    %3381 = vmatprep.subr.mxu0 %v2954
    %3382 = vmatpush1.msra.mxu0 %v2953
    %3383 = vmatprep.subr.mxu0 %v2956
    %3384 = vmatpush1.msra.mxu0 %v2955
    %3385 = vmatprep.subr.mxu0 %v2958
    %3386 = vmatpush1.msra.mxu0 %v2957
    %3387 = vmatprep.subr.mxu0 %v2960
    %3388 = vmatpush1.msra.mxu0 %v2959
    %3389 = vmatprep.subr.mxu0 %v2962
    %3390 = vmatpush1.msra.mxu0 %v2961
    %3391 = vmatprep.subr.mxu0 %v2964
    %3392 = vmatpush1.msra.mxu0 %v2963
    %3393 = vmatprep.subr.mxu0 %v2966
    %3394 = vmatpush1.msra.mxu0 %v2965
    %3395 = vmatprep.subr.mxu0 %v2968
    %3396 = vmatpush1.msra.mxu0 %v2967
    %3397 = vmatprep.subr.mxu0 %v2970
    %3398 = vmatpush1.msra.mxu0 %v2969
    %3399 = vmatprep.subr.mxu0 %v2972
    %3400 = vmatpush1.msra.mxu0 %v2971
    %3401 = vmatprep.subr.mxu0 %v2974
    %3402 = vmatpush1.msra.mxu0 %v2973
    %3403 = vmatprep.subr.mxu0 %v2976
    %3404 = vmatpush1.msra.mxu0 %v2975
    %3405 = vmatprep.subr.mxu0 %v2978
    %3406 = vmatpush1.msra.mxu0 %v2977
    %3407 = vmatprep.subr.mxu0 %v2980
    %3408 = vmatpush1.msra.mxu0 %v2979
    %3409 = vmatprep.subr.mxu0 %v2982
    %3410 = vmatpush1.msra.mxu0 %v2981
    %3411 = vmatprep.subr.mxu0 %v2984
    %3412 = vmatpush1.msra.mxu0 %v2983
    %3413 = vmatprep.subr.mxu0 %v2986
    %3414 = vmatpush1.msra.mxu0 %v2985
    %3415 = vmatprep.subr.mxu0 %v2988
    %3416 = vmatpush1.msra.mxu0 %v2987
    %3417 = vmatprep.subr.mxu0 %v2990
    %3418 = vmatpush1.msra.mxu0 %v2989
    %3419 = vmatprep.subr.mxu0 %v2992
    %3420 = vmatpush1.msra.mxu0 %v2991
    %3421 = vmatprep.mubr.f32.mxu0 %v43
    %3422 = vmatmul.mubr.f32.gmra.mrb[0].mxu0 %v42
    %v3423 = vpop.f32.mrb[0].mxu0
    %v3424 = vadd.f32 %v3353, %v3423
    %v3425 = vpop.f32.mrb[0].mxu0
    %v3426 = vadd.f32 %v3355, %v3425
    %3427 = vdwg.mxu0
    %3428 = vmatprep.subr.mxu0 %v2994
    %3429 = vmatpush1.msra.mxu0 %v2993
    %3430 = vmatprep.subr.mxu0 %v2996
    %3431 = vmatpush1.msra.mxu0 %v2995
    %3432 = vmatprep.subr.mxu0 %v2998
    %3433 = vmatpush1.msra.mxu0 %v2997
    %3434 = vmatprep.subr.mxu0 %v3000
    %3435 = vmatpush1.msra.mxu0 %v2999
    %3436 = vmatprep.subr.mxu0 %v3002
    %3437 = vmatpush1.msra.mxu0 %v3001
    %3438 = vmatprep.subr.mxu0 %v3004
    %3439 = vmatpush1.msra.mxu0 %v3003
    %3440 = vmatprep.subr.mxu0 %v3006
    %3441 = vmatpush1.msra.mxu0 %v3005
    %3442 = vmatprep.subr.mxu0 %v3008
    %3443 = vmatpush1.msra.mxu0 %v3007
    %3444 = vmatprep.subr.mxu0 %v3010
    %3445 = vmatpush1.msra.mxu0 %v3009
    %3446 = vmatprep.subr.mxu0 %v3012
    %3447 = vmatpush1.msra.mxu0 %v3011
    %3448 = vmatprep.subr.mxu0 %v3014
    %3449 = vmatpush1.msra.mxu0 %v3013
    %3450 = vmatprep.subr.mxu0 %v3016
    %3451 = vmatpush1.msra.mxu0 %v3015
    %3452 = vmatprep.subr.mxu0 %v3018
    %3453 = vmatpush1.msra.mxu0 %v3017
    %3454 = vmatprep.subr.mxu0 %v3020
    %3455 = vmatpush1.msra.mxu0 %v3019
    %3456 = vmatprep.subr.mxu0 %v3022
    %3457 = vmatpush1.msra.mxu0 %v3021
    %3458 = vmatprep.subr.mxu0 %v3024
    %3459 = vmatpush1.msra.mxu0 %v3023
    %3460 = vmatprep.subr.mxu0 %v3026
    %3461 = vmatpush1.msra.mxu0 %v3025
    %3462 = vmatprep.subr.mxu0 %v3028
    %3463 = vmatpush1.msra.mxu0 %v3027
    %3464 = vmatprep.subr.mxu0 %v3030
    %3465 = vmatpush1.msra.mxu0 %v3029
    %3466 = vmatprep.subr.mxu0 %v3032
    %3467 = vmatpush1.msra.mxu0 %v3031
    %3468 = vmatprep.subr.mxu0 %v3034
    %3469 = vmatpush1.msra.mxu0 %v3033
    %3470 = vmatprep.subr.mxu0 %v3036
    %3471 = vmatpush1.msra.mxu0 %v3035
    %3472 = vmatprep.subr.mxu0 %v3038
    %3473 = vmatpush1.msra.mxu0 %v3037
    %3474 = vmatprep.subr.mxu0 %v3040
    %3475 = vmatpush1.msra.mxu0 %v3039
    %3476 = vmatprep.subr.mxu0 %v3042
    %3477 = vmatpush1.msra.mxu0 %v3041
    %3478 = vmatprep.subr.mxu0 %v3044
    %3479 = vmatpush1.msra.mxu0 %v3043
    %3480 = vmatprep.subr.mxu0 %v3046
    %3481 = vmatpush1.msra.mxu0 %v3045
    %3482 = vmatprep.subr.mxu0 %v3048
    %3483 = vmatpush1.msra.mxu0 %v3047
    %3484 = vmatprep.subr.mxu0 %v3050
    %3485 = vmatpush1.msra.mxu0 %v3049
    %3486 = vmatprep.subr.mxu0 %v3052
    %3487 = vmatpush1.msra.mxu0 %v3051
    %3488 = vmatprep.subr.mxu0 %v3054
    %3489 = vmatpush1.msra.mxu0 %v3053
    %3490 = vmatprep.subr.mxu0 %v3056
    %3491 = vmatpush1.msra.mxu0 %v3055
    %3492 = vmatprep.mubr.f32.mxu0 %v45
    %3493 = vmatmul.mubr.f32.gmra.mrb[0].mxu0 %v44
    %v3494 = vpop.f32.mrb[0].mxu0
    %v3495 = vadd.f32 %v3424, %v3494
    %v3496 = vpop.f32.mrb[0].mxu0
    %v3497 = vadd.f32 %v3426, %v3496
    %3498 = vdwg.mxu0
    %3499 = vmatprep.subr.mxu0 %v3058
    %3500 = vmatpush1.msra.mxu0 %v3057
    %3501 = vmatprep.subr.mxu0 %v3060
    %3502 = vmatpush1.msra.mxu0 %v3059
    %3503 = vmatprep.subr.mxu0 %v3062
    %3504 = vmatpush1.msra.mxu0 %v3061
    %3505 = vmatprep.subr.mxu0 %v3064
    %3506 = vmatpush1.msra.mxu0 %v3063
    %3507 = vmatprep.subr.mxu0 %v3066
    %3508 = vmatpush1.msra.mxu0 %v3065
    %3509 = vmatprep.subr.mxu0 %v3068
    %3510 = vmatpush1.msra.mxu0 %v3067
    %3511 = vmatprep.subr.mxu0 %v3070
    %3512 = vmatpush1.msra.mxu0 %v3069
    %3513 = vmatprep.subr.mxu0 %v3072
    %3514 = vmatpush1.msra.mxu0 %v3071
    %3515 = vmatprep.subr.mxu0 %v3074
    %3516 = vmatpush1.msra.mxu0 %v3073
    %3517 = vmatprep.subr.mxu0 %v3076
    %3518 = vmatpush1.msra.mxu0 %v3075
    %3519 = vmatprep.subr.mxu0 %v3078
    %3520 = vmatpush1.msra.mxu0 %v3077
    %3521 = vmatprep.subr.mxu0 %v3080
    %3522 = vmatpush1.msra.mxu0 %v3079
    %3523 = vmatprep.subr.mxu0 %v3082
    %3524 = vmatpush1.msra.mxu0 %v3081
    %3525 = vmatprep.subr.mxu0 %v3084
    %3526 = vmatpush1.msra.mxu0 %v3083
    %3527 = vmatprep.subr.mxu0 %v3086
    %3528 = vmatpush1.msra.mxu0 %v3085
    %3529 = vmatprep.subr.mxu0 %v3088
    %3530 = vmatpush1.msra.mxu0 %v3087
    %3531 = vmatprep.subr.mxu0 %v3090
    %3532 = vmatpush1.msra.mxu0 %v3089
    %3533 = vmatprep.subr.mxu0 %v3092
    %3534 = vmatpush1.msra.mxu0 %v3091
    %3535 = vmatprep.subr.mxu0 %v3094
    %3536 = vmatpush1.msra.mxu0 %v3093
    %3537 = vmatprep.subr.mxu0 %v3096
    %3538 = vmatpush1.msra.mxu0 %v3095
    %3539 = vmatprep.subr.mxu0 %v3098
    %3540 = vmatpush1.msra.mxu0 %v3097
    %3541 = vmatprep.subr.mxu0 %v3100
    %3542 = vmatpush1.msra.mxu0 %v3099
    %3543 = vmatprep.subr.mxu0 %v3102
    %3544 = vmatpush1.msra.mxu0 %v3101
    %3545 = vmatprep.subr.mxu0 %v3104
    %3546 = vmatpush1.msra.mxu0 %v3103
    %3547 = vmatprep.subr.mxu0 %v3106
    %3548 = vmatpush1.msra.mxu0 %v3105
    %3549 = vmatprep.subr.mxu0 %v3108
    %3550 = vmatpush1.msra.mxu0 %v3107
    %3551 = vmatprep.subr.mxu0 %v3110
    %3552 = vmatpush1.msra.mxu0 %v3109
    %3553 = vmatprep.subr.mxu0 %v3112
    %3554 = vmatpush1.msra.mxu0 %v3111
    %3555 = vmatprep.subr.mxu0 %v3114
    %3556 = vmatpush1.msra.mxu0 %v3113
    %3557 = vmatprep.subr.mxu0 %v3116
    %3558 = vmatpush1.msra.mxu0 %v3115
    %3559 = vmatprep.subr.mxu0 %v3118
    %3560 = vmatpush1.msra.mxu0 %v3117
    %3561 = vmatprep.subr.mxu0 %v3120
    %3562 = vmatpush1.msra.mxu0 %v3119
    %3563 = vmatprep.mubr.f32.mxu0 %v47
    %3564 = vmatmul.mubr.f32.gmra.mrb[0].mxu0 %v46
    %v3565 = vpop.f32.mrb[0].mxu0
    %v3566 = vadd.f32 %v3495, %v3565
    %v3567 = vpop.f32.mrb[0].mxu0
    %v3568 = vadd.f32 %v3497, %v3567
    %3569 = vdwg.mxu0
    %3570 = vmatprep.subr.mxu0 %v3122
    %3571 = vmatpush1.msra.mxu0 %v3121
    %3572 = vmatprep.subr.mxu0 %v3124
    %3573 = vmatpush1.msra.mxu0 %v3123
    %3574 = vmatprep.subr.mxu0 %v3126
    %3575 = vmatpush1.msra.mxu0 %v3125
    %3576 = vmatprep.subr.mxu0 %v3128
    %3577 = vmatpush1.msra.mxu0 %v3127
    %3578 = vmatprep.subr.mxu0 %v3130
    %3579 = vmatpush1.msra.mxu0 %v3129
    %3580 = vmatprep.subr.mxu0 %v3132
    %3581 = vmatpush1.msra.mxu0 %v3131
    %3582 = vmatprep.subr.mxu0 %v3134
    %3583 = vmatpush1.msra.mxu0 %v3133
    %3584 = vmatprep.subr.mxu0 %v3136
    %3585 = vmatpush1.msra.mxu0 %v3135
    %3586 = vmatprep.subr.mxu0 %v3138
    %3587 = vmatpush1.msra.mxu0 %v3137
    %3588 = vmatprep.subr.mxu0 %v3140
    %3589 = vmatpush1.msra.mxu0 %v3139
    %3590 = vmatprep.subr.mxu0 %v3142
    %3591 = vmatpush1.msra.mxu0 %v3141
    %3592 = vmatprep.subr.mxu0 %v3144
    %3593 = vmatpush1.msra.mxu0 %v3143
    %3594 = vmatprep.subr.mxu0 %v3146
    %3595 = vmatpush1.msra.mxu0 %v3145
    %3596 = vmatprep.subr.mxu0 %v3148
    %3597 = vmatpush1.msra.mxu0 %v3147
    %3598 = vmatprep.subr.mxu0 %v3150
    %3599 = vmatpush1.msra.mxu0 %v3149
    %3600 = vmatprep.subr.mxu0 %v3152
    %3601 = vmatpush1.msra.mxu0 %v3151
    %3602 = vmatprep.subr.mxu0 %v3154
    %3603 = vmatpush1.msra.mxu0 %v3153
    %3604 = vmatprep.subr.mxu0 %v3156
    %3605 = vmatpush1.msra.mxu0 %v3155
    %3606 = vmatprep.subr.mxu0 %v3158
    %3607 = vmatpush1.msra.mxu0 %v3157
    %3608 = vmatprep.subr.mxu0 %v3160
    %3609 = vmatpush1.msra.mxu0 %v3159
    %3610 = vmatprep.subr.mxu0 %v3162
    %3611 = vmatpush1.msra.mxu0 %v3161
    %3612 = vmatprep.subr.mxu0 %v3164
    %3613 = vmatpush1.msra.mxu0 %v3163
    %3614 = vmatprep.subr.mxu0 %v3166
    %3615 = vmatpush1.msra.mxu0 %v3165
    %3616 = vmatprep.subr.mxu0 %v3168
    %3617 = vmatpush1.msra.mxu0 %v3167
    %3618 = vmatprep.subr.mxu0 %v3170
    %3619 = vmatpush1.msra.mxu0 %v3169
    %3620 = vmatprep.subr.mxu0 %v3172
    %3621 = vmatpush1.msra.mxu0 %v3171
    %3622 = vmatprep.subr.mxu0 %v3174
    %3623 = vmatpush1.msra.mxu0 %v3173
    %3624 = vmatprep.subr.mxu0 %v3176
    %3625 = vmatpush1.msra.mxu0 %v3175
    %3626 = vmatprep.subr.mxu0 %v3178
    %3627 = vmatpush1.msra.mxu0 %v3177
    %3628 = vmatprep.subr.mxu0 %v3180
    %3629 = vmatpush1.msra.mxu0 %v3179
    %3630 = vmatprep.subr.mxu0 %v3182
    %3631 = vmatpush1.msra.mxu0 %v3181
    %3632 = vmatprep.subr.mxu0 %v3184
    %3633 = vmatpush1.msra.mxu0 %v3183
    %3634 = vmatprep.mubr.f32.mxu0 %v49
    %3635 = vmatmul.mubr.f32.gmra.mrb[0].mxu0 %v48
    %v3636 = vpop.f32.mrb[0].mxu0
    %v3637 = vadd.f32 %v3566, %v3636
    %v3638 = vpop.f32.mrb[0].mxu0
    %v3639 = vadd.f32 %v3568, %v3638
    %3640 = vdwg.mxu0
    %3641 = vmatprep.subr.mxu0 %v3186
    %3642 = vmatpush1.msra.mxu0 %v3185
    %3643 = vmatprep.subr.mxu0 %v3188
    %3644 = vmatpush1.msra.mxu0 %v3187
    %3645 = vmatprep.subr.mxu0 %v3190
    %3646 = vmatpush1.msra.mxu0 %v3189
    %3647 = vmatprep.subr.mxu0 %v3192
    %3648 = vmatpush1.msra.mxu0 %v3191
    %3649 = vmatprep.subr.mxu0 %v3194
    %3650 = vmatpush1.msra.mxu0 %v3193
    %3651 = vmatprep.subr.mxu0 %v3196
    %3652 = vmatpush1.msra.mxu0 %v3195
    %3653 = vmatprep.subr.mxu0 %v3198
    %3654 = vmatpush1.msra.mxu0 %v3197
    %3655 = vmatprep.subr.mxu0 %v3200
    %3656 = vmatpush1.msra.mxu0 %v3199
    %3657 = vmatprep.subr.mxu0 %v3202
    %3658 = vmatpush1.msra.mxu0 %v3201
    %3659 = vmatprep.subr.mxu0 %v3204
    %3660 = vmatpush1.msra.mxu0 %v3203
    %3661 = vmatprep.subr.mxu0 %v3206
    %3662 = vmatpush1.msra.mxu0 %v3205
    %3663 = vmatprep.subr.mxu0 %v3213
    %3664 = vmatpush1.msra.mxu0 %v3210
    %3665 = vmatprep.subr.mxu0 0.0
    %3666 = vmatpush1.msra.mxu0 0.0
    %3667 = vmatprep.subr.mxu0 0.0
    %3668 = vmatpush1.msra.mxu0 0.0
    %3669 = vmatprep.subr.mxu0 0.0
    %3670 = vmatpush1.msra.mxu0 0.0
    %3671 = vmatprep.subr.mxu0 0.0
    %3672 = vmatpush1.msra.mxu0 0.0
    %3673 = vmatprep.subr.mxu0 0.0
    %3674 = vmatpush1.msra.mxu0 0.0
    %3675 = vmatprep.subr.mxu0 0.0
    %3676 = vmatpush1.msra.mxu0 0.0
    %3677 = vmatprep.subr.mxu0 0.0
    %3678 = vmatpush1.msra.mxu0 0.0
    %3679 = vmatprep.subr.mxu0 0.0
    %3680 = vmatpush1.msra.mxu0 0.0
    %3681 = vmatprep.subr.mxu0 0.0
    %3682 = vmatpush1.msra.mxu0 0.0
    %3683 = vmatprep.subr.mxu0 0.0
    %3684 = vmatpush1.msra.mxu0 0.0
    %3685 = vmatprep.subr.mxu0 0.0
    %3686 = vmatpush1.msra.mxu0 0.0
    %3687 = vmatprep.subr.mxu0 0.0
    %3688 = vmatpush1.msra.mxu0 0.0
    %3689 = vmatprep.subr.mxu0 0.0
    %3690 = vmatpush1.msra.mxu0 0.0
    %3691 = vmatprep.subr.mxu0 0.0
    %3692 = vmatpush1.msra.mxu0 0.0
    %3693 = vmatprep.subr.mxu0 0.0
    %3694 = vmatpush1.msra.mxu0 0.0
    %3695 = vmatprep.subr.mxu0 0.0
    %3696 = vmatpush1.msra.mxu0 0.0
    %3697 = vmatprep.subr.mxu0 0.0
    %3698 = vmatpush1.msra.mxu0 0.0
    %3699 = vmatprep.subr.mxu0 0.0
    %3700 = vmatpush1.msra.mxu0 0.0
    %3701 = vmatprep.subr.mxu0 0.0
    %3702 = vmatpush1.msra.mxu0 0.0
    %3703 = vmatprep.subr.mxu0 0.0
    %3704 = vmatpush1.msra.mxu0 0.0
    %3705 = vmatprep.mubr.f32.mxu0 0.0
    %3706 = vmatmul.mubr.f32.gmra.mrb[0].mxu0 %v461
    %v3707 = vpop.f32.mrb[0].mxu0
    %v3708 = vadd.f32 %v3637, %v3707
    %v3709 = vpop.f32.mrb[0].mxu0
    %v3710 = vadd.f32 %v3639, %v3709
    %3711 = vdwg.mxu0
    %s3712 = scalar_lea.vmem [#allocation7], 48
    %3713 = vst.msk [vmem:[%s3712] sm:$0xff] %vm967, %v3708
    %s3714 = scalar_lea.vmem [#allocation7], 56
    %3715 = vst.msk [vmem:[%s3714] sm:$0xff] %vm967, %v3710
    %v3716 = vld [vmem:[#allocation5 + $0x40] sm:$0xff]
    %v3717 = vld [vmem:[#allocation5 + $0x48] sm:$0xff]
    %v3718 = vld [vmem:[#allocation5 + $0xa8] sm:$0xff]
    %v3719 = vld [vmem:[#allocation5 + $0xb0] sm:$0xff]
    %v3720 = vld [vmem:[#allocation5 + $0x110] sm:$0xff]
    %v3721 = vld [vmem:[#allocation5 + $0x118] sm:$0xff]
    %v3722 = vld [vmem:[#allocation5 + $0x178] sm:$0xff]
    %v3723 = vld [vmem:[#allocation5 + $0x180] sm:$0xff]
    %v3724 = vld [vmem:[#allocation5 + $0x1e0] sm:$0xff]
    %v3725 = vld [vmem:[#allocation5 + $0x1e8] sm:$0xff]
    %v3726 = vld [vmem:[#allocation5 + $0x248] sm:$0xff]
    %v3727 = vld [vmem:[#allocation5 + $0x250] sm:$0xff]
    %v3728 = vld [vmem:[#allocation5 + $0x2b0] sm:$0xff]
    %v3729 = vld [vmem:[#allocation5 + $0x2b8] sm:$0xff]
    %v3730 = vld [vmem:[#allocation5 + $0x318] sm:$0xff]
    %v3731 = vld [vmem:[#allocation5 + $0x320] sm:$0xff]
    %v3732 = vld [vmem:[#allocation5 + $0x380] sm:$0xff]
    %v3733 = vld [vmem:[#allocation5 + $0x388] sm:$0xff]
    %v3734 = vld [vmem:[#allocation5 + $0x3e8] sm:$0xff]
    %v3735 = vld [vmem:[#allocation5 + $0x3f0] sm:$0xff]
    %v3736 = vld [vmem:[#allocation5 + $0x450] sm:$0xff]
    %v3737 = vld [vmem:[#allocation5 + $0x458] sm:$0xff]
    %v3738 = vld [vmem:[#allocation5 + $0x4b8] sm:$0xff]
    %v3739 = vld [vmem:[#allocation5 + $0x4c0] sm:$0xff]
    %v3740 = vld [vmem:[#allocation5 + $0x520] sm:$0xff]
    %v3741 = vld [vmem:[#allocation5 + $0x528] sm:$0xff]
    %v3742 = vld [vmem:[#allocation5 + $0x588] sm:$0xff]
    %v3743 = vld [vmem:[#allocation5 + $0x590] sm:$0xff]
    %v3744 = vld [vmem:[#allocation5 + $0x5f0] sm:$0xff]
    %v3745 = vld [vmem:[#allocation5 + $0x5f8] sm:$0xff]
    %v3746 = vld [vmem:[#allocation5 + $0x658] sm:$0xff]
    %v3747 = vld [vmem:[#allocation5 + $0x660] sm:$0xff]
    %v3748 = vld [vmem:[#allocation5 + $0x6c0] sm:$0xff]
    %v3749 = vld [vmem:[#allocation5 + $0x6c8] sm:$0xff]
    %v3750 = vld [vmem:[#allocation5 + $0x728] sm:$0xff]
    %v3751 = vld [vmem:[#allocation5 + $0x730] sm:$0xff]
    %v3752 = vld [vmem:[#allocation5 + $0x790] sm:$0xff]
    %v3753 = vld [vmem:[#allocation5 + $0x798] sm:$0xff]
    %v3754 = vld [vmem:[#allocation5 + $0x7f8] sm:$0xff]
    %v3755 = vld [vmem:[#allocation5 + $0x800] sm:$0xff]
    %v3756 = vld [vmem:[#allocation5 + $0x860] sm:$0xff]
    %v3757 = vld [vmem:[#allocation5 + $0x868] sm:$0xff]
    %v3758 = vld [vmem:[#allocation5 + $0x8c8] sm:$0xff]
    %v3759 = vld [vmem:[#allocation5 + $0x8d0] sm:$0xff]
    %v3760 = vld [vmem:[#allocation5 + $0x930] sm:$0xff]
    %v3761 = vld [vmem:[#allocation5 + $0x938] sm:$0xff]
    %v3762 = vld [vmem:[#allocation5 + $0x998] sm:$0xff]
    %v3763 = vld [vmem:[#allocation5 + $0x9a0] sm:$0xff]
    %v3764 = vld [vmem:[#allocation5 + $0xa00] sm:$0xff]
    %v3765 = vld [vmem:[#allocation5 + $0xa08] sm:$0xff]
    %v3766 = vld [vmem:[#allocation5 + $0xa68] sm:$0xff]
    %v3767 = vld [vmem:[#allocation5 + $0xa70] sm:$0xff]
    %v3768 = vld [vmem:[#allocation5 + $0xad0] sm:$0xff]
    %v3769 = vld [vmem:[#allocation5 + $0xad8] sm:$0xff]
    %v3770 = vld [vmem:[#allocation5 + $0xb38] sm:$0xff]
    %v3771 = vld [vmem:[#allocation5 + $0xb40] sm:$0xff]
    %v3772 = vld [vmem:[#allocation5 + $0xba0] sm:$0xff]
    %v3773 = vld [vmem:[#allocation5 + $0xba8] sm:$0xff]
    %v3774 = vld [vmem:[#allocation5 + $0xc08] sm:$0xff]
    %v3775 = vld [vmem:[#allocation5 + $0xc10] sm:$0xff]
    %v3776 = vld [vmem:[#allocation5 + $0xc70] sm:$0xff]
    %v3777 = vld [vmem:[#allocation5 + $0xc78] sm:$0xff]
    %v3778 = vld [vmem:[#allocation5 + $0xcd8] sm:$0xff]
    %v3779 = vld [vmem:[#allocation5 + $0xce0] sm:$0xff]
    %v3780 = vld [vmem:[#allocation5 + $0xd40] sm:$0xff]
    %v3781 = vld [vmem:[#allocation5 + $0xd48] sm:$0xff]
    %v3782 = vld [vmem:[#allocation5 + $0xda8] sm:$0xff]
    %v3783 = vld [vmem:[#allocation5 + $0xdb0] sm:$0xff]
    %v3784 = vld [vmem:[#allocation5 + $0xe10] sm:$0xff]
    %v3785 = vld [vmem:[#allocation5 + $0xe18] sm:$0xff]
    %v3786 = vld [vmem:[#allocation5 + $0xe78] sm:$0xff]
    %v3787 = vld [vmem:[#allocation5 + $0xe80] sm:$0xff]
    %v3788 = vld [vmem:[#allocation5 + $0xee0] sm:$0xff]
    %v3789 = vld [vmem:[#allocation5 + $0xee8] sm:$0xff]
    %v3790 = vld [vmem:[#allocation5 + $0xf48] sm:$0xff]
    %v3791 = vld [vmem:[#allocation5 + $0xf50] sm:$0xff]
    %v3792 = vld [vmem:[#allocation5 + $0xfb0] sm:$0xff]
    %v3793 = vld [vmem:[#allocation5 + $0xfb8] sm:$0xff]
    %v3794 = vld [vmem:[#allocation5 + $0x1018] sm:$0xff]
    %v3795 = vld [vmem:[#allocation5 + $0x1020] sm:$0xff]
    %v3796 = vld [vmem:[#allocation5 + $0x1080] sm:$0xff]
    %v3797 = vld [vmem:[#allocation5 + $0x1088] sm:$0xff]
    %v3798 = vld [vmem:[#allocation5 + $0x10e8] sm:$0xff]
    %v3799 = vld [vmem:[#allocation5 + $0x10f0] sm:$0xff]
    %v3800 = vld [vmem:[#allocation5 + $0x1150] sm:$0xff]
    %v3801 = vld [vmem:[#allocation5 + $0x1158] sm:$0xff]
    %v3802 = vld [vmem:[#allocation5 + $0x11b8] sm:$0xff]
    %v3803 = vld [vmem:[#allocation5 + $0x11c0] sm:$0xff]
    %v3804 = vld [vmem:[#allocation5 + $0x1220] sm:$0xff]
    %v3805 = vld [vmem:[#allocation5 + $0x1228] sm:$0xff]
    %v3806 = vld [vmem:[#allocation5 + $0x1288] sm:$0xff]
    %v3807 = vld [vmem:[#allocation5 + $0x1290] sm:$0xff]
    %v3808 = vld [vmem:[#allocation5 + $0x12f0] sm:$0xff]
    %v3809 = vld [vmem:[#allocation5 + $0x12f8] sm:$0xff]
    %v3810 = vld [vmem:[#allocation5 + $0x1358] sm:$0xff]
    %v3811 = vld [vmem:[#allocation5 + $0x1360] sm:$0xff]
    %v3812 = vld [vmem:[#allocation5 + $0x13c0] sm:$0xff]
    %v3813 = vld [vmem:[#allocation5 + $0x13c8] sm:$0xff]
    %v3814 = vld [vmem:[#allocation5 + $0x1428] sm:$0xff]
    %v3815 = vld [vmem:[#allocation5 + $0x1430] sm:$0xff]
    %v3816 = vld [vmem:[#allocation5 + $0x1490] sm:$0xff]
    %v3817 = vld [vmem:[#allocation5 + $0x1498] sm:$0xff]
    %v3818 = vld [vmem:[#allocation5 + $0x14f8] sm:$0xff]
    %v3819 = vld [vmem:[#allocation5 + $0x1500] sm:$0xff]
    %v3820 = vld [vmem:[#allocation5 + $0x1560] sm:$0xff]
    %v3821 = vld [vmem:[#allocation5 + $0x1568] sm:$0xff]
    %v3822 = vld [vmem:[#allocation5 + $0x15c8] sm:$0xff]
    %v3823 = vld [vmem:[#allocation5 + $0x15d0] sm:$0xff]
    %v3824 = vld [vmem:[#allocation5 + $0x1630] sm:$0xff]
    %v3825 = vld [vmem:[#allocation5 + $0x1638] sm:$0xff]
    %v3826 = vld [vmem:[#allocation5 + $0x1698] sm:$0xff]
    %v3827 = vld [vmem:[#allocation5 + $0x16a0] sm:$0xff]
    %v3828 = vld [vmem:[#allocation5 + $0x1700] sm:$0xff]
    %v3829 = vld [vmem:[#allocation5 + $0x1708] sm:$0xff]
    %v3830 = vld [vmem:[#allocation5 + $0x1768] sm:$0xff]
    %v3831 = vld [vmem:[#allocation5 + $0x1770] sm:$0xff]
    %v3832 = vld [vmem:[#allocation5 + $0x17d0] sm:$0xff]
    %v3833 = vld [vmem:[#allocation5 + $0x17d8] sm:$0xff]
    %v3834 = vld [vmem:[#allocation5 + $0x1838] sm:$0xff]
    %v3835 = vld [vmem:[#allocation5 + $0x1840] sm:$0xff]
    %v3836 = vld [vmem:[#allocation5 + $0x18a0] sm:$0xff]
    %v3837 = vld [vmem:[#allocation5 + $0x18a8] sm:$0xff]
    %v3838 = vld [vmem:[#allocation5 + $0x1908] sm:$0xff]
    %v3839 = vld [vmem:[#allocation5 + $0x1910] sm:$0xff]
    %v3840 = vld [vmem:[#allocation5 + $0x1970] sm:$0xff]
    %v3841 = vld [vmem:[#allocation5 + $0x1978] sm:$0xff]
    %v3842 = vld [vmem:[#allocation5 + $0x19d8] sm:$0xff]
    %v3843 = vld [vmem:[#allocation5 + $0x19e0] sm:$0xff]
    %v3844 = vld [vmem:[#allocation5 + $0x1a40] sm:$0xff]
    %v3845 = vld [vmem:[#allocation5 + $0x1a48] sm:$0xff]
    %v3846 = vld [vmem:[#allocation5 + $0x1aa8] sm:$0xff]
    %v3847 = vld [vmem:[#allocation5 + $0x1ab0] sm:$0xff]
    %v3848 = vld [vmem:[#allocation5 + $0x1b10] sm:$0xff]
    %v3849 = vld [vmem:[#allocation5 + $0x1b18] sm:$0xff]
    %v3850 = vld [vmem:[#allocation5 + $0x1b78] sm:$0xff]
    %v3851 = vld [vmem:[#allocation5 + $0x1b80] sm:$0xff]
    %v3852 = vld [vmem:[#allocation5 + $0x1be0] sm:$0xff]
    %v3853 = vld [vmem:[#allocation5 + $0x1be8] sm:$0xff]
    %v3854 = vld [vmem:[#allocation5 + $0x1c48] sm:$0xff]
    %v3855 = vld [vmem:[#allocation5 + $0x1c50] sm:$0xff]
    %v3856 = vld [vmem:[#allocation5 + $0x1cb0] sm:$0xff]
    %v3857 = vld [vmem:[#allocation5 + $0x1cb8] sm:$0xff]
    %v3858 = vld [vmem:[#allocation5 + $0x1d18] sm:$0xff]
    %v3859 = vld [vmem:[#allocation5 + $0x1d20] sm:$0xff]
    %v3860 = vld [vmem:[#allocation5 + $0x1d80] sm:$0xff]
    %v3861 = vld [vmem:[#allocation5 + $0x1d88] sm:$0xff]
    %v3862 = vld [vmem:[#allocation5 + $0x1de8] sm:$0xff]
    %v3863 = vld [vmem:[#allocation5 + $0x1df0] sm:$0xff]
    %v3864 = vld [vmem:[#allocation5 + $0x1e50] sm:$0xff]
    %v3865 = vld [vmem:[#allocation5 + $0x1e58] sm:$0xff]
    %v3866 = vld [vmem:[#allocation5 + $0x1eb8] sm:$0xff]
    %v3867 = vld [vmem:[#allocation5 + $0x1ec0] sm:$0xff]
    %v3868 = vld [vmem:[#allocation5 + $0x1f20] sm:$0xff]
    %v3869 = vld [vmem:[#allocation5 + $0x1f28] sm:$0xff]
    %v3870 = vld [vmem:[#allocation5 + $0x1f88] sm:$0xff]
    %v3871 = vld [vmem:[#allocation5 + $0x1f90] sm:$0xff]
    %v3872 = vld [vmem:[#allocation5 + $0x1ff0] sm:$0xff]
    %v3873 = vld [vmem:[#allocation5 + $0x1ff8] sm:$0xff]
    %v3874 = vld [vmem:[#allocation5 + $0x2058] sm:$0xff]
    %v3875 = vld [vmem:[#allocation5 + $0x2060] sm:$0xff]
    %v3876 = vld [vmem:[#allocation5 + $0x20c0] sm:$0xff]
    %v3877 = vld [vmem:[#allocation5 + $0x20c8] sm:$0xff]
    %v3878 = vld [vmem:[#allocation5 + $0x2128] sm:$0xff]
    %v3879 = vld [vmem:[#allocation5 + $0x2130] sm:$0xff]
    %v3880 = vld [vmem:[#allocation5 + $0x2190] sm:$0xff]
    %v3881 = vld [vmem:[#allocation5 + $0x2198] sm:$0xff]
    %v3882 = vld [vmem:[#allocation5 + $0x21f8] sm:$0xff]
    %v3883 = vld [vmem:[#allocation5 + $0x2200] sm:$0xff]
    %v3884 = vld [vmem:[#allocation5 + $0x2260] sm:$0xff]
    %v3885 = vld [vmem:[#allocation5 + $0x2268] sm:$0xff]
    %v3886 = vld [vmem:[#allocation5 + $0x22c8] sm:$0xff]
    %v3887 = vld [vmem:[#allocation5 + $0x22d0] sm:$0xff]
    %v3888 = vld [vmem:[#allocation5 + $0x2330] sm:$0xff]
    %v3889 = vld [vmem:[#allocation5 + $0x2338] sm:$0xff]
    %v3890 = vld [vmem:[#allocation5 + $0x2398] sm:$0xff]
    %v3891 = vld [vmem:[#allocation5 + $0x23a0] sm:$0xff]
    %v3892 = vld [vmem:[#allocation5 + $0x2400] sm:$0xff]
    %v3893 = vld [vmem:[#allocation5 + $0x2408] sm:$0xff]
    %v3894 = vld [vmem:[#allocation5 + $0x2468] sm:$0xff]
    %v3895 = vld [vmem:[#allocation5 + $0x2470] sm:$0xff]
    %v3896 = vld [vmem:[#allocation5 + $0x24d0] sm:$0xff]
    %v3897 = vld [vmem:[#allocation5 + $0x24d8] sm:$0xff]
    %v3898 = vld [vmem:[#allocation5 + $0x2538] sm:$0xff]
    %v3899 = vld [vmem:[#allocation5 + $0x2540] sm:$0xff]
    %v3900 = vld [vmem:[#allocation5 + $0x25a0] sm:$0xff]
    %v3901 = vld [vmem:[#allocation5 + $0x25a8] sm:$0xff]
    %v3902 = vld [vmem:[#allocation5 + $0x2608] sm:$0xff]
    %v3903 = vld [vmem:[#allocation5 + $0x2610] sm:$0xff]
    %v3904 = vld [vmem:[#allocation5 + $0x2670] sm:$0xff]
    %v3905 = vld [vmem:[#allocation5 + $0x2678] sm:$0xff]
    %v3906 = vld [vmem:[#allocation5 + $0x26d8] sm:$0xff]
    %v3907 = vld [vmem:[#allocation5 + $0x26e0] sm:$0xff]
    %v3908 = vld [vmem:[#allocation5 + $0x2740] sm:$0xff]
    %v3909 = vld [vmem:[#allocation5 + $0x2748] sm:$0xff]
    %v3910 = vld [vmem:[#allocation5 + $0x27a8] sm:$0xff]
    %v3911 = vld [vmem:[#allocation5 + $0x27b0] sm:$0xff]
    %v3912 = vld [vmem:[#allocation5 + $0x2810] sm:$0xff]
    %v3913 = vld [vmem:[#allocation5 + $0x2818] sm:$0xff]
    %v3914 = vld [vmem:[#allocation5 + $0x2878] sm:$0xff]
    %v3915 = vld [vmem:[#allocation5 + $0x2880] sm:$0xff]
    %v3916 = vld [vmem:[#allocation5 + $0x28e0] sm:$0xff]
    %v3917 = vld [vmem:[#allocation5 + $0x28e8] sm:$0xff]
    %v3918 = vld [vmem:[#allocation5 + $0x2948] sm:$0xff]
    %v3919 = vld [vmem:[#allocation5 + $0x2950] sm:$0xff]
    %v3920 = vld [vmem:[#allocation5 + $0x29b0] sm:$0xff]
    %v3921 = vld [vmem:[#allocation5 + $0x29b8] sm:$0xff]
    %v3922 = vld [vmem:[#allocation5 + $0x2a18] sm:$0xff]
    %v3923 = vld [vmem:[#allocation5 + $0x2a20] sm:$0xff]
    %v3924 = vld [vmem:[#allocation5 + $0x2a80] sm:$0xff]
    %v3925 = vld [vmem:[#allocation5 + $0x2a88] sm:$0xff]
    %v3926 = vld [vmem:[#allocation5 + $0x2ae8] sm:$0xff]
    %v3927 = vld [vmem:[#allocation5 + $0x2af0] sm:$0xff]
    %v3928 = vld [vmem:[#allocation5 + $0x2b50] sm:$0xff]
    %v3929 = vld [vmem:[#allocation5 + $0x2b58] sm:$0xff]
    %v3930 = vld [vmem:[#allocation5 + $0x2bb8] sm:$0xff]
    %v3931 = vld [vmem:[#allocation5 + $0x2bc0] sm:$0xff]
    %v3932 = vld [vmem:[#allocation5 + $0x2c20] sm:$0xff]
    %v3933 = vld [vmem:[#allocation5 + $0x2c28] sm:$0xff]
    %v3934 = vld [vmem:[#allocation5 + $0x2c88] sm:$0xff]
    %v3935 = vld [vmem:[#allocation5 + $0x2c90] sm:$0xff]
    %v3936 = vld [vmem:[#allocation5 + $0x2cf0] sm:$0xff]
    %v3937 = vld [vmem:[#allocation5 + $0x2cf8] sm:$0xff]
    %v3938 = vld [vmem:[#allocation5 + $0x2d58] sm:$0xff]
    %v3939 = vld [vmem:[#allocation5 + $0x2d60] sm:$0xff]
    %v3940 = vld [vmem:[#allocation5 + $0x2dc0] sm:$0xff]
    %v3941 = vld [vmem:[#allocation5 + $0x2dc8] sm:$0xff]
    %v3942 = vld [vmem:[#allocation5 + $0x2e28] sm:$0xff]
    %v3943 = vld [vmem:[#allocation5 + $0x2e30] sm:$0xff]
    %v3944 = vld [vmem:[#allocation5 + $0x2e90] sm:$0xff]
    %v3945 = vld [vmem:[#allocation5 + $0x2e98] sm:$0xff]
    %v3946 = vld [vmem:[#allocation5 + $0x2ef8] sm:$0xff]
    %v3947 = vld [vmem:[#allocation5 + $0x2f00] sm:$0xff]
    %v3948 = vld [vmem:[#allocation5 + $0x2f60] sm:$0xff]
    %v3949 = vld [vmem:[#allocation5 + $0x2f68] sm:$0xff]
    %v3950 = vld [vmem:[#allocation5 + $0x2fc8] sm:$0xff]
    %v3951 = vld [vmem:[#allocation5 + $0x2fd0] sm:$0xff]
    %v3952 = vld [vmem:[#allocation5 + $0x3030] sm:$0xff]
    %v3953 = vld [vmem:[#allocation5 + $0x3038] sm:$0xff]
    %v3954 = vld [vmem:[#allocation5 + $0x3098] sm:$0xff]
    %v3955 = vld [vmem:[#allocation5 + $0x30a0] sm:$0xff]
    %v3956 = vld [vmem:[#allocation5 + $0x3100] sm:$0xff]
    %v3957 = vld [vmem:[#allocation5 + $0x3108] sm:$0xff]
    %v3958 = vld [vmem:[#allocation5 + $0x3168] sm:$0xff]
    %v3959 = vld [vmem:[#allocation5 + $0x3170] sm:$0xff]
    %v3960 = vld [vmem:[#allocation5 + $0x31d0] sm:$0xff]
    %v3961 = vld [vmem:[#allocation5 + $0x31d8] sm:$0xff]
    %v3962 = vld [vmem:[#allocation5 + $0x3238] sm:$0xff]
    %v3963 = vld [vmem:[#allocation5 + $0x3240] sm:$0xff]
    %v3964 = vld [vmem:[#allocation5 + $0x32a0] sm:$0xff]
    %v3965 = vld [vmem:[#allocation5 + $0x32a8] sm:$0xff]
    %v3966 = vld [vmem:[#allocation5 + $0x3308] sm:$0xff]
    %v3967 = vld [vmem:[#allocation5 + $0x3310] sm:$0xff]
    %v3968 = vld [vmem:[#allocation5 + $0x3370] sm:$0xff]
    %v3969 = vld [vmem:[#allocation5 + $0x3378] sm:$0xff]
    %v3970 = vld [vmem:[#allocation5 + $0x33d8] sm:$0xff]
    %v3971 = vld [vmem:[#allocation5 + $0x33e0] sm:$0xff]
    %v3972 = vld [vmem:[#allocation5 + $0x3440] sm:$0xff]
    %v3973 = vld [vmem:[#allocation5 + $0x3448] sm:$0xff]
    %v3974 = vld [vmem:[#allocation5 + $0x34a8] sm:$0xff]
    %v3975 = vld [vmem:[#allocation5 + $0x34b0] sm:$0xff]
    %v3976 = vld [vmem:[#allocation5 + $0x3510] sm:$0xff]
    %v3977 = vld [vmem:[#allocation5 + $0x3518] sm:$0xff]
    %v3978 = vld [vmem:[#allocation5 + $0x3578] sm:$0xff]
    %v3979 = vld [vmem:[#allocation5 + $0x3580] sm:$0xff]
    %v3980 = vld [vmem:[#allocation5 + $0x35e0] sm:$0xff]
    %v3981 = vld [vmem:[#allocation5 + $0x35e8] sm:$0xff]
    %v3982 = vld [vmem:[#allocation5 + $0x3648] sm:$0xff]
    %v3983 = vld [vmem:[#allocation5 + $0x3650] sm:$0xff]
    %v3984 = vld [vmem:[#allocation5 + $0x36b0] sm:$0xff]
    %v3985 = vld [vmem:[#allocation5 + $0x36b8] sm:$0xff]
    %v3986 = vld [vmem:[#allocation5 + $0x3718] sm:$0xff]
    %v3987 = vld [vmem:[#allocation5 + $0x3720] sm:$0xff]
    %v3988 = vld [vmem:[#allocation5 + $0x3780] sm:$0xff]
    %v3989 = vld [vmem:[#allocation5 + $0x3788] sm:$0xff]
    %v3990 = vld [vmem:[#allocation5 + $0x37e8] sm:$0xff]
    %v3991 = vld [vmem:[#allocation5 + $0x37f0] sm:$0xff]
    %v3992 = vld [vmem:[#allocation5 + $0x3850] sm:$0xff]
    %v3993 = vld [vmem:[#allocation5 + $0x3858] sm:$0xff]
    %v3994 = vld [vmem:[#allocation5 + $0x38b8] sm:$0xff]
    %v3995 = vld [vmem:[#allocation5 + $0x38c0] sm:$0xff]
    %v3996 = vld [vmem:[#allocation5 + $0x3920] sm:$0xff]
    %v3997 = vld [vmem:[#allocation5 + $0x3928] sm:$0xff]
    %v3998 = vld [vmem:[#allocation5 + $0x3988] sm:$0xff]
    %v3999 = vld [vmem:[#allocation5 + $0x3990] sm:$0xff]
    %v4000 = vld [vmem:[#allocation5 + $0x39f0] sm:$0xff]
    %v4001 = vld [vmem:[#allocation5 + $0x39f8] sm:$0xff]
    %v4002 = vld [vmem:[#allocation5 + $0x3a58] sm:$0xff]
    %v4003 = vld [vmem:[#allocation5 + $0x3a60] sm:$0xff]
    %v4004 = vld [vmem:[#allocation5 + $0x3ac0] sm:$0xff]
    %v4005 = vld [vmem:[#allocation5 + $0x3ac8] sm:$0xff]
    %v4006 = vld [vmem:[#allocation5 + $0x3b28] sm:$0xff]
    %v4007 = vld [vmem:[#allocation5 + $0x3b30] sm:$0xff]
    %v4008 = vld [vmem:[#allocation5 + $0x3b90] sm:$0xff]
    %v4009 = vld [vmem:[#allocation5 + $0x3b98] sm:$0xff]
    %v4010 = vld [vmem:[#allocation5 + $0x3bf8] sm:$0xff]
    %v4011 = vld [vmem:[#allocation5 + $0x3c00] sm:$0xff]
    %v4012 = vld [vmem:[#allocation5 + $0x3c60] sm:$0xff]
    %v4013 = vld [vmem:[#allocation5 + $0x3c68] sm:$0xff]
    %v4014 = vld [vmem:[#allocation5 + $0x3cc8] sm:$0xff]
    %v4015 = vld [vmem:[#allocation5 + $0x3cd0] sm:$0xff]
    %v4016 = vld [vmem:[#allocation5 + $0x3d30] sm:$0xff]
    %v4017 = vld [vmem:[#allocation5 + $0x3d38] sm:$0xff]
    %v4018 = vld [vmem:[#allocation5 + $0x3d98] sm:$0xff]
    %v4019 = vld [vmem:[#allocation5 + $0x3da0] sm:$0xff]
    %v4020 = vld [vmem:[#allocation5 + $0x3e00] sm:$0xff]
    %v4021 = vld [vmem:[#allocation5 + $0x3e08] sm:$0xff]
    %v4022 = vld [vmem:[#allocation5 + $0x3e68] sm:$0xff]
    %v4023 = vld [vmem:[#allocation5 + $0x3e70] sm:$0xff]
    %v4024 = vld [vmem:[#allocation5 + $0x3ed0] sm:$0xff]
    %v4025 = vld [vmem:[#allocation5 + $0x3ed8] sm:$0xff]
    %v4026 = vld [vmem:[#allocation5 + $0x3f38] sm:$0xff]
    %v4027 = vld [vmem:[#allocation5 + $0x3f40] sm:$0xff]
    %v4028 = vld [vmem:[#allocation5 + $0x3fa0] sm:$0xff]
    %v4029 = vld [vmem:[#allocation5 + $0x3fa8] sm:$0xff]
    %v4030 = vld [vmem:[#allocation5 + $0x4008] sm:$0xff]
    %v4031 = vld [vmem:[#allocation5 + $0x4010] sm:$0xff]
    %v4032 = vld [vmem:[#allocation5 + $0x4070] sm:$0xff]
    %v4033 = vld [vmem:[#allocation5 + $0x4078] sm:$0xff]
    %v4034 = vld [vmem:[#allocation5 + $0x40d8] sm:$0xff]
    %v4035 = vld [vmem:[#allocation5 + $0x40e0] sm:$0xff]
    %v4036 = vld [vmem:[#allocation5 + $0x4140] sm:$0xff]
    %v4037 = vld [vmem:[#allocation5 + $0x4148] sm:$0xff]
    %v4038 = vld [vmem:[#allocation5 + $0x41a8] sm:$0xff]
    %v4039 = vld [vmem:[#allocation5 + $0x41b0] sm:$0xff]
    %v4040 = vld [vmem:[#allocation5 + $0x4210] sm:$0xff]
    %v4041 = vld [vmem:[#allocation5 + $0x4218] sm:$0xff]
    %v4042 = vld [vmem:[#allocation5 + $0x4278] sm:$0xff]
    %v4043 = vld [vmem:[#allocation5 + $0x4280] sm:$0xff]
    %v4044 = vld [vmem:[#allocation5 + $0x42e0] sm:$0xff]
    %v4045 = vld [vmem:[#allocation5 + $0x42e8] sm:$0xff]
    %v4046 = vld [vmem:[#allocation5 + $0x4348] sm:$0xff]
    %v4047 = vld [vmem:[#allocation5 + $0x4350] sm:$0xff]
    %v4048 = vld [vmem:[#allocation5 + $0x43b0] sm:$0xff]
    %v4049 = vld [vmem:[#allocation5 + $0x43b8] sm:$0xff]
    %v4050 = vld [vmem:[#allocation5 + $0x4418] sm:$0xff]
    %v4051 = vld [vmem:[#allocation5 + $0x4420] sm:$0xff]
    %v4052 = vld [vmem:[#allocation5 + $0x4480] sm:$0xff]
    %v4053 = vld [vmem:[#allocation5 + $0x4488] sm:$0xff]
    %v4054 = vld [vmem:[#allocation5 + $0x44e8] sm:$0xff]
    %v4055 = vld [vmem:[#allocation5 + $0x44f0] sm:$0xff]
    %v4056 = vld [vmem:[#allocation5 + $0x4550] sm:$0xff]
    %v4057 = vld [vmem:[#allocation5 + $0x4558] sm:$0xff]
    %v4058 = vld [vmem:[#allocation5 + $0x45b8] sm:$0xff]
    %v4059 = vld [vmem:[#allocation5 + $0x45c0] sm:$0xff]
    %v4060 = vld [vmem:[#allocation5 + $0x4620] sm:$0xff]
    %v4061 = vld [vmem:[#allocation5 + $0x4628] sm:$0xff]
    %v4062 = vld [vmem:[#allocation5 + $0x4688] sm:$0xff]
    %v4063 = vld [vmem:[#allocation5 + $0x4690] sm:$0xff]
    %v4064 = vld [vmem:[#allocation5 + $0x46f0] sm:$0xff]
    %v4065 = vld [vmem:[#allocation5 + $0x46f8] sm:$0xff]
    %v4066 = vld [vmem:[#allocation5 + $0x4758] sm:$0xff]
    %v4067 = vld [vmem:[#allocation5 + $0x4760] sm:$0xff]
    %v4068 = vld [vmem:[#allocation5 + $0x47c0] sm:$0xff]
    %v4069 = vld [vmem:[#allocation5 + $0x47c8] sm:$0xff]
    %v4070 = vld [vmem:[#allocation5 + $0x4828] sm:$0xff]
    %v4071 = vld [vmem:[#allocation5 + $0x4830] sm:$0xff]
    %v4072 = vld [vmem:[#allocation5 + $0x4890] sm:$0xff]
    %v4073 = vld [vmem:[#allocation5 + $0x4898] sm:$0xff]
    %v4074 = vld [vmem:[#allocation5 + $0x48f8] sm:$0xff]
    %v4075 = vld [vmem:[#allocation5 + $0x4900] sm:$0xff]
    %v4076 = vld [vmem:[#allocation5 + $0x4960] sm:$0xff]
    %v4077 = vld [vmem:[#allocation5 + $0x4968] sm:$0xff]
    %v4078 = vld [vmem:[#allocation5 + $0x49c8] sm:$0xff]
    %v4079 = vld [vmem:[#allocation5 + $0x49d0] sm:$0xff]
    %v4080 = vld [vmem:[#allocation5 + $0x4a30] sm:$0xff]
    %v4081 = vld [vmem:[#allocation5 + $0x4a38] sm:$0xff]
    %v4082 = vld [vmem:[#allocation5 + $0x4a98] sm:$0xff]
    %v4083 = vld [vmem:[#allocation5 + $0x4aa0] sm:$0xff]
    %v4084 = vld [vmem:[#allocation5 + $0x4b00] sm:$0xff]
    %v4085 = vld [vmem:[#allocation5 + $0x4b08] sm:$0xff]
    %v4086 = vld [vmem:[#allocation5 + $0x4b68] sm:$0xff]
    %v4087 = vld [vmem:[#allocation5 + $0x4b70] sm:$0xff]
    %v4088 = vld [vmem:[#allocation5 + $0x4bd0] sm:$0xff]
    %v4089 = vld [vmem:[#allocation5 + $0x4bd8] sm:$0xff]
    %v4090 = vld [vmem:[#allocation5 + $0x4c38] sm:$0xff]
    %v4091 = vld [vmem:[#allocation5 + $0x4c40] sm:$0xff]
    %v4092 = vld [vmem:[#allocation5 + $0x4ca0] sm:$0xff]
    %v4093 = vld [vmem:[#allocation5 + $0x4ca8] sm:$0xff]
    %v4094 = vld [vmem:[#allocation5 + $0x4d08] sm:$0xff]
    %v4095 = vld [vmem:[#allocation5 + $0x4d10] sm:$0xff]
    %v4096 = vld [vmem:[#allocation5 + $0x4d70] sm:$0xff]
    %v4097 = vld [vmem:[#allocation5 + $0x4d78] sm:$0xff]
    %v4098 = vld [vmem:[#allocation5 + $0x4dd8] sm:$0xff]
    %v4099 = vld [vmem:[#allocation5 + $0x4de0] sm:$0xff]
    %v4100 = vld [vmem:[#allocation5 + $0x4e40] sm:$0xff]
    %v4101 = vld [vmem:[#allocation5 + $0x4e48] sm:$0xff]
    %v4102 = vld [vmem:[#allocation5 + $0x4ea8] sm:$0xff]
    %v4103 = vld [vmem:[#allocation5 + $0x4eb0] sm:$0xff]
    %v4104 = vld [vmem:[#allocation5 + $0x4f10] sm:$0xff]
    %v4105 = vld [vmem:[#allocation5 + $0x4f18] sm:$0xff]
    %v4106 = vld [vmem:[#allocation5 + $0x4f78] sm:$0xff]
    %v4107 = vld [vmem:[#allocation5 + $0x4f80] sm:$0xff]
    %v4108 = vld [vmem:[#allocation5 + $0x4fe0] sm:$0xff]
    %v4109 = vld [vmem:[#allocation5 + $0x4fe8] sm:$0xff]
    %v4110 = vld [vmem:[#allocation5 + $0x5048] sm:$0xff]
    %v4111 = vld [vmem:[#allocation5 + $0x5050] sm:$0xff]
    %v4112 = vld [vmem:[#allocation5 + $0x50b0] sm:$0xff]
    %v4113 = vld [vmem:[#allocation5 + $0x50b8] sm:$0xff]
    %v4114 = vld [vmem:[#allocation5 + $0x5118] sm:$0xff]
    %v4115 = vld [vmem:[#allocation5 + $0x5120] sm:$0xff]
    %v4116 = vld [vmem:[#allocation5 + $0x5180] sm:$0xff]
    %v4117 = vld [vmem:[#allocation5 + $0x5188] sm:$0xff]
    %v4118 = vld [vmem:[#allocation5 + $0x51e8] sm:$0xff]
    %v4119 = vld [vmem:[#allocation5 + $0x51f0] sm:$0xff]
    %v4120 = vld [vmem:[#allocation5 + $0x5250] sm:$0xff]
    %v4121 = vld [vmem:[#allocation5 + $0x5258] sm:$0xff]
    %v4122 = vld [vmem:[#allocation5 + $0x52b8] sm:$0x1]
    %v4123 = vld [vmem:[#allocation5 + $0x52c0] sm:$0x1]
    %v4125 = vsel %vm463, %v4122, 0
    %v4128 = vsel %vm463, %v4123, 0
    %4130 = vmatprep.subr.mxu0 %v3717
    %4131 = vmatpush1.msra.mxu0 %v3716
    %4132 = vmatprep.subr.mxu0 %v3719
    %4133 = vmatpush1.msra.mxu0 %v3718
    %4134 = vmatprep.subr.mxu0 %v3721
    %4135 = vmatpush1.msra.mxu0 %v3720
    %4136 = vmatprep.subr.mxu0 %v3723
    %4137 = vmatpush1.msra.mxu0 %v3722
    %4138 = vmatprep.subr.mxu0 %v3725
    %4139 = vmatpush1.msra.mxu0 %v3724
    %4140 = vmatprep.subr.mxu0 %v3727
    %4141 = vmatpush1.msra.mxu0 %v3726
    %4142 = vmatprep.subr.mxu0 %v3729
    %4143 = vmatpush1.msra.mxu0 %v3728
    %4144 = vmatprep.subr.mxu0 %v3731
    %4145 = vmatpush1.msra.mxu0 %v3730
    %4146 = vmatprep.subr.mxu0 %v3733
    %4147 = vmatpush1.msra.mxu0 %v3732
    %4148 = vmatprep.subr.mxu0 %v3735
    %4149 = vmatpush1.msra.mxu0 %v3734
    %4150 = vmatprep.subr.mxu0 %v3737
    %4151 = vmatpush1.msra.mxu0 %v3736
    %4152 = vmatprep.subr.mxu0 %v3739
    %4153 = vmatpush1.msra.mxu0 %v3738
    %4154 = vmatprep.subr.mxu0 %v3741
    %4155 = vmatpush1.msra.mxu0 %v3740
    %4156 = vmatprep.subr.mxu0 %v3743
    %4157 = vmatpush1.msra.mxu0 %v3742
    %4158 = vmatprep.subr.mxu0 %v3745
    %4159 = vmatpush1.msra.mxu0 %v3744
    %4160 = vmatprep.subr.mxu0 %v3747
    %4161 = vmatpush1.msra.mxu0 %v3746
    %4162 = vmatprep.subr.mxu0 %v3749
    %4163 = vmatpush1.msra.mxu0 %v3748
    %4164 = vmatprep.subr.mxu0 %v3751
    %4165 = vmatpush1.msra.mxu0 %v3750
    %4166 = vmatprep.subr.mxu0 %v3753
    %4167 = vmatpush1.msra.mxu0 %v3752
    %4168 = vmatprep.subr.mxu0 %v3755
    %4169 = vmatpush1.msra.mxu0 %v3754
    %4170 = vmatprep.subr.mxu0 %v3757
    %4171 = vmatpush1.msra.mxu0 %v3756
    %4172 = vmatprep.subr.mxu0 %v3759
    %4173 = vmatpush1.msra.mxu0 %v3758
    %4174 = vmatprep.subr.mxu0 %v3761
    %4175 = vmatpush1.msra.mxu0 %v3760
    %4176 = vmatprep.subr.mxu0 %v3763
    %4177 = vmatpush1.msra.mxu0 %v3762
    %4178 = vmatprep.subr.mxu0 %v3765
    %4179 = vmatpush1.msra.mxu0 %v3764
    %4180 = vmatprep.subr.mxu0 %v3767
    %4181 = vmatpush1.msra.mxu0 %v3766
    %4182 = vmatprep.subr.mxu0 %v3769
    %4183 = vmatpush1.msra.mxu0 %v3768
    %4184 = vmatprep.subr.mxu0 %v3771
    %4185 = vmatpush1.msra.mxu0 %v3770
    %4186 = vmatprep.subr.mxu0 %v3773
    %4187 = vmatpush1.msra.mxu0 %v3772
    %4188 = vmatprep.subr.mxu0 %v3775
    %4189 = vmatpush1.msra.mxu0 %v3774
    %4190 = vmatprep.subr.mxu0 %v3777
    %4191 = vmatpush1.msra.mxu0 %v3776
    %4192 = vmatprep.subr.mxu0 %v3779
    %4193 = vmatpush1.msra.mxu0 %v3778
    %4194 = vmatprep.mubr.f32.mxu0 %v39
    %4195 = vmatmul.mubr.f32.gmra.mrb[0].mxu0 %v38
    %v4196 = vpop.f32.mrb[0].mxu0
    %v4197 = vadd.f32 0.0, %v4196
    %v4198 = vpop.f32.mrb[0].mxu0
    %v4199 = vadd.f32 0.0, %v4198
    %4200 = vdwg.mxu0
    %4201 = vmatprep.subr.mxu0 %v3781
    %4202 = vmatpush1.msra.mxu0 %v3780
    %4203 = vmatprep.subr.mxu0 %v3783
    %4204 = vmatpush1.msra.mxu0 %v3782
    %4205 = vmatprep.subr.mxu0 %v3785
    %4206 = vmatpush1.msra.mxu0 %v3784
    %4207 = vmatprep.subr.mxu0 %v3787
    %4208 = vmatpush1.msra.mxu0 %v3786
    %4209 = vmatprep.subr.mxu0 %v3789
    %4210 = vmatpush1.msra.mxu0 %v3788
    %4211 = vmatprep.subr.mxu0 %v3791
    %4212 = vmatpush1.msra.mxu0 %v3790
    %4213 = vmatprep.subr.mxu0 %v3793
    %4214 = vmatpush1.msra.mxu0 %v3792
    %4215 = vmatprep.subr.mxu0 %v3795
    %4216 = vmatpush1.msra.mxu0 %v3794
    %4217 = vmatprep.subr.mxu0 %v3797
    %4218 = vmatpush1.msra.mxu0 %v3796
    %4219 = vmatprep.subr.mxu0 %v3799
    %4220 = vmatpush1.msra.mxu0 %v3798
    %4221 = vmatprep.subr.mxu0 %v3801
    %4222 = vmatpush1.msra.mxu0 %v3800
    %4223 = vmatprep.subr.mxu0 %v3803
    %4224 = vmatpush1.msra.mxu0 %v3802
    %4225 = vmatprep.subr.mxu0 %v3805
    %4226 = vmatpush1.msra.mxu0 %v3804
    %4227 = vmatprep.subr.mxu0 %v3807
    %4228 = vmatpush1.msra.mxu0 %v3806
    %4229 = vmatprep.subr.mxu0 %v3809
    %4230 = vmatpush1.msra.mxu0 %v3808
    %4231 = vmatprep.subr.mxu0 %v3811
    %4232 = vmatpush1.msra.mxu0 %v3810
    %4233 = vmatprep.subr.mxu0 %v3813
    %4234 = vmatpush1.msra.mxu0 %v3812
    %4235 = vmatprep.subr.mxu0 %v3815
    %4236 = vmatpush1.msra.mxu0 %v3814
    %4237 = vmatprep.subr.mxu0 %v3817
    %4238 = vmatpush1.msra.mxu0 %v3816
    %4239 = vmatprep.subr.mxu0 %v3819
    %4240 = vmatpush1.msra.mxu0 %v3818
    %4241 = vmatprep.subr.mxu0 %v3821
    %4242 = vmatpush1.msra.mxu0 %v3820
    %4243 = vmatprep.subr.mxu0 %v3823
    %4244 = vmatpush1.msra.mxu0 %v3822
    %4245 = vmatprep.subr.mxu0 %v3825
    %4246 = vmatpush1.msra.mxu0 %v3824
    %4247 = vmatprep.subr.mxu0 %v3827
    %4248 = vmatpush1.msra.mxu0 %v3826
    %4249 = vmatprep.subr.mxu0 %v3829
    %4250 = vmatpush1.msra.mxu0 %v3828
    %4251 = vmatprep.subr.mxu0 %v3831
    %4252 = vmatpush1.msra.mxu0 %v3830
    %4253 = vmatprep.subr.mxu0 %v3833
    %4254 = vmatpush1.msra.mxu0 %v3832
    %4255 = vmatprep.subr.mxu0 %v3835
    %4256 = vmatpush1.msra.mxu0 %v3834
    %4257 = vmatprep.subr.mxu0 %v3837
    %4258 = vmatpush1.msra.mxu0 %v3836
    %4259 = vmatprep.subr.mxu0 %v3839
    %4260 = vmatpush1.msra.mxu0 %v3838
    %4261 = vmatprep.subr.mxu0 %v3841
    %4262 = vmatpush1.msra.mxu0 %v3840
    %4263 = vmatprep.subr.mxu0 %v3843
    %4264 = vmatpush1.msra.mxu0 %v3842
    %4265 = vmatprep.mubr.f32.mxu0 %v41
    %4266 = vmatmul.mubr.f32.gmra.mrb[0].mxu0 %v40
    %v4267 = vpop.f32.mrb[0].mxu0
    %v4268 = vadd.f32 %v4197, %v4267
    %v4269 = vpop.f32.mrb[0].mxu0
    %v4270 = vadd.f32 %v4199, %v4269
    %4271 = vdwg.mxu0
    %4272 = vmatprep.subr.mxu0 %v3845
    %4273 = vmatpush1.msra.mxu0 %v3844
    %4274 = vmatprep.subr.mxu0 %v3847
    %4275 = vmatpush1.msra.mxu0 %v3846
    %4276 = vmatprep.subr.mxu0 %v3849
    %4277 = vmatpush1.msra.mxu0 %v3848
    %4278 = vmatprep.subr.mxu0 %v3851
    %4279 = vmatpush1.msra.mxu0 %v3850
    %4280 = vmatprep.subr.mxu0 %v3853
    %4281 = vmatpush1.msra.mxu0 %v3852
    %4282 = vmatprep.subr.mxu0 %v3855
    %4283 = vmatpush1.msra.mxu0 %v3854
    %4284 = vmatprep.subr.mxu0 %v3857
    %4285 = vmatpush1.msra.mxu0 %v3856
    %4286 = vmatprep.subr.mxu0 %v3859
    %4287 = vmatpush1.msra.mxu0 %v3858
    %4288 = vmatprep.subr.mxu0 %v3861
    %4289 = vmatpush1.msra.mxu0 %v3860
    %4290 = vmatprep.subr.mxu0 %v3863
    %4291 = vmatpush1.msra.mxu0 %v3862
    %4292 = vmatprep.subr.mxu0 %v3865
    %4293 = vmatpush1.msra.mxu0 %v3864
    %4294 = vmatprep.subr.mxu0 %v3867
    %4295 = vmatpush1.msra.mxu0 %v3866
    %4296 = vmatprep.subr.mxu0 %v3869
    %4297 = vmatpush1.msra.mxu0 %v3868
    %4298 = vmatprep.subr.mxu0 %v3871
    %4299 = vmatpush1.msra.mxu0 %v3870
    %4300 = vmatprep.subr.mxu0 %v3873
    %4301 = vmatpush1.msra.mxu0 %v3872
    %4302 = vmatprep.subr.mxu0 %v3875
    %4303 = vmatpush1.msra.mxu0 %v3874
    %4304 = vmatprep.subr.mxu0 %v3877
    %4305 = vmatpush1.msra.mxu0 %v3876
    %4306 = vmatprep.subr.mxu0 %v3879
    %4307 = vmatpush1.msra.mxu0 %v3878
    %4308 = vmatprep.subr.mxu0 %v3881
    %4309 = vmatpush1.msra.mxu0 %v3880
    %4310 = vmatprep.subr.mxu0 %v3883
    %4311 = vmatpush1.msra.mxu0 %v3882
    %4312 = vmatprep.subr.mxu0 %v3885
    %4313 = vmatpush1.msra.mxu0 %v3884
    %4314 = vmatprep.subr.mxu0 %v3887
    %4315 = vmatpush1.msra.mxu0 %v3886
    %4316 = vmatprep.subr.mxu0 %v3889
    %4317 = vmatpush1.msra.mxu0 %v3888
    %4318 = vmatprep.subr.mxu0 %v3891
    %4319 = vmatpush1.msra.mxu0 %v3890
    %4320 = vmatprep.subr.mxu0 %v3893
    %4321 = vmatpush1.msra.mxu0 %v3892
    %4322 = vmatprep.subr.mxu0 %v3895
    %4323 = vmatpush1.msra.mxu0 %v3894
    %4324 = vmatprep.subr.mxu0 %v3897
    %4325 = vmatpush1.msra.mxu0 %v3896
    %4326 = vmatprep.subr.mxu0 %v3899
    %4327 = vmatpush1.msra.mxu0 %v3898
    %4328 = vmatprep.subr.mxu0 %v3901
    %4329 = vmatpush1.msra.mxu0 %v3900
    %4330 = vmatprep.subr.mxu0 %v3903
    %4331 = vmatpush1.msra.mxu0 %v3902
    %4332 = vmatprep.subr.mxu0 %v3905
    %4333 = vmatpush1.msra.mxu0 %v3904
    %4334 = vmatprep.subr.mxu0 %v3907
    %4335 = vmatpush1.msra.mxu0 %v3906
    %4336 = vmatprep.mubr.f32.mxu0 %v43
    %4337 = vmatmul.mubr.f32.gmra.mrb[0].mxu0 %v42
    %v4338 = vpop.f32.mrb[0].mxu0
    %v4339 = vadd.f32 %v4268, %v4338
    %v4340 = vpop.f32.mrb[0].mxu0
    %v4341 = vadd.f32 %v4270, %v4340
    %4342 = vdwg.mxu0
    %4343 = vmatprep.subr.mxu0 %v3909
    %4344 = vmatpush1.msra.mxu0 %v3908
    %4345 = vmatprep.subr.mxu0 %v3911
    %4346 = vmatpush1.msra.mxu0 %v3910
    %4347 = vmatprep.subr.mxu0 %v3913
    %4348 = vmatpush1.msra.mxu0 %v3912
    %4349 = vmatprep.subr.mxu0 %v3915
    %4350 = vmatpush1.msra.mxu0 %v3914
    %4351 = vmatprep.subr.mxu0 %v3917
    %4352 = vmatpush1.msra.mxu0 %v3916
    %4353 = vmatprep.subr.mxu0 %v3919
    %4354 = vmatpush1.msra.mxu0 %v3918
    %4355 = vmatprep.subr.mxu0 %v3921
    %4356 = vmatpush1.msra.mxu0 %v3920
    %4357 = vmatprep.subr.mxu0 %v3923
    %4358 = vmatpush1.msra.mxu0 %v3922
    %4359 = vmatprep.subr.mxu0 %v3925
    %4360 = vmatpush1.msra.mxu0 %v3924
    %4361 = vmatprep.subr.mxu0 %v3927
    %4362 = vmatpush1.msra.mxu0 %v3926
    %4363 = vmatprep.subr.mxu0 %v3929
    %4364 = vmatpush1.msra.mxu0 %v3928
    %4365 = vmatprep.subr.mxu0 %v3931
    %4366 = vmatpush1.msra.mxu0 %v3930
    %4367 = vmatprep.subr.mxu0 %v3933
    %4368 = vmatpush1.msra.mxu0 %v3932
    %4369 = vmatprep.subr.mxu0 %v3935
    %4370 = vmatpush1.msra.mxu0 %v3934
    %4371 = vmatprep.subr.mxu0 %v3937
    %4372 = vmatpush1.msra.mxu0 %v3936
    %4373 = vmatprep.subr.mxu0 %v3939
    %4374 = vmatpush1.msra.mxu0 %v3938
    %4375 = vmatprep.subr.mxu0 %v3941
    %4376 = vmatpush1.msra.mxu0 %v3940
    %4377 = vmatprep.subr.mxu0 %v3943
    %4378 = vmatpush1.msra.mxu0 %v3942
    %4379 = vmatprep.subr.mxu0 %v3945
    %4380 = vmatpush1.msra.mxu0 %v3944
    %4381 = vmatprep.subr.mxu0 %v3947
    %4382 = vmatpush1.msra.mxu0 %v3946
    %4383 = vmatprep.subr.mxu0 %v3949
    %4384 = vmatpush1.msra.mxu0 %v3948
    %4385 = vmatprep.subr.mxu0 %v3951
    %4386 = vmatpush1.msra.mxu0 %v3950
    %4387 = vmatprep.subr.mxu0 %v3953
    %4388 = vmatpush1.msra.mxu0 %v3952
    %4389 = vmatprep.subr.mxu0 %v3955
    %4390 = vmatpush1.msra.mxu0 %v3954
    %4391 = vmatprep.subr.mxu0 %v3957
    %4392 = vmatpush1.msra.mxu0 %v3956
    %4393 = vmatprep.subr.mxu0 %v3959
    %4394 = vmatpush1.msra.mxu0 %v3958
    %4395 = vmatprep.subr.mxu0 %v3961
    %4396 = vmatpush1.msra.mxu0 %v3960
    %4397 = vmatprep.subr.mxu0 %v3963
    %4398 = vmatpush1.msra.mxu0 %v3962
    %4399 = vmatprep.subr.mxu0 %v3965
    %4400 = vmatpush1.msra.mxu0 %v3964
    %4401 = vmatprep.subr.mxu0 %v3967
    %4402 = vmatpush1.msra.mxu0 %v3966
    %4403 = vmatprep.subr.mxu0 %v3969
    %4404 = vmatpush1.msra.mxu0 %v3968
    %4405 = vmatprep.subr.mxu0 %v3971
    %4406 = vmatpush1.msra.mxu0 %v3970
    %4407 = vmatprep.mubr.f32.mxu0 %v45
    %4408 = vmatmul.mubr.f32.gmra.mrb[0].mxu0 %v44
    %v4409 = vpop.f32.mrb[0].mxu0
    %v4410 = vadd.f32 %v4339, %v4409
    %v4411 = vpop.f32.mrb[0].mxu0
    %v4412 = vadd.f32 %v4341, %v4411
    %4413 = vdwg.mxu0
    %4414 = vmatprep.subr.mxu0 %v3973
    %4415 = vmatpush1.msra.mxu0 %v3972
    %4416 = vmatprep.subr.mxu0 %v3975
    %4417 = vmatpush1.msra.mxu0 %v3974
    %4418 = vmatprep.subr.mxu0 %v3977
    %4419 = vmatpush1.msra.mxu0 %v3976
    %4420 = vmatprep.subr.mxu0 %v3979
    %4421 = vmatpush1.msra.mxu0 %v3978
    %4422 = vmatprep.subr.mxu0 %v3981
    %4423 = vmatpush1.msra.mxu0 %v3980
    %4424 = vmatprep.subr.mxu0 %v3983
    %4425 = vmatpush1.msra.mxu0 %v3982
    %4426 = vmatprep.subr.mxu0 %v3985
    %4427 = vmatpush1.msra.mxu0 %v3984
    %4428 = vmatprep.subr.mxu0 %v3987
    %4429 = vmatpush1.msra.mxu0 %v3986
    %4430 = vmatprep.subr.mxu0 %v3989
    %4431 = vmatpush1.msra.mxu0 %v3988
    %4432 = vmatprep.subr.mxu0 %v3991
    %4433 = vmatpush1.msra.mxu0 %v3990
    %4434 = vmatprep.subr.mxu0 %v3993
    %4435 = vmatpush1.msra.mxu0 %v3992
    %4436 = vmatprep.subr.mxu0 %v3995
    %4437 = vmatpush1.msra.mxu0 %v3994
    %4438 = vmatprep.subr.mxu0 %v3997
    %4439 = vmatpush1.msra.mxu0 %v3996
    %4440 = vmatprep.subr.mxu0 %v3999
    %4441 = vmatpush1.msra.mxu0 %v3998
    %4442 = vmatprep.subr.mxu0 %v4001
    %4443 = vmatpush1.msra.mxu0 %v4000
    %4444 = vmatprep.subr.mxu0 %v4003
    %4445 = vmatpush1.msra.mxu0 %v4002
    %4446 = vmatprep.subr.mxu0 %v4005
    %4447 = vmatpush1.msra.mxu0 %v4004
    %4448 = vmatprep.subr.mxu0 %v4007
    %4449 = vmatpush1.msra.mxu0 %v4006
    %4450 = vmatprep.subr.mxu0 %v4009
    %4451 = vmatpush1.msra.mxu0 %v4008
    %4452 = vmatprep.subr.mxu0 %v4011
    %4453 = vmatpush1.msra.mxu0 %v4010
    %4454 = vmatprep.subr.mxu0 %v4013
    %4455 = vmatpush1.msra.mxu0 %v4012
    %4456 = vmatprep.subr.mxu0 %v4015
    %4457 = vmatpush1.msra.mxu0 %v4014
    %4458 = vmatprep.subr.mxu0 %v4017
    %4459 = vmatpush1.msra.mxu0 %v4016
    %4460 = vmatprep.subr.mxu0 %v4019
    %4461 = vmatpush1.msra.mxu0 %v4018
    %4462 = vmatprep.subr.mxu0 %v4021
    %4463 = vmatpush1.msra.mxu0 %v4020
    %4464 = vmatprep.subr.mxu0 %v4023
    %4465 = vmatpush1.msra.mxu0 %v4022
    %4466 = vmatprep.subr.mxu0 %v4025
    %4467 = vmatpush1.msra.mxu0 %v4024
    %4468 = vmatprep.subr.mxu0 %v4027
    %4469 = vmatpush1.msra.mxu0 %v4026
    %4470 = vmatprep.subr.mxu0 %v4029
    %4471 = vmatpush1.msra.mxu0 %v4028
    %4472 = vmatprep.subr.mxu0 %v4031
    %4473 = vmatpush1.msra.mxu0 %v4030
    %4474 = vmatprep.subr.mxu0 %v4033
    %4475 = vmatpush1.msra.mxu0 %v4032
    %4476 = vmatprep.subr.mxu0 %v4035
    %4477 = vmatpush1.msra.mxu0 %v4034
    %4478 = vmatprep.mubr.f32.mxu0 %v47
    %4479 = vmatmul.mubr.f32.gmra.mrb[0].mxu0 %v46
    %v4480 = vpop.f32.mrb[0].mxu0
    %v4481 = vadd.f32 %v4410, %v4480
    %v4482 = vpop.f32.mrb[0].mxu0
    %v4483 = vadd.f32 %v4412, %v4482
    %4484 = vdwg.mxu0
    %4485 = vmatprep.subr.mxu0 %v4037
    %4486 = vmatpush1.msra.mxu0 %v4036
    %4487 = vmatprep.subr.mxu0 %v4039
    %4488 = vmatpush1.msra.mxu0 %v4038
    %4489 = vmatprep.subr.mxu0 %v4041
    %4490 = vmatpush1.msra.mxu0 %v4040
    %4491 = vmatprep.subr.mxu0 %v4043
    %4492 = vmatpush1.msra.mxu0 %v4042
    %4493 = vmatprep.subr.mxu0 %v4045
    %4494 = vmatpush1.msra.mxu0 %v4044
    %4495 = vmatprep.subr.mxu0 %v4047
    %4496 = vmatpush1.msra.mxu0 %v4046
    %4497 = vmatprep.subr.mxu0 %v4049
    %4498 = vmatpush1.msra.mxu0 %v4048
    %4499 = vmatprep.subr.mxu0 %v4051
    %4500 = vmatpush1.msra.mxu0 %v4050
    %4501 = vmatprep.subr.mxu0 %v4053
    %4502 = vmatpush1.msra.mxu0 %v4052
    %4503 = vmatprep.subr.mxu0 %v4055
    %4504 = vmatpush1.msra.mxu0 %v4054
    %4505 = vmatprep.subr.mxu0 %v4057
    %4506 = vmatpush1.msra.mxu0 %v4056
    %4507 = vmatprep.subr.mxu0 %v4059
    %4508 = vmatpush1.msra.mxu0 %v4058
    %4509 = vmatprep.subr.mxu0 %v4061
    %4510 = vmatpush1.msra.mxu0 %v4060
    %4511 = vmatprep.subr.mxu0 %v4063
    %4512 = vmatpush1.msra.mxu0 %v4062
    %4513 = vmatprep.subr.mxu0 %v4065
    %4514 = vmatpush1.msra.mxu0 %v4064
    %4515 = vmatprep.subr.mxu0 %v4067
    %4516 = vmatpush1.msra.mxu0 %v4066
    %4517 = vmatprep.subr.mxu0 %v4069
    %4518 = vmatpush1.msra.mxu0 %v4068
    %4519 = vmatprep.subr.mxu0 %v4071
    %4520 = vmatpush1.msra.mxu0 %v4070
    %4521 = vmatprep.subr.mxu0 %v4073
    %4522 = vmatpush1.msra.mxu0 %v4072
    %4523 = vmatprep.subr.mxu0 %v4075
    %4524 = vmatpush1.msra.mxu0 %v4074
    %4525 = vmatprep.subr.mxu0 %v4077
    %4526 = vmatpush1.msra.mxu0 %v4076
    %4527 = vmatprep.subr.mxu0 %v4079
    %4528 = vmatpush1.msra.mxu0 %v4078
    %4529 = vmatprep.subr.mxu0 %v4081
    %4530 = vmatpush1.msra.mxu0 %v4080
    %4531 = vmatprep.subr.mxu0 %v4083
    %4532 = vmatpush1.msra.mxu0 %v4082
    %4533 = vmatprep.subr.mxu0 %v4085
    %4534 = vmatpush1.msra.mxu0 %v4084
    %4535 = vmatprep.subr.mxu0 %v4087
    %4536 = vmatpush1.msra.mxu0 %v4086
    %4537 = vmatprep.subr.mxu0 %v4089
    %4538 = vmatpush1.msra.mxu0 %v4088
    %4539 = vmatprep.subr.mxu0 %v4091
    %4540 = vmatpush1.msra.mxu0 %v4090
    %4541 = vmatprep.subr.mxu0 %v4093
    %4542 = vmatpush1.msra.mxu0 %v4092
    %4543 = vmatprep.subr.mxu0 %v4095
    %4544 = vmatpush1.msra.mxu0 %v4094
    %4545 = vmatprep.subr.mxu0 %v4097
    %4546 = vmatpush1.msra.mxu0 %v4096
    %4547 = vmatprep.subr.mxu0 %v4099
    %4548 = vmatpush1.msra.mxu0 %v4098
    %4549 = vmatprep.mubr.f32.mxu0 %v49
    %4550 = vmatmul.mubr.f32.gmra.mrb[0].mxu0 %v48
    %v4551 = vpop.f32.mrb[0].mxu0
    %v4552 = vadd.f32 %v4481, %v4551
    %v4553 = vpop.f32.mrb[0].mxu0
    %v4554 = vadd.f32 %v4483, %v4553
    %4555 = vdwg.mxu0
    %4556 = vmatprep.subr.mxu0 %v4101
    %4557 = vmatpush1.msra.mxu0 %v4100
    %4558 = vmatprep.subr.mxu0 %v4103
    %4559 = vmatpush1.msra.mxu0 %v4102
    %4560 = vmatprep.subr.mxu0 %v4105
    %4561 = vmatpush1.msra.mxu0 %v4104
    %4562 = vmatprep.subr.mxu0 %v4107
    %4563 = vmatpush1.msra.mxu0 %v4106
    %4564 = vmatprep.subr.mxu0 %v4109
    %4565 = vmatpush1.msra.mxu0 %v4108
    %4566 = vmatprep.subr.mxu0 %v4111
    %4567 = vmatpush1.msra.mxu0 %v4110
    %4568 = vmatprep.subr.mxu0 %v4113
    %4569 = vmatpush1.msra.mxu0 %v4112
    %4570 = vmatprep.subr.mxu0 %v4115
    %4571 = vmatpush1.msra.mxu0 %v4114
    %4572 = vmatprep.subr.mxu0 %v4117
    %4573 = vmatpush1.msra.mxu0 %v4116
    %4574 = vmatprep.subr.mxu0 %v4119
    %4575 = vmatpush1.msra.mxu0 %v4118
    %4576 = vmatprep.subr.mxu0 %v4121
    %4577 = vmatpush1.msra.mxu0 %v4120
    %4578 = vmatprep.subr.mxu0 %v4128
    %4579 = vmatpush1.msra.mxu0 %v4125
    %4580 = vmatprep.subr.mxu0 0.0
    %4581 = vmatpush1.msra.mxu0 0.0
    %4582 = vmatprep.subr.mxu0 0.0
    %4583 = vmatpush1.msra.mxu0 0.0
    %4584 = vmatprep.subr.mxu0 0.0
    %4585 = vmatpush1.msra.mxu0 0.0
    %4586 = vmatprep.subr.mxu0 0.0
    %4587 = vmatpush1.msra.mxu0 0.0
    %4588 = vmatprep.subr.mxu0 0.0
    %4589 = vmatpush1.msra.mxu0 0.0
    %4590 = vmatprep.subr.mxu0 0.0
    %4591 = vmatpush1.msra.mxu0 0.0
    %4592 = vmatprep.subr.mxu0 0.0
    %4593 = vmatpush1.msra.mxu0 0.0
    %4594 = vmatprep.subr.mxu0 0.0
    %4595 = vmatpush1.msra.mxu0 0.0
    %4596 = vmatprep.subr.mxu0 0.0
    %4597 = vmatpush1.msra.mxu0 0.0
    %4598 = vmatprep.subr.mxu0 0.0
    %4599 = vmatpush1.msra.mxu0 0.0
    %4600 = vmatprep.subr.mxu0 0.0
    %4601 = vmatpush1.msra.mxu0 0.0
    %4602 = vmatprep.subr.mxu0 0.0
    %4603 = vmatpush1.msra.mxu0 0.0
    %4604 = vmatprep.subr.mxu0 0.0
    %4605 = vmatpush1.msra.mxu0 0.0
    %4606 = vmatprep.subr.mxu0 0.0
    %4607 = vmatpush1.msra.mxu0 0.0
    %4608 = vmatprep.subr.mxu0 0.0
    %4609 = vmatpush1.msra.mxu0 0.0
    %4610 = vmatprep.subr.mxu0 0.0
    %4611 = vmatpush1.msra.mxu0 0.0
    %4612 = vmatprep.subr.mxu0 0.0
    %4613 = vmatpush1.msra.mxu0 0.0
    %4614 = vmatprep.subr.mxu0 0.0
    %4615 = vmatpush1.msra.mxu0 0.0
    %4616 = vmatprep.subr.mxu0 0.0
    %4617 = vmatpush1.msra.mxu0 0.0
    %4618 = vmatprep.subr.mxu0 0.0
    %4619 = vmatpush1.msra.mxu0 0.0
    %4620 = vmatprep.mubr.f32.mxu0 0.0
    %4621 = vmatmul.mubr.f32.gmra.mrb[0].mxu0 %v461
    %v4622 = vpop.f32.mrb[0].mxu0
    %v4623 = vadd.f32 %v4552, %v4622
    %v4624 = vpop.f32.mrb[0].mxu0
    %v4625 = vadd.f32 %v4554, %v4624
    %4626 = vdwg.mxu0
    %s4627 = scalar_lea.vmem [#allocation7], 64
    %4628 = vst.msk [vmem:[%s4627] sm:$0xff] %vm967, %v4623
    %s4629 = scalar_lea.vmem [#allocation7], 72
    %4630 = vst.msk [vmem:[%s4629] sm:$0xff] %vm967, %v4625
    %v4631 = vld [vmem:[#allocation5 + $0x50] sm:$0xff]
    %v4632 = vld [vmem:[#allocation5 + $0x58] sm:$0xff]
    %v4633 = vld [vmem:[#allocation5 + $0xb8] sm:$0xff]
    %v4634 = vld [vmem:[#allocation5 + $0xc0] sm:$0xff]
    %v4635 = vld [vmem:[#allocation5 + $0x120] sm:$0xff]
    %v4636 = vld [vmem:[#allocation5 + $0x128] sm:$0xff]
    %v4637 = vld [vmem:[#allocation5 + $0x188] sm:$0xff]
    %v4638 = vld [vmem:[#allocation5 + $0x190] sm:$0xff]
    %v4639 = vld [vmem:[#allocation5 + $0x1f0] sm:$0xff]
    %v4640 = vld [vmem:[#allocation5 + $0x1f8] sm:$0xff]
    %v4641 = vld [vmem:[#allocation5 + $0x258] sm:$0xff]
    %v4642 = vld [vmem:[#allocation5 + $0x260] sm:$0xff]
    %v4643 = vld [vmem:[#allocation5 + $0x2c0] sm:$0xff]
    %v4644 = vld [vmem:[#allocation5 + $0x2c8] sm:$0xff]
    %v4645 = vld [vmem:[#allocation5 + $0x328] sm:$0xff]
    %v4646 = vld [vmem:[#allocation5 + $0x330] sm:$0xff]
    %v4647 = vld [vmem:[#allocation5 + $0x390] sm:$0xff]
    %v4648 = vld [vmem:[#allocation5 + $0x398] sm:$0xff]
    %v4649 = vld [vmem:[#allocation5 + $0x3f8] sm:$0xff]
    %v4650 = vld [vmem:[#allocation5 + $0x400] sm:$0xff]
    %v4651 = vld [vmem:[#allocation5 + $0x460] sm:$0xff]
    %v4652 = vld [vmem:[#allocation5 + $0x468] sm:$0xff]
    %v4653 = vld [vmem:[#allocation5 + $0x4c8] sm:$0xff]
    %v4654 = vld [vmem:[#allocation5 + $0x4d0] sm:$0xff]
    %v4655 = vld [vmem:[#allocation5 + $0x530] sm:$0xff]
    %v4656 = vld [vmem:[#allocation5 + $0x538] sm:$0xff]
    %v4657 = vld [vmem:[#allocation5 + $0x598] sm:$0xff]
    %v4658 = vld [vmem:[#allocation5 + $0x5a0] sm:$0xff]
    %v4659 = vld [vmem:[#allocation5 + $0x600] sm:$0xff]
    %v4660 = vld [vmem:[#allocation5 + $0x608] sm:$0xff]
    %v4661 = vld [vmem:[#allocation5 + $0x668] sm:$0xff]
    %v4662 = vld [vmem:[#allocation5 + $0x670] sm:$0xff]
    %v4663 = vld [vmem:[#allocation5 + $0x6d0] sm:$0xff]
    %v4664 = vld [vmem:[#allocation5 + $0x6d8] sm:$0xff]
    %v4665 = vld [vmem:[#allocation5 + $0x738] sm:$0xff]
    %v4666 = vld [vmem:[#allocation5 + $0x740] sm:$0xff]
    %v4667 = vld [vmem:[#allocation5 + $0x7a0] sm:$0xff]
    %v4668 = vld [vmem:[#allocation5 + $0x7a8] sm:$0xff]
    %v4669 = vld [vmem:[#allocation5 + $0x808] sm:$0xff]
    %v4670 = vld [vmem:[#allocation5 + $0x810] sm:$0xff]
    %v4671 = vld [vmem:[#allocation5 + $0x870] sm:$0xff]
    %v4672 = vld [vmem:[#allocation5 + $0x878] sm:$0xff]
    %v4673 = vld [vmem:[#allocation5 + $0x8d8] sm:$0xff]
    %v4674 = vld [vmem:[#allocation5 + $0x8e0] sm:$0xff]
    %v4675 = vld [vmem:[#allocation5 + $0x940] sm:$0xff]
    %v4676 = vld [vmem:[#allocation5 + $0x948] sm:$0xff]
    %v4677 = vld [vmem:[#allocation5 + $0x9a8] sm:$0xff]
    %v4678 = vld [vmem:[#allocation5 + $0x9b0] sm:$0xff]
    %v4679 = vld [vmem:[#allocation5 + $0xa10] sm:$0xff]
    %v4680 = vld [vmem:[#allocation5 + $0xa18] sm:$0xff]
    %v4681 = vld [vmem:[#allocation5 + $0xa78] sm:$0xff]
    %v4682 = vld [vmem:[#allocation5 + $0xa80] sm:$0xff]
    %v4683 = vld [vmem:[#allocation5 + $0xae0] sm:$0xff]
    %v4684 = vld [vmem:[#allocation5 + $0xae8] sm:$0xff]
    %v4685 = vld [vmem:[#allocation5 + $0xb48] sm:$0xff]
    %v4686 = vld [vmem:[#allocation5 + $0xb50] sm:$0xff]
    %v4687 = vld [vmem:[#allocation5 + $0xbb0] sm:$0xff]
    %v4688 = vld [vmem:[#allocation5 + $0xbb8] sm:$0xff]
    %v4689 = vld [vmem:[#allocation5 + $0xc18] sm:$0xff]
    %v4690 = vld [vmem:[#allocation5 + $0xc20] sm:$0xff]
    %v4691 = vld [vmem:[#allocation5 + $0xc80] sm:$0xff]
    %v4692 = vld [vmem:[#allocation5 + $0xc88] sm:$0xff]
    %v4693 = vld [vmem:[#allocation5 + $0xce8] sm:$0xff]
    %v4694 = vld [vmem:[#allocation5 + $0xcf0] sm:$0xff]
    %v4695 = vld [vmem:[#allocation5 + $0xd50] sm:$0xff]
    %v4696 = vld [vmem:[#allocation5 + $0xd58] sm:$0xff]
    %v4697 = vld [vmem:[#allocation5 + $0xdb8] sm:$0xff]
    %v4698 = vld [vmem:[#allocation5 + $0xdc0] sm:$0xff]
    %v4699 = vld [vmem:[#allocation5 + $0xe20] sm:$0xff]
    %v4700 = vld [vmem:[#allocation5 + $0xe28] sm:$0xff]
    %v4701 = vld [vmem:[#allocation5 + $0xe88] sm:$0xff]
    %v4702 = vld [vmem:[#allocation5 + $0xe90] sm:$0xff]
    %v4703 = vld [vmem:[#allocation5 + $0xef0] sm:$0xff]
    %v4704 = vld [vmem:[#allocation5 + $0xef8] sm:$0xff]
    %v4705 = vld [vmem:[#allocation5 + $0xf58] sm:$0xff]
    %v4706 = vld [vmem:[#allocation5 + $0xf60] sm:$0xff]
    %v4707 = vld [vmem:[#allocation5 + $0xfc0] sm:$0xff]
    %v4708 = vld [vmem:[#allocation5 + $0xfc8] sm:$0xff]
    %v4709 = vld [vmem:[#allocation5 + $0x1028] sm:$0xff]
    %v4710 = vld [vmem:[#allocation5 + $0x1030] sm:$0xff]
    %v4711 = vld [vmem:[#allocation5 + $0x1090] sm:$0xff]
    %v4712 = vld [vmem:[#allocation5 + $0x1098] sm:$0xff]
    %v4713 = vld [vmem:[#allocation5 + $0x10f8] sm:$0xff]
    %v4714 = vld [vmem:[#allocation5 + $0x1100] sm:$0xff]
    %v4715 = vld [vmem:[#allocation5 + $0x1160] sm:$0xff]
    %v4716 = vld [vmem:[#allocation5 + $0x1168] sm:$0xff]
    %v4717 = vld [vmem:[#allocation5 + $0x11c8] sm:$0xff]
    %v4718 = vld [vmem:[#allocation5 + $0x11d0] sm:$0xff]
    %v4719 = vld [vmem:[#allocation5 + $0x1230] sm:$0xff]
    %v4720 = vld [vmem:[#allocation5 + $0x1238] sm:$0xff]
    %v4721 = vld [vmem:[#allocation5 + $0x1298] sm:$0xff]
    %v4722 = vld [vmem:[#allocation5 + $0x12a0] sm:$0xff]
    %v4723 = vld [vmem:[#allocation5 + $0x1300] sm:$0xff]
    %v4724 = vld [vmem:[#allocation5 + $0x1308] sm:$0xff]
    %v4725 = vld [vmem:[#allocation5 + $0x1368] sm:$0xff]
    %v4726 = vld [vmem:[#allocation5 + $0x1370] sm:$0xff]
    %v4727 = vld [vmem:[#allocation5 + $0x13d0] sm:$0xff]
    %v4728 = vld [vmem:[#allocation5 + $0x13d8] sm:$0xff]
    %v4729 = vld [vmem:[#allocation5 + $0x1438] sm:$0xff]
    %v4730 = vld [vmem:[#allocation5 + $0x1440] sm:$0xff]
    %v4731 = vld [vmem:[#allocation5 + $0x14a0] sm:$0xff]
    %v4732 = vld [vmem:[#allocation5 + $0x14a8] sm:$0xff]
    %v4733 = vld [vmem:[#allocation5 + $0x1508] sm:$0xff]
    %v4734 = vld [vmem:[#allocation5 + $0x1510] sm:$0xff]
    %v4735 = vld [vmem:[#allocation5 + $0x1570] sm:$0xff]
    %v4736 = vld [vmem:[#allocation5 + $0x1578] sm:$0xff]
    %v4737 = vld [vmem:[#allocation5 + $0x15d8] sm:$0xff]
    %v4738 = vld [vmem:[#allocation5 + $0x15e0] sm:$0xff]
    %v4739 = vld [vmem:[#allocation5 + $0x1640] sm:$0xff]
    %v4740 = vld [vmem:[#allocation5 + $0x1648] sm:$0xff]
    %v4741 = vld [vmem:[#allocation5 + $0x16a8] sm:$0xff]
    %v4742 = vld [vmem:[#allocation5 + $0x16b0] sm:$0xff]
    %v4743 = vld [vmem:[#allocation5 + $0x1710] sm:$0xff]
    %v4744 = vld [vmem:[#allocation5 + $0x1718] sm:$0xff]
    %v4745 = vld [vmem:[#allocation5 + $0x1778] sm:$0xff]
    %v4746 = vld [vmem:[#allocation5 + $0x1780] sm:$0xff]
    %v4747 = vld [vmem:[#allocation5 + $0x17e0] sm:$0xff]
    %v4748 = vld [vmem:[#allocation5 + $0x17e8] sm:$0xff]
    %v4749 = vld [vmem:[#allocation5 + $0x1848] sm:$0xff]
    %v4750 = vld [vmem:[#allocation5 + $0x1850] sm:$0xff]
    %v4751 = vld [vmem:[#allocation5 + $0x18b0] sm:$0xff]
    %v4752 = vld [vmem:[#allocation5 + $0x18b8] sm:$0xff]
    %v4753 = vld [vmem:[#allocation5 + $0x1918] sm:$0xff]
    %v4754 = vld [vmem:[#allocation5 + $0x1920] sm:$0xff]
    %v4755 = vld [vmem:[#allocation5 + $0x1980] sm:$0xff]
    %v4756 = vld [vmem:[#allocation5 + $0x1988] sm:$0xff]
    %v4757 = vld [vmem:[#allocation5 + $0x19e8] sm:$0xff]
    %v4758 = vld [vmem:[#allocation5 + $0x19f0] sm:$0xff]
    %v4759 = vld [vmem:[#allocation5 + $0x1a50] sm:$0xff]
    %v4760 = vld [vmem:[#allocation5 + $0x1a58] sm:$0xff]
    %v4761 = vld [vmem:[#allocation5 + $0x1ab8] sm:$0xff]
    %v4762 = vld [vmem:[#allocation5 + $0x1ac0] sm:$0xff]
    %v4763 = vld [vmem:[#allocation5 + $0x1b20] sm:$0xff]
    %v4764 = vld [vmem:[#allocation5 + $0x1b28] sm:$0xff]
    %v4765 = vld [vmem:[#allocation5 + $0x1b88] sm:$0xff]
    %v4766 = vld [vmem:[#allocation5 + $0x1b90] sm:$0xff]
    %v4767 = vld [vmem:[#allocation5 + $0x1bf0] sm:$0xff]
    %v4768 = vld [vmem:[#allocation5 + $0x1bf8] sm:$0xff]
    %v4769 = vld [vmem:[#allocation5 + $0x1c58] sm:$0xff]
    %v4770 = vld [vmem:[#allocation5 + $0x1c60] sm:$0xff]
    %v4771 = vld [vmem:[#allocation5 + $0x1cc0] sm:$0xff]
    %v4772 = vld [vmem:[#allocation5 + $0x1cc8] sm:$0xff]
    %v4773 = vld [vmem:[#allocation5 + $0x1d28] sm:$0xff]
    %v4774 = vld [vmem:[#allocation5 + $0x1d30] sm:$0xff]
    %v4775 = vld [vmem:[#allocation5 + $0x1d90] sm:$0xff]
    %v4776 = vld [vmem:[#allocation5 + $0x1d98] sm:$0xff]
    %v4777 = vld [vmem:[#allocation5 + $0x1df8] sm:$0xff]
    %v4778 = vld [vmem:[#allocation5 + $0x1e00] sm:$0xff]
    %v4779 = vld [vmem:[#allocation5 + $0x1e60] sm:$0xff]
    %v4780 = vld [vmem:[#allocation5 + $0x1e68] sm:$0xff]
    %v4781 = vld [vmem:[#allocation5 + $0x1ec8] sm:$0xff]
    %v4782 = vld [vmem:[#allocation5 + $0x1ed0] sm:$0xff]
    %v4783 = vld [vmem:[#allocation5 + $0x1f30] sm:$0xff]
    %v4784 = vld [vmem:[#allocation5 + $0x1f38] sm:$0xff]
    %v4785 = vld [vmem:[#allocation5 + $0x1f98] sm:$0xff]
    %v4786 = vld [vmem:[#allocation5 + $0x1fa0] sm:$0xff]
    %v4787 = vld [vmem:[#allocation5 + $0x2000] sm:$0xff]
    %v4788 = vld [vmem:[#allocation5 + $0x2008] sm:$0xff]
    %v4789 = vld [vmem:[#allocation5 + $0x2068] sm:$0xff]
    %v4790 = vld [vmem:[#allocation5 + $0x2070] sm:$0xff]
    %v4791 = vld [vmem:[#allocation5 + $0x20d0] sm:$0xff]
    %v4792 = vld [vmem:[#allocation5 + $0x20d8] sm:$0xff]
    %v4793 = vld [vmem:[#allocation5 + $0x2138] sm:$0xff]
    %v4794 = vld [vmem:[#allocation5 + $0x2140] sm:$0xff]
    %v4795 = vld [vmem:[#allocation5 + $0x21a0] sm:$0xff]
    %v4796 = vld [vmem:[#allocation5 + $0x21a8] sm:$0xff]
    %v4797 = vld [vmem:[#allocation5 + $0x2208] sm:$0xff]
    %v4798 = vld [vmem:[#allocation5 + $0x2210] sm:$0xff]
    %v4799 = vld [vmem:[#allocation5 + $0x2270] sm:$0xff]
    %v4800 = vld [vmem:[#allocation5 + $0x2278] sm:$0xff]
    %v4801 = vld [vmem:[#allocation5 + $0x22d8] sm:$0xff]
    %v4802 = vld [vmem:[#allocation5 + $0x22e0] sm:$0xff]
    %v4803 = vld [vmem:[#allocation5 + $0x2340] sm:$0xff]
    %v4804 = vld [vmem:[#allocation5 + $0x2348] sm:$0xff]
    %v4805 = vld [vmem:[#allocation5 + $0x23a8] sm:$0xff]
    %v4806 = vld [vmem:[#allocation5 + $0x23b0] sm:$0xff]
    %v4807 = vld [vmem:[#allocation5 + $0x2410] sm:$0xff]
    %v4808 = vld [vmem:[#allocation5 + $0x2418] sm:$0xff]
    %v4809 = vld [vmem:[#allocation5 + $0x2478] sm:$0xff]
    %v4810 = vld [vmem:[#allocation5 + $0x2480] sm:$0xff]
    %v4811 = vld [vmem:[#allocation5 + $0x24e0] sm:$0xff]
    %v4812 = vld [vmem:[#allocation5 + $0x24e8] sm:$0xff]
    %v4813 = vld [vmem:[#allocation5 + $0x2548] sm:$0xff]
    %v4814 = vld [vmem:[#allocation5 + $0x2550] sm:$0xff]
    %v4815 = vld [vmem:[#allocation5 + $0x25b0] sm:$0xff]
    %v4816 = vld [vmem:[#allocation5 + $0x25b8] sm:$0xff]
    %v4817 = vld [vmem:[#allocation5 + $0x2618] sm:$0xff]
    %v4818 = vld [vmem:[#allocation5 + $0x2620] sm:$0xff]
    %v4819 = vld [vmem:[#allocation5 + $0x2680] sm:$0xff]
    %v4820 = vld [vmem:[#allocation5 + $0x2688] sm:$0xff]
    %v4821 = vld [vmem:[#allocation5 + $0x26e8] sm:$0xff]
    %v4822 = vld [vmem:[#allocation5 + $0x26f0] sm:$0xff]
    %v4823 = vld [vmem:[#allocation5 + $0x2750] sm:$0xff]
    %v4824 = vld [vmem:[#allocation5 + $0x2758] sm:$0xff]
    %v4825 = vld [vmem:[#allocation5 + $0x27b8] sm:$0xff]
    %v4826 = vld [vmem:[#allocation5 + $0x27c0] sm:$0xff]
    %v4827 = vld [vmem:[#allocation5 + $0x2820] sm:$0xff]
    %v4828 = vld [vmem:[#allocation5 + $0x2828] sm:$0xff]
    %v4829 = vld [vmem:[#allocation5 + $0x2888] sm:$0xff]
    %v4830 = vld [vmem:[#allocation5 + $0x2890] sm:$0xff]
    %v4831 = vld [vmem:[#allocation5 + $0x28f0] sm:$0xff]
    %v4832 = vld [vmem:[#allocation5 + $0x28f8] sm:$0xff]
    %v4833 = vld [vmem:[#allocation5 + $0x2958] sm:$0xff]
    %v4834 = vld [vmem:[#allocation5 + $0x2960] sm:$0xff]
    %v4835 = vld [vmem:[#allocation5 + $0x29c0] sm:$0xff]
    %v4836 = vld [vmem:[#allocation5 + $0x29c8] sm:$0xff]
    %v4837 = vld [vmem:[#allocation5 + $0x2a28] sm:$0xff]
    %v4838 = vld [vmem:[#allocation5 + $0x2a30] sm:$0xff]
    %v4839 = vld [vmem:[#allocation5 + $0x2a90] sm:$0xff]
    %v4840 = vld [vmem:[#allocation5 + $0x2a98] sm:$0xff]
    %v4841 = vld [vmem:[#allocation5 + $0x2af8] sm:$0xff]
    %v4842 = vld [vmem:[#allocation5 + $0x2b00] sm:$0xff]
    %v4843 = vld [vmem:[#allocation5 + $0x2b60] sm:$0xff]
    %v4844 = vld [vmem:[#allocation5 + $0x2b68] sm:$0xff]
    %v4845 = vld [vmem:[#allocation5 + $0x2bc8] sm:$0xff]
    %v4846 = vld [vmem:[#allocation5 + $0x2bd0] sm:$0xff]
    %v4847 = vld [vmem:[#allocation5 + $0x2c30] sm:$0xff]
    %v4848 = vld [vmem:[#allocation5 + $0x2c38] sm:$0xff]
    %v4849 = vld [vmem:[#allocation5 + $0x2c98] sm:$0xff]
    %v4850 = vld [vmem:[#allocation5 + $0x2ca0] sm:$0xff]
    %v4851 = vld [vmem:[#allocation5 + $0x2d00] sm:$0xff]
    %v4852 = vld [vmem:[#allocation5 + $0x2d08] sm:$0xff]
    %v4853 = vld [vmem:[#allocation5 + $0x2d68] sm:$0xff]
    %v4854 = vld [vmem:[#allocation5 + $0x2d70] sm:$0xff]
    %v4855 = vld [vmem:[#allocation5 + $0x2dd0] sm:$0xff]
    %v4856 = vld [vmem:[#allocation5 + $0x2dd8] sm:$0xff]
    %v4857 = vld [vmem:[#allocation5 + $0x2e38] sm:$0xff]
    %v4858 = vld [vmem:[#allocation5 + $0x2e40] sm:$0xff]
    %v4859 = vld [vmem:[#allocation5 + $0x2ea0] sm:$0xff]
    %v4860 = vld [vmem:[#allocation5 + $0x2ea8] sm:$0xff]
    %v4861 = vld [vmem:[#allocation5 + $0x2f08] sm:$0xff]
    %v4862 = vld [vmem:[#allocation5 + $0x2f10] sm:$0xff]
    %v4863 = vld [vmem:[#allocation5 + $0x2f70] sm:$0xff]
    %v4864 = vld [vmem:[#allocation5 + $0x2f78] sm:$0xff]
    %v4865 = vld [vmem:[#allocation5 + $0x2fd8] sm:$0xff]
    %v4866 = vld [vmem:[#allocation5 + $0x2fe0] sm:$0xff]
    %v4867 = vld [vmem:[#allocation5 + $0x3040] sm:$0xff]
    %v4868 = vld [vmem:[#allocation5 + $0x3048] sm:$0xff]
    %v4869 = vld [vmem:[#allocation5 + $0x30a8] sm:$0xff]
    %v4870 = vld [vmem:[#allocation5 + $0x30b0] sm:$0xff]
    %v4871 = vld [vmem:[#allocation5 + $0x3110] sm:$0xff]
    %v4872 = vld [vmem:[#allocation5 + $0x3118] sm:$0xff]
    %v4873 = vld [vmem:[#allocation5 + $0x3178] sm:$0xff]
    %v4874 = vld [vmem:[#allocation5 + $0x3180] sm:$0xff]
    %v4875 = vld [vmem:[#allocation5 + $0x31e0] sm:$0xff]
    %v4876 = vld [vmem:[#allocation5 + $0x31e8] sm:$0xff]
    %v4877 = vld [vmem:[#allocation5 + $0x3248] sm:$0xff]
    %v4878 = vld [vmem:[#allocation5 + $0x3250] sm:$0xff]
    %v4879 = vld [vmem:[#allocation5 + $0x32b0] sm:$0xff]
    %v4880 = vld [vmem:[#allocation5 + $0x32b8] sm:$0xff]
    %v4881 = vld [vmem:[#allocation5 + $0x3318] sm:$0xff]
    %v4882 = vld [vmem:[#allocation5 + $0x3320] sm:$0xff]
    %v4883 = vld [vmem:[#allocation5 + $0x3380] sm:$0xff]
    %v4884 = vld [vmem:[#allocation5 + $0x3388] sm:$0xff]
    %v4885 = vld [vmem:[#allocation5 + $0x33e8] sm:$0xff]
    %v4886 = vld [vmem:[#allocation5 + $0x33f0] sm:$0xff]
    %v4887 = vld [vmem:[#allocation5 + $0x3450] sm:$0xff]
    %v4888 = vld [vmem:[#allocation5 + $0x3458] sm:$0xff]
    %v4889 = vld [vmem:[#allocation5 + $0x34b8] sm:$0xff]
    %v4890 = vld [vmem:[#allocation5 + $0x34c0] sm:$0xff]
    %v4891 = vld [vmem:[#allocation5 + $0x3520] sm:$0xff]
    %v4892 = vld [vmem:[#allocation5 + $0x3528] sm:$0xff]
    %v4893 = vld [vmem:[#allocation5 + $0x3588] sm:$0xff]
    %v4894 = vld [vmem:[#allocation5 + $0x3590] sm:$0xff]
    %v4895 = vld [vmem:[#allocation5 + $0x35f0] sm:$0xff]
    %v4896 = vld [vmem:[#allocation5 + $0x35f8] sm:$0xff]
    %v4897 = vld [vmem:[#allocation5 + $0x3658] sm:$0xff]
    %v4898 = vld [vmem:[#allocation5 + $0x3660] sm:$0xff]
    %v4899 = vld [vmem:[#allocation5 + $0x36c0] sm:$0xff]
    %v4900 = vld [vmem:[#allocation5 + $0x36c8] sm:$0xff]
    %v4901 = vld [vmem:[#allocation5 + $0x3728] sm:$0xff]
    %v4902 = vld [vmem:[#allocation5 + $0x3730] sm:$0xff]
    %v4903 = vld [vmem:[#allocation5 + $0x3790] sm:$0xff]
    %v4904 = vld [vmem:[#allocation5 + $0x3798] sm:$0xff]
    %v4905 = vld [vmem:[#allocation5 + $0x37f8] sm:$0xff]
    %v4906 = vld [vmem:[#allocation5 + $0x3800] sm:$0xff]
    %v4907 = vld [vmem:[#allocation5 + $0x3860] sm:$0xff]
    %v4908 = vld [vmem:[#allocation5 + $0x3868] sm:$0xff]
    %v4909 = vld [vmem:[#allocation5 + $0x38c8] sm:$0xff]
    %v4910 = vld [vmem:[#allocation5 + $0x38d0] sm:$0xff]
    %v4911 = vld [vmem:[#allocation5 + $0x3930] sm:$0xff]
    %v4912 = vld [vmem:[#allocation5 + $0x3938] sm:$0xff]
    %v4913 = vld [vmem:[#allocation5 + $0x3998] sm:$0xff]
    %v4914 = vld [vmem:[#allocation5 + $0x39a0] sm:$0xff]
    %v4915 = vld [vmem:[#allocation5 + $0x3a00] sm:$0xff]
    %v4916 = vld [vmem:[#allocation5 + $0x3a08] sm:$0xff]
    %v4917 = vld [vmem:[#allocation5 + $0x3a68] sm:$0xff]
    %v4918 = vld [vmem:[#allocation5 + $0x3a70] sm:$0xff]
    %v4919 = vld [vmem:[#allocation5 + $0x3ad0] sm:$0xff]
    %v4920 = vld [vmem:[#allocation5 + $0x3ad8] sm:$0xff]
    %v4921 = vld [vmem:[#allocation5 + $0x3b38] sm:$0xff]
    %v4922 = vld [vmem:[#allocation5 + $0x3b40] sm:$0xff]
    %v4923 = vld [vmem:[#allocation5 + $0x3ba0] sm:$0xff]
    %v4924 = vld [vmem:[#allocation5 + $0x3ba8] sm:$0xff]
    %v4925 = vld [vmem:[#allocation5 + $0x3c08] sm:$0xff]
    %v4926 = vld [vmem:[#allocation5 + $0x3c10] sm:$0xff]
    %v4927 = vld [vmem:[#allocation5 + $0x3c70] sm:$0xff]
    %v4928 = vld [vmem:[#allocation5 + $0x3c78] sm:$0xff]
    %v4929 = vld [vmem:[#allocation5 + $0x3cd8] sm:$0xff]
    %v4930 = vld [vmem:[#allocation5 + $0x3ce0] sm:$0xff]
    %v4931 = vld [vmem:[#allocation5 + $0x3d40] sm:$0xff]
    %v4932 = vld [vmem:[#allocation5 + $0x3d48] sm:$0xff]
    %v4933 = vld [vmem:[#allocation5 + $0x3da8] sm:$0xff]
    %v4934 = vld [vmem:[#allocation5 + $0x3db0] sm:$0xff]
    %v4935 = vld [vmem:[#allocation5 + $0x3e10] sm:$0xff]
    %v4936 = vld [vmem:[#allocation5 + $0x3e18] sm:$0xff]
    %v4937 = vld [vmem:[#allocation5 + $0x3e78] sm:$0xff]
    %v4938 = vld [vmem:[#allocation5 + $0x3e80] sm:$0xff]
    %v4939 = vld [vmem:[#allocation5 + $0x3ee0] sm:$0xff]
    %v4940 = vld [vmem:[#allocation5 + $0x3ee8] sm:$0xff]
    %v4941 = vld [vmem:[#allocation5 + $0x3f48] sm:$0xff]
    %v4942 = vld [vmem:[#allocation5 + $0x3f50] sm:$0xff]
    %v4943 = vld [vmem:[#allocation5 + $0x3fb0] sm:$0xff]
    %v4944 = vld [vmem:[#allocation5 + $0x3fb8] sm:$0xff]
    %v4945 = vld [vmem:[#allocation5 + $0x4018] sm:$0xff]
    %v4946 = vld [vmem:[#allocation5 + $0x4020] sm:$0xff]
    %v4947 = vld [vmem:[#allocation5 + $0x4080] sm:$0xff]
    %v4948 = vld [vmem:[#allocation5 + $0x4088] sm:$0xff]
    %v4949 = vld [vmem:[#allocation5 + $0x40e8] sm:$0xff]
    %v4950 = vld [vmem:[#allocation5 + $0x40f0] sm:$0xff]
    %v4951 = vld [vmem:[#allocation5 + $0x4150] sm:$0xff]
    %v4952 = vld [vmem:[#allocation5 + $0x4158] sm:$0xff]
    %v4953 = vld [vmem:[#allocation5 + $0x41b8] sm:$0xff]
    %v4954 = vld [vmem:[#allocation5 + $0x41c0] sm:$0xff]
    %v4955 = vld [vmem:[#allocation5 + $0x4220] sm:$0xff]
    %v4956 = vld [vmem:[#allocation5 + $0x4228] sm:$0xff]
    %v4957 = vld [vmem:[#allocation5 + $0x4288] sm:$0xff]
    %v4958 = vld [vmem:[#allocation5 + $0x4290] sm:$0xff]
    %v4959 = vld [vmem:[#allocation5 + $0x42f0] sm:$0xff]
    %v4960 = vld [vmem:[#allocation5 + $0x42f8] sm:$0xff]
    %v4961 = vld [vmem:[#allocation5 + $0x4358] sm:$0xff]
    %v4962 = vld [vmem:[#allocation5 + $0x4360] sm:$0xff]
    %v4963 = vld [vmem:[#allocation5 + $0x43c0] sm:$0xff]
    %v4964 = vld [vmem:[#allocation5 + $0x43c8] sm:$0xff]
    %v4965 = vld [vmem:[#allocation5 + $0x4428] sm:$0xff]
    %v4966 = vld [vmem:[#allocation5 + $0x4430] sm:$0xff]
    %v4967 = vld [vmem:[#allocation5 + $0x4490] sm:$0xff]
    %v4968 = vld [vmem:[#allocation5 + $0x4498] sm:$0xff]
    %v4969 = vld [vmem:[#allocation5 + $0x44f8] sm:$0xff]
    %v4970 = vld [vmem:[#allocation5 + $0x4500] sm:$0xff]
    %v4971 = vld [vmem:[#allocation5 + $0x4560] sm:$0xff]
    %v4972 = vld [vmem:[#allocation5 + $0x4568] sm:$0xff]
    %v4973 = vld [vmem:[#allocation5 + $0x45c8] sm:$0xff]
    %v4974 = vld [vmem:[#allocation5 + $0x45d0] sm:$0xff]
    %v4975 = vld [vmem:[#allocation5 + $0x4630] sm:$0xff]
    %v4976 = vld [vmem:[#allocation5 + $0x4638] sm:$0xff]
    %v4977 = vld [vmem:[#allocation5 + $0x4698] sm:$0xff]
    %v4978 = vld [vmem:[#allocation5 + $0x46a0] sm:$0xff]
    %v4979 = vld [vmem:[#allocation5 + $0x4700] sm:$0xff]
    %v4980 = vld [vmem:[#allocation5 + $0x4708] sm:$0xff]
    %v4981 = vld [vmem:[#allocation5 + $0x4768] sm:$0xff]
    %v4982 = vld [vmem:[#allocation5 + $0x4770] sm:$0xff]
    %v4983 = vld [vmem:[#allocation5 + $0x47d0] sm:$0xff]
    %v4984 = vld [vmem:[#allocation5 + $0x47d8] sm:$0xff]
    %v4985 = vld [vmem:[#allocation5 + $0x4838] sm:$0xff]
    %v4986 = vld [vmem:[#allocation5 + $0x4840] sm:$0xff]
    %v4987 = vld [vmem:[#allocation5 + $0x48a0] sm:$0xff]
    %v4988 = vld [vmem:[#allocation5 + $0x48a8] sm:$0xff]
    %v4989 = vld [vmem:[#allocation5 + $0x4908] sm:$0xff]
    %v4990 = vld [vmem:[#allocation5 + $0x4910] sm:$0xff]
    %v4991 = vld [vmem:[#allocation5 + $0x4970] sm:$0xff]
    %v4992 = vld [vmem:[#allocation5 + $0x4978] sm:$0xff]
    %v4993 = vld [vmem:[#allocation5 + $0x49d8] sm:$0xff]
    %v4994 = vld [vmem:[#allocation5 + $0x49e0] sm:$0xff]
    %v4995 = vld [vmem:[#allocation5 + $0x4a40] sm:$0xff]
    %v4996 = vld [vmem:[#allocation5 + $0x4a48] sm:$0xff]
    %v4997 = vld [vmem:[#allocation5 + $0x4aa8] sm:$0xff]
    %v4998 = vld [vmem:[#allocation5 + $0x4ab0] sm:$0xff]
    %v4999 = vld [vmem:[#allocation5 + $0x4b10] sm:$0xff]
    %v5000 = vld [vmem:[#allocation5 + $0x4b18] sm:$0xff]
    %v5001 = vld [vmem:[#allocation5 + $0x4b78] sm:$0xff]
    %v5002 = vld [vmem:[#allocation5 + $0x4b80] sm:$0xff]
    %v5003 = vld [vmem:[#allocation5 + $0x4be0] sm:$0xff]
    %v5004 = vld [vmem:[#allocation5 + $0x4be8] sm:$0xff]
    %v5005 = vld [vmem:[#allocation5 + $0x4c48] sm:$0xff]
    %v5006 = vld [vmem:[#allocation5 + $0x4c50] sm:$0xff]
    %v5007 = vld [vmem:[#allocation5 + $0x4cb0] sm:$0xff]
    %v5008 = vld [vmem:[#allocation5 + $0x4cb8] sm:$0xff]
    %v5009 = vld [vmem:[#allocation5 + $0x4d18] sm:$0xff]
    %v5010 = vld [vmem:[#allocation5 + $0x4d20] sm:$0xff]
    %v5011 = vld [vmem:[#allocation5 + $0x4d80] sm:$0xff]
    %v5012 = vld [vmem:[#allocation5 + $0x4d88] sm:$0xff]
    %v5013 = vld [vmem:[#allocation5 + $0x4de8] sm:$0xff]
    %v5014 = vld [vmem:[#allocation5 + $0x4df0] sm:$0xff]
    %v5015 = vld [vmem:[#allocation5 + $0x4e50] sm:$0xff]
    %v5016 = vld [vmem:[#allocation5 + $0x4e58] sm:$0xff]
    %v5017 = vld [vmem:[#allocation5 + $0x4eb8] sm:$0xff]
    %v5018 = vld [vmem:[#allocation5 + $0x4ec0] sm:$0xff]
    %v5019 = vld [vmem:[#allocation5 + $0x4f20] sm:$0xff]
    %v5020 = vld [vmem:[#allocation5 + $0x4f28] sm:$0xff]
    %v5021 = vld [vmem:[#allocation5 + $0x4f88] sm:$0xff]
    %v5022 = vld [vmem:[#allocation5 + $0x4f90] sm:$0xff]
    %v5023 = vld [vmem:[#allocation5 + $0x4ff0] sm:$0xff]
    %v5024 = vld [vmem:[#allocation5 + $0x4ff8] sm:$0xff]
    %v5025 = vld [vmem:[#allocation5 + $0x5058] sm:$0xff]
    %v5026 = vld [vmem:[#allocation5 + $0x5060] sm:$0xff]
    %v5027 = vld [vmem:[#allocation5 + $0x50c0] sm:$0xff]
    %v5028 = vld [vmem:[#allocation5 + $0x50c8] sm:$0xff]
    %v5029 = vld [vmem:[#allocation5 + $0x5128] sm:$0xff]
    %v5030 = vld [vmem:[#allocation5 + $0x5130] sm:$0xff]
    %v5031 = vld [vmem:[#allocation5 + $0x5190] sm:$0xff]
    %v5032 = vld [vmem:[#allocation5 + $0x5198] sm:$0xff]
    %v5033 = vld [vmem:[#allocation5 + $0x51f8] sm:$0xff]
    %v5034 = vld [vmem:[#allocation5 + $0x5200] sm:$0xff]
    %v5035 = vld [vmem:[#allocation5 + $0x5260] sm:$0xff]
    %v5036 = vld [vmem:[#allocation5 + $0x5268] sm:$0xff]
    %v5037 = vld [vmem:[#allocation5 + $0x52c8] sm:$0x1]
    %v5038 = vld [vmem:[#allocation5 + $0x52d0] sm:$0x1]
    %v5040 = vsel %vm463, %v5037, 0
    %v5043 = vsel %vm463, %v5038, 0
    %5045 = vmatprep.subr.mxu0 %v4632
    %5046 = vmatpush1.msra.mxu0 %v4631
    %5047 = vmatprep.subr.mxu0 %v4634
    %5048 = vmatpush1.msra.mxu0 %v4633
    %5049 = vmatprep.subr.mxu0 %v4636
    %5050 = vmatpush1.msra.mxu0 %v4635
    %5051 = vmatprep.subr.mxu0 %v4638
    %5052 = vmatpush1.msra.mxu0 %v4637
    %5053 = vmatprep.subr.mxu0 %v4640
    %5054 = vmatpush1.msra.mxu0 %v4639
    %5055 = vmatprep.subr.mxu0 %v4642
    %5056 = vmatpush1.msra.mxu0 %v4641
    %5057 = vmatprep.subr.mxu0 %v4644
    %5058 = vmatpush1.msra.mxu0 %v4643
    %5059 = vmatprep.subr.mxu0 %v4646
    %5060 = vmatpush1.msra.mxu0 %v4645
    %5061 = vmatprep.subr.mxu0 %v4648
    %5062 = vmatpush1.msra.mxu0 %v4647
    %5063 = vmatprep.subr.mxu0 %v4650
    %5064 = vmatpush1.msra.mxu0 %v4649
    %5065 = vmatprep.subr.mxu0 %v4652
    %5066 = vmatpush1.msra.mxu0 %v4651
    %5067 = vmatprep.subr.mxu0 %v4654
    %5068 = vmatpush1.msra.mxu0 %v4653
    %5069 = vmatprep.subr.mxu0 %v4656
    %5070 = vmatpush1.msra.mxu0 %v4655
    %5071 = vmatprep.subr.mxu0 %v4658
    %5072 = vmatpush1.msra.mxu0 %v4657
    %5073 = vmatprep.subr.mxu0 %v4660
    %5074 = vmatpush1.msra.mxu0 %v4659
    %5075 = vmatprep.subr.mxu0 %v4662
    %5076 = vmatpush1.msra.mxu0 %v4661
    %5077 = vmatprep.subr.mxu0 %v4664
    %5078 = vmatpush1.msra.mxu0 %v4663
    %5079 = vmatprep.subr.mxu0 %v4666
    %5080 = vmatpush1.msra.mxu0 %v4665
    %5081 = vmatprep.subr.mxu0 %v4668
    %5082 = vmatpush1.msra.mxu0 %v4667
    %5083 = vmatprep.subr.mxu0 %v4670
    %5084 = vmatpush1.msra.mxu0 %v4669
    %5085 = vmatprep.subr.mxu0 %v4672
    %5086 = vmatpush1.msra.mxu0 %v4671
    %5087 = vmatprep.subr.mxu0 %v4674
    %5088 = vmatpush1.msra.mxu0 %v4673
    %5089 = vmatprep.subr.mxu0 %v4676
    %5090 = vmatpush1.msra.mxu0 %v4675
    %5091 = vmatprep.subr.mxu0 %v4678
    %5092 = vmatpush1.msra.mxu0 %v4677
    %5093 = vmatprep.subr.mxu0 %v4680
    %5094 = vmatpush1.msra.mxu0 %v4679
    %5095 = vmatprep.subr.mxu0 %v4682
    %5096 = vmatpush1.msra.mxu0 %v4681
    %5097 = vmatprep.subr.mxu0 %v4684
    %5098 = vmatpush1.msra.mxu0 %v4683
    %5099 = vmatprep.subr.mxu0 %v4686
    %5100 = vmatpush1.msra.mxu0 %v4685
    %5101 = vmatprep.subr.mxu0 %v4688
    %5102 = vmatpush1.msra.mxu0 %v4687
    %5103 = vmatprep.subr.mxu0 %v4690
    %5104 = vmatpush1.msra.mxu0 %v4689
    %5105 = vmatprep.subr.mxu0 %v4692
    %5106 = vmatpush1.msra.mxu0 %v4691
    %5107 = vmatprep.subr.mxu0 %v4694
    %5108 = vmatpush1.msra.mxu0 %v4693
    %5109 = vmatprep.mubr.f32.mxu0 %v39
    %5110 = vmatmul.mubr.f32.gmra.mrb[0].mxu0 %v38
    %v5111 = vpop.f32.mrb[0].mxu0
    %v5112 = vadd.f32 0.0, %v5111
    %v5113 = vpop.f32.mrb[0].mxu0
    %v5114 = vadd.f32 0.0, %v5113
    %5115 = vdwg.mxu0
    %5116 = vmatprep.subr.mxu0 %v4696
    %5117 = vmatpush1.msra.mxu0 %v4695
    %5118 = vmatprep.subr.mxu0 %v4698
    %5119 = vmatpush1.msra.mxu0 %v4697
    %5120 = vmatprep.subr.mxu0 %v4700
    %5121 = vmatpush1.msra.mxu0 %v4699
    %5122 = vmatprep.subr.mxu0 %v4702
    %5123 = vmatpush1.msra.mxu0 %v4701
    %5124 = vmatprep.subr.mxu0 %v4704
    %5125 = vmatpush1.msra.mxu0 %v4703
    %5126 = vmatprep.subr.mxu0 %v4706
    %5127 = vmatpush1.msra.mxu0 %v4705
    %5128 = vmatprep.subr.mxu0 %v4708
    %5129 = vmatpush1.msra.mxu0 %v4707
    %5130 = vmatprep.subr.mxu0 %v4710
    %5131 = vmatpush1.msra.mxu0 %v4709
    %5132 = vmatprep.subr.mxu0 %v4712
    %5133 = vmatpush1.msra.mxu0 %v4711
    %5134 = vmatprep.subr.mxu0 %v4714
    %5135 = vmatpush1.msra.mxu0 %v4713
    %5136 = vmatprep.subr.mxu0 %v4716
    %5137 = vmatpush1.msra.mxu0 %v4715
    %5138 = vmatprep.subr.mxu0 %v4718
    %5139 = vmatpush1.msra.mxu0 %v4717
    %5140 = vmatprep.subr.mxu0 %v4720
    %5141 = vmatpush1.msra.mxu0 %v4719
    %5142 = vmatprep.subr.mxu0 %v4722
    %5143 = vmatpush1.msra.mxu0 %v4721
    %5144 = vmatprep.subr.mxu0 %v4724
    %5145 = vmatpush1.msra.mxu0 %v4723
    %5146 = vmatprep.subr.mxu0 %v4726
    %5147 = vmatpush1.msra.mxu0 %v4725
    %5148 = vmatprep.subr.mxu0 %v4728
    %5149 = vmatpush1.msra.mxu0 %v4727
    %5150 = vmatprep.subr.mxu0 %v4730
    %5151 = vmatpush1.msra.mxu0 %v4729
    %5152 = vmatprep.subr.mxu0 %v4732
    %5153 = vmatpush1.msra.mxu0 %v4731
    %5154 = vmatprep.subr.mxu0 %v4734
    %5155 = vmatpush1.msra.mxu0 %v4733
    %5156 = vmatprep.subr.mxu0 %v4736
    %5157 = vmatpush1.msra.mxu0 %v4735
    %5158 = vmatprep.subr.mxu0 %v4738
    %5159 = vmatpush1.msra.mxu0 %v4737
    %5160 = vmatprep.subr.mxu0 %v4740
    %5161 = vmatpush1.msra.mxu0 %v4739
    %5162 = vmatprep.subr.mxu0 %v4742
    %5163 = vmatpush1.msra.mxu0 %v4741
    %5164 = vmatprep.subr.mxu0 %v4744
    %5165 = vmatpush1.msra.mxu0 %v4743
    %5166 = vmatprep.subr.mxu0 %v4746
    %5167 = vmatpush1.msra.mxu0 %v4745
    %5168 = vmatprep.subr.mxu0 %v4748
    %5169 = vmatpush1.msra.mxu0 %v4747
    %5170 = vmatprep.subr.mxu0 %v4750
    %5171 = vmatpush1.msra.mxu0 %v4749
    %5172 = vmatprep.subr.mxu0 %v4752
    %5173 = vmatpush1.msra.mxu0 %v4751
    %5174 = vmatprep.subr.mxu0 %v4754
    %5175 = vmatpush1.msra.mxu0 %v4753
    %5176 = vmatprep.subr.mxu0 %v4756
    %5177 = vmatpush1.msra.mxu0 %v4755
    %5178 = vmatprep.subr.mxu0 %v4758
    %5179 = vmatpush1.msra.mxu0 %v4757
    %5180 = vmatprep.mubr.f32.mxu0 %v41
    %5181 = vmatmul.mubr.f32.gmra.mrb[0].mxu0 %v40
    %v5182 = vpop.f32.mrb[0].mxu0
    %v5183 = vadd.f32 %v5112, %v5182
    %v5184 = vpop.f32.mrb[0].mxu0
    %v5185 = vadd.f32 %v5114, %v5184
    %5186 = vdwg.mxu0
    %5187 = vmatprep.subr.mxu0 %v4760
    %5188 = vmatpush1.msra.mxu0 %v4759
    %5189 = vmatprep.subr.mxu0 %v4762
    %5190 = vmatpush1.msra.mxu0 %v4761
    %5191 = vmatprep.subr.mxu0 %v4764
    %5192 = vmatpush1.msra.mxu0 %v4763
    %5193 = vmatprep.subr.mxu0 %v4766
    %5194 = vmatpush1.msra.mxu0 %v4765
    %5195 = vmatprep.subr.mxu0 %v4768
    %5196 = vmatpush1.msra.mxu0 %v4767
    %5197 = vmatprep.subr.mxu0 %v4770
    %5198 = vmatpush1.msra.mxu0 %v4769
    %5199 = vmatprep.subr.mxu0 %v4772
    %5200 = vmatpush1.msra.mxu0 %v4771
    %5201 = vmatprep.subr.mxu0 %v4774
    %5202 = vmatpush1.msra.mxu0 %v4773
    %5203 = vmatprep.subr.mxu0 %v4776
    %5204 = vmatpush1.msra.mxu0 %v4775
    %5205 = vmatprep.subr.mxu0 %v4778
    %5206 = vmatpush1.msra.mxu0 %v4777
    %5207 = vmatprep.subr.mxu0 %v4780
    %5208 = vmatpush1.msra.mxu0 %v4779
    %5209 = vmatprep.subr.mxu0 %v4782
    %5210 = vmatpush1.msra.mxu0 %v4781
    %5211 = vmatprep.subr.mxu0 %v4784
    %5212 = vmatpush1.msra.mxu0 %v4783
    %5213 = vmatprep.subr.mxu0 %v4786
    %5214 = vmatpush1.msra.mxu0 %v4785
    %5215 = vmatprep.subr.mxu0 %v4788
    %5216 = vmatpush1.msra.mxu0 %v4787
    %5217 = vmatprep.subr.mxu0 %v4790
    %5218 = vmatpush1.msra.mxu0 %v4789
    %5219 = vmatprep.subr.mxu0 %v4792
    %5220 = vmatpush1.msra.mxu0 %v4791
    %5221 = vmatprep.subr.mxu0 %v4794
    %5222 = vmatpush1.msra.mxu0 %v4793
    %5223 = vmatprep.subr.mxu0 %v4796
    %5224 = vmatpush1.msra.mxu0 %v4795
    %5225 = vmatprep.subr.mxu0 %v4798
    %5226 = vmatpush1.msra.mxu0 %v4797
    %5227 = vmatprep.subr.mxu0 %v4800
    %5228 = vmatpush1.msra.mxu0 %v4799
    %5229 = vmatprep.subr.mxu0 %v4802
    %5230 = vmatpush1.msra.mxu0 %v4801
    %5231 = vmatprep.subr.mxu0 %v4804
    %5232 = vmatpush1.msra.mxu0 %v4803
    %5233 = vmatprep.subr.mxu0 %v4806
    %5234 = vmatpush1.msra.mxu0 %v4805
    %5235 = vmatprep.subr.mxu0 %v4808
    %5236 = vmatpush1.msra.mxu0 %v4807
    %5237 = vmatprep.subr.mxu0 %v4810
    %5238 = vmatpush1.msra.mxu0 %v4809
    %5239 = vmatprep.subr.mxu0 %v4812
    %5240 = vmatpush1.msra.mxu0 %v4811
    %5241 = vmatprep.subr.mxu0 %v4814
    %5242 = vmatpush1.msra.mxu0 %v4813
    %5243 = vmatprep.subr.mxu0 %v4816
    %5244 = vmatpush1.msra.mxu0 %v4815
    %5245 = vmatprep.subr.mxu0 %v4818
    %5246 = vmatpush1.msra.mxu0 %v4817
    %5247 = vmatprep.subr.mxu0 %v4820
    %5248 = vmatpush1.msra.mxu0 %v4819
    %5249 = vmatprep.subr.mxu0 %v4822
    %5250 = vmatpush1.msra.mxu0 %v4821
    %5251 = vmatprep.mubr.f32.mxu0 %v43
    %5252 = vmatmul.mubr.f32.gmra.mrb[0].mxu0 %v42
    %v5253 = vpop.f32.mrb[0].mxu0
    %v5254 = vadd.f32 %v5183, %v5253
    %v5255 = vpop.f32.mrb[0].mxu0
    %v5256 = vadd.f32 %v5185, %v5255
    %5257 = vdwg.mxu0
    %5258 = vmatprep.subr.mxu0 %v4824
    %5259 = vmatpush1.msra.mxu0 %v4823
    %5260 = vmatprep.subr.mxu0 %v4826
    %5261 = vmatpush1.msra.mxu0 %v4825
    %5262 = vmatprep.subr.mxu0 %v4828
    %5263 = vmatpush1.msra.mxu0 %v4827
    %5264 = vmatprep.subr.mxu0 %v4830
    %5265 = vmatpush1.msra.mxu0 %v4829
    %5266 = vmatprep.subr.mxu0 %v4832
    %5267 = vmatpush1.msra.mxu0 %v4831
    %5268 = vmatprep.subr.mxu0 %v4834
    %5269 = vmatpush1.msra.mxu0 %v4833
    %5270 = vmatprep.subr.mxu0 %v4836
    %5271 = vmatpush1.msra.mxu0 %v4835
    %5272 = vmatprep.subr.mxu0 %v4838
    %5273 = vmatpush1.msra.mxu0 %v4837
    %5274 = vmatprep.subr.mxu0 %v4840
    %5275 = vmatpush1.msra.mxu0 %v4839
    %5276 = vmatprep.subr.mxu0 %v4842
    %5277 = vmatpush1.msra.mxu0 %v4841
    %5278 = vmatprep.subr.mxu0 %v4844
    %5279 = vmatpush1.msra.mxu0 %v4843
    %5280 = vmatprep.subr.mxu0 %v4846
    %5281 = vmatpush1.msra.mxu0 %v4845
    %5282 = vmatprep.subr.mxu0 %v4848
    %5283 = vmatpush1.msra.mxu0 %v4847
    %5284 = vmatprep.subr.mxu0 %v4850
    %5285 = vmatpush1.msra.mxu0 %v4849
    %5286 = vmatprep.subr.mxu0 %v4852
    %5287 = vmatpush1.msra.mxu0 %v4851
    %5288 = vmatprep.subr.mxu0 %v4854
    %5289 = vmatpush1.msra.mxu0 %v4853
    %5290 = vmatprep.subr.mxu0 %v4856
    %5291 = vmatpush1.msra.mxu0 %v4855
    %5292 = vmatprep.subr.mxu0 %v4858
    %5293 = vmatpush1.msra.mxu0 %v4857
    %5294 = vmatprep.subr.mxu0 %v4860
    %5295 = vmatpush1.msra.mxu0 %v4859
    %5296 = vmatprep.subr.mxu0 %v4862
    %5297 = vmatpush1.msra.mxu0 %v4861
    %5298 = vmatprep.subr.mxu0 %v4864
    %5299 = vmatpush1.msra.mxu0 %v4863
    %5300 = vmatprep.subr.mxu0 %v4866
    %5301 = vmatpush1.msra.mxu0 %v4865
    %5302 = vmatprep.subr.mxu0 %v4868
    %5303 = vmatpush1.msra.mxu0 %v4867
    %5304 = vmatprep.subr.mxu0 %v4870
    %5305 = vmatpush1.msra.mxu0 %v4869
    %5306 = vmatprep.subr.mxu0 %v4872
    %5307 = vmatpush1.msra.mxu0 %v4871
    %5308 = vmatprep.subr.mxu0 %v4874
    %5309 = vmatpush1.msra.mxu0 %v4873
    %5310 = vmatprep.subr.mxu0 %v4876
    %5311 = vmatpush1.msra.mxu0 %v4875
    %5312 = vmatprep.subr.mxu0 %v4878
    %5313 = vmatpush1.msra.mxu0 %v4877
    %5314 = vmatprep.subr.mxu0 %v4880
    %5315 = vmatpush1.msra.mxu0 %v4879
    %5316 = vmatprep.subr.mxu0 %v4882
    %5317 = vmatpush1.msra.mxu0 %v4881
    %5318 = vmatprep.subr.mxu0 %v4884
    %5319 = vmatpush1.msra.mxu0 %v4883
    %5320 = vmatprep.subr.mxu0 %v4886
    %5321 = vmatpush1.msra.mxu0 %v4885
    %5322 = vmatprep.mubr.f32.mxu0 %v45
    %5323 = vmatmul.mubr.f32.gmra.mrb[0].mxu0 %v44
    %v5324 = vpop.f32.mrb[0].mxu0
    %v5325 = vadd.f32 %v5254, %v5324
    %v5326 = vpop.f32.mrb[0].mxu0
    %v5327 = vadd.f32 %v5256, %v5326
    %5328 = vdwg.mxu0
    %5329 = vmatprep.subr.mxu0 %v4888
    %5330 = vmatpush1.msra.mxu0 %v4887
    %5331 = vmatprep.subr.mxu0 %v4890
    %5332 = vmatpush1.msra.mxu0 %v4889
    %5333 = vmatprep.subr.mxu0 %v4892
    %5334 = vmatpush1.msra.mxu0 %v4891
    %5335 = vmatprep.subr.mxu0 %v4894
    %5336 = vmatpush1.msra.mxu0 %v4893
    %5337 = vmatprep.subr.mxu0 %v4896
    %5338 = vmatpush1.msra.mxu0 %v4895
    %5339 = vmatprep.subr.mxu0 %v4898
    %5340 = vmatpush1.msra.mxu0 %v4897
    %5341 = vmatprep.subr.mxu0 %v4900
    %5342 = vmatpush1.msra.mxu0 %v4899
    %5343 = vmatprep.subr.mxu0 %v4902
    %5344 = vmatpush1.msra.mxu0 %v4901
    %5345 = vmatprep.subr.mxu0 %v4904
    %5346 = vmatpush1.msra.mxu0 %v4903
    %5347 = vmatprep.subr.mxu0 %v4906
    %5348 = vmatpush1.msra.mxu0 %v4905
    %5349 = vmatprep.subr.mxu0 %v4908
    %5350 = vmatpush1.msra.mxu0 %v4907
    %5351 = vmatprep.subr.mxu0 %v4910
    %5352 = vmatpush1.msra.mxu0 %v4909
    %5353 = vmatprep.subr.mxu0 %v4912
    %5354 = vmatpush1.msra.mxu0 %v4911
    %5355 = vmatprep.subr.mxu0 %v4914
    %5356 = vmatpush1.msra.mxu0 %v4913
    %5357 = vmatprep.subr.mxu0 %v4916
    %5358 = vmatpush1.msra.mxu0 %v4915
    %5359 = vmatprep.subr.mxu0 %v4918
    %5360 = vmatpush1.msra.mxu0 %v4917
    %5361 = vmatprep.subr.mxu0 %v4920
    %5362 = vmatpush1.msra.mxu0 %v4919
    %5363 = vmatprep.subr.mxu0 %v4922
    %5364 = vmatpush1.msra.mxu0 %v4921
    %5365 = vmatprep.subr.mxu0 %v4924
    %5366 = vmatpush1.msra.mxu0 %v4923
    %5367 = vmatprep.subr.mxu0 %v4926
    %5368 = vmatpush1.msra.mxu0 %v4925
    %5369 = vmatprep.subr.mxu0 %v4928
    %5370 = vmatpush1.msra.mxu0 %v4927
    %5371 = vmatprep.subr.mxu0 %v4930
    %5372 = vmatpush1.msra.mxu0 %v4929
    %5373 = vmatprep.subr.mxu0 %v4932
    %5374 = vmatpush1.msra.mxu0 %v4931
    %5375 = vmatprep.subr.mxu0 %v4934
    %5376 = vmatpush1.msra.mxu0 %v4933
    %5377 = vmatprep.subr.mxu0 %v4936
    %5378 = vmatpush1.msra.mxu0 %v4935
    %5379 = vmatprep.subr.mxu0 %v4938
    %5380 = vmatpush1.msra.mxu0 %v4937
    %5381 = vmatprep.subr.mxu0 %v4940
    %5382 = vmatpush1.msra.mxu0 %v4939
    %5383 = vmatprep.subr.mxu0 %v4942
    %5384 = vmatpush1.msra.mxu0 %v4941
    %5385 = vmatprep.subr.mxu0 %v4944
    %5386 = vmatpush1.msra.mxu0 %v4943
    %5387 = vmatprep.subr.mxu0 %v4946
    %5388 = vmatpush1.msra.mxu0 %v4945
    %5389 = vmatprep.subr.mxu0 %v4948
    %5390 = vmatpush1.msra.mxu0 %v4947
    %5391 = vmatprep.subr.mxu0 %v4950
    %5392 = vmatpush1.msra.mxu0 %v4949
    %5393 = vmatprep.mubr.f32.mxu0 %v47
    %5394 = vmatmul.mubr.f32.gmra.mrb[0].mxu0 %v46
    %v5395 = vpop.f32.mrb[0].mxu0
    %v5396 = vadd.f32 %v5325, %v5395
    %v5397 = vpop.f32.mrb[0].mxu0
    %v5398 = vadd.f32 %v5327, %v5397
    %5399 = vdwg.mxu0
    %5400 = vmatprep.subr.mxu0 %v4952
    %5401 = vmatpush1.msra.mxu0 %v4951
    %5402 = vmatprep.subr.mxu0 %v4954
    %5403 = vmatpush1.msra.mxu0 %v4953
    %5404 = vmatprep.subr.mxu0 %v4956
    %5405 = vmatpush1.msra.mxu0 %v4955
    %5406 = vmatprep.subr.mxu0 %v4958
    %5407 = vmatpush1.msra.mxu0 %v4957
    %5408 = vmatprep.subr.mxu0 %v4960
    %5409 = vmatpush1.msra.mxu0 %v4959
    %5410 = vmatprep.subr.mxu0 %v4962
    %5411 = vmatpush1.msra.mxu0 %v4961
    %5412 = vmatprep.subr.mxu0 %v4964
    %5413 = vmatpush1.msra.mxu0 %v4963
    %5414 = vmatprep.subr.mxu0 %v4966
    %5415 = vmatpush1.msra.mxu0 %v4965
    %5416 = vmatprep.subr.mxu0 %v4968
    %5417 = vmatpush1.msra.mxu0 %v4967
    %5418 = vmatprep.subr.mxu0 %v4970
    %5419 = vmatpush1.msra.mxu0 %v4969
    %5420 = vmatprep.subr.mxu0 %v4972
    %5421 = vmatpush1.msra.mxu0 %v4971
    %5422 = vmatprep.subr.mxu0 %v4974
    %5423 = vmatpush1.msra.mxu0 %v4973
    %5424 = vmatprep.subr.mxu0 %v4976
    %5425 = vmatpush1.msra.mxu0 %v4975
    %5426 = vmatprep.subr.mxu0 %v4978
    %5427 = vmatpush1.msra.mxu0 %v4977
    %5428 = vmatprep.subr.mxu0 %v4980
    %5429 = vmatpush1.msra.mxu0 %v4979
    %5430 = vmatprep.subr.mxu0 %v4982
    %5431 = vmatpush1.msra.mxu0 %v4981
    %5432 = vmatprep.subr.mxu0 %v4984
    %5433 = vmatpush1.msra.mxu0 %v4983
    %5434 = vmatprep.subr.mxu0 %v4986
    %5435 = vmatpush1.msra.mxu0 %v4985
    %5436 = vmatprep.subr.mxu0 %v4988
    %5437 = vmatpush1.msra.mxu0 %v4987
    %5438 = vmatprep.subr.mxu0 %v4990
    %5439 = vmatpush1.msra.mxu0 %v4989
    %5440 = vmatprep.subr.mxu0 %v4992
    %5441 = vmatpush1.msra.mxu0 %v4991
    %5442 = vmatprep.subr.mxu0 %v4994
    %5443 = vmatpush1.msra.mxu0 %v4993
    %5444 = vmatprep.subr.mxu0 %v4996
    %5445 = vmatpush1.msra.mxu0 %v4995
    %5446 = vmatprep.subr.mxu0 %v4998
    %5447 = vmatpush1.msra.mxu0 %v4997
    %5448 = vmatprep.subr.mxu0 %v5000
    %5449 = vmatpush1.msra.mxu0 %v4999
    %5450 = vmatprep.subr.mxu0 %v5002
    %5451 = vmatpush1.msra.mxu0 %v5001
    %5452 = vmatprep.subr.mxu0 %v5004
    %5453 = vmatpush1.msra.mxu0 %v5003
    %5454 = vmatprep.subr.mxu0 %v5006
    %5455 = vmatpush1.msra.mxu0 %v5005
    %5456 = vmatprep.subr.mxu0 %v5008
    %5457 = vmatpush1.msra.mxu0 %v5007
    %5458 = vmatprep.subr.mxu0 %v5010
    %5459 = vmatpush1.msra.mxu0 %v5009
    %5460 = vmatprep.subr.mxu0 %v5012
    %5461 = vmatpush1.msra.mxu0 %v5011
    %5462 = vmatprep.subr.mxu0 %v5014
    %5463 = vmatpush1.msra.mxu0 %v5013
    %5464 = vmatprep.mubr.f32.mxu0 %v49
    %5465 = vmatmul.mubr.f32.gmra.mrb[0].mxu0 %v48
    %v5466 = vpop.f32.mrb[0].mxu0
    %v5467 = vadd.f32 %v5396, %v5466
    %v5468 = vpop.f32.mrb[0].mxu0
    %v5469 = vadd.f32 %v5398, %v5468
    %5470 = vdwg.mxu0
    %5471 = vmatprep.subr.mxu0 %v5016
    %5472 = vmatpush1.msra.mxu0 %v5015
    %5473 = vmatprep.subr.mxu0 %v5018
    %5474 = vmatpush1.msra.mxu0 %v5017
    %5475 = vmatprep.subr.mxu0 %v5020
    %5476 = vmatpush1.msra.mxu0 %v5019
    %5477 = vmatprep.subr.mxu0 %v5022
    %5478 = vmatpush1.msra.mxu0 %v5021
    %5479 = vmatprep.subr.mxu0 %v5024
    %5480 = vmatpush1.msra.mxu0 %v5023
    %5481 = vmatprep.subr.mxu0 %v5026
    %5482 = vmatpush1.msra.mxu0 %v5025
    %5483 = vmatprep.subr.mxu0 %v5028
    %5484 = vmatpush1.msra.mxu0 %v5027
    %5485 = vmatprep.subr.mxu0 %v5030
    %5486 = vmatpush1.msra.mxu0 %v5029
    %5487 = vmatprep.subr.mxu0 %v5032
    %5488 = vmatpush1.msra.mxu0 %v5031
    %5489 = vmatprep.subr.mxu0 %v5034
    %5490 = vmatpush1.msra.mxu0 %v5033
    %5491 = vmatprep.subr.mxu0 %v5036
    %5492 = vmatpush1.msra.mxu0 %v5035
    %5493 = vmatprep.subr.mxu0 %v5043
    %5494 = vmatpush1.msra.mxu0 %v5040
    %5495 = vmatprep.subr.mxu0 0.0
    %5496 = vmatpush1.msra.mxu0 0.0
    %5497 = vmatprep.subr.mxu0 0.0
    %5498 = vmatpush1.msra.mxu0 0.0
    %5499 = vmatprep.subr.mxu0 0.0
    %5500 = vmatpush1.msra.mxu0 0.0
    %5501 = vmatprep.subr.mxu0 0.0
    %5502 = vmatpush1.msra.mxu0 0.0
    %5503 = vmatprep.subr.mxu0 0.0
    %5504 = vmatpush1.msra.mxu0 0.0
    %5505 = vmatprep.subr.mxu0 0.0
    %5506 = vmatpush1.msra.mxu0 0.0
    %5507 = vmatprep.subr.mxu0 0.0
    %5508 = vmatpush1.msra.mxu0 0.0
    %5509 = vmatprep.subr.mxu0 0.0
    %5510 = vmatpush1.msra.mxu0 0.0
    %5511 = vmatprep.subr.mxu0 0.0
    %5512 = vmatpush1.msra.mxu0 0.0
    %5513 = vmatprep.subr.mxu0 0.0
    %5514 = vmatpush1.msra.mxu0 0.0
    %5515 = vmatprep.subr.mxu0 0.0
    %5516 = vmatpush1.msra.mxu0 0.0
    %5517 = vmatprep.subr.mxu0 0.0
    %5518 = vmatpush1.msra.mxu0 0.0
    %5519 = vmatprep.subr.mxu0 0.0
    %5520 = vmatpush1.msra.mxu0 0.0
    %5521 = vmatprep.subr.mxu0 0.0
    %5522 = vmatpush1.msra.mxu0 0.0
    %5523 = vmatprep.subr.mxu0 0.0
    %5524 = vmatpush1.msra.mxu0 0.0
    %5525 = vmatprep.subr.mxu0 0.0
    %5526 = vmatpush1.msra.mxu0 0.0
    %5527 = vmatprep.subr.mxu0 0.0
    %5528 = vmatpush1.msra.mxu0 0.0
    %5529 = vmatprep.subr.mxu0 0.0
    %5530 = vmatpush1.msra.mxu0 0.0
    %5531 = vmatprep.subr.mxu0 0.0
    %5532 = vmatpush1.msra.mxu0 0.0
    %5533 = vmatprep.subr.mxu0 0.0
    %5534 = vmatpush1.msra.mxu0 0.0
    %5535 = vmatprep.mubr.f32.mxu0 0.0
    %5536 = vmatmul.mubr.f32.gmra.mrb[0].mxu0 %v461
    %v5537 = vpop.f32.mrb[0].mxu0
    %v5538 = vadd.f32 %v5467, %v5537
    %v5539 = vpop.f32.mrb[0].mxu0
    %v5540 = vadd.f32 %v5469, %v5539
    %5541 = vdwg.mxu0
    %s5542 = scalar_lea.vmem [#allocation7], 80
    %5543 = vst.msk [vmem:[%s5542] sm:$0xff] %vm967, %v5538
    %s5544 = scalar_lea.vmem [#allocation7], 88
    %5545 = vst.msk [vmem:[%s5544] sm:$0xff] %vm967, %v5540
    %v5546 = vld [vmem:[#allocation5 + $0x60] sm:$0xff]
    %v5547 = vld [vmem:[#allocation5 + $0xc8] sm:$0xff]
    %v5548 = vld [vmem:[#allocation5 + $0x130] sm:$0xff]
    %v5549 = vld [vmem:[#allocation5 + $0x198] sm:$0xff]
    %v5550 = vld [vmem:[#allocation5 + $0x200] sm:$0xff]
    %v5551 = vld [vmem:[#allocation5 + $0x268] sm:$0xff]
    %v5552 = vld [vmem:[#allocation5 + $0x2d0] sm:$0xff]
    %v5553 = vld [vmem:[#allocation5 + $0x338] sm:$0xff]
    %v5554 = vld [vmem:[#allocation5 + $0x3a0] sm:$0xff]
    %v5555 = vld [vmem:[#allocation5 + $0x408] sm:$0xff]
    %v5556 = vld [vmem:[#allocation5 + $0x470] sm:$0xff]
    %v5557 = vld [vmem:[#allocation5 + $0x4d8] sm:$0xff]
    %v5558 = vld [vmem:[#allocation5 + $0x540] sm:$0xff]
    %v5559 = vld [vmem:[#allocation5 + $0x5a8] sm:$0xff]
    %v5560 = vld [vmem:[#allocation5 + $0x610] sm:$0xff]
    %v5561 = vld [vmem:[#allocation5 + $0x678] sm:$0xff]
    %v5562 = vld [vmem:[#allocation5 + $0x6e0] sm:$0xff]
    %v5563 = vld [vmem:[#allocation5 + $0x748] sm:$0xff]
    %v5564 = vld [vmem:[#allocation5 + $0x7b0] sm:$0xff]
    %v5565 = vld [vmem:[#allocation5 + $0x818] sm:$0xff]
    %v5566 = vld [vmem:[#allocation5 + $0x880] sm:$0xff]
    %v5567 = vld [vmem:[#allocation5 + $0x8e8] sm:$0xff]
    %v5568 = vld [vmem:[#allocation5 + $0x950] sm:$0xff]
    %v5569 = vld [vmem:[#allocation5 + $0x9b8] sm:$0xff]
    %v5570 = vld [vmem:[#allocation5 + $0xa20] sm:$0xff]
    %v5571 = vld [vmem:[#allocation5 + $0xa88] sm:$0xff]
    %v5572 = vld [vmem:[#allocation5 + $0xaf0] sm:$0xff]
    %v5573 = vld [vmem:[#allocation5 + $0xb58] sm:$0xff]
    %v5574 = vld [vmem:[#allocation5 + $0xbc0] sm:$0xff]
    %v5575 = vld [vmem:[#allocation5 + $0xc28] sm:$0xff]
    %v5576 = vld [vmem:[#allocation5 + $0xc90] sm:$0xff]
    %v5577 = vld [vmem:[#allocation5 + $0xcf8] sm:$0xff]
    %v5578 = vld [vmem:[#allocation5 + $0xd60] sm:$0xff]
    %v5579 = vld [vmem:[#allocation5 + $0xdc8] sm:$0xff]
    %v5580 = vld [vmem:[#allocation5 + $0xe30] sm:$0xff]
    %v5581 = vld [vmem:[#allocation5 + $0xe98] sm:$0xff]
    %v5582 = vld [vmem:[#allocation5 + $0xf00] sm:$0xff]
    %v5583 = vld [vmem:[#allocation5 + $0xf68] sm:$0xff]
    %v5584 = vld [vmem:[#allocation5 + $0xfd0] sm:$0xff]
    %v5585 = vld [vmem:[#allocation5 + $0x1038] sm:$0xff]
    %v5586 = vld [vmem:[#allocation5 + $0x10a0] sm:$0xff]
    %v5587 = vld [vmem:[#allocation5 + $0x1108] sm:$0xff]
    %v5588 = vld [vmem:[#allocation5 + $0x1170] sm:$0xff]
    %v5589 = vld [vmem:[#allocation5 + $0x11d8] sm:$0xff]
    %v5590 = vld [vmem:[#allocation5 + $0x1240] sm:$0xff]
    %v5591 = vld [vmem:[#allocation5 + $0x12a8] sm:$0xff]
    %v5592 = vld [vmem:[#allocation5 + $0x1310] sm:$0xff]
    %v5593 = vld [vmem:[#allocation5 + $0x1378] sm:$0xff]
    %v5594 = vld [vmem:[#allocation5 + $0x13e0] sm:$0xff]
    %v5595 = vld [vmem:[#allocation5 + $0x1448] sm:$0xff]
    %v5596 = vld [vmem:[#allocation5 + $0x14b0] sm:$0xff]
    %v5597 = vld [vmem:[#allocation5 + $0x1518] sm:$0xff]
    %v5598 = vld [vmem:[#allocation5 + $0x1580] sm:$0xff]
    %v5599 = vld [vmem:[#allocation5 + $0x15e8] sm:$0xff]
    %v5600 = vld [vmem:[#allocation5 + $0x1650] sm:$0xff]
    %v5601 = vld [vmem:[#allocation5 + $0x16b8] sm:$0xff]
    %v5602 = vld [vmem:[#allocation5 + $0x1720] sm:$0xff]
    %v5603 = vld [vmem:[#allocation5 + $0x1788] sm:$0xff]
    %v5604 = vld [vmem:[#allocation5 + $0x17f0] sm:$0xff]
    %v5605 = vld [vmem:[#allocation5 + $0x1858] sm:$0xff]
    %v5606 = vld [vmem:[#allocation5 + $0x18c0] sm:$0xff]
    %v5607 = vld [vmem:[#allocation5 + $0x1928] sm:$0xff]
    %v5608 = vld [vmem:[#allocation5 + $0x1990] sm:$0xff]
    %v5609 = vld [vmem:[#allocation5 + $0x19f8] sm:$0xff]
    %v5610 = vld [vmem:[#allocation5 + $0x1a60] sm:$0xff]
    %v5611 = vld [vmem:[#allocation5 + $0x1ac8] sm:$0xff]
    %v5612 = vld [vmem:[#allocation5 + $0x1b30] sm:$0xff]
    %v5613 = vld [vmem:[#allocation5 + $0x1b98] sm:$0xff]
    %v5614 = vld [vmem:[#allocation5 + $0x1c00] sm:$0xff]
    %v5615 = vld [vmem:[#allocation5 + $0x1c68] sm:$0xff]
    %v5616 = vld [vmem:[#allocation5 + $0x1cd0] sm:$0xff]
    %v5617 = vld [vmem:[#allocation5 + $0x1d38] sm:$0xff]
    %v5618 = vld [vmem:[#allocation5 + $0x1da0] sm:$0xff]
    %v5619 = vld [vmem:[#allocation5 + $0x1e08] sm:$0xff]
    %v5620 = vld [vmem:[#allocation5 + $0x1e70] sm:$0xff]
    %v5621 = vld [vmem:[#allocation5 + $0x1ed8] sm:$0xff]
    %v5622 = vld [vmem:[#allocation5 + $0x1f40] sm:$0xff]
    %v5623 = vld [vmem:[#allocation5 + $0x1fa8] sm:$0xff]
    %v5624 = vld [vmem:[#allocation5 + $0x2010] sm:$0xff]
    %v5625 = vld [vmem:[#allocation5 + $0x2078] sm:$0xff]
    %v5626 = vld [vmem:[#allocation5 + $0x20e0] sm:$0xff]
    %v5627 = vld [vmem:[#allocation5 + $0x2148] sm:$0xff]
    %v5628 = vld [vmem:[#allocation5 + $0x21b0] sm:$0xff]
    %v5629 = vld [vmem:[#allocation5 + $0x2218] sm:$0xff]
    %v5630 = vld [vmem:[#allocation5 + $0x2280] sm:$0xff]
    %v5631 = vld [vmem:[#allocation5 + $0x22e8] sm:$0xff]
    %v5632 = vld [vmem:[#allocation5 + $0x2350] sm:$0xff]
    %v5633 = vld [vmem:[#allocation5 + $0x23b8] sm:$0xff]
    %v5634 = vld [vmem:[#allocation5 + $0x2420] sm:$0xff]
    %v5635 = vld [vmem:[#allocation5 + $0x2488] sm:$0xff]
    %v5636 = vld [vmem:[#allocation5 + $0x24f0] sm:$0xff]
    %v5637 = vld [vmem:[#allocation5 + $0x2558] sm:$0xff]
    %v5638 = vld [vmem:[#allocation5 + $0x25c0] sm:$0xff]
    %v5639 = vld [vmem:[#allocation5 + $0x2628] sm:$0xff]
    %v5640 = vld [vmem:[#allocation5 + $0x2690] sm:$0xff]
    %v5641 = vld [vmem:[#allocation5 + $0x26f8] sm:$0xff]
    %v5642 = vld [vmem:[#allocation5 + $0x2760] sm:$0xff]
    %v5643 = vld [vmem:[#allocation5 + $0x27c8] sm:$0xff]
    %v5644 = vld [vmem:[#allocation5 + $0x2830] sm:$0xff]
    %v5645 = vld [vmem:[#allocation5 + $0x2898] sm:$0xff]
    %v5646 = vld [vmem:[#allocation5 + $0x2900] sm:$0xff]
    %v5647 = vld [vmem:[#allocation5 + $0x2968] sm:$0xff]
    %v5648 = vld [vmem:[#allocation5 + $0x29d0] sm:$0xff]
    %v5649 = vld [vmem:[#allocation5 + $0x2a38] sm:$0xff]
    %v5650 = vld [vmem:[#allocation5 + $0x2aa0] sm:$0xff]
    %v5651 = vld [vmem:[#allocation5 + $0x2b08] sm:$0xff]
    %v5652 = vld [vmem:[#allocation5 + $0x2b70] sm:$0xff]
    %v5653 = vld [vmem:[#allocation5 + $0x2bd8] sm:$0xff]
    %v5654 = vld [vmem:[#allocation5 + $0x2c40] sm:$0xff]
    %v5655 = vld [vmem:[#allocation5 + $0x2ca8] sm:$0xff]
    %v5656 = vld [vmem:[#allocation5 + $0x2d10] sm:$0xff]
    %v5657 = vld [vmem:[#allocation5 + $0x2d78] sm:$0xff]
    %v5658 = vld [vmem:[#allocation5 + $0x2de0] sm:$0xff]
    %v5659 = vld [vmem:[#allocation5 + $0x2e48] sm:$0xff]
    %v5660 = vld [vmem:[#allocation5 + $0x2eb0] sm:$0xff]
    %v5661 = vld [vmem:[#allocation5 + $0x2f18] sm:$0xff]
    %v5662 = vld [vmem:[#allocation5 + $0x2f80] sm:$0xff]
    %v5663 = vld [vmem:[#allocation5 + $0x2fe8] sm:$0xff]
    %v5664 = vld [vmem:[#allocation5 + $0x3050] sm:$0xff]
    %v5665 = vld [vmem:[#allocation5 + $0x30b8] sm:$0xff]
    %v5666 = vld [vmem:[#allocation5 + $0x3120] sm:$0xff]
    %v5667 = vld [vmem:[#allocation5 + $0x3188] sm:$0xff]
    %v5668 = vld [vmem:[#allocation5 + $0x31f0] sm:$0xff]
    %v5669 = vld [vmem:[#allocation5 + $0x3258] sm:$0xff]
    %v5670 = vld [vmem:[#allocation5 + $0x32c0] sm:$0xff]
    %v5671 = vld [vmem:[#allocation5 + $0x3328] sm:$0xff]
    %v5672 = vld [vmem:[#allocation5 + $0x3390] sm:$0xff]
    %v5673 = vld [vmem:[#allocation5 + $0x33f8] sm:$0xff]
    %v5674 = vld [vmem:[#allocation5 + $0x3460] sm:$0xff]
    %v5675 = vld [vmem:[#allocation5 + $0x34c8] sm:$0xff]
    %v5676 = vld [vmem:[#allocation5 + $0x3530] sm:$0xff]
    %v5677 = vld [vmem:[#allocation5 + $0x3598] sm:$0xff]
    %v5678 = vld [vmem:[#allocation5 + $0x3600] sm:$0xff]
    %v5679 = vld [vmem:[#allocation5 + $0x3668] sm:$0xff]
    %v5680 = vld [vmem:[#allocation5 + $0x36d0] sm:$0xff]
    %v5681 = vld [vmem:[#allocation5 + $0x3738] sm:$0xff]
    %v5682 = vld [vmem:[#allocation5 + $0x37a0] sm:$0xff]
    %v5683 = vld [vmem:[#allocation5 + $0x3808] sm:$0xff]
    %v5684 = vld [vmem:[#allocation5 + $0x3870] sm:$0xff]
    %v5685 = vld [vmem:[#allocation5 + $0x38d8] sm:$0xff]
    %v5686 = vld [vmem:[#allocation5 + $0x3940] sm:$0xff]
    %v5687 = vld [vmem:[#allocation5 + $0x39a8] sm:$0xff]
    %v5688 = vld [vmem:[#allocation5 + $0x3a10] sm:$0xff]
    %v5689 = vld [vmem:[#allocation5 + $0x3a78] sm:$0xff]
    %v5690 = vld [vmem:[#allocation5 + $0x3ae0] sm:$0xff]
    %v5691 = vld [vmem:[#allocation5 + $0x3b48] sm:$0xff]
    %v5692 = vld [vmem:[#allocation5 + $0x3bb0] sm:$0xff]
    %v5693 = vld [vmem:[#allocation5 + $0x3c18] sm:$0xff]
    %v5694 = vld [vmem:[#allocation5 + $0x3c80] sm:$0xff]
    %v5695 = vld [vmem:[#allocation5 + $0x3ce8] sm:$0xff]
    %v5696 = vld [vmem:[#allocation5 + $0x3d50] sm:$0xff]
    %v5697 = vld [vmem:[#allocation5 + $0x3db8] sm:$0xff]
    %v5698 = vld [vmem:[#allocation5 + $0x3e20] sm:$0xff]
    %v5699 = vld [vmem:[#allocation5 + $0x3e88] sm:$0xff]
    %v5700 = vld [vmem:[#allocation5 + $0x3ef0] sm:$0xff]
    %v5701 = vld [vmem:[#allocation5 + $0x3f58] sm:$0xff]
    %v5702 = vld [vmem:[#allocation5 + $0x3fc0] sm:$0xff]
    %v5703 = vld [vmem:[#allocation5 + $0x4028] sm:$0xff]
    %v5704 = vld [vmem:[#allocation5 + $0x4090] sm:$0xff]
    %v5705 = vld [vmem:[#allocation5 + $0x40f8] sm:$0xff]
    %v5706 = vld [vmem:[#allocation5 + $0x4160] sm:$0xff]
    %v5707 = vld [vmem:[#allocation5 + $0x41c8] sm:$0xff]
    %v5708 = vld [vmem:[#allocation5 + $0x4230] sm:$0xff]
    %v5709 = vld [vmem:[#allocation5 + $0x4298] sm:$0xff]
    %v5710 = vld [vmem:[#allocation5 + $0x4300] sm:$0xff]
    %v5711 = vld [vmem:[#allocation5 + $0x4368] sm:$0xff]
    %v5712 = vld [vmem:[#allocation5 + $0x43d0] sm:$0xff]
    %v5713 = vld [vmem:[#allocation5 + $0x4438] sm:$0xff]
    %v5714 = vld [vmem:[#allocation5 + $0x44a0] sm:$0xff]
    %v5715 = vld [vmem:[#allocation5 + $0x4508] sm:$0xff]
    %v5716 = vld [vmem:[#allocation5 + $0x4570] sm:$0xff]
    %v5717 = vld [vmem:[#allocation5 + $0x45d8] sm:$0xff]
    %v5718 = vld [vmem:[#allocation5 + $0x4640] sm:$0xff]
    %v5719 = vld [vmem:[#allocation5 + $0x46a8] sm:$0xff]
    %v5720 = vld [vmem:[#allocation5 + $0x4710] sm:$0xff]
    %v5721 = vld [vmem:[#allocation5 + $0x4778] sm:$0xff]
    %v5722 = vld [vmem:[#allocation5 + $0x47e0] sm:$0xff]
    %v5723 = vld [vmem:[#allocation5 + $0x4848] sm:$0xff]
    %v5724 = vld [vmem:[#allocation5 + $0x48b0] sm:$0xff]
    %v5725 = vld [vmem:[#allocation5 + $0x4918] sm:$0xff]
    %v5726 = vld [vmem:[#allocation5 + $0x4980] sm:$0xff]
    %v5727 = vld [vmem:[#allocation5 + $0x49e8] sm:$0xff]
    %v5728 = vld [vmem:[#allocation5 + $0x4a50] sm:$0xff]
    %v5729 = vld [vmem:[#allocation5 + $0x4ab8] sm:$0xff]
    %v5730 = vld [vmem:[#allocation5 + $0x4b20] sm:$0xff]
    %v5731 = vld [vmem:[#allocation5 + $0x4b88] sm:$0xff]
    %v5732 = vld [vmem:[#allocation5 + $0x4bf0] sm:$0xff]
    %v5733 = vld [vmem:[#allocation5 + $0x4c58] sm:$0xff]
    %v5734 = vld [vmem:[#allocation5 + $0x4cc0] sm:$0xff]
    %v5735 = vld [vmem:[#allocation5 + $0x4d28] sm:$0xff]
    %v5736 = vld [vmem:[#allocation5 + $0x4d90] sm:$0xff]
    %v5737 = vld [vmem:[#allocation5 + $0x4df8] sm:$0xff]
    %v5738 = vld [vmem:[#allocation5 + $0x4e60] sm:$0xff]
    %v5739 = vld [vmem:[#allocation5 + $0x4ec8] sm:$0xff]
    %v5740 = vld [vmem:[#allocation5 + $0x4f30] sm:$0xff]
    %v5741 = vld [vmem:[#allocation5 + $0x4f98] sm:$0xff]
    %v5742 = vld [vmem:[#allocation5 + $0x5000] sm:$0xff]
    %v5743 = vld [vmem:[#allocation5 + $0x5068] sm:$0xff]
    %v5744 = vld [vmem:[#allocation5 + $0x50d0] sm:$0xff]
    %v5745 = vld [vmem:[#allocation5 + $0x5138] sm:$0xff]
    %v5746 = vld [vmem:[#allocation5 + $0x51a0] sm:$0xff]
    %v5747 = vld [vmem:[#allocation5 + $0x5208] sm:$0xff]
    %v5748 = vld [vmem:[#allocation5 + $0x5270] sm:$0xff]
    %v5749 = vld [vmem:[#allocation5 + $0x52d8] sm:$0x1]
    %v5751 = vsel %vm463, %v5749, 0
    %5753 = vmatprep.subr.mxu0 0.0
    %5754 = vmatpush1.msra.mxu0 %v5546
    %5755 = vmatprep.subr.mxu0 0.0
    %5756 = vmatpush1.msra.mxu0 %v5547
    %5757 = vmatprep.subr.mxu0 0.0
    %5758 = vmatpush1.msra.mxu0 %v5548
    %5759 = vmatprep.subr.mxu0 0.0
    %5760 = vmatpush1.msra.mxu0 %v5549
    %5761 = vmatprep.subr.mxu0 0.0
    %5762 = vmatpush1.msra.mxu0 %v5550
    %5763 = vmatprep.subr.mxu0 0.0
    %5764 = vmatpush1.msra.mxu0 %v5551
    %5765 = vmatprep.subr.mxu0 0.0
    %5766 = vmatpush1.msra.mxu0 %v5552
    %5767 = vmatprep.subr.mxu0 0.0
    %5768 = vmatpush1.msra.mxu0 %v5553
    %5769 = vmatprep.subr.mxu0 0.0
    %5770 = vmatpush1.msra.mxu0 %v5554
    %5771 = vmatprep.subr.mxu0 0.0
    %5772 = vmatpush1.msra.mxu0 %v5555
    %5773 = vmatprep.subr.mxu0 0.0
    %5774 = vmatpush1.msra.mxu0 %v5556
    %5775 = vmatprep.subr.mxu0 0.0
    %5776 = vmatpush1.msra.mxu0 %v5557
    %5777 = vmatprep.subr.mxu0 0.0
    %5778 = vmatpush1.msra.mxu0 %v5558
    %5779 = vmatprep.subr.mxu0 0.0
    %5780 = vmatpush1.msra.mxu0 %v5559
    %5781 = vmatprep.subr.mxu0 0.0
    %5782 = vmatpush1.msra.mxu0 %v5560
    %5783 = vmatprep.subr.mxu0 0.0
    %5784 = vmatpush1.msra.mxu0 %v5561
    %5785 = vmatprep.subr.mxu0 0.0
    %5786 = vmatpush1.msra.mxu0 %v5562
    %5787 = vmatprep.subr.mxu0 0.0
    %5788 = vmatpush1.msra.mxu0 %v5563
    %5789 = vmatprep.subr.mxu0 0.0
    %5790 = vmatpush1.msra.mxu0 %v5564
    %5791 = vmatprep.subr.mxu0 0.0
    %5792 = vmatpush1.msra.mxu0 %v5565
    %5793 = vmatprep.subr.mxu0 0.0
    %5794 = vmatpush1.msra.mxu0 %v5566
    %5795 = vmatprep.subr.mxu0 0.0
    %5796 = vmatpush1.msra.mxu0 %v5567
    %5797 = vmatprep.subr.mxu0 0.0
    %5798 = vmatpush1.msra.mxu0 %v5568
    %5799 = vmatprep.subr.mxu0 0.0
    %5800 = vmatpush1.msra.mxu0 %v5569
    %5801 = vmatprep.subr.mxu0 0.0
    %5802 = vmatpush1.msra.mxu0 %v5570
    %5803 = vmatprep.subr.mxu0 0.0
    %5804 = vmatpush1.msra.mxu0 %v5571
    %5805 = vmatprep.subr.mxu0 0.0
    %5806 = vmatpush1.msra.mxu0 %v5572
    %5807 = vmatprep.subr.mxu0 0.0
    %5808 = vmatpush1.msra.mxu0 %v5573
    %5809 = vmatprep.subr.mxu0 0.0
    %5810 = vmatpush1.msra.mxu0 %v5574
    %5811 = vmatprep.subr.mxu0 0.0
    %5812 = vmatpush1.msra.mxu0 %v5575
    %5813 = vmatprep.subr.mxu0 0.0
    %5814 = vmatpush1.msra.mxu0 %v5576
    %5815 = vmatprep.subr.mxu0 0.0
    %5816 = vmatpush1.msra.mxu0 %v5577
    %5817 = vmatprep.mubr.f32.mxu0 %v39
    %5818 = vmatmul.mubr.f32.gmra.mrb[0].mxu0 %v38
    %v5819 = vpop.f32.mrb[0].mxu0
    %v5820 = vadd.f32 0.0, %v5819
    %v5821 = vpop.f32.mrb[0].mxu0
    %5822 = vdwg.mxu0
    %5823 = vmatprep.subr.mxu0 0.0
    %5824 = vmatpush1.msra.mxu0 %v5578
    %5825 = vmatprep.subr.mxu0 0.0
    %5826 = vmatpush1.msra.mxu0 %v5579
    %5827 = vmatprep.subr.mxu0 0.0
    %5828 = vmatpush1.msra.mxu0 %v5580
    %5829 = vmatprep.subr.mxu0 0.0
    %5830 = vmatpush1.msra.mxu0 %v5581
    %5831 = vmatprep.subr.mxu0 0.0
    %5832 = vmatpush1.msra.mxu0 %v5582
    %5833 = vmatprep.subr.mxu0 0.0
    %5834 = vmatpush1.msra.mxu0 %v5583
    %5835 = vmatprep.subr.mxu0 0.0
    %5836 = vmatpush1.msra.mxu0 %v5584
    %5837 = vmatprep.subr.mxu0 0.0
    %5838 = vmatpush1.msra.mxu0 %v5585
    %5839 = vmatprep.subr.mxu0 0.0
    %5840 = vmatpush1.msra.mxu0 %v5586
    %5841 = vmatprep.subr.mxu0 0.0
    %5842 = vmatpush1.msra.mxu0 %v5587
    %5843 = vmatprep.subr.mxu0 0.0
    %5844 = vmatpush1.msra.mxu0 %v5588
    %5845 = vmatprep.subr.mxu0 0.0
    %5846 = vmatpush1.msra.mxu0 %v5589
    %5847 = vmatprep.subr.mxu0 0.0
    %5848 = vmatpush1.msra.mxu0 %v5590
    %5849 = vmatprep.subr.mxu0 0.0
    %5850 = vmatpush1.msra.mxu0 %v5591
    %5851 = vmatprep.subr.mxu0 0.0
    %5852 = vmatpush1.msra.mxu0 %v5592
    %5853 = vmatprep.subr.mxu0 0.0
    %5854 = vmatpush1.msra.mxu0 %v5593
    %5855 = vmatprep.subr.mxu0 0.0
    %5856 = vmatpush1.msra.mxu0 %v5594
    %5857 = vmatprep.subr.mxu0 0.0
    %5858 = vmatpush1.msra.mxu0 %v5595
    %5859 = vmatprep.subr.mxu0 0.0
    %5860 = vmatpush1.msra.mxu0 %v5596
    %5861 = vmatprep.subr.mxu0 0.0
    %5862 = vmatpush1.msra.mxu0 %v5597
    %5863 = vmatprep.subr.mxu0 0.0
    %5864 = vmatpush1.msra.mxu0 %v5598
    %5865 = vmatprep.subr.mxu0 0.0
    %5866 = vmatpush1.msra.mxu0 %v5599
    %5867 = vmatprep.subr.mxu0 0.0
    %5868 = vmatpush1.msra.mxu0 %v5600
    %5869 = vmatprep.subr.mxu0 0.0
    %5870 = vmatpush1.msra.mxu0 %v5601
    %5871 = vmatprep.subr.mxu0 0.0
    %5872 = vmatpush1.msra.mxu0 %v5602
    %5873 = vmatprep.subr.mxu0 0.0
    %5874 = vmatpush1.msra.mxu0 %v5603
    %5875 = vmatprep.subr.mxu0 0.0
    %5876 = vmatpush1.msra.mxu0 %v5604
    %5877 = vmatprep.subr.mxu0 0.0
    %5878 = vmatpush1.msra.mxu0 %v5605
    %5879 = vmatprep.subr.mxu0 0.0
    %5880 = vmatpush1.msra.mxu0 %v5606
    %5881 = vmatprep.subr.mxu0 0.0
    %5882 = vmatpush1.msra.mxu0 %v5607
    %5883 = vmatprep.subr.mxu0 0.0
    %5884 = vmatpush1.msra.mxu0 %v5608
    %5885 = vmatprep.subr.mxu0 0.0
    %5886 = vmatpush1.msra.mxu0 %v5609
    %5887 = vmatprep.mubr.f32.mxu0 %v41
    %5888 = vmatmul.mubr.f32.gmra.mrb[0].mxu0 %v40
    %v5889 = vpop.f32.mrb[0].mxu0
    %v5890 = vadd.f32 %v5820, %v5889
    %v5891 = vpop.f32.mrb[0].mxu0
    %5892 = vdwg.mxu0
    %5893 = vmatprep.subr.mxu0 0.0
    %5894 = vmatpush1.msra.mxu0 %v5610
    %5895 = vmatprep.subr.mxu0 0.0
    %5896 = vmatpush1.msra.mxu0 %v5611
    %5897 = vmatprep.subr.mxu0 0.0
    %5898 = vmatpush1.msra.mxu0 %v5612
    %5899 = vmatprep.subr.mxu0 0.0
    %5900 = vmatpush1.msra.mxu0 %v5613
    %5901 = vmatprep.subr.mxu0 0.0
    %5902 = vmatpush1.msra.mxu0 %v5614
    %5903 = vmatprep.subr.mxu0 0.0
    %5904 = vmatpush1.msra.mxu0 %v5615
    %5905 = vmatprep.subr.mxu0 0.0
    %5906 = vmatpush1.msra.mxu0 %v5616
    %5907 = vmatprep.subr.mxu0 0.0
    %5908 = vmatpush1.msra.mxu0 %v5617
    %5909 = vmatprep.subr.mxu0 0.0
    %5910 = vmatpush1.msra.mxu0 %v5618
    %5911 = vmatprep.subr.mxu0 0.0
    %5912 = vmatpush1.msra.mxu0 %v5619
    %5913 = vmatprep.subr.mxu0 0.0
    %5914 = vmatpush1.msra.mxu0 %v5620
    %5915 = vmatprep.subr.mxu0 0.0
    %5916 = vmatpush1.msra.mxu0 %v5621
    %5917 = vmatprep.subr.mxu0 0.0
    %5918 = vmatpush1.msra.mxu0 %v5622
    %5919 = vmatprep.subr.mxu0 0.0
    %5920 = vmatpush1.msra.mxu0 %v5623
    %5921 = vmatprep.subr.mxu0 0.0
    %5922 = vmatpush1.msra.mxu0 %v5624
    %5923 = vmatprep.subr.mxu0 0.0
    %5924 = vmatpush1.msra.mxu0 %v5625
    %5925 = vmatprep.subr.mxu0 0.0
    %5926 = vmatpush1.msra.mxu0 %v5626
    %5927 = vmatprep.subr.mxu0 0.0
    %5928 = vmatpush1.msra.mxu0 %v5627
    %5929 = vmatprep.subr.mxu0 0.0
    %5930 = vmatpush1.msra.mxu0 %v5628
    %5931 = vmatprep.subr.mxu0 0.0
    %5932 = vmatpush1.msra.mxu0 %v5629
    %5933 = vmatprep.subr.mxu0 0.0
    %5934 = vmatpush1.msra.mxu0 %v5630
    %5935 = vmatprep.subr.mxu0 0.0
    %5936 = vmatpush1.msra.mxu0 %v5631
    %5937 = vmatprep.subr.mxu0 0.0
    %5938 = vmatpush1.msra.mxu0 %v5632
    %5939 = vmatprep.subr.mxu0 0.0
    %5940 = vmatpush1.msra.mxu0 %v5633
    %5941 = vmatprep.subr.mxu0 0.0
    %5942 = vmatpush1.msra.mxu0 %v5634
    %5943 = vmatprep.subr.mxu0 0.0
    %5944 = vmatpush1.msra.mxu0 %v5635
    %5945 = vmatprep.subr.mxu0 0.0
    %5946 = vmatpush1.msra.mxu0 %v5636
    %5947 = vmatprep.subr.mxu0 0.0
    %5948 = vmatpush1.msra.mxu0 %v5637
    %5949 = vmatprep.subr.mxu0 0.0
    %5950 = vmatpush1.msra.mxu0 %v5638
    %5951 = vmatprep.subr.mxu0 0.0
    %5952 = vmatpush1.msra.mxu0 %v5639
    %5953 = vmatprep.subr.mxu0 0.0
    %5954 = vmatpush1.msra.mxu0 %v5640
    %5955 = vmatprep.subr.mxu0 0.0
    %5956 = vmatpush1.msra.mxu0 %v5641
    %5957 = vmatprep.mubr.f32.mxu0 %v43
    %5958 = vmatmul.mubr.f32.gmra.mrb[0].mxu0 %v42
    %v5959 = vpop.f32.mrb[0].mxu0
    %v5960 = vadd.f32 %v5890, %v5959
    %v5961 = vpop.f32.mrb[0].mxu0
    %5962 = vdwg.mxu0
    %5963 = vmatprep.subr.mxu0 0.0
    %5964 = vmatpush1.msra.mxu0 %v5642
    %5965 = vmatprep.subr.mxu0 0.0
    %5966 = vmatpush1.msra.mxu0 %v5643
    %5967 = vmatprep.subr.mxu0 0.0
    %5968 = vmatpush1.msra.mxu0 %v5644
    %5969 = vmatprep.subr.mxu0 0.0
    %5970 = vmatpush1.msra.mxu0 %v5645
    %5971 = vmatprep.subr.mxu0 0.0
    %5972 = vmatpush1.msra.mxu0 %v5646
    %5973 = vmatprep.subr.mxu0 0.0
    %5974 = vmatpush1.msra.mxu0 %v5647
    %5975 = vmatprep.subr.mxu0 0.0
    %5976 = vmatpush1.msra.mxu0 %v5648
    %5977 = vmatprep.subr.mxu0 0.0
    %5978 = vmatpush1.msra.mxu0 %v5649
    %5979 = vmatprep.subr.mxu0 0.0
    %5980 = vmatpush1.msra.mxu0 %v5650
    %5981 = vmatprep.subr.mxu0 0.0
    %5982 = vmatpush1.msra.mxu0 %v5651
    %5983 = vmatprep.subr.mxu0 0.0
    %5984 = vmatpush1.msra.mxu0 %v5652
    %5985 = vmatprep.subr.mxu0 0.0
    %5986 = vmatpush1.msra.mxu0 %v5653
    %5987 = vmatprep.subr.mxu0 0.0
    %5988 = vmatpush1.msra.mxu0 %v5654
    %5989 = vmatprep.subr.mxu0 0.0
    %5990 = vmatpush1.msra.mxu0 %v5655
    %5991 = vmatprep.subr.mxu0 0.0
    %5992 = vmatpush1.msra.mxu0 %v5656
    %5993 = vmatprep.subr.mxu0 0.0
    %5994 = vmatpush1.msra.mxu0 %v5657
    %5995 = vmatprep.subr.mxu0 0.0
    %5996 = vmatpush1.msra.mxu0 %v5658
    %5997 = vmatprep.subr.mxu0 0.0
    %5998 = vmatpush1.msra.mxu0 %v5659
    %5999 = vmatprep.subr.mxu0 0.0
    %6000 = vmatpush1.msra.mxu0 %v5660
    %6001 = vmatprep.subr.mxu0 0.0
    %6002 = vmatpush1.msra.mxu0 %v5661
    %6003 = vmatprep.subr.mxu0 0.0
    %6004 = vmatpush1.msra.mxu0 %v5662
    %6005 = vmatprep.subr.mxu0 0.0
    %6006 = vmatpush1.msra.mxu0 %v5663
    %6007 = vmatprep.subr.mxu0 0.0
    %6008 = vmatpush1.msra.mxu0 %v5664
    %6009 = vmatprep.subr.mxu0 0.0
    %6010 = vmatpush1.msra.mxu0 %v5665
    %6011 = vmatprep.subr.mxu0 0.0
    %6012 = vmatpush1.msra.mxu0 %v5666
    %6013 = vmatprep.subr.mxu0 0.0
    %6014 = vmatpush1.msra.mxu0 %v5667
    %6015 = vmatprep.subr.mxu0 0.0
    %6016 = vmatpush1.msra.mxu0 %v5668
    %6017 = vmatprep.subr.mxu0 0.0
    %6018 = vmatpush1.msra.mxu0 %v5669
    %6019 = vmatprep.subr.mxu0 0.0
    %6020 = vmatpush1.msra.mxu0 %v5670
    %6021 = vmatprep.subr.mxu0 0.0
    %6022 = vmatpush1.msra.mxu0 %v5671
    %6023 = vmatprep.subr.mxu0 0.0
    %6024 = vmatpush1.msra.mxu0 %v5672
    %6025 = vmatprep.subr.mxu0 0.0
    %6026 = vmatpush1.msra.mxu0 %v5673
    %6027 = vmatprep.mubr.f32.mxu0 %v45
    %6028 = vmatmul.mubr.f32.gmra.mrb[0].mxu0 %v44
    %v6029 = vpop.f32.mrb[0].mxu0
    %v6030 = vadd.f32 %v5960, %v6029
    %v6031 = vpop.f32.mrb[0].mxu0
    %6032 = vdwg.mxu0
    %6033 = vmatprep.subr.mxu0 0.0
    %6034 = vmatpush1.msra.mxu0 %v5674
    %6035 = vmatprep.subr.mxu0 0.0
    %6036 = vmatpush1.msra.mxu0 %v5675
    %6037 = vmatprep.subr.mxu0 0.0
    %6038 = vmatpush1.msra.mxu0 %v5676
    %6039 = vmatprep.subr.mxu0 0.0
    %6040 = vmatpush1.msra.mxu0 %v5677
    %6041 = vmatprep.subr.mxu0 0.0
    %6042 = vmatpush1.msra.mxu0 %v5678
    %6043 = vmatprep.subr.mxu0 0.0
    %6044 = vmatpush1.msra.mxu0 %v5679
    %6045 = vmatprep.subr.mxu0 0.0
    %6046 = vmatpush1.msra.mxu0 %v5680
    %6047 = vmatprep.subr.mxu0 0.0
    %6048 = vmatpush1.msra.mxu0 %v5681
    %6049 = vmatprep.subr.mxu0 0.0
    %6050 = vmatpush1.msra.mxu0 %v5682
    %6051 = vmatprep.subr.mxu0 0.0
    %6052 = vmatpush1.msra.mxu0 %v5683
    %6053 = vmatprep.subr.mxu0 0.0
    %6054 = vmatpush1.msra.mxu0 %v5684
    %6055 = vmatprep.subr.mxu0 0.0
    %6056 = vmatpush1.msra.mxu0 %v5685
    %6057 = vmatprep.subr.mxu0 0.0
    %6058 = vmatpush1.msra.mxu0 %v5686
    %6059 = vmatprep.subr.mxu0 0.0
    %6060 = vmatpush1.msra.mxu0 %v5687
    %6061 = vmatprep.subr.mxu0 0.0
    %6062 = vmatpush1.msra.mxu0 %v5688
    %6063 = vmatprep.subr.mxu0 0.0
    %6064 = vmatpush1.msra.mxu0 %v5689
    %6065 = vmatprep.subr.mxu0 0.0
    %6066 = vmatpush1.msra.mxu0 %v5690
    %6067 = vmatprep.subr.mxu0 0.0
    %6068 = vmatpush1.msra.mxu0 %v5691
    %6069 = vmatprep.subr.mxu0 0.0
    %6070 = vmatpush1.msra.mxu0 %v5692
    %6071 = vmatprep.subr.mxu0 0.0
    %6072 = vmatpush1.msra.mxu0 %v5693
    %6073 = vmatprep.subr.mxu0 0.0
    %6074 = vmatpush1.msra.mxu0 %v5694
    %6075 = vmatprep.subr.mxu0 0.0
    %6076 = vmatpush1.msra.mxu0 %v5695
    %6077 = vmatprep.subr.mxu0 0.0
    %6078 = vmatpush1.msra.mxu0 %v5696
    %6079 = vmatprep.subr.mxu0 0.0
    %6080 = vmatpush1.msra.mxu0 %v5697
    %6081 = vmatprep.subr.mxu0 0.0
    %6082 = vmatpush1.msra.mxu0 %v5698
    %6083 = vmatprep.subr.mxu0 0.0
    %6084 = vmatpush1.msra.mxu0 %v5699
    %6085 = vmatprep.subr.mxu0 0.0
    %6086 = vmatpush1.msra.mxu0 %v5700
    %6087 = vmatprep.subr.mxu0 0.0
    %6088 = vmatpush1.msra.mxu0 %v5701
    %6089 = vmatprep.subr.mxu0 0.0
    %6090 = vmatpush1.msra.mxu0 %v5702
    %6091 = vmatprep.subr.mxu0 0.0
    %6092 = vmatpush1.msra.mxu0 %v5703
    %6093 = vmatprep.subr.mxu0 0.0
    %6094 = vmatpush1.msra.mxu0 %v5704
    %6095 = vmatprep.subr.mxu0 0.0
    %6096 = vmatpush1.msra.mxu0 %v5705
    %6097 = vmatprep.mubr.f32.mxu0 %v47
    %6098 = vmatmul.mubr.f32.gmra.mrb[0].mxu0 %v46
    %v6099 = vpop.f32.mrb[0].mxu0
    %v6100 = vadd.f32 %v6030, %v6099
    %v6101 = vpop.f32.mrb[0].mxu0
    %6102 = vdwg.mxu0
    %6103 = vmatprep.subr.mxu0 0.0
    %6104 = vmatpush1.msra.mxu0 %v5706
    %6105 = vmatprep.subr.mxu0 0.0
    %6106 = vmatpush1.msra.mxu0 %v5707
    %6107 = vmatprep.subr.mxu0 0.0
    %6108 = vmatpush1.msra.mxu0 %v5708
    %6109 = vmatprep.subr.mxu0 0.0
    %6110 = vmatpush1.msra.mxu0 %v5709
    %6111 = vmatprep.subr.mxu0 0.0
    %6112 = vmatpush1.msra.mxu0 %v5710
    %6113 = vmatprep.subr.mxu0 0.0
    %6114 = vmatpush1.msra.mxu0 %v5711
    %6115 = vmatprep.subr.mxu0 0.0
    %6116 = vmatpush1.msra.mxu0 %v5712
    %6117 = vmatprep.subr.mxu0 0.0
    %6118 = vmatpush1.msra.mxu0 %v5713
    %6119 = vmatprep.subr.mxu0 0.0
    %6120 = vmatpush1.msra.mxu0 %v5714
    %6121 = vmatprep.subr.mxu0 0.0
    %6122 = vmatpush1.msra.mxu0 %v5715
    %6123 = vmatprep.subr.mxu0 0.0
    %6124 = vmatpush1.msra.mxu0 %v5716
    %6125 = vmatprep.subr.mxu0 0.0
    %6126 = vmatpush1.msra.mxu0 %v5717
    %6127 = vmatprep.subr.mxu0 0.0
    %6128 = vmatpush1.msra.mxu0 %v5718
    %6129 = vmatprep.subr.mxu0 0.0
    %6130 = vmatpush1.msra.mxu0 %v5719
    %6131 = vmatprep.subr.mxu0 0.0
    %6132 = vmatpush1.msra.mxu0 %v5720
    %6133 = vmatprep.subr.mxu0 0.0
    %6134 = vmatpush1.msra.mxu0 %v5721
    %6135 = vmatprep.subr.mxu0 0.0
    %6136 = vmatpush1.msra.mxu0 %v5722
    %6137 = vmatprep.subr.mxu0 0.0
    %6138 = vmatpush1.msra.mxu0 %v5723
    %6139 = vmatprep.subr.mxu0 0.0
    %6140 = vmatpush1.msra.mxu0 %v5724
    %6141 = vmatprep.subr.mxu0 0.0
    %6142 = vmatpush1.msra.mxu0 %v5725
    %6143 = vmatprep.subr.mxu0 0.0
    %6144 = vmatpush1.msra.mxu0 %v5726
    %6145 = vmatprep.subr.mxu0 0.0
    %6146 = vmatpush1.msra.mxu0 %v5727
    %6147 = vmatprep.subr.mxu0 0.0
    %6148 = vmatpush1.msra.mxu0 %v5728
    %6149 = vmatprep.subr.mxu0 0.0
    %6150 = vmatpush1.msra.mxu0 %v5729
    %6151 = vmatprep.subr.mxu0 0.0
    %6152 = vmatpush1.msra.mxu0 %v5730
    %6153 = vmatprep.subr.mxu0 0.0
    %6154 = vmatpush1.msra.mxu0 %v5731
    %6155 = vmatprep.subr.mxu0 0.0
    %6156 = vmatpush1.msra.mxu0 %v5732
    %6157 = vmatprep.subr.mxu0 0.0
    %6158 = vmatpush1.msra.mxu0 %v5733
    %6159 = vmatprep.subr.mxu0 0.0
    %6160 = vmatpush1.msra.mxu0 %v5734
    %6161 = vmatprep.subr.mxu0 0.0
    %6162 = vmatpush1.msra.mxu0 %v5735
    %6163 = vmatprep.subr.mxu0 0.0
    %6164 = vmatpush1.msra.mxu0 %v5736
    %6165 = vmatprep.subr.mxu0 0.0
    %6166 = vmatpush1.msra.mxu0 %v5737
    %6167 = vmatprep.mubr.f32.mxu0 %v49
    %6168 = vmatmul.mubr.f32.gmra.mrb[0].mxu0 %v48
    %v6169 = vpop.f32.mrb[0].mxu0
    %v6170 = vadd.f32 %v6100, %v6169
    %v6171 = vpop.f32.mrb[0].mxu0
    %6172 = vdwg.mxu0
    %6173 = vmatprep.subr.mxu0 0.0
    %6174 = vmatpush1.msra.mxu0 %v5738
    %6175 = vmatprep.subr.mxu0 0.0
    %6176 = vmatpush1.msra.mxu0 %v5739
    %6177 = vmatprep.subr.mxu0 0.0
    %6178 = vmatpush1.msra.mxu0 %v5740
    %6179 = vmatprep.subr.mxu0 0.0
    %6180 = vmatpush1.msra.mxu0 %v5741
    %6181 = vmatprep.subr.mxu0 0.0
    %6182 = vmatpush1.msra.mxu0 %v5742
    %6183 = vmatprep.subr.mxu0 0.0
    %6184 = vmatpush1.msra.mxu0 %v5743
    %6185 = vmatprep.subr.mxu0 0.0
    %6186 = vmatpush1.msra.mxu0 %v5744
    %6187 = vmatprep.subr.mxu0 0.0
    %6188 = vmatpush1.msra.mxu0 %v5745
    %6189 = vmatprep.subr.mxu0 0.0
    %6190 = vmatpush1.msra.mxu0 %v5746
    %6191 = vmatprep.subr.mxu0 0.0
    %6192 = vmatpush1.msra.mxu0 %v5747
    %6193 = vmatprep.subr.mxu0 0.0
    %6194 = vmatpush1.msra.mxu0 %v5748
    %6195 = vmatprep.subr.mxu0 0.0
    %6196 = vmatpush1.msra.mxu0 %v5751
    %6197 = vmatprep.subr.mxu0 0.0
    %6198 = vmatpush1.msra.mxu0 0.0
    %6199 = vmatprep.subr.mxu0 0.0
    %6200 = vmatpush1.msra.mxu0 0.0
    %6201 = vmatprep.subr.mxu0 0.0
    %6202 = vmatpush1.msra.mxu0 0.0
    %6203 = vmatprep.subr.mxu0 0.0
    %6204 = vmatpush1.msra.mxu0 0.0
    %6205 = vmatprep.subr.mxu0 0.0
    %6206 = vmatpush1.msra.mxu0 0.0
    %6207 = vmatprep.subr.mxu0 0.0
    %6208 = vmatpush1.msra.mxu0 0.0
    %6209 = vmatprep.subr.mxu0 0.0
    %6210 = vmatpush1.msra.mxu0 0.0
    %6211 = vmatprep.subr.mxu0 0.0
    %6212 = vmatpush1.msra.mxu0 0.0
    %6213 = vmatprep.subr.mxu0 0.0
    %6214 = vmatpush1.msra.mxu0 0.0
    %6215 = vmatprep.subr.mxu0 0.0
    %6216 = vmatpush1.msra.mxu0 0.0
    %6217 = vmatprep.subr.mxu0 0.0
    %6218 = vmatpush1.msra.mxu0 0.0
    %6219 = vmatprep.subr.mxu0 0.0
    %6220 = vmatpush1.msra.mxu0 0.0
    %6221 = vmatprep.subr.mxu0 0.0
    %6222 = vmatpush1.msra.mxu0 0.0
    %6223 = vmatprep.subr.mxu0 0.0
    %6224 = vmatpush1.msra.mxu0 0.0
    %6225 = vmatprep.subr.mxu0 0.0
    %6226 = vmatpush1.msra.mxu0 0.0
    %6227 = vmatprep.subr.mxu0 0.0
    %6228 = vmatpush1.msra.mxu0 0.0
    %6229 = vmatprep.subr.mxu0 0.0
    %6230 = vmatpush1.msra.mxu0 0.0
    %6231 = vmatprep.subr.mxu0 0.0
    %6232 = vmatpush1.msra.mxu0 0.0
    %6233 = vmatprep.subr.mxu0 0.0
    %6234 = vmatpush1.msra.mxu0 0.0
    %6235 = vmatprep.subr.mxu0 0.0
    %6236 = vmatpush1.msra.mxu0 0.0
    %6237 = vmatprep.mubr.f32.mxu0 0.0
    %6238 = vmatmul.mubr.f32.gmra.mrb[0].mxu0 %v461
    %v6239 = vpop.f32.mrb[0].mxu0
    %v6240 = vadd.f32 %v6170, %v6239
    %v6241 = vpop.f32.mrb[0].mxu0
    %6242 = vdwg.mxu0
    %s6243 = scalar_lea.vmem [#allocation7], 96
    %6244 = vst.msk [vmem:[%s6243] sm:$0xff] %vm967, %v6240
    // Predicated region
    $region18: #{tpu_custom_call.1} parent=1 // pred_check
      _
    $region19: #{tpu_custom_call.1} parent=1 // pred_check_branch
      %6246 = sbr.rel (0) target = $region21
    $region20: #{tpu_custom_call.1} parent=1 // pred_region
      %s6248 = ssub.s32 1664, 1664
      %6249 = vsyncadd [#allocation4], %s6248
      %s6250 = sshll.u32 [#allocation7], 4
      %s6251 = int_to_ptr.vmem [resolvable:$true] %s6250
      %6256 = dma.vmem_to_hbm [thread:$0]  %s6251, 1664, %s2, [#allocation4], 128, 128, 8
    $region21: #{tpu_custom_call.1} parent=1 // pred_fallthru
      _
    // Predicated region
    $region22: #{tpu_custom_call.1} parent=1 // pred_check
      _
    $region23: #{tpu_custom_call.1} parent=1 // pred_check_branch
      %6258 = sbr.rel (0) target = $region25
    $region24: #{tpu_custom_call.1} parent=1 // pred_region
      %6259 = dma.done [#allocation4], 1664
    $region25: #{tpu_custom_call.1} parent=1 // pred_fallthru
      _
    %6260 = vsyncpa [#allocation3], 1
    %6261 = vsyncpa [#allocation6], 1
    %6262 = vsyncpa [#allocation4], 1

</llo_original>
